<compile_context>
chip_gen: v7x
topology: tpu7x:2x2x1
jax: 0.10.0
libtpu: 0.0.40
codegen_flags: <defaults>
</compile_context>

<pallas_src>
import functools

import jax
import jax.numpy as jnp
from jax.experimental import pallas as pl
from jax.experimental.pallas import tpu as pltpu


# --------------------------------------------------------------------------
# In-kernel helpers
# --------------------------------------------------------------------------

def _pool2x2_relu(src_ref, H, W):
    """ReLU(MaxPool2d(2)) of an (H, W, C) VMEM ref -> (H//2, W//2, C) value."""
    C = src_ref.shape[-1]
    even = src_ref[:, pl.ds(0, W // 2, 2), :]          # columns 0, 2, 4, ...
    odd = src_ref[:, pl.ds(1, W // 2, 2), :]           # columns 1, 3, 5, ...
    m = jnp.maximum(even, odd).reshape(H // 2, 2, W // 2, C)
    m = jnp.maximum(m[:, 0], m[:, 1])                  # rows 2i vs 2i+1
    return jnp.maximum(m, 0.0)


def _conv_accum(pad_ref, w_ref, b_ref, KH, KW, Ho, Wo):
    """Conv as KH*KW shifted-slice matmuls.

    pad_ref: (Ho+KH-1, Wo+KW-1, Cin) zero-padded input (NHWC)
    w_ref:   (KH, KW, Cin, Cout)
    b_ref:   (1, Cout)
    returns  (Ho*Wo, Cout) f32, rows in (h, w) row-major order.
    """
    Cin = pad_ref.shape[-1]
    Cout = w_ref.shape[-1]
    acc = jnp.zeros((Ho * Wo, Cout), jnp.float32)
    for kh in range(KH):
        for kw in range(KW):
            xs = pad_ref[pl.ds(kh, Ho), pl.ds(kw, Wo), :].reshape(Ho * Wo, Cin)
            acc = acc + jnp.dot(xs, w_ref[kh, kw],
                                preferred_element_type=jnp.float32)
    return acc + b_ref[...]


# --------------------------------------------------------------------------
# Fused encoder kernel: one grid step == one batch element, all stages in VMEM
# --------------------------------------------------------------------------

def _encoder_kernel(x_ref, w1_ref, b1_ref, w2_ref, b2_ref, w3_ref, b3_ref,
                    wl_ref, bl_ref, out_ref,
                    pad1, c1s, pad2, c2s, pad3, c3s, *, S, E):
    # ---- stage 1: Conv2d(1, 64, 5, padding=2) -> MaxPool2d(2) -> ReLU -------
    C1 = w1_ref.shape[-1]
    pad1[...] = jnp.zeros(pad1.shape, jnp.float32)
    pad1[pl.ds(2, S), pl.ds(2, S), :] = x_ref[0]
    acc1 = jnp.zeros((S * S, C1), jnp.float32)
    for kh in range(5):                    # Cin == 1: outer product on the VPU
        for kw in range(5):
            col = pad1[pl.ds(kh, S), pl.ds(kw, S), :].reshape(S * S, 1)
            acc1 = acc1 + col * w1_ref[kh, kw].reshape(1, C1)
    c1s[...] = (acc1 + b1_ref[...]).reshape(S, S, C1)
    p1 = _pool2x2_relu(c1s, S, S)                              # (S/2, S/2, 64)

    # ---- stage 2: Conv2d(64, 32, 3, padding=1) -> MaxPool2d(2) -> ReLU ------
    H2 = S // 2
    C2 = w2_ref.shape[-1]
    pad2[...] = jnp.zeros(pad2.shape, jnp.float32)
    pad2[pl.ds(1, H2), pl.ds(1, H2), :] = p1
    c2s[...] = _conv_accum(pad2, w2_ref, b2_ref, 3, 3, H2, H2).reshape(H2, H2, C2)
    p2 = _pool2x2_relu(c2s, H2, H2)                            # (S/4, S/4, 32)

    # ---- stage 3: Conv2d(32, 32, 3, padding=1) -> MaxPool2d(2) -> ReLU ------
    H3 = S // 4
    C3 = w3_ref.shape[-1]
    pad3[...] = jnp.zeros(pad3.shape, jnp.float32)
    pad3[pl.ds(1, H3), pl.ds(1, H3), :] = p2
    c3s[...] = _conv_accum(pad3, w3_ref, b3_ref, 3, 3, H3, H3).reshape(H3, H3, C3)
    cf = _pool2x2_relu(c3s, H3, H3)                            # (S/8, S/8, 32)

    # ---- flatten + Linear(S*S/2, E) with eval-mode BatchNorm1d folded in ----
    # Weights are pre-permuted to NHWC flatten order, so a plain reshape works.
    K = (S // 8) * (S // 8)
    cfm = cf.reshape(K, cf.shape[-1])                          # (K, 32)
    emb = bl_ref[...]                                          # (1, E)
    for k in range(K):
        emb = emb + jnp.dot(cfm[k:k + 1, :], wl_ref[k],
                            preferred_element_type=jnp.float32)
    out_ref[...] = emb.reshape(1, 1, E)


# --------------------------------------------------------------------------
# One-time parameter preparation (hoisted out of the forward hot path)
# --------------------------------------------------------------------------

def prepare_params(p, S, E, eps=1e-5):
    scale = p["bn_gamma"] / jnp.sqrt(p["bn_var"] + eps)        # eval-mode BN fold
    # Linear weight: PyTorch flatten order is (c, h, w); re-order to NHWC (h, w, c)
    wl = p["lin_w"].reshape(E, 32, S // 8, S // 8)             # (E, C, Hf, Wf)
    wl = wl.transpose(2, 3, 1, 0).reshape((S // 8) * (S // 8), 32, E)
    wl = wl * scale[None, None, :]
    bl = ((p["lin_b"] - p["bn_mean"]) * scale + p["bn_beta"]).reshape(1, E)
    return {
        "w1": p["conv1_w"].transpose(2, 3, 1, 0)[:, :, 0, :],  # (5, 5, 64)
        "b1": p["conv1_b"].reshape(1, -1),
        "w2": p["conv2_w"].transpose(2, 3, 1, 0),              # (3, 3, 64, 32)
        "b2": p["conv2_b"].reshape(1, -1),
        "w3": p["conv3_w"].transpose(2, 3, 1, 0),              # (3, 3, 32, 32)
        "b3": p["conv3_b"].reshape(1, -1),
        "wl": wl,                                              # (K, 32, E)
        "bl": bl,                                              # (1, E)
    }


# --------------------------------------------------------------------------
# Forward wrapper (NCHW in, embedding out) — one pallas_call, jitted
# --------------------------------------------------------------------------

@functools.partial(jax.jit, static_argnames=("input_size", "embedding_size"))
def wm811k_encoder_ae_forward(x_nchw, kp, *, input_size, embedding_size):
    S, E = input_size, embedding_size
    B = x_nchw.shape[0]
    x_nhwc = x_nchw.reshape(B, S, S, 1)     # Cin == 1: NCHW -> NHWC is a pure reshape
    K = (S // 8) * (S // 8)
    kernel = functools.partial(_encoder_kernel, S=S, E=E)
    out = pl.pallas_call(
        kernel,
        out_shape=jax.ShapeDtypeStruct((B, 1, E), jnp.float32),
        grid=(B,),
        in_specs=[
            pl.BlockSpec((1, S, S, 1), lambda b: (b, 0, 0, 0)),
            pl.BlockSpec((5, 5, 64), lambda b: (0, 0, 0)),
            pl.BlockSpec((1, 64), lambda b: (0, 0)),
            pl.BlockSpec((3, 3, 64, 32), lambda b: (0, 0, 0, 0)),
            pl.BlockSpec((1, 32), lambda b: (0, 0)),
            pl.BlockSpec((3, 3, 32, 32), lambda b: (0, 0, 0, 0)),
            pl.BlockSpec((1, 32), lambda b: (0, 0)),
            pl.BlockSpec((K, 32, E), lambda b: (0, 0, 0)),
            pl.BlockSpec((1, E), lambda b: (0, 0)),
        ],
        out_specs=pl.BlockSpec((1, 1, E), lambda b: (b, 0, 0)),
        scratch_shapes=[
            pltpu.VMEM((S + 4, S + 4, 1), jnp.float32),            # conv1 padded input
            pltpu.VMEM((S, S, 64), jnp.float32),                   # conv1 output
            pltpu.VMEM((S // 2 + 2, S // 2 + 2, 64), jnp.float32),  # conv2 padded input
            pltpu.VMEM((S // 2, S // 2, 32), jnp.float32),          # conv2 output
            pltpu.VMEM((S // 4 + 2, S // 4 + 2, 32), jnp.float32),  # conv3 padded input
            pltpu.VMEM((S // 4, S // 4, 32), jnp.float32),          # conv3 output
        ],
        compiler_params=pltpu.CompilerParams(
            dimension_semantics=("parallel",)),   # batch axis -> 2 TCs on v7x
    )(x_nhwc, kp["w1"], kp["b1"], kp["w2"], kp["b2"], kp["w3"], kp["b3"],
      kp["wl"], kp["bl"])
    return out.reshape(B, E)


# --------------------------------------------------------------------------
# Pure-JAX reference (PyTorch semantics, NCHW) for correctness checking
# --------------------------------------------------------------------------

def reference_forward(x_nchw, p, S, E, eps=1e-5):
    hp = jax.lax.Precision.HIGHEST

    def conv(x, w, b, pad):
        y = jax.lax.conv_general_dilated(
            x, w, window_strides=(1, 1), padding=[(pad, pad), (pad, pad)],
            dimension_numbers=("NCHW", "OIHW", "NCHW"), precision=hp)
        return y + b.reshape(1, -1, 1, 1)

    def pool(x):
        return jax.lax.reduce_window(x, -jnp.inf, jax.lax.max,
                                     (1, 1, 2, 2), (1, 1, 2, 2), "VALID")

    relu = jax.nn.relu
    c1 = pool(conv(x_nchw, p["conv1_w"], p["conv1_b"], 2))
    c2 = pool(conv(relu(c1), p["conv2_w"], p["conv2_b"], 1))
    c3 = pool(conv(relu(c2), p["conv3_w"], p["conv3_b"], 1))
    feat = relu(c3).reshape(x_nchw.shape[0], -1)               # NCHW flatten
    z = jnp.dot(feat, p["lin_w"].T, precision=hp) + p["lin_b"]
    return (z - p["bn_mean"]) / jnp.sqrt(p["bn_var"] + eps) * p["bn_gamma"] + p["bn_beta"]


# --------------------------------------------------------------------------
# Deterministic parameter / input construction
# --------------------------------------------------------------------------

def init_params(key, S, E):
    D = S * S // 2
    ks = jax.random.split(key, 12)

    def u(k, shape, fan_in):
        bound = 1.0 / float(fan_in) ** 0.5
        return jax.random.uniform(k, shape, jnp.float32, -bound, bound)

    return {
        "conv1_w": u(ks[0], (64, 1, 5, 5), 1 * 25),
        "conv1_b": u(ks[1], (64,), 1 * 25),
        "conv2_w": u(ks[2], (32, 64, 3, 3), 64 * 9),
        "conv2_b": u(ks[3], (32,), 64 * 9),
        "conv3_w": u(ks[4], (32, 32, 3, 3), 32 * 9),
        "conv3_b": u(ks[5], (32,), 32 * 9),
        "lin_w": u(ks[6], (E, D), D),
        "lin_b": u(ks[7], (E,), D),
        "bn_gamma": jax.random.uniform(ks[8], (E,), jnp.float32, 0.5, 1.5),
        "bn_beta": u(ks[9], (E,), 1),
        "bn_mean": 0.1 * jax.random.normal(ks[10], (E,), jnp.float32),
        "bn_var": jax.random.uniform(ks[11], (E,), jnp.float32, 0.5, 1.5),
    }


if __name__ == "__main__":
    B, S, E = 2, 16, 32          # batch, cfg.input_size, cfg.embedding_size
    key = jax.random.PRNGKey(0)
    k_x, k_p = jax.random.split(key)

    params = init_params(k_p, S, E)
    x = jax.random.uniform(k_x, (B, 1, S, S), jnp.float32)     # wafer maps in [0,1)

    kparams = prepare_params(params, S, E)                     # one-time re-layout
    emb = wm811k_encoder_ae_forward(x, kparams, input_size=S, embedding_size=E)
    emb = jax.block_until_ready(emb)

    ref = reference_forward(x, params, S, E)
    assert emb.shape == (B, E), emb.shape
    assert bool(jnp.all(jnp.isfinite(emb)))
    err = float(jnp.max(jnp.abs(emb - ref)))
    assert err < 5e-3, f"max abs err vs reference: {err}"
    print("KERNEL_OK")
</pallas_src>

<mosaic_0001>
module attributes {stable_mosaic.version = 11 : i64} {
  func.func @_encoder_kernel(%arg0: i32, %arg1: memref<1x16x16x1xf32, #tpu.memory_space<vmem>>, %arg2: memref<5x5x64xf32, #tpu.memory_space<vmem>>, %arg3: memref<1x64xf32, #tpu.memory_space<vmem>>, %arg4: memref<3x3x64x32xf32, #tpu.memory_space<vmem>>, %arg5: memref<1x32xf32, #tpu.memory_space<vmem>>, %arg6: memref<3x3x32x32xf32, #tpu.memory_space<vmem>>, %arg7: memref<1x32xf32, #tpu.memory_space<vmem>>, %arg8: memref<4x32x32xf32, #tpu.memory_space<vmem>>, %arg9: memref<1x32xf32, #tpu.memory_space<vmem>>, %arg10: memref<1x1x32xf32, #tpu.memory_space<vmem>>, %arg11: memref<20x20x1xf32, #tpu.memory_space<vmem>>, %arg12: memref<16x16x64xf32, #tpu.memory_space<vmem>>, %arg13: memref<10x10x64xf32, #tpu.memory_space<vmem>>, %arg14: memref<8x8x32xf32, #tpu.memory_space<vmem>>, %arg15: memref<6x6x32xf32, #tpu.memory_space<vmem>>, %arg16: memref<4x4x32xf32, #tpu.memory_space<vmem>>) attributes {dimension_semantics = [#tpu.dimension_semantics<parallel>], iteration_bounds = array<i64: 2>, scalar_prefetch = 0 : i64, scratch_operands = 6 : i64, tpu.core_type = #tpu.core_type<tc>, window_params = [{transform_indices = @transform_0, window_bounds = array<i64: 1, 16, 16, 1>}, {pipeline_mode = #tpu.pipeline_mode<synchronous>, transform_indices = @transform_1, window_bounds = array<i64: 5, 5, 64>}, {pipeline_mode = #tpu.pipeline_mode<synchronous>, transform_indices = @transform_2, window_bounds = array<i64: 1, 64>}, {pipeline_mode = #tpu.pipeline_mode<synchronous>, transform_indices = @transform_3, window_bounds = array<i64: 3, 3, 64, 32>}, {pipeline_mode = #tpu.pipeline_mode<synchronous>, transform_indices = @transform_4, window_bounds = array<i64: 1, 32>}, {pipeline_mode = #tpu.pipeline_mode<synchronous>, transform_indices = @transform_5, window_bounds = array<i64: 3, 3, 32, 32>}, {pipeline_mode = #tpu.pipeline_mode<synchronous>, transform_indices = @transform_6, window_bounds = array<i64: 1, 32>}, {pipeline_mode = #tpu.pipeline_mode<synchronous>, transform_indices = @transform_7, window_bounds = array<i64: 4, 32, 32>}, {pipeline_mode = #tpu.pipeline_mode<synchronous>, transform_indices = @transform_8, window_bounds = array<i64: 1, 32>}, {transform_indices = @transform_9, window_bounds = array<i64: 1, 1, 32>}]} {
    %cst = arith.constant 0.000000e+00 : f32
    %0 = vector.broadcast %cst : f32 to vector<20x20x1xf32>
    %c0 = arith.constant 0 : index
    %c0_0 = arith.constant 0 : index
    %c0_1 = arith.constant 0 : index
    %1 = vector.load %arg11[%c0, %c0_0, %c0_1] : memref<20x20x1xf32, #tpu.memory_space<vmem>>, vector<20x20x1xf32>
    tpu.vector_store %arg11[%c0, %c0_0, %c0_1], %0 {strides = array<i32>} : memref<20x20x1xf32, #tpu.memory_space<vmem>>, vector<20x20x1xf32>,
    %c0_2 = arith.constant 0 : index
    %c0_3 = arith.constant 0 : index
    %c0_4 = arith.constant 0 : index
    %c0_5 = arith.constant 0 : index
    %2 = vector.load %arg1[%c0_2, %c0_3, %c0_4, %c0_5] : memref<1x16x16x1xf32, #tpu.memory_space<vmem>>, vector<1x16x16x1xf32>
    %3 = vector.shape_cast %2 : vector<1x16x16x1xf32> to vector<16x16x1xf32>
    %c2 = arith.constant 2 : index
    %c2_6 = arith.constant 2 : index
    %c0_7 = arith.constant 0 : index
    %4 = vector.load %arg11[%c2, %c2_6, %c0_7] : memref<20x20x1xf32, #tpu.memory_space<vmem>>, vector<16x16x1xf32>
    tpu.vector_store %arg11[%c2, %c2_6, %c0_7], %3 {strides = array<i32>} : memref<20x20x1xf32, #tpu.memory_space<vmem>>, vector<16x16x1xf32>,
    %cst_8 = arith.constant 0.000000e+00 : f32
    %5 = vector.broadcast %cst_8 : f32 to vector<256x64xf32>
    %c0_9 = arith.constant 0 : index
    %c0_10 = arith.constant 0 : index
    %c0_11 = arith.constant 0 : index
    %6 = vector.load %arg11[%c0_9, %c0_10, %c0_11] : memref<20x20x1xf32, #tpu.memory_space<vmem>>, vector<16x16x1xf32>
    %7 = vector.shape_cast %6 : vector<16x16x1xf32> to vector<256x1xf32>
    %c0_12 = arith.constant 0 : index
    %c0_13 = arith.constant 0 : index
    %c0_14 = arith.constant 0 : index
    %8 = vector.load %arg2[%c0_12, %c0_13, %c0_14] : memref<5x5x64xf32, #tpu.memory_space<vmem>>, vector<1x1x64xf32>
    %9 = vector.shape_cast %8 : vector<1x1x64xf32> to vector<64xf32>
    %10 = vector.shape_cast %9 : vector<64xf32> to vector<1x64xf32>
    %11 = vector.broadcast %7 : vector<256x1xf32> to vector<256x64xf32>
    %12 = vector.broadcast %10 : vector<1x64xf32> to vector<256x64xf32>
    %13 = arith.mulf %11, %12 : vector<256x64xf32>
    %14 = arith.addf %5, %13 : vector<256x64xf32>
    %c0_15 = arith.constant 0 : index
    %c1 = arith.constant 1 : index
    %c0_16 = arith.constant 0 : index
    %15 = vector.load %arg11[%c0_15, %c1, %c0_16] : memref<20x20x1xf32, #tpu.memory_space<vmem>>, vector<16x16x1xf32>
    %16 = vector.shape_cast %15 : vector<16x16x1xf32> to vector<256x1xf32>
    %c0_17 = arith.constant 0 : index
    %c1_18 = arith.constant 1 : index
    %c0_19 = arith.constant 0 : index
    %17 = vector.load %arg2[%c0_17, %c1_18, %c0_19] : memref<5x5x64xf32, #tpu.memory_space<vmem>>, vector<1x1x64xf32>
    %18 = vector.shape_cast %17 : vector<1x1x64xf32> to vector<64xf32>
    %19 = vector.shape_cast %18 : vector<64xf32> to vector<1x64xf32>
    %20 = vector.broadcast %16 : vector<256x1xf32> to vector<256x64xf32>
    %21 = vector.broadcast %19 : vector<1x64xf32> to vector<256x64xf32>
    %22 = arith.mulf %20, %21 : vector<256x64xf32>
    %23 = arith.addf %14, %22 : vector<256x64xf32>
    %c0_20 = arith.constant 0 : index
    %c2_21 = arith.constant 2 : index
    %c0_22 = arith.constant 0 : index
    %24 = vector.load %arg11[%c0_20, %c2_21, %c0_22] : memref<20x20x1xf32, #tpu.memory_space<vmem>>, vector<16x16x1xf32>
    %25 = vector.shape_cast %24 : vector<16x16x1xf32> to vector<256x1xf32>
    %c0_23 = arith.constant 0 : index
    %c2_24 = arith.constant 2 : index
    %c0_25 = arith.constant 0 : index
    %26 = vector.load %arg2[%c0_23, %c2_24, %c0_25] : memref<5x5x64xf32, #tpu.memory_space<vmem>>, vector<1x1x64xf32>
    %27 = vector.shape_cast %26 : vector<1x1x64xf32> to vector<64xf32>
    %28 = vector.shape_cast %27 : vector<64xf32> to vector<1x64xf32>
    %29 = vector.broadcast %25 : vector<256x1xf32> to vector<256x64xf32>
    %30 = vector.broadcast %28 : vector<1x64xf32> to vector<256x64xf32>
    %31 = arith.mulf %29, %30 : vector<256x64xf32>
    %32 = arith.addf %23, %31 : vector<256x64xf32>
    %c0_26 = arith.constant 0 : index
    %c3 = arith.constant 3 : index
    %c0_27 = arith.constant 0 : index
    %33 = vector.load %arg11[%c0_26, %c3, %c0_27] : memref<20x20x1xf32, #tpu.memory_space<vmem>>, vector<16x16x1xf32>
    %34 = vector.shape_cast %33 : vector<16x16x1xf32> to vector<256x1xf32>
    %c0_28 = arith.constant 0 : index
    %c3_29 = arith.constant 3 : index
    %c0_30 = arith.constant 0 : index
    %35 = vector.load %arg2[%c0_28, %c3_29, %c0_30] : memref<5x5x64xf32, #tpu.memory_space<vmem>>, vector<1x1x64xf32>
    %36 = vector.shape_cast %35 : vector<1x1x64xf32> to vector<64xf32>
    %37 = vector.shape_cast %36 : vector<64xf32> to vector<1x64xf32>
    %38 = vector.broadcast %34 : vector<256x1xf32> to vector<256x64xf32>
    %39 = vector.broadcast %37 : vector<1x64xf32> to vector<256x64xf32>
    %40 = arith.mulf %38, %39 : vector<256x64xf32>
    %41 = arith.addf %32, %40 : vector<256x64xf32>
    %c0_31 = arith.constant 0 : index
    %c4 = arith.constant 4 : index
    %c0_32 = arith.constant 0 : index
    %42 = vector.load %arg11[%c0_31, %c4, %c0_32] : memref<20x20x1xf32, #tpu.memory_space<vmem>>, vector<16x16x1xf32>
    %43 = vector.shape_cast %42 : vector<16x16x1xf32> to vector<256x1xf32>
    %c0_33 = arith.constant 0 : index
    %c4_34 = arith.constant 4 : index
    %c0_35 = arith.constant 0 : index
    %44 = vector.load %arg2[%c0_33, %c4_34, %c0_35] : memref<5x5x64xf32, #tpu.memory_space<vmem>>, vector<1x1x64xf32>
    %45 = vector.shape_cast %44 : vector<1x1x64xf32> to vector<64xf32>
    %46 = vector.shape_cast %45 : vector<64xf32> to vector<1x64xf32>
    %47 = vector.broadcast %43 : vector<256x1xf32> to vector<256x64xf32>
    %48 = vector.broadcast %46 : vector<1x64xf32> to vector<256x64xf32>
    %49 = arith.mulf %47, %48 : vector<256x64xf32>
    %50 = arith.addf %41, %49 : vector<256x64xf32>
    %c1_36 = arith.constant 1 : index
    %c0_37 = arith.constant 0 : index
    %c0_38 = arith.constant 0 : index
    %51 = vector.load %arg11[%c1_36, %c0_37, %c0_38] : memref<20x20x1xf32, #tpu.memory_space<vmem>>, vector<16x16x1xf32>
    %52 = vector.shape_cast %51 : vector<16x16x1xf32> to vector<256x1xf32>
    %c1_39 = arith.constant 1 : index
    %c0_40 = arith.constant 0 : index
    %c0_41 = arith.constant 0 : index
    %53 = vector.load %arg2[%c1_39, %c0_40, %c0_41] : memref<5x5x64xf32, #tpu.memory_space<vmem>>, vector<1x1x64xf32>
    %54 = vector.shape_cast %53 : vector<1x1x64xf32> to vector<64xf32>
    %55 = vector.shape_cast %54 : vector<64xf32> to vector<1x64xf32>
    %56 = vector.broadcast %52 : vector<256x1xf32> to vector<256x64xf32>
    %57 = vector.broadcast %55 : vector<1x64xf32> to vector<256x64xf32>
    %58 = arith.mulf %56, %57 : vector<256x64xf32>
    %59 = arith.addf %50, %58 : vector<256x64xf32>
    %c1_42 = arith.constant 1 : index
    %c1_43 = arith.constant 1 : index
    %c0_44 = arith.constant 0 : index
    %60 = vector.load %arg11[%c1_42, %c1_43, %c0_44] : memref<20x20x1xf32, #tpu.memory_space<vmem>>, vector<16x16x1xf32>
    %61 = vector.shape_cast %60 : vector<16x16x1xf32> to vector<256x1xf32>
    %c1_45 = arith.constant 1 : index
    %c1_46 = arith.constant 1 : index
    %c0_47 = arith.constant 0 : index
    %62 = vector.load %arg2[%c1_45, %c1_46, %c0_47] : memref<5x5x64xf32, #tpu.memory_space<vmem>>, vector<1x1x64xf32>
    %63 = vector.shape_cast %62 : vector<1x1x64xf32> to vector<64xf32>
    %64 = vector.shape_cast %63 : vector<64xf32> to vector<1x64xf32>
    %65 = vector.broadcast %61 : vector<256x1xf32> to vector<256x64xf32>
    %66 = vector.broadcast %64 : vector<1x64xf32> to vector<256x64xf32>
    %67 = arith.mulf %65, %66 : vector<256x64xf32>
    %68 = arith.addf %59, %67 : vector<256x64xf32>
    %c1_48 = arith.constant 1 : index
    %c2_49 = arith.constant 2 : index
    %c0_50 = arith.constant 0 : index
    %69 = vector.load %arg11[%c1_48, %c2_49, %c0_50] : memref<20x20x1xf32, #tpu.memory_space<vmem>>, vector<16x16x1xf32>
    %70 = vector.shape_cast %69 : vector<16x16x1xf32> to vector<256x1xf32>
    %c1_51 = arith.constant 1 : index
    %c2_52 = arith.constant 2 : index
    %c0_53 = arith.constant 0 : index
    %71 = vector.load %arg2[%c1_51, %c2_52, %c0_53] : memref<5x5x64xf32, #tpu.memory_space<vmem>>, vector<1x1x64xf32>
    %72 = vector.shape_cast %71 : vector<1x1x64xf32> to vector<64xf32>
    %73 = vector.shape_cast %72 : vector<64xf32> to vector<1x64xf32>
    %74 = vector.broadcast %70 : vector<256x1xf32> to vector<256x64xf32>
    %75 = vector.broadcast %73 : vector<1x64xf32> to vector<256x64xf32>
    %76 = arith.mulf %74, %75 : vector<256x64xf32>
    %77 = arith.addf %68, %76 : vector<256x64xf32>
    %c1_54 = arith.constant 1 : index
    %c3_55 = arith.constant 3 : index
    %c0_56 = arith.constant 0 : index
    %78 = vector.load %arg11[%c1_54, %c3_55, %c0_56] : memref<20x20x1xf32, #tpu.memory_space<vmem>>, vector<16x16x1xf32>
    %79 = vector.shape_cast %78 : vector<16x16x1xf32> to vector<256x1xf32>
    %c1_57 = arith.constant 1 : index
    %c3_58 = arith.constant 3 : index
    %c0_59 = arith.constant 0 : index
    %80 = vector.load %arg2[%c1_57, %c3_58, %c0_59] : memref<5x5x64xf32, #tpu.memory_space<vmem>>, vector<1x1x64xf32>
    %81 = vector.shape_cast %80 : vector<1x1x64xf32> to vector<64xf32>
    %82 = vector.shape_cast %81 : vector<64xf32> to vector<1x64xf32>
    %83 = vector.broadcast %79 : vector<256x1xf32> to vector<256x64xf32>
    %84 = vector.broadcast %82 : vector<1x64xf32> to vector<256x64xf32>
    %85 = arith.mulf %83, %84 : vector<256x64xf32>
    %86 = arith.addf %77, %85 : vector<256x64xf32>
    %c1_60 = arith.constant 1 : index
    %c4_61 = arith.constant 4 : index
    %c0_62 = arith.constant 0 : index
    %87 = vector.load %arg11[%c1_60, %c4_61, %c0_62] : memref<20x20x1xf32, #tpu.memory_space<vmem>>, vector<16x16x1xf32>
    %88 = vector.shape_cast %87 : vector<16x16x1xf32> to vector<256x1xf32>
    %c1_63 = arith.constant 1 : index
    %c4_64 = arith.constant 4 : index
    %c0_65 = arith.constant 0 : index
    %89 = vector.load %arg2[%c1_63, %c4_64, %c0_65] : memref<5x5x64xf32, #tpu.memory_space<vmem>>, vector<1x1x64xf32>
    %90 = vector.shape_cast %89 : vector<1x1x64xf32> to vector<64xf32>
    %91 = vector.shape_cast %90 : vector<64xf32> to vector<1x64xf32>
    %92 = vector.broadcast %88 : vector<256x1xf32> to vector<256x64xf32>
    %93 = vector.broadcast %91 : vector<1x64xf32> to vector<256x64xf32>
    %94 = arith.mulf %92, %93 : vector<256x64xf32>
    %95 = arith.addf %86, %94 : vector<256x64xf32>
    %c2_66 = arith.constant 2 : index
    %c0_67 = arith.constant 0 : index
    %c0_68 = arith.constant 0 : index
    %96 = vector.load %arg11[%c2_66, %c0_67, %c0_68] : memref<20x20x1xf32, #tpu.memory_space<vmem>>, vector<16x16x1xf32>
    %97 = vector.shape_cast %96 : vector<16x16x1xf32> to vector<256x1xf32>
    %c2_69 = arith.constant 2 : index
    %c0_70 = arith.constant 0 : index
    %c0_71 = arith.constant 0 : index
    %98 = vector.load %arg2[%c2_69, %c0_70, %c0_71] : memref<5x5x64xf32, #tpu.memory_space<vmem>>, vector<1x1x64xf32>
    %99 = vector.shape_cast %98 : vector<1x1x64xf32> to vector<64xf32>
    %100 = vector.shape_cast %99 : vector<64xf32> to vector<1x64xf32>
    %101 = vector.broadcast %97 : vector<256x1xf32> to vector<256x64xf32>
    %102 = vector.broadcast %100 : vector<1x64xf32> to vector<256x64xf32>
    %103 = arith.mulf %101, %102 : vector<256x64xf32>
    %104 = arith.addf %95, %103 : vector<256x64xf32>
    %c2_72 = arith.constant 2 : index
    %c1_73 = arith.constant 1 : index
    %c0_74 = arith.constant 0 : index
    %105 = vector.load %arg11[%c2_72, %c1_73, %c0_74] : memref<20x20x1xf32, #tpu.memory_space<vmem>>, vector<16x16x1xf32>
    %106 = vector.shape_cast %105 : vector<16x16x1xf32> to vector<256x1xf32>
    %c2_75 = arith.constant 2 : index
    %c1_76 = arith.constant 1 : index
    %c0_77 = arith.constant 0 : index
    %107 = vector.load %arg2[%c2_75, %c1_76, %c0_77] : memref<5x5x64xf32, #tpu.memory_space<vmem>>, vector<1x1x64xf32>
    %108 = vector.shape_cast %107 : vector<1x1x64xf32> to vector<64xf32>
    %109 = vector.shape_cast %108 : vector<64xf32> to vector<1x64xf32>
    %110 = vector.broadcast %106 : vector<256x1xf32> to vector<256x64xf32>
    %111 = vector.broadcast %109 : vector<1x64xf32> to vector<256x64xf32>
    %112 = arith.mulf %110, %111 : vector<256x64xf32>
    %113 = arith.addf %104, %112 : vector<256x64xf32>
    %c2_78 = arith.constant 2 : index
    %c2_79 = arith.constant 2 : index
    %c0_80 = arith.constant 0 : index
    %114 = vector.load %arg11[%c2_78, %c2_79, %c0_80] : memref<20x20x1xf32, #tpu.memory_space<vmem>>, vector<16x16x1xf32>
    %115 = vector.shape_cast %114 : vector<16x16x1xf32> to vector<256x1xf32>
    %c2_81 = arith.constant 2 : index
    %c2_82 = arith.constant 2 : index
    %c0_83 = arith.constant 0 : index
    %116 = vector.load %arg2[%c2_81, %c2_82, %c0_83] : memref<5x5x64xf32, #tpu.memory_space<vmem>>, vector<1x1x64xf32>
    %117 = vector.shape_cast %116 : vector<1x1x64xf32> to vector<64xf32>
    %118 = vector.shape_cast %117 : vector<64xf32> to vector<1x64xf32>
    %119 = vector.broadcast %115 : vector<256x1xf32> to vector<256x64xf32>
    %120 = vector.broadcast %118 : vector<1x64xf32> to vector<256x64xf32>
    %121 = arith.mulf %119, %120 : vector<256x64xf32>
    %122 = arith.addf %113, %121 : vector<256x64xf32>
    %c2_84 = arith.constant 2 : index
    %c3_85 = arith.constant 3 : index
    %c0_86 = arith.constant 0 : index
    %123 = vector.load %arg11[%c2_84, %c3_85, %c0_86] : memref<20x20x1xf32, #tpu.memory_space<vmem>>, vector<16x16x1xf32>
    %124 = vector.shape_cast %123 : vector<16x16x1xf32> to vector<256x1xf32>
    %c2_87 = arith.constant 2 : index
    %c3_88 = arith.constant 3 : index
    %c0_89 = arith.constant 0 : index
    %125 = vector.load %arg2[%c2_87, %c3_88, %c0_89] : memref<5x5x64xf32, #tpu.memory_space<vmem>>, vector<1x1x64xf32>
    %126 = vector.shape_cast %125 : vector<1x1x64xf32> to vector<64xf32>
    %127 = vector.shape_cast %126 : vector<64xf32> to vector<1x64xf32>
    %128 = vector.broadcast %124 : vector<256x1xf32> to vector<256x64xf32>
    %129 = vector.broadcast %127 : vector<1x64xf32> to vector<256x64xf32>
    %130 = arith.mulf %128, %129 : vector<256x64xf32>
    %131 = arith.addf %122, %130 : vector<256x64xf32>
    %c2_90 = arith.constant 2 : index
    %c4_91 = arith.constant 4 : index
    %c0_92 = arith.constant 0 : index
    %132 = vector.load %arg11[%c2_90, %c4_91, %c0_92] : memref<20x20x1xf32, #tpu.memory_space<vmem>>, vector<16x16x1xf32>
    %133 = vector.shape_cast %132 : vector<16x16x1xf32> to vector<256x1xf32>
    %c2_93 = arith.constant 2 : index
    %c4_94 = arith.constant 4 : index
    %c0_95 = arith.constant 0 : index
    %134 = vector.load %arg2[%c2_93, %c4_94, %c0_95] : memref<5x5x64xf32, #tpu.memory_space<vmem>>, vector<1x1x64xf32>
    %135 = vector.shape_cast %134 : vector<1x1x64xf32> to vector<64xf32>
    %136 = vector.shape_cast %135 : vector<64xf32> to vector<1x64xf32>
    %137 = vector.broadcast %133 : vector<256x1xf32> to vector<256x64xf32>
    %138 = vector.broadcast %136 : vector<1x64xf32> to vector<256x64xf32>
    %139 = arith.mulf %137, %138 : vector<256x64xf32>
    %140 = arith.addf %131, %139 : vector<256x64xf32>
    %c3_96 = arith.constant 3 : index
    %c0_97 = arith.constant 0 : index
    %c0_98 = arith.constant 0 : index
    %141 = vector.load %arg11[%c3_96, %c0_97, %c0_98] : memref<20x20x1xf32, #tpu.memory_space<vmem>>, vector<16x16x1xf32>
    %142 = vector.shape_cast %141 : vector<16x16x1xf32> to vector<256x1xf32>
    %c3_99 = arith.constant 3 : index
    %c0_100 = arith.constant 0 : index
    %c0_101 = arith.constant 0 : index
    %143 = vector.load %arg2[%c3_99, %c0_100, %c0_101] : memref<5x5x64xf32, #tpu.memory_space<vmem>>, vector<1x1x64xf32>
    %144 = vector.shape_cast %143 : vector<1x1x64xf32> to vector<64xf32>
    %145 = vector.shape_cast %144 : vector<64xf32> to vector<1x64xf32>
    %146 = vector.broadcast %142 : vector<256x1xf32> to vector<256x64xf32>
    %147 = vector.broadcast %145 : vector<1x64xf32> to vector<256x64xf32>
    %148 = arith.mulf %146, %147 : vector<256x64xf32>
    %149 = arith.addf %140, %148 : vector<256x64xf32>
    %c3_102 = arith.constant 3 : index
    %c1_103 = arith.constant 1 : index
    %c0_104 = arith.constant 0 : index
    %150 = vector.load %arg11[%c3_102, %c1_103, %c0_104] : memref<20x20x1xf32, #tpu.memory_space<vmem>>, vector<16x16x1xf32>
    %151 = vector.shape_cast %150 : vector<16x16x1xf32> to vector<256x1xf32>
    %c3_105 = arith.constant 3 : index
    %c1_106 = arith.constant 1 : index
    %c0_107 = arith.constant 0 : index
    %152 = vector.load %arg2[%c3_105, %c1_106, %c0_107] : memref<5x5x64xf32, #tpu.memory_space<vmem>>, vector<1x1x64xf32>
    %153 = vector.shape_cast %152 : vector<1x1x64xf32> to vector<64xf32>
    %154 = vector.shape_cast %153 : vector<64xf32> to vector<1x64xf32>
    %155 = vector.broadcast %151 : vector<256x1xf32> to vector<256x64xf32>
    %156 = vector.broadcast %154 : vector<1x64xf32> to vector<256x64xf32>
    %157 = arith.mulf %155, %156 : vector<256x64xf32>
    %158 = arith.addf %149, %157 : vector<256x64xf32>
    %c3_108 = arith.constant 3 : index
    %c2_109 = arith.constant 2 : index
    %c0_110 = arith.constant 0 : index
    %159 = vector.load %arg11[%c3_108, %c2_109, %c0_110] : memref<20x20x1xf32, #tpu.memory_space<vmem>>, vector<16x16x1xf32>
    %160 = vector.shape_cast %159 : vector<16x16x1xf32> to vector<256x1xf32>
    %c3_111 = arith.constant 3 : index
    %c2_112 = arith.constant 2 : index
    %c0_113 = arith.constant 0 : index
    %161 = vector.load %arg2[%c3_111, %c2_112, %c0_113] : memref<5x5x64xf32, #tpu.memory_space<vmem>>, vector<1x1x64xf32>
    %162 = vector.shape_cast %161 : vector<1x1x64xf32> to vector<64xf32>
    %163 = vector.shape_cast %162 : vector<64xf32> to vector<1x64xf32>
    %164 = vector.broadcast %160 : vector<256x1xf32> to vector<256x64xf32>
    %165 = vector.broadcast %163 : vector<1x64xf32> to vector<256x64xf32>
    %166 = arith.mulf %164, %165 : vector<256x64xf32>
    %167 = arith.addf %158, %166 : vector<256x64xf32>
    %c3_114 = arith.constant 3 : index
    %c3_115 = arith.constant 3 : index
    %c0_116 = arith.constant 0 : index
    %168 = vector.load %arg11[%c3_114, %c3_115, %c0_116] : memref<20x20x1xf32, #tpu.memory_space<vmem>>, vector<16x16x1xf32>
    %169 = vector.shape_cast %168 : vector<16x16x1xf32> to vector<256x1xf32>
    %c3_117 = arith.constant 3 : index
    %c3_118 = arith.constant 3 : index
    %c0_119 = arith.constant 0 : index
    %170 = vector.load %arg2[%c3_117, %c3_118, %c0_119] : memref<5x5x64xf32, #tpu.memory_space<vmem>>, vector<1x1x64xf32>
    %171 = vector.shape_cast %170 : vector<1x1x64xf32> to vector<64xf32>
    %172 = vector.shape_cast %171 : vector<64xf32> to vector<1x64xf32>
    %173 = vector.broadcast %169 : vector<256x1xf32> to vector<256x64xf32>
    %174 = vector.broadcast %172 : vector<1x64xf32> to vector<256x64xf32>
    %175 = arith.mulf %173, %174 : vector<256x64xf32>
    %176 = arith.addf %167, %175 : vector<256x64xf32>
    %c3_120 = arith.constant 3 : index
    %c4_121 = arith.constant 4 : index
    %c0_122 = arith.constant 0 : index
    %177 = vector.load %arg11[%c3_120, %c4_121, %c0_122] : memref<20x20x1xf32, #tpu.memory_space<vmem>>, vector<16x16x1xf32>
    %178 = vector.shape_cast %177 : vector<16x16x1xf32> to vector<256x1xf32>
    %c3_123 = arith.constant 3 : index
    %c4_124 = arith.constant 4 : index
    %c0_125 = arith.constant 0 : index
    %179 = vector.load %arg2[%c3_123, %c4_124, %c0_125] : memref<5x5x64xf32, #tpu.memory_space<vmem>>, vector<1x1x64xf32>
    %180 = vector.shape_cast %179 : vector<1x1x64xf32> to vector<64xf32>
    %181 = vector.shape_cast %180 : vector<64xf32> to vector<1x64xf32>
    %182 = vector.broadcast %178 : vector<256x1xf32> to vector<256x64xf32>
    %183 = vector.broadcast %181 : vector<1x64xf32> to vector<256x64xf32>
    %184 = arith.mulf %182, %183 : vector<256x64xf32>
    %185 = arith.addf %176, %184 : vector<256x64xf32>
    %c4_126 = arith.constant 4 : index
    %c0_127 = arith.constant 0 : index
    %c0_128 = arith.constant 0 : index
    %186 = vector.load %arg11[%c4_126, %c0_127, %c0_128] : memref<20x20x1xf32, #tpu.memory_space<vmem>>, vector<16x16x1xf32>
    %187 = vector.shape_cast %186 : vector<16x16x1xf32> to vector<256x1xf32>
    %c4_129 = arith.constant 4 : index
    %c0_130 = arith.constant 0 : index
    %c0_131 = arith.constant 0 : index
    %188 = vector.load %arg2[%c4_129, %c0_130, %c0_131] : memref<5x5x64xf32, #tpu.memory_space<vmem>>, vector<1x1x64xf32>
    %189 = vector.shape_cast %188 : vector<1x1x64xf32> to vector<64xf32>
    %190 = vector.shape_cast %189 : vector<64xf32> to vector<1x64xf32>
    %191 = vector.broadcast %187 : vector<256x1xf32> to vector<256x64xf32>
    %192 = vector.broadcast %190 : vector<1x64xf32> to vector<256x64xf32>
    %193 = arith.mulf %191, %192 : vector<256x64xf32>
    %194 = arith.addf %185, %193 : vector<256x64xf32>
    %c4_132 = arith.constant 4 : index
    %c1_133 = arith.constant 1 : index
    %c0_134 = arith.constant 0 : index
    %195 = vector.load %arg11[%c4_132, %c1_133, %c0_134] : memref<20x20x1xf32, #tpu.memory_space<vmem>>, vector<16x16x1xf32>
    %196 = vector.shape_cast %195 : vector<16x16x1xf32> to vector<256x1xf32>
    %c4_135 = arith.constant 4 : index
    %c1_136 = arith.constant 1 : index
    %c0_137 = arith.constant 0 : index
    %197 = vector.load %arg2[%c4_135, %c1_136, %c0_137] : memref<5x5x64xf32, #tpu.memory_space<vmem>>, vector<1x1x64xf32>
    %198 = vector.shape_cast %197 : vector<1x1x64xf32> to vector<64xf32>
    %199 = vector.shape_cast %198 : vector<64xf32> to vector<1x64xf32>
    %200 = vector.broadcast %196 : vector<256x1xf32> to vector<256x64xf32>
    %201 = vector.broadcast %199 : vector<1x64xf32> to vector<256x64xf32>
    %202 = arith.mulf %200, %201 : vector<256x64xf32>
    %203 = arith.addf %194, %202 : vector<256x64xf32>
    %c4_138 = arith.constant 4 : index
    %c2_139 = arith.constant 2 : index
    %c0_140 = arith.constant 0 : index
    %204 = vector.load %arg11[%c4_138, %c2_139, %c0_140] : memref<20x20x1xf32, #tpu.memory_space<vmem>>, vector<16x16x1xf32>
    %205 = vector.shape_cast %204 : vector<16x16x1xf32> to vector<256x1xf32>
    %c4_141 = arith.constant 4 : index
    %c2_142 = arith.constant 2 : index
    %c0_143 = arith.constant 0 : index
    %206 = vector.load %arg2[%c4_141, %c2_142, %c0_143] : memref<5x5x64xf32, #tpu.memory_space<vmem>>, vector<1x1x64xf32>
    %207 = vector.shape_cast %206 : vector<1x1x64xf32> to vector<64xf32>
    %208 = vector.shape_cast %207 : vector<64xf32> to vector<1x64xf32>
    %209 = vector.broadcast %205 : vector<256x1xf32> to vector<256x64xf32>
    %210 = vector.broadcast %208 : vector<1x64xf32> to vector<256x64xf32>
    %211 = arith.mulf %209, %210 : vector<256x64xf32>
    %212 = arith.addf %203, %211 : vector<256x64xf32>
    %c4_144 = arith.constant 4 : index
    %c3_145 = arith.constant 3 : index
    %c0_146 = arith.constant 0 : index
    %213 = vector.load %arg11[%c4_144, %c3_145, %c0_146] : memref<20x20x1xf32, #tpu.memory_space<vmem>>, vector<16x16x1xf32>
    %214 = vector.shape_cast %213 : vector<16x16x1xf32> to vector<256x1xf32>
    %c4_147 = arith.constant 4 : index
    %c3_148 = arith.constant 3 : index
    %c0_149 = arith.constant 0 : index
    %215 = vector.load %arg2[%c4_147, %c3_148, %c0_149] : memref<5x5x64xf32, #tpu.memory_space<vmem>>, vector<1x1x64xf32>
    %216 = vector.shape_cast %215 : vector<1x1x64xf32> to vector<64xf32>
    %217 = vector.shape_cast %216 : vector<64xf32> to vector<1x64xf32>
    %218 = vector.broadcast %214 : vector<256x1xf32> to vector<256x64xf32>
    %219 = vector.broadcast %217 : vector<1x64xf32> to vector<256x64xf32>
    %220 = arith.mulf %218, %219 : vector<256x64xf32>
    %221 = arith.addf %212, %220 : vector<256x64xf32>
    %c4_150 = arith.constant 4 : index
    %c4_151 = arith.constant 4 : index
    %c0_152 = arith.constant 0 : index
    %222 = vector.load %arg11[%c4_150, %c4_151, %c0_152] : memref<20x20x1xf32, #tpu.memory_space<vmem>>, vector<16x16x1xf32>
    %223 = vector.shape_cast %222 : vector<16x16x1xf32> to vector<256x1xf32>
    %c4_153 = arith.constant 4 : index
    %c4_154 = arith.constant 4 : index
    %c0_155 = arith.constant 0 : index
    %224 = vector.load %arg2[%c4_153, %c4_154, %c0_155] : memref<5x5x64xf32, #tpu.memory_space<vmem>>, vector<1x1x64xf32>
    %225 = vector.shape_cast %224 : vector<1x1x64xf32> to vector<64xf32>
    %226 = vector.shape_cast %225 : vector<64xf32> to vector<1x64xf32>
    %227 = vector.broadcast %223 : vector<256x1xf32> to vector<256x64xf32>
    %228 = vector.broadcast %226 : vector<1x64xf32> to vector<256x64xf32>
    %229 = arith.mulf %227, %228 : vector<256x64xf32>
    %230 = arith.addf %221, %229 : vector<256x64xf32>
    %c0_156 = arith.constant 0 : index
    %c0_157 = arith.constant 0 : index
    %231 = vector.load %arg3[%c0_156, %c0_157] : memref<1x64xf32, #tpu.memory_space<vmem>>, vector<1x64xf32>
    %232 = vector.broadcast %231 : vector<1x64xf32> to vector<256x64xf32>
    %233 = arith.addf %230, %232 : vector<256x64xf32>
    %234 = vector.shape_cast %233 : vector<256x64xf32> to vector<16x16x64xf32>
    %c0_158 = arith.constant 0 : index
    %c0_159 = arith.constant 0 : index
    %c0_160 = arith.constant 0 : index
    %235 = vector.load %arg12[%c0_158, %c0_159, %c0_160] : memref<16x16x64xf32, #tpu.memory_space<vmem>>, vector<16x16x64xf32>
    tpu.vector_store %arg12[%c0_158, %c0_159, %c0_160], %234 {strides = array<i32>} : memref<16x16x64xf32, #tpu.memory_space<vmem>>, vector<16x16x64xf32>,
    %c0_161 = arith.constant 0 : index
    %c0_162 = arith.constant 0 : index
    %c0_163 = arith.constant 0 : index
    %236 = tpu.strided_load %arg12[%c0_161, %c0_162, %c0_163] {strides = array<i32: 1, 2, 1>} : memref<16x16x64xf32, #tpu.memory_space<vmem>>, vector<16x8x64xf32>
    %c0_164 = arith.constant 0 : index
    %c1_165 = arith.constant 1 : index
    %c0_166 = arith.constant 0 : index
    %237 = tpu.strided_load %arg12[%c0_164, %c1_165, %c0_166] {strides = array<i32: 1, 2, 1>} : memref<16x16x64xf32, #tpu.memory_space<vmem>>, vector<16x8x64xf32>
    %238 = arith.maximumf %236, %237 : vector<16x8x64xf32>
    %239 = vector.shape_cast %238 : vector<16x8x64xf32> to vector<8x2x8x64xf32>
    %240 = vector.extract_strided_slice %239 {offsets = [0, 0, 0, 0], sizes = [8, 1, 8, 64], strides = [1, 1, 1, 1]} : vector<8x2x8x64xf32> to vector<8x1x8x64xf32>
    %241 = vector.shape_cast %240 : vector<8x1x8x64xf32> to vector<8x8x64xf32>
    %242 = vector.extract_strided_slice %239 {offsets = [0, 1, 0, 0], sizes = [8, 1, 8, 64], strides = [1, 1, 1, 1]} : vector<8x2x8x64xf32> to vector<8x1x8x64xf32>
    %243 = vector.shape_cast %242 : vector<8x1x8x64xf32> to vector<8x8x64xf32>
    %244 = arith.maximumf %241, %243 : vector<8x8x64xf32>
    %cst_167 = arith.constant 0.000000e+00 : f32
    %245 = vector.broadcast %cst_167 : f32 to vector<8x8x64xf32>
    %246 = arith.maximumf %244, %245 : vector<8x8x64xf32>
    %cst_168 = arith.constant 0.000000e+00 : f32
    %247 = vector.broadcast %cst_168 : f32 to vector<10x10x64xf32>
    %c0_169 = arith.constant 0 : index
    %c0_170 = arith.constant 0 : index
    %c0_171 = arith.constant 0 : index
    %248 = vector.load %arg13[%c0_169, %c0_170, %c0_171] : memref<10x10x64xf32, #tpu.memory_space<vmem>>, vector<10x10x64xf32>
    tpu.vector_store %arg13[%c0_169, %c0_170, %c0_171], %247 {strides = array<i32>} : memref<10x10x64xf32, #tpu.memory_space<vmem>>, vector<10x10x64xf32>,
    %c1_172 = arith.constant 1 : index
    %c1_173 = arith.constant 1 : index
    %c0_174 = arith.constant 0 : index
    %249 = vector.load %arg13[%c1_172, %c1_173, %c0_174] : memref<10x10x64xf32, #tpu.memory_space<vmem>>, vector<8x8x64xf32>
    tpu.vector_store %arg13[%c1_172, %c1_173, %c0_174], %246 {strides = array<i32>} : memref<10x10x64xf32, #tpu.memory_space<vmem>>, vector<8x8x64xf32>,
    %cst_175 = arith.constant 0.000000e+00 : f32
    %250 = vector.broadcast %cst_175 : f32 to vector<64x32xf32>
    %c0_176 = arith.constant 0 : index
    %c0_177 = arith.constant 0 : index
    %c0_178 = arith.constant 0 : index
    %251 = vector.load %arg13[%c0_176, %c0_177, %c0_178] : memref<10x10x64xf32, #tpu.memory_space<vmem>>, vector<8x8x64xf32>
    %252 = vector.shape_cast %251 : vector<8x8x64xf32> to vector<64x64xf32>
    %c0_179 = arith.constant 0 : index
    %c0_180 = arith.constant 0 : index
    %c0_181 = arith.constant 0 : index
    %c0_182 = arith.constant 0 : index
    %253 = vector.load %arg4[%c0_179, %c0_180, %c0_181, %c0_182] : memref<3x3x64x32xf32, #tpu.memory_space<vmem>>, vector<1x1x64x32xf32>
    %254 = vector.shape_cast %253 : vector<1x1x64x32xf32> to vector<64x32xf32>
    %cst_183 = arith.constant dense<0.000000e+00> : vector<64x32xf32>
    %255 = tpu.matmul %252, %254, %cst_183 {dimension_numbers = #tpu.dot_dimension_numbers<[1], [0], [0], [1], [0, 0, 1, 1], [], []>} : vector<64x64xf32>, vector<64x32xf32>, vector<64x32xf32> -> vector<64x32xf32>
    %256 = arith.addf %250, %255 : vector<64x32xf32>
    %c0_184 = arith.constant 0 : index
    %c1_185 = arith.constant 1 : index
    %c0_186 = arith.constant 0 : index
    %257 = vector.load %arg13[%c0_184, %c1_185, %c0_186] : memref<10x10x64xf32, #tpu.memory_space<vmem>>, vector<8x8x64xf32>
    %258 = vector.shape_cast %257 : vector<8x8x64xf32> to vector<64x64xf32>
    %c0_187 = arith.constant 0 : index
    %c1_188 = arith.constant 1 : index
    %c0_189 = arith.constant 0 : index
    %c0_190 = arith.constant 0 : index
    %259 = vector.load %arg4[%c0_187, %c1_188, %c0_189, %c0_190] : memref<3x3x64x32xf32, #tpu.memory_space<vmem>>, vector<1x1x64x32xf32>
    %260 = vector.shape_cast %259 : vector<1x1x64x32xf32> to vector<64x32xf32>
    %cst_191 = arith.constant dense<0.000000e+00> : vector<64x32xf32>
    %261 = tpu.matmul %258, %260, %cst_191 {dimension_numbers = #tpu.dot_dimension_numbers<[1], [0], [0], [1], [0, 0, 1, 1], [], []>} : vector<64x64xf32>, vector<64x32xf32>, vector<64x32xf32> -> vector<64x32xf32>
    %262 = arith.addf %256, %261 : vector<64x32xf32>
    %c0_192 = arith.constant 0 : index
    %c2_193 = arith.constant 2 : index
    %c0_194 = arith.constant 0 : index
    %263 = vector.load %arg13[%c0_192, %c2_193, %c0_194] : memref<10x10x64xf32, #tpu.memory_space<vmem>>, vector<8x8x64xf32>
    %264 = vector.shape_cast %263 : vector<8x8x64xf32> to vector<64x64xf32>
    %c0_195 = arith.constant 0 : index
    %c2_196 = arith.constant 2 : index
    %c0_197 = arith.constant 0 : index
    %c0_198 = arith.constant 0 : index
    %265 = vector.load %arg4[%c0_195, %c2_196, %c0_197, %c0_198] : memref<3x3x64x32xf32, #tpu.memory_space<vmem>>, vector<1x1x64x32xf32>
    %266 = vector.shape_cast %265 : vector<1x1x64x32xf32> to vector<64x32xf32>
    %cst_199 = arith.constant dense<0.000000e+00> : vector<64x32xf32>
    %267 = tpu.matmul %264, %266, %cst_199 {dimension_numbers = #tpu.dot_dimension_numbers<[1], [0], [0], [1], [0, 0, 1, 1], [], []>} : vector<64x64xf32>, vector<64x32xf32>, vector<64x32xf32> -> vector<64x32xf32>
    %268 = arith.addf %262, %267 : vector<64x32xf32>
    %c1_200 = arith.constant 1 : index
    %c0_201 = arith.constant 0 : index
    %c0_202 = arith.constant 0 : index
    %269 = vector.load %arg13[%c1_200, %c0_201, %c0_202] : memref<10x10x64xf32, #tpu.memory_space<vmem>>, vector<8x8x64xf32>
    %270 = vector.shape_cast %269 : vector<8x8x64xf32> to vector<64x64xf32>
    %c1_203 = arith.constant 1 : index
    %c0_204 = arith.constant 0 : index
    %c0_205 = arith.constant 0 : index
    %c0_206 = arith.constant 0 : index
    %271 = vector.load %arg4[%c1_203, %c0_204, %c0_205, %c0_206] : memref<3x3x64x32xf32, #tpu.memory_space<vmem>>, vector<1x1x64x32xf32>
    %272 = vector.shape_cast %271 : vector<1x1x64x32xf32> to vector<64x32xf32>
    %cst_207 = arith.constant dense<0.000000e+00> : vector<64x32xf32>
    %273 = tpu.matmul %270, %272, %cst_207 {dimension_numbers = #tpu.dot_dimension_numbers<[1], [0], [0], [1], [0, 0, 1, 1], [], []>} : vector<64x64xf32>, vector<64x32xf32>, vector<64x32xf32> -> vector<64x32xf32>
    %274 = arith.addf %268, %273 : vector<64x32xf32>
    %c1_208 = arith.constant 1 : index
    %c1_209 = arith.constant 1 : index
    %c0_210 = arith.constant 0 : index
    %275 = vector.load %arg13[%c1_208, %c1_209, %c0_210] : memref<10x10x64xf32, #tpu.memory_space<vmem>>, vector<8x8x64xf32>
    %276 = vector.shape_cast %275 : vector<8x8x64xf32> to vector<64x64xf32>
    %c1_211 = arith.constant 1 : index
    %c1_212 = arith.constant 1 : index
    %c0_213 = arith.constant 0 : index
    %c0_214 = arith.constant 0 : index
    %277 = vector.load %arg4[%c1_211, %c1_212, %c0_213, %c0_214] : memref<3x3x64x32xf32, #tpu.memory_space<vmem>>, vector<1x1x64x32xf32>
    %278 = vector.shape_cast %277 : vector<1x1x64x32xf32> to vector<64x32xf32>
    %cst_215 = arith.constant dense<0.000000e+00> : vector<64x32xf32>
    %279 = tpu.matmul %276, %278, %cst_215 {dimension_numbers = #tpu.dot_dimension_numbers<[1], [0], [0], [1], [0, 0, 1, 1], [], []>} : vector<64x64xf32>, vector<64x32xf32>, vector<64x32xf32> -> vector<64x32xf32>
    %280 = arith.addf %274, %279 : vector<64x32xf32>
    %c1_216 = arith.constant 1 : index
    %c2_217 = arith.constant 2 : index
    %c0_218 = arith.constant 0 : index
    %281 = vector.load %arg13[%c1_216, %c2_217, %c0_218] : memref<10x10x64xf32, #tpu.memory_space<vmem>>, vector<8x8x64xf32>
    %282 = vector.shape_cast %281 : vector<8x8x64xf32> to vector<64x64xf32>
    %c1_219 = arith.constant 1 : index
    %c2_220 = arith.constant 2 : index
    %c0_221 = arith.constant 0 : index
    %c0_222 = arith.constant 0 : index
    %283 = vector.load %arg4[%c1_219, %c2_220, %c0_221, %c0_222] : memref<3x3x64x32xf32, #tpu.memory_space<vmem>>, vector<1x1x64x32xf32>
    %284 = vector.shape_cast %283 : vector<1x1x64x32xf32> to vector<64x32xf32>
    %cst_223 = arith.constant dense<0.000000e+00> : vector<64x32xf32>
    %285 = tpu.matmul %282, %284, %cst_223 {dimension_numbers = #tpu.dot_dimension_numbers<[1], [0], [0], [1], [0, 0, 1, 1], [], []>} : vector<64x64xf32>, vector<64x32xf32>, vector<64x32xf32> -> vector<64x32xf32>
    %286 = arith.addf %280, %285 : vector<64x32xf32>
    %c2_224 = arith.constant 2 : index
    %c0_225 = arith.constant 0 : index
    %c0_226 = arith.constant 0 : index
    %287 = vector.load %arg13[%c2_224, %c0_225, %c0_226] : memref<10x10x64xf32, #tpu.memory_space<vmem>>, vector<8x8x64xf32>
    %288 = vector.shape_cast %287 : vector<8x8x64xf32> to vector<64x64xf32>
    %c2_227 = arith.constant 2 : index
    %c0_228 = arith.constant 0 : index
    %c0_229 = arith.constant 0 : index
    %c0_230 = arith.constant 0 : index
    %289 = vector.load %arg4[%c2_227, %c0_228, %c0_229, %c0_230] : memref<3x3x64x32xf32, #tpu.memory_space<vmem>>, vector<1x1x64x32xf32>
    %290 = vector.shape_cast %289 : vector<1x1x64x32xf32> to vector<64x32xf32>
    %cst_231 = arith.constant dense<0.000000e+00> : vector<64x32xf32>
    %291 = tpu.matmul %288, %290, %cst_231 {dimension_numbers = #tpu.dot_dimension_numbers<[1], [0], [0], [1], [0, 0, 1, 1], [], []>} : vector<64x64xf32>, vector<64x32xf32>, vector<64x32xf32> -> vector<64x32xf32>
    %292 = arith.addf %286, %291 : vector<64x32xf32>
    %c2_232 = arith.constant 2 : index
    %c1_233 = arith.constant 1 : index
    %c0_234 = arith.constant 0 : index
    %293 = vector.load %arg13[%c2_232, %c1_233, %c0_234] : memref<10x10x64xf32, #tpu.memory_space<vmem>>, vector<8x8x64xf32>
    %294 = vector.shape_cast %293 : vector<8x8x64xf32> to vector<64x64xf32>
    %c2_235 = arith.constant 2 : index
    %c1_236 = arith.constant 1 : index
    %c0_237 = arith.constant 0 : index
    %c0_238 = arith.constant 0 : index
    %295 = vector.load %arg4[%c2_235, %c1_236, %c0_237, %c0_238] : memref<3x3x64x32xf32, #tpu.memory_space<vmem>>, vector<1x1x64x32xf32>
    %296 = vector.shape_cast %295 : vector<1x1x64x32xf32> to vector<64x32xf32>
    %cst_239 = arith.constant dense<0.000000e+00> : vector<64x32xf32>
    %297 = tpu.matmul %294, %296, %cst_239 {dimension_numbers = #tpu.dot_dimension_numbers<[1], [0], [0], [1], [0, 0, 1, 1], [], []>} : vector<64x64xf32>, vector<64x32xf32>, vector<64x32xf32> -> vector<64x32xf32>
    %298 = arith.addf %292, %297 : vector<64x32xf32>
    %c2_240 = arith.constant 2 : index
    %c2_241 = arith.constant 2 : index
    %c0_242 = arith.constant 0 : index
    %299 = vector.load %arg13[%c2_240, %c2_241, %c0_242] : memref<10x10x64xf32, #tpu.memory_space<vmem>>, vector<8x8x64xf32>
    %300 = vector.shape_cast %299 : vector<8x8x64xf32> to vector<64x64xf32>
    %c2_243 = arith.constant 2 : index
    %c2_244 = arith.constant 2 : index
    %c0_245 = arith.constant 0 : index
    %c0_246 = arith.constant 0 : index
    %301 = vector.load %arg4[%c2_243, %c2_244, %c0_245, %c0_246] : memref<3x3x64x32xf32, #tpu.memory_space<vmem>>, vector<1x1x64x32xf32>
    %302 = vector.shape_cast %301 : vector<1x1x64x32xf32> to vector<64x32xf32>
    %cst_247 = arith.constant dense<0.000000e+00> : vector<64x32xf32>
    %303 = tpu.matmul %300, %302, %cst_247 {dimension_numbers = #tpu.dot_dimension_numbers<[1], [0], [0], [1], [0, 0, 1, 1], [], []>} : vector<64x64xf32>, vector<64x32xf32>, vector<64x32xf32> -> vector<64x32xf32>
    %304 = arith.addf %298, %303 : vector<64x32xf32>
    %c0_248 = arith.constant 0 : index
    %c0_249 = arith.constant 0 : index
    %305 = vector.load %arg5[%c0_248, %c0_249] : memref<1x32xf32, #tpu.memory_space<vmem>>, vector<1x32xf32>
    %306 = vector.broadcast %305 : vector<1x32xf32> to vector<64x32xf32>
    %307 = arith.addf %304, %306 : vector<64x32xf32>
    %308 = vector.shape_cast %307 : vector<64x32xf32> to vector<8x8x32xf32>
    %c0_250 = arith.constant 0 : index
    %c0_251 = arith.constant 0 : index
    %c0_252 = arith.constant 0 : index
    %309 = vector.load %arg14[%c0_250, %c0_251, %c0_252] : memref<8x8x32xf32, #tpu.memory_space<vmem>>, vector<8x8x32xf32>
    tpu.vector_store %arg14[%c0_250, %c0_251, %c0_252], %308 {strides = array<i32>} : memref<8x8x32xf32, #tpu.memory_space<vmem>>, vector<8x8x32xf32>,
    %c0_253 = arith.constant 0 : index
    %c0_254 = arith.constant 0 : index
    %c0_255 = arith.constant 0 : index
    %310 = tpu.strided_load %arg14[%c0_253, %c0_254, %c0_255] {strides = array<i32: 1, 2, 1>} : memref<8x8x32xf32, #tpu.memory_space<vmem>>, vector<8x4x32xf32>
    %c0_256 = arith.constant 0 : index
    %c1_257 = arith.constant 1 : index
    %c0_258 = arith.constant 0 : index
    %311 = tpu.strided_load %arg14[%c0_256, %c1_257, %c0_258] {strides = array<i32: 1, 2, 1>} : memref<8x8x32xf32, #tpu.memory_space<vmem>>, vector<8x4x32xf32>
    %312 = arith.maximumf %310, %311 : vector<8x4x32xf32>
    %313 = vector.shape_cast %312 : vector<8x4x32xf32> to vector<4x2x4x32xf32>
    %314 = vector.extract_strided_slice %313 {offsets = [0, 0, 0, 0], sizes = [4, 1, 4, 32], strides = [1, 1, 1, 1]} : vector<4x2x4x32xf32> to vector<4x1x4x32xf32>
    %315 = vector.shape_cast %314 : vector<4x1x4x32xf32> to vector<4x4x32xf32>
    %316 = vector.extract_strided_slice %313 {offsets = [0, 1, 0, 0], sizes = [4, 1, 4, 32], strides = [1, 1, 1, 1]} : vector<4x2x4x32xf32> to vector<4x1x4x32xf32>
    %317 = vector.shape_cast %316 : vector<4x1x4x32xf32> to vector<4x4x32xf32>
    %318 = arith.maximumf %315, %317 : vector<4x4x32xf32>
    %cst_259 = arith.constant 0.000000e+00 : f32
    %319 = vector.broadcast %cst_259 : f32 to vector<4x4x32xf32>
    %320 = arith.maximumf %318, %319 : vector<4x4x32xf32>
    %cst_260 = arith.constant 0.000000e+00 : f32
    %321 = vector.broadcast %cst_260 : f32 to vector<6x6x32xf32>
    %c0_261 = arith.constant 0 : index
    %c0_262 = arith.constant 0 : index
    %c0_263 = arith.constant 0 : index
    %322 = vector.load %arg15[%c0_261, %c0_262, %c0_263] : memref<6x6x32xf32, #tpu.memory_space<vmem>>, vector<6x6x32xf32>
    tpu.vector_store %arg15[%c0_261, %c0_262, %c0_263], %321 {strides = array<i32>} : memref<6x6x32xf32, #tpu.memory_space<vmem>>, vector<6x6x32xf32>,
    %c1_264 = arith.constant 1 : index
    %c1_265 = arith.constant 1 : index
    %c0_266 = arith.constant 0 : index
    %323 = vector.load %arg15[%c1_264, %c1_265, %c0_266] : memref<6x6x32xf32, #tpu.memory_space<vmem>>, vector<4x4x32xf32>
    tpu.vector_store %arg15[%c1_264, %c1_265, %c0_266], %320 {strides = array<i32>} : memref<6x6x32xf32, #tpu.memory_space<vmem>>, vector<4x4x32xf32>,
    %cst_267 = arith.constant 0.000000e+00 : f32
    %324 = vector.broadcast %cst_267 : f32 to vector<16x32xf32>
    %c0_268 = arith.constant 0 : index
    %c0_269 = arith.constant 0 : index
    %c0_270 = arith.constant 0 : index
    %325 = vector.load %arg15[%c0_268, %c0_269, %c0_270] : memref<6x6x32xf32, #tpu.memory_space<vmem>>, vector<4x4x32xf32>
    %326 = vector.shape_cast %325 : vector<4x4x32xf32> to vector<16x32xf32>
    %c0_271 = arith.constant 0 : index
    %c0_272 = arith.constant 0 : index
    %c0_273 = arith.constant 0 : index
    %c0_274 = arith.constant 0 : index
    %327 = vector.load %arg6[%c0_271, %c0_272, %c0_273, %c0_274] : memref<3x3x32x32xf32, #tpu.memory_space<vmem>>, vector<1x1x32x32xf32>
    %328 = vector.shape_cast %327 : vector<1x1x32x32xf32> to vector<32x32xf32>
    %cst_275 = arith.constant dense<0.000000e+00> : vector<16x32xf32>
    %329 = tpu.matmul %326, %328, %cst_275 {dimension_numbers = #tpu.dot_dimension_numbers<[1], [0], [0], [1], [0, 0, 1, 1], [], []>} : vector<16x32xf32>, vector<32x32xf32>, vector<16x32xf32> -> vector<16x32xf32>
    %330 = arith.addf %324, %329 : vector<16x32xf32>
    %c0_276 = arith.constant 0 : index
    %c1_277 = arith.constant 1 : index
    %c0_278 = arith.constant 0 : index
    %331 = vector.load %arg15[%c0_276, %c1_277, %c0_278] : memref<6x6x32xf32, #tpu.memory_space<vmem>>, vector<4x4x32xf32>
    %332 = vector.shape_cast %331 : vector<4x4x32xf32> to vector<16x32xf32>
    %c0_279 = arith.constant 0 : index
    %c1_280 = arith.constant 1 : index
    %c0_281 = arith.constant 0 : index
    %c0_282 = arith.constant 0 : index
    %333 = vector.load %arg6[%c0_279, %c1_280, %c0_281, %c0_282] : memref<3x3x32x32xf32, #tpu.memory_space<vmem>>, vector<1x1x32x32xf32>
    %334 = vector.shape_cast %333 : vector<1x1x32x32xf32> to vector<32x32xf32>
    %cst_283 = arith.constant dense<0.000000e+00> : vector<16x32xf32>
    %335 = tpu.matmul %332, %334, %cst_283 {dimension_numbers = #tpu.dot_dimension_numbers<[1], [0], [0], [1], [0, 0, 1, 1], [], []>} : vector<16x32xf32>, vector<32x32xf32>, vector<16x32xf32> -> vector<16x32xf32>
    %336 = arith.addf %330, %335 : vector<16x32xf32>
    %c0_284 = arith.constant 0 : index
    %c2_285 = arith.constant 2 : index
    %c0_286 = arith.constant 0 : index
    %337 = vector.load %arg15[%c0_284, %c2_285, %c0_286] : memref<6x6x32xf32, #tpu.memory_space<vmem>>, vector<4x4x32xf32>
    %338 = vector.shape_cast %337 : vector<4x4x32xf32> to vector<16x32xf32>
    %c0_287 = arith.constant 0 : index
    %c2_288 = arith.constant 2 : index
    %c0_289 = arith.constant 0 : index
    %c0_290 = arith.constant 0 : index
    %339 = vector.load %arg6[%c0_287, %c2_288, %c0_289, %c0_290] : memref<3x3x32x32xf32, #tpu.memory_space<vmem>>, vector<1x1x32x32xf32>
    %340 = vector.shape_cast %339 : vector<1x1x32x32xf32> to vector<32x32xf32>
    %cst_291 = arith.constant dense<0.000000e+00> : vector<16x32xf32>
    %341 = tpu.matmul %338, %340, %cst_291 {dimension_numbers = #tpu.dot_dimension_numbers<[1], [0], [0], [1], [0, 0, 1, 1], [], []>} : vector<16x32xf32>, vector<32x32xf32>, vector<16x32xf32> -> vector<16x32xf32>
    %342 = arith.addf %336, %341 : vector<16x32xf32>
    %c1_292 = arith.constant 1 : index
    %c0_293 = arith.constant 0 : index
    %c0_294 = arith.constant 0 : index
    %343 = vector.load %arg15[%c1_292, %c0_293, %c0_294] : memref<6x6x32xf32, #tpu.memory_space<vmem>>, vector<4x4x32xf32>
    %344 = vector.shape_cast %343 : vector<4x4x32xf32> to vector<16x32xf32>
    %c1_295 = arith.constant 1 : index
    %c0_296 = arith.constant 0 : index
    %c0_297 = arith.constant 0 : index
    %c0_298 = arith.constant 0 : index
    %345 = vector.load %arg6[%c1_295, %c0_296, %c0_297, %c0_298] : memref<3x3x32x32xf32, #tpu.memory_space<vmem>>, vector<1x1x32x32xf32>
    %346 = vector.shape_cast %345 : vector<1x1x32x32xf32> to vector<32x32xf32>
    %cst_299 = arith.constant dense<0.000000e+00> : vector<16x32xf32>
    %347 = tpu.matmul %344, %346, %cst_299 {dimension_numbers = #tpu.dot_dimension_numbers<[1], [0], [0], [1], [0, 0, 1, 1], [], []>} : vector<16x32xf32>, vector<32x32xf32>, vector<16x32xf32> -> vector<16x32xf32>
    %348 = arith.addf %342, %347 : vector<16x32xf32>
    %c1_300 = arith.constant 1 : index
    %c1_301 = arith.constant 1 : index
    %c0_302 = arith.constant 0 : index
    %349 = vector.load %arg15[%c1_300, %c1_301, %c0_302] : memref<6x6x32xf32, #tpu.memory_space<vmem>>, vector<4x4x32xf32>
    %350 = vector.shape_cast %349 : vector<4x4x32xf32> to vector<16x32xf32>
    %c1_303 = arith.constant 1 : index
    %c1_304 = arith.constant 1 : index
    %c0_305 = arith.constant 0 : index
    %c0_306 = arith.constant 0 : index
    %351 = vector.load %arg6[%c1_303, %c1_304, %c0_305, %c0_306] : memref<3x3x32x32xf32, #tpu.memory_space<vmem>>, vector<1x1x32x32xf32>
    %352 = vector.shape_cast %351 : vector<1x1x32x32xf32> to vector<32x32xf32>
    %cst_307 = arith.constant dense<0.000000e+00> : vector<16x32xf32>
    %353 = tpu.matmul %350, %352, %cst_307 {dimension_numbers = #tpu.dot_dimension_numbers<[1], [0], [0], [1], [0, 0, 1, 1], [], []>} : vector<16x32xf32>, vector<32x32xf32>, vector<16x32xf32> -> vector<16x32xf32>
    %354 = arith.addf %348, %353 : vector<16x32xf32>
    %c1_308 = arith.constant 1 : index
    %c2_309 = arith.constant 2 : index
    %c0_310 = arith.constant 0 : index
    %355 = vector.load %arg15[%c1_308, %c2_309, %c0_310] : memref<6x6x32xf32, #tpu.memory_space<vmem>>, vector<4x4x32xf32>
    %356 = vector.shape_cast %355 : vector<4x4x32xf32> to vector<16x32xf32>
    %c1_311 = arith.constant 1 : index
    %c2_312 = arith.constant 2 : index
    %c0_313 = arith.constant 0 : index
    %c0_314 = arith.constant 0 : index
    %357 = vector.load %arg6[%c1_311, %c2_312, %c0_313, %c0_314] : memref<3x3x32x32xf32, #tpu.memory_space<vmem>>, vector<1x1x32x32xf32>
    %358 = vector.shape_cast %357 : vector<1x1x32x32xf32> to vector<32x32xf32>
    %cst_315 = arith.constant dense<0.000000e+00> : vector<16x32xf32>
    %359 = tpu.matmul %356, %358, %cst_315 {dimension_numbers = #tpu.dot_dimension_numbers<[1], [0], [0], [1], [0, 0, 1, 1], [], []>} : vector<16x32xf32>, vector<32x32xf32>, vector<16x32xf32> -> vector<16x32xf32>
    %360 = arith.addf %354, %359 : vector<16x32xf32>
    %c2_316 = arith.constant 2 : index
    %c0_317 = arith.constant 0 : index
    %c0_318 = arith.constant 0 : index
    %361 = vector.load %arg15[%c2_316, %c0_317, %c0_318] : memref<6x6x32xf32, #tpu.memory_space<vmem>>, vector<4x4x32xf32>
    %362 = vector.shape_cast %361 : vector<4x4x32xf32> to vector<16x32xf32>
    %c2_319 = arith.constant 2 : index
    %c0_320 = arith.constant 0 : index
    %c0_321 = arith.constant 0 : index
    %c0_322 = arith.constant 0 : index
    %363 = vector.load %arg6[%c2_319, %c0_320, %c0_321, %c0_322] : memref<3x3x32x32xf32, #tpu.memory_space<vmem>>, vector<1x1x32x32xf32>
    %364 = vector.shape_cast %363 : vector<1x1x32x32xf32> to vector<32x32xf32>
    %cst_323 = arith.constant dense<0.000000e+00> : vector<16x32xf32>
    %365 = tpu.matmul %362, %364, %cst_323 {dimension_numbers = #tpu.dot_dimension_numbers<[1], [0], [0], [1], [0, 0, 1, 1], [], []>} : vector<16x32xf32>, vector<32x32xf32>, vector<16x32xf32> -> vector<16x32xf32>
    %366 = arith.addf %360, %365 : vector<16x32xf32>
    %c2_324 = arith.constant 2 : index
    %c1_325 = arith.constant 1 : index
    %c0_326 = arith.constant 0 : index
    %367 = vector.load %arg15[%c2_324, %c1_325, %c0_326] : memref<6x6x32xf32, #tpu.memory_space<vmem>>, vector<4x4x32xf32>
    %368 = vector.shape_cast %367 : vector<4x4x32xf32> to vector<16x32xf32>
    %c2_327 = arith.constant 2 : index
    %c1_328 = arith.constant 1 : index
    %c0_329 = arith.constant 0 : index
    %c0_330 = arith.constant 0 : index
    %369 = vector.load %arg6[%c2_327, %c1_328, %c0_329, %c0_330] : memref<3x3x32x32xf32, #tpu.memory_space<vmem>>, vector<1x1x32x32xf32>
    %370 = vector.shape_cast %369 : vector<1x1x32x32xf32> to vector<32x32xf32>
    %cst_331 = arith.constant dense<0.000000e+00> : vector<16x32xf32>
    %371 = tpu.matmul %368, %370, %cst_331 {dimension_numbers = #tpu.dot_dimension_numbers<[1], [0], [0], [1], [0, 0, 1, 1], [], []>} : vector<16x32xf32>, vector<32x32xf32>, vector<16x32xf32> -> vector<16x32xf32>
    %372 = arith.addf %366, %371 : vector<16x32xf32>
    %c2_332 = arith.constant 2 : index
    %c2_333 = arith.constant 2 : index
    %c0_334 = arith.constant 0 : index
    %373 = vector.load %arg15[%c2_332, %c2_333, %c0_334] : memref<6x6x32xf32, #tpu.memory_space<vmem>>, vector<4x4x32xf32>
    %374 = vector.shape_cast %373 : vector<4x4x32xf32> to vector<16x32xf32>
    %c2_335 = arith.constant 2 : index
    %c2_336 = arith.constant 2 : index
    %c0_337 = arith.constant 0 : index
    %c0_338 = arith.constant 0 : index
    %375 = vector.load %arg6[%c2_335, %c2_336, %c0_337, %c0_338] : memref<3x3x32x32xf32, #tpu.memory_space<vmem>>, vector<1x1x32x32xf32>
    %376 = vector.shape_cast %375 : vector<1x1x32x32xf32> to vector<32x32xf32>
    %cst_339 = arith.constant dense<0.000000e+00> : vector<16x32xf32>
    %377 = tpu.matmul %374, %376, %cst_339 {dimension_numbers = #tpu.dot_dimension_numbers<[1], [0], [0], [1], [0, 0, 1, 1], [], []>} : vector<16x32xf32>, vector<32x32xf32>, vector<16x32xf32> -> vector<16x32xf32>
    %378 = arith.addf %372, %377 : vector<16x32xf32>
    %c0_340 = arith.constant 0 : index
    %c0_341 = arith.constant 0 : index
    %379 = vector.load %arg7[%c0_340, %c0_341] : memref<1x32xf32, #tpu.memory_space<vmem>>, vector<1x32xf32>
    %380 = vector.broadcast %379 : vector<1x32xf32> to vector<16x32xf32>
    %381 = arith.addf %378, %380 : vector<16x32xf32>
    %382 = vector.shape_cast %381 : vector<16x32xf32> to vector<4x4x32xf32>
    %c0_342 = arith.constant 0 : index
    %c0_343 = arith.constant 0 : index
    %c0_344 = arith.constant 0 : index
    %383 = vector.load %arg16[%c0_342, %c0_343, %c0_344] : memref<4x4x32xf32, #tpu.memory_space<vmem>>, vector<4x4x32xf32>
    tpu.vector_store %arg16[%c0_342, %c0_343, %c0_344], %382 {strides = array<i32>} : memref<4x4x32xf32, #tpu.memory_space<vmem>>, vector<4x4x32xf32>,
    %c0_345 = arith.constant 0 : index
    %c0_346 = arith.constant 0 : index
    %c0_347 = arith.constant 0 : index
    %384 = tpu.strided_load %arg16[%c0_345, %c0_346, %c0_347] {strides = array<i32: 1, 2, 1>} : memref<4x4x32xf32, #tpu.memory_space<vmem>>, vector<4x2x32xf32>
    %c0_348 = arith.constant 0 : index
    %c1_349 = arith.constant 1 : index
    %c0_350 = arith.constant 0 : index
    %385 = tpu.strided_load %arg16[%c0_348, %c1_349, %c0_350] {strides = array<i32: 1, 2, 1>} : memref<4x4x32xf32, #tpu.memory_space<vmem>>, vector<4x2x32xf32>
    %386 = arith.maximumf %384, %385 : vector<4x2x32xf32>
    %387 = vector.shape_cast %386 : vector<4x2x32xf32> to vector<2x2x2x32xf32>
    %388 = vector.extract_strided_slice %387 {offsets = [0, 0, 0, 0], sizes = [2, 1, 2, 32], strides = [1, 1, 1, 1]} : vector<2x2x2x32xf32> to vector<2x1x2x32xf32>
    %389 = vector.shape_cast %388 : vector<2x1x2x32xf32> to vector<2x2x32xf32>
    %390 = vector.extract_strided_slice %387 {offsets = [0, 1, 0, 0], sizes = [2, 1, 2, 32], strides = [1, 1, 1, 1]} : vector<2x2x2x32xf32> to vector<2x1x2x32xf32>
    %391 = vector.shape_cast %390 : vector<2x1x2x32xf32> to vector<2x2x32xf32>
    %392 = arith.maximumf %389, %391 : vector<2x2x32xf32>
    %cst_351 = arith.constant 0.000000e+00 : f32
    %393 = vector.broadcast %cst_351 : f32 to vector<2x2x32xf32>
    %394 = arith.maximumf %392, %393 : vector<2x2x32xf32>
    %395 = vector.shape_cast %394 : vector<2x2x32xf32> to vector<4x32xf32>
    %c0_352 = arith.constant 0 : index
    %c0_353 = arith.constant 0 : index
    %396 = vector.load %arg9[%c0_352, %c0_353] : memref<1x32xf32, #tpu.memory_space<vmem>>, vector<1x32xf32>
    %397 = vector.extract_strided_slice %395 {offsets = [0, 0], sizes = [1, 32], strides = [1, 1]} : vector<4x32xf32> to vector<1x32xf32>
    %c0_354 = arith.constant 0 : index
    %c0_355 = arith.constant 0 : index
    %c0_356 = arith.constant 0 : index
    %398 = vector.load %arg8[%c0_354, %c0_355, %c0_356] : memref<4x32x32xf32, #tpu.memory_space<vmem>>, vector<1x32x32xf32>
    %399 = vector.shape_cast %398 : vector<1x32x32xf32> to vector<32x32xf32>
    %cst_357 = arith.constant dense<0.000000e+00> : vector<1x32xf32>
    %400 = tpu.matmul %397, %399, %cst_357 {dimension_numbers = #tpu.dot_dimension_numbers<[1], [0], [0], [1], [0, 0, 1, 1], [], []>} : vector<1x32xf32>, vector<32x32xf32>, vector<1x32xf32> -> vector<1x32xf32>
    %401 = arith.addf %396, %400 : vector<1x32xf32>
    %402 = vector.extract_strided_slice %395 {offsets = [1, 0], sizes = [1, 32], strides = [1, 1]} : vector<4x32xf32> to vector<1x32xf32>
    %c1_358 = arith.constant 1 : index
    %c0_359 = arith.constant 0 : index
    %c0_360 = arith.constant 0 : index
    %403 = vector.load %arg8[%c1_358, %c0_359, %c0_360] : memref<4x32x32xf32, #tpu.memory_space<vmem>>, vector<1x32x32xf32>
    %404 = vector.shape_cast %403 : vector<1x32x32xf32> to vector<32x32xf32>
    %cst_361 = arith.constant dense<0.000000e+00> : vector<1x32xf32>
    %405 = tpu.matmul %402, %404, %cst_361 {dimension_numbers = #tpu.dot_dimension_numbers<[1], [0], [0], [1], [0, 0, 1, 1], [], []>} : vector<1x32xf32>, vector<32x32xf32>, vector<1x32xf32> -> vector<1x32xf32>
    %406 = arith.addf %401, %405 : vector<1x32xf32>
    %407 = vector.extract_strided_slice %395 {offsets = [2, 0], sizes = [1, 32], strides = [1, 1]} : vector<4x32xf32> to vector<1x32xf32>
    %c2_362 = arith.constant 2 : index
    %c0_363 = arith.constant 0 : index
    %c0_364 = arith.constant 0 : index
    %408 = vector.load %arg8[%c2_362, %c0_363, %c0_364] : memref<4x32x32xf32, #tpu.memory_space<vmem>>, vector<1x32x32xf32>
    %409 = vector.shape_cast %408 : vector<1x32x32xf32> to vector<32x32xf32>
    %cst_365 = arith.constant dense<0.000000e+00> : vector<1x32xf32>
    %410 = tpu.matmul %407, %409, %cst_365 {dimension_numbers = #tpu.dot_dimension_numbers<[1], [0], [0], [1], [0, 0, 1, 1], [], []>} : vector<1x32xf32>, vector<32x32xf32>, vector<1x32xf32> -> vector<1x32xf32>
    %411 = arith.addf %406, %410 : vector<1x32xf32>
    %412 = vector.extract_strided_slice %395 {offsets = [3, 0], sizes = [1, 32], strides = [1, 1]} : vector<4x32xf32> to vector<1x32xf32>
    %c3_366 = arith.constant 3 : index
    %c0_367 = arith.constant 0 : index
    %c0_368 = arith.constant 0 : index
    %413 = vector.load %arg8[%c3_366, %c0_367, %c0_368] : memref<4x32x32xf32, #tpu.memory_space<vmem>>, vector<1x32x32xf32>
    %414 = vector.shape_cast %413 : vector<1x32x32xf32> to vector<32x32xf32>
    %cst_369 = arith.constant dense<0.000000e+00> : vector<1x32xf32>
    %415 = tpu.matmul %412, %414, %cst_369 {dimension_numbers = #tpu.dot_dimension_numbers<[1], [0], [0], [1], [0, 0, 1, 1], [], []>} : vector<1x32xf32>, vector<32x32xf32>, vector<1x32xf32> -> vector<1x32xf32>
    %416 = arith.addf %411, %415 : vector<1x32xf32>
    %417 = vector.shape_cast %416 : vector<1x32xf32> to vector<1x1x32xf32>
    %c0_370 = arith.constant 0 : index
    %c0_371 = arith.constant 0 : index
    %c0_372 = arith.constant 0 : index
    %418 = vector.load %arg10[%c0_370, %c0_371, %c0_372] : memref<1x1x32xf32, #tpu.memory_space<vmem>>, vector<1x1x32xf32>
    tpu.vector_store %arg10[%c0_370, %c0_371, %c0_372], %417 {strides = array<i32>} : memref<1x1x32xf32, #tpu.memory_space<vmem>>, vector<1x1x32xf32>,
    return
  }
  func.func @transform_0(%arg0: i32) -> (i32, i32, i32, i32) {
    %c0_i32 = arith.constant 0 : i32
    %c0_i32_0 = arith.constant 0 : i32
    %c0_i32_1 = arith.constant 0 : i32
    %c0_i32_2 = arith.constant 0 : i32
    return %arg0, %c0_i32, %c0_i32_0, %c0_i32_1 : i32, i32, i32, i32
  }
  func.func @transform_1(%arg0: i32) -> (i32, i32, i32) {
    %c0_i32 = arith.constant 0 : i32
    %c0_i32_0 = arith.constant 0 : i32
    %c0_i32_1 = arith.constant 0 : i32
    %c0_i32_2 = arith.constant 0 : i32
    return %c0_i32, %c0_i32_0, %c0_i32_1 : i32, i32, i32
  }
  func.func @transform_2(%arg0: i32) -> (i32, i32) {
    %c0_i32 = arith.constant 0 : i32
    %c0_i32_0 = arith.constant 0 : i32
    %c0_i32_1 = arith.constant 0 : i32
    return %c0_i32, %c0_i32_0 : i32, i32
  }
  func.func @transform_3(%arg0: i32) -> (i32, i32, i32, i32) {
    %c0_i32 = arith.constant 0 : i32
    %c0_i32_0 = arith.constant 0 : i32
    %c0_i32_1 = arith.constant 0 : i32
    %c0_i32_2 = arith.constant 0 : i32
    %c0_i32_3 = arith.constant 0 : i32
    return %c0_i32, %c0_i32_0, %c0_i32_1, %c0_i32_2 : i32, i32, i32, i32
  }
  func.func @transform_4(%arg0: i32) -> (i32, i32) {
    %c0_i32 = arith.constant 0 : i32
    %c0_i32_0 = arith.constant 0 : i32
    %c0_i32_1 = arith.constant 0 : i32
    return %c0_i32, %c0_i32_0 : i32, i32
  }
  func.func @transform_5(%arg0: i32) -> (i32, i32, i32, i32) {
    %c0_i32 = arith.constant 0 : i32
    %c0_i32_0 = arith.constant 0 : i32
    %c0_i32_1 = arith.constant 0 : i32
    %c0_i32_2 = arith.constant 0 : i32
    %c0_i32_3 = arith.constant 0 : i32
    return %c0_i32, %c0_i32_0, %c0_i32_1, %c0_i32_2 : i32, i32, i32, i32
  }
  func.func @transform_6(%arg0: i32) -> (i32, i32) {
    %c0_i32 = arith.constant 0 : i32
    %c0_i32_0 = arith.constant 0 : i32
    %c0_i32_1 = arith.constant 0 : i32
    return %c0_i32, %c0_i32_0 : i32, i32
  }
  func.func @transform_7(%arg0: i32) -> (i32, i32, i32) {
    %c0_i32 = arith.constant 0 : i32
    %c0_i32_0 = arith.constant 0 : i32
    %c0_i32_1 = arith.constant 0 : i32
    %c0_i32_2 = arith.constant 0 : i32
    return %c0_i32, %c0_i32_0, %c0_i32_1 : i32, i32, i32
  }
  func.func @transform_8(%arg0: i32) -> (i32, i32) {
    %c0_i32 = arith.constant 0 : i32
    %c0_i32_0 = arith.constant 0 : i32
    %c0_i32_1 = arith.constant 0 : i32
    return %c0_i32, %c0_i32_0 : i32, i32
  }
  func.func @transform_9(%arg0: i32) -> (i32, i32, i32) {
    %c0_i32 = arith.constant 0 : i32
    %c0_i32_0 = arith.constant 0 : i32
    %c0_i32_1 = arith.constant 0 : i32
    return %arg0, %c0_i32, %c0_i32_0 : i32, i32, i32
  }
}

</mosaic_0001>

<llo_original>
// kernel: wm811k_encoder_ae_forward.1
$region0: #{wm811k_encoder_ae_forward.1}
  #allocation0 [shape = 'u32[]', space=smem, size = 0x4, offset = 0x4, fixed_abs, tag = 'smem constant byte address 0x4 - core index']
  #allocation1 [shape = 'u32[144,128]{1,0:T(1,128)}', space=vmem, size = 0x12000, scoped, tag = 'internal scratch']
  #allocation2 [shape = 'f32[20,20,1]{2,1,0:T(8,128)}', space=vmem, size = 0x3c000, scoped, tag = 'scratch operand']
  #allocation3 [shape = 'f32[16,16,64]{2,1,0:T(8,128)}', space=vmem, size = 0x20000, scoped, tag = 'scratch operand']
  #allocation4 [shape = 'f32[10,10,64]{2,1,0:T(8,128)}', space=vmem, size = 0x14000, scoped, tag = 'scratch operand']
  #allocation5 [shape = 'f32[8,8,32]{2,1,0:T(8,128)}', space=vmem, size = 0x8000, scoped, tag = 'scratch operand']
  #allocation6 [shape = 'f32[6,6,32]{2,1,0:T(8,128)}', space=vmem, size = 0x6000, scoped, tag = 'scratch operand']
  #allocation7 [shape = 'f32[4,4,32]{2,1,0:T(4,128)}', space=vmem, size = 0x2000, scoped, tag = 'scratch operand']
  %s0 = inlined_call_operand.vmem [shape: f32[2,16,16,1], index: 0, kind: input, shape index: {}]
  %s1 = inlined_call_operand.vmem [shape: f32[5,5,64], index: 1, kind: input, shape index: {}]
  %s2 = inlined_call_operand.vmem [shape: f32[1,64], index: 2, kind: input, shape index: {}]
  %s3 = inlined_call_operand.vmem [shape: f32[3,3,64,32], index: 3, kind: input, shape index: {}]
  %s4 = inlined_call_operand.vmem [shape: f32[1,32], index: 4, kind: input, shape index: {}]
  %s5 = inlined_call_operand.vmem [shape: f32[3,3,32,32], index: 5, kind: input, shape index: {}]
  %s6 = inlined_call_operand.vmem [shape: f32[1,32], index: 6, kind: input, shape index: {}]
  %s7 = inlined_call_operand.vmem [shape: f32[4,32,32], index: 7, kind: input, shape index: {}]
  %s8 = inlined_call_operand.vmem [shape: f32[1,32], index: 8, kind: input, shape index: {}]
  %s9 = inlined_call_operand.hbm [shape: f32[2,1,32], index: 9, kind: output, shape index: {}]
  %s10 = sld [smem:[#allocation0]]
  $region69: #{wm811k_encoder_ae_forward.1} parent=0
    _
  %s12 = ssub.s32 1, %s10
  %s13 = scalar_select 0, %s12, %s10
  $region1: #{wm811k_encoder_ae_forward.1} parent=0
    #allocation8 [shape = 'u8[1024]{0}', space=vmem, size = 0x400, scoped, tag = 'output window, operand 0']
    #allocation9 [shape = 's32[2]{0}', space=sflag, size = 0x8, scoped, tag = 'scoped memory for wm811k_encoder_ae_forward.1']
    %14 = vsyncpa [#allocation9], 0
    %s15 = scalar_lea.sflag [#allocation9], 1
    %16 = vsyncpa %s15, 0
    loop: start=0, step=1, limit=4
    $region2: #{wm811k_encoder_ae_forward.1} parent=1 // loop_pre_header
      _
    $region3: #{wm811k_encoder_ae_forward.1} parent=1 // loop_header
      %s18 = sphi 0, %s22
      %p19 = scmp.ge.s32.totalorder %s18, 4
      %s28 = sphi 0, %s30
      %s31 = sphi 0, %s28
      %s32 = sphi 0, %s31
      %s48 = sphi 0, %s32
      %s52 = sphi 0, %s52
      %s54 = sphi 0, %s52
      %s55 = sphi 0, %s54
      %s69 = sphi 0, %s55
      %s73 = sphi 0, %s73
      %s75 = sphi 0, %s73
      %s76 = sphi 0, %s75
      %s90 = sphi 0, %s76
      %s94 = sphi 0, %s94
      %s96 = sphi 0, %s94
      %s97 = sphi 0, %s96
      %s111 = sphi 0, %s97
      %s115 = sphi 0, %s115
      %s117 = sphi 0, %s115
      %s118 = sphi 0, %s117
      %s132 = sphi 0, %s118
      %s136 = sphi 0, %s136
      %s138 = sphi 0, %s136
      %s139 = sphi 0, %s138
      %s153 = sphi 0, %s139
      %s157 = sphi 0, %s157
      %s159 = sphi 0, %s157
      %s160 = sphi 0, %s159
      %s174 = sphi 0, %s160
      %s178 = sphi 0, %s178
      %s180 = sphi 0, %s178
      %s181 = sphi 0, %s180
      %s195 = sphi 0, %s181
      %s199 = sphi 0, %s199
      %s201 = sphi 0, %s199
      %s202 = sphi 0, %s201
      %s216 = sphi 0, %s202
      %s222 = sphi 0, %s224
      %s225 = sphi 0, %s222
      %s226 = sphi 0, %s225
      %s242 = sphi 0, %s226
    $region4: #{wm811k_encoder_ae_forward.1} parent=1 // loop_header_branch
      %21 = sbr.rel (%p19) target = $region8
    $region5: #{wm811k_encoder_ae_forward.1} parent=1 // loop_body
      %s23 = ssub.s32 %s18, 1
      %s24 = ssub.s32 %s18, 2
      %s25 = sadd.s32 %s18, 1
      %s26 = ssub.s32 %s18, %s25
      %p27 = scmp.eq.s32.totalorder %s26, 0
      %s29 = sadd.s32 %s28, 1
      %s30 = scalar_select %p27, %s28, %s29
      %p33 = pneg %p27
      %p34 = scmp.eq.s32.totalorder %s18, 1
      %p35 = por %p33, %p34
      %p36 = scmp.ne.s32.totalorder %s28, %s31
      %p37 = scmp.eq.s32.totalorder %s18, 0
      %p38 = por %p36, %p37
      %p39 = scmp.ne.s32.totalorder %s28, %s31
      %p40 = scmp.eq.s32.totalorder %s23, 1
      %p41 = por %p39, %p40
      %p42 = scmp.ne.s32.totalorder %s31, %s32
      %p43 = scmp.eq.s32.totalorder %s23, 0
      %p44 = por %p42, %p43
      %p45 = scmp.ne.s32.totalorder %s31, %s32
      %p46 = scmp.eq.s32.totalorder %s24, 1
      %p47 = por %p45, %p46
      %p49 = scmp.ne.s32.totalorder %s32, %s48
      %p50 = scmp.eq.s32.totalorder %s24, 0
      %p51 = por %p49, %p50
      %s53 = sadd.s32 %s52, 1
      %p56 = scmp.eq.s32.totalorder %s18, 1
      %p57 = scmp.ne.s32.totalorder %s52, %s54
      %p58 = scmp.eq.s32.totalorder %s18, 0
      %p59 = por %p57, %p58
      %p60 = scmp.ne.s32.totalorder %s52, %s54
      %p61 = scmp.eq.s32.totalorder %s23, 1
      %p62 = por %p60, %p61
      %p63 = scmp.ne.s32.totalorder %s54, %s55
      %p64 = scmp.eq.s32.totalorder %s23, 0
      %p65 = por %p63, %p64
      %p66 = scmp.ne.s32.totalorder %s54, %s55
      %p67 = scmp.eq.s32.totalorder %s24, 1
      %p68 = por %p66, %p67
      %p70 = scmp.ne.s32.totalorder %s55, %s69
      %p71 = scmp.eq.s32.totalorder %s24, 0
      %p72 = por %p70, %p71
      %s74 = sadd.s32 %s73, 1
      %p77 = scmp.eq.s32.totalorder %s18, 1
      %p78 = scmp.ne.s32.totalorder %s73, %s75
      %p79 = scmp.eq.s32.totalorder %s18, 0
      %p80 = por %p78, %p79
      %p81 = scmp.ne.s32.totalorder %s73, %s75
      %p82 = scmp.eq.s32.totalorder %s23, 1
      %p83 = por %p81, %p82
      %p84 = scmp.ne.s32.totalorder %s75, %s76
      %p85 = scmp.eq.s32.totalorder %s23, 0
      %p86 = por %p84, %p85
      %p87 = scmp.ne.s32.totalorder %s75, %s76
      %p88 = scmp.eq.s32.totalorder %s24, 1
      %p89 = por %p87, %p88
      %p91 = scmp.ne.s32.totalorder %s76, %s90
      %p92 = scmp.eq.s32.totalorder %s24, 0
      %p93 = por %p91, %p92
      %s95 = sadd.s32 %s94, 1
      %p98 = scmp.eq.s32.totalorder %s18, 1
      %p99 = scmp.ne.s32.totalorder %s94, %s96
      %p100 = scmp.eq.s32.totalorder %s18, 0
      %p101 = por %p99, %p100
      %p102 = scmp.ne.s32.totalorder %s94, %s96
      %p103 = scmp.eq.s32.totalorder %s23, 1
      %p104 = por %p102, %p103
      %p105 = scmp.ne.s32.totalorder %s96, %s97
      %p106 = scmp.eq.s32.totalorder %s23, 0
      %p107 = por %p105, %p106
      %p108 = scmp.ne.s32.totalorder %s96, %s97
      %p109 = scmp.eq.s32.totalorder %s24, 1
      %p110 = por %p108, %p109
      %p112 = scmp.ne.s32.totalorder %s97, %s111
      %p113 = scmp.eq.s32.totalorder %s24, 0
      %p114 = por %p112, %p113
      %s116 = sadd.s32 %s115, 1
      %p119 = scmp.eq.s32.totalorder %s18, 1
      %p120 = scmp.ne.s32.totalorder %s115, %s117
      %p121 = scmp.eq.s32.totalorder %s18, 0
      %p122 = por %p120, %p121
      %p123 = scmp.ne.s32.totalorder %s115, %s117
      %p124 = scmp.eq.s32.totalorder %s23, 1
      %p125 = por %p123, %p124
      %p126 = scmp.ne.s32.totalorder %s117, %s118
      %p127 = scmp.eq.s32.totalorder %s23, 0
      %p128 = por %p126, %p127
      %p129 = scmp.ne.s32.totalorder %s117, %s118
      %p130 = scmp.eq.s32.totalorder %s24, 1
      %p131 = por %p129, %p130
      %p133 = scmp.ne.s32.totalorder %s118, %s132
      %p134 = scmp.eq.s32.totalorder %s24, 0
      %p135 = por %p133, %p134
      %s137 = sadd.s32 %s136, 1
      %p140 = scmp.eq.s32.totalorder %s18, 1
      %p141 = scmp.ne.s32.totalorder %s136, %s138
      %p142 = scmp.eq.s32.totalorder %s18, 0
      %p143 = por %p141, %p142
      %p144 = scmp.ne.s32.totalorder %s136, %s138
      %p145 = scmp.eq.s32.totalorder %s23, 1
      %p146 = por %p144, %p145
      %p147 = scmp.ne.s32.totalorder %s138, %s139
      %p148 = scmp.eq.s32.totalorder %s23, 0
      %p149 = por %p147, %p148
      %p150 = scmp.ne.s32.totalorder %s138, %s139
      %p151 = scmp.eq.s32.totalorder %s24, 1
      %p152 = por %p150, %p151
      %p154 = scmp.ne.s32.totalorder %s139, %s153
      %p155 = scmp.eq.s32.totalorder %s24, 0
      %p156 = por %p154, %p155
      %s158 = sadd.s32 %s157, 1
      %p161 = scmp.eq.s32.totalorder %s18, 1
      %p162 = scmp.ne.s32.totalorder %s157, %s159
      %p163 = scmp.eq.s32.totalorder %s18, 0
      %p164 = por %p162, %p163
      %p165 = scmp.ne.s32.totalorder %s157, %s159
      %p166 = scmp.eq.s32.totalorder %s23, 1
      %p167 = por %p165, %p166
      %p168 = scmp.ne.s32.totalorder %s159, %s160
      %p169 = scmp.eq.s32.totalorder %s23, 0
      %p170 = por %p168, %p169
      %p171 = scmp.ne.s32.totalorder %s159, %s160
      %p172 = scmp.eq.s32.totalorder %s24, 1
      %p173 = por %p171, %p172
      %p175 = scmp.ne.s32.totalorder %s160, %s174
      %p176 = scmp.eq.s32.totalorder %s24, 0
      %p177 = por %p175, %p176
      %s179 = sadd.s32 %s178, 1
      %p182 = scmp.eq.s32.totalorder %s18, 1
      %p183 = scmp.ne.s32.totalorder %s178, %s180
      %p184 = scmp.eq.s32.totalorder %s18, 0
      %p185 = por %p183, %p184
      %p186 = scmp.ne.s32.totalorder %s178, %s180
      %p187 = scmp.eq.s32.totalorder %s23, 1
      %p188 = por %p186, %p187
      %p189 = scmp.ne.s32.totalorder %s180, %s181
      %p190 = scmp.eq.s32.totalorder %s23, 0
      %p191 = por %p189, %p190
      %p192 = scmp.ne.s32.totalorder %s180, %s181
      %p193 = scmp.eq.s32.totalorder %s24, 1
      %p194 = por %p192, %p193
      %p196 = scmp.ne.s32.totalorder %s181, %s195
      %p197 = scmp.eq.s32.totalorder %s24, 0
      %p198 = por %p196, %p197
      %s200 = sadd.s32 %s199, 1
      %p203 = scmp.eq.s32.totalorder %s18, 1
      %p204 = scmp.ne.s32.totalorder %s199, %s201
      %p205 = scmp.eq.s32.totalorder %s18, 0
      %p206 = por %p204, %p205
      %p207 = scmp.ne.s32.totalorder %s199, %s201
      %p208 = scmp.eq.s32.totalorder %s23, 1
      %p209 = por %p207, %p208
      %p210 = scmp.ne.s32.totalorder %s201, %s202
      %p211 = scmp.eq.s32.totalorder %s23, 0
      %p212 = por %p210, %p211
      %p213 = scmp.ne.s32.totalorder %s201, %s202
      %p214 = scmp.eq.s32.totalorder %s24, 1
      %p215 = por %p213, %p214
      %p217 = scmp.ne.s32.totalorder %s202, %s216
      %p218 = scmp.eq.s32.totalorder %s24, 0
      %p219 = por %p217, %p218
      %s220 = ssub.s32 %s18, %s25
      %p221 = scmp.eq.s32.totalorder %s220, 0
      %s223 = sadd.s32 %s222, 1
      %s224 = scalar_select %p221, %s222, %s223
      %p227 = pneg %p221
      %p228 = scmp.eq.s32.totalorder %s18, 1
      %p229 = por %p227, %p228
      %p230 = scmp.ne.s32.totalorder %s222, %s225
      %p231 = scmp.eq.s32.totalorder %s18, 0
      %p232 = por %p230, %p231
      %p233 = scmp.ne.s32.totalorder %s222, %s225
      %p234 = scmp.eq.s32.totalorder %s23, 1
      %p235 = por %p233, %p234
      %p236 = scmp.ne.s32.totalorder %s225, %s226
      %p237 = scmp.eq.s32.totalorder %s23, 0
      %p238 = por %p236, %p237
      %p239 = scmp.ne.s32.totalorder %s225, %s226
      %p240 = scmp.eq.s32.totalorder %s24, 1
      %p241 = por %p239, %p240
      %p243 = scmp.ne.s32.totalorder %s226, %s242
      %p244 = scmp.eq.s32.totalorder %s24, 0
      %p245 = por %p243, %p244
      %p246 = scmp.le.s32.totalorder 1, %s18
      %p247 = scmp.lt.s32.totalorder %s18, 3
      %p248 = pnand %p246, %p247
      %p249 = pneg %p248
      // Predicated region
      $region9: #{wm811k_encoder_ae_forward.1} parent=5 // pred_check
        _
      $region10: #{wm811k_encoder_ae_forward.1} parent=5 // pred_check_branch
        %251 = sbr.rel (%p248) target = $region12
      $region11: #{wm811k_encoder_ae_forward.1} parent=5 // pred_region
        %s252 = ssub.s32 %s18, 1
        // Predicated region
        $region13: #{wm811k_encoder_ae_forward.1} parent=11 // pred_check
          %p253 = pneg %p65
        $region14: #{wm811k_encoder_ae_forward.1} parent=11 // pred_check_branch
          %255 = sbr.rel (%p253) target = $region16
        $region15: #{wm811k_encoder_ae_forward.1} parent=11 // pred_region
          _
        $region16: #{wm811k_encoder_ae_forward.1} parent=11 // pred_fallthru
          _
        // Predicated region
        $region17: #{wm811k_encoder_ae_forward.1} parent=11 // pred_check
          %p256 = pneg %p86
        $region18: #{wm811k_encoder_ae_forward.1} parent=11 // pred_check_branch
          %258 = sbr.rel (%p256) target = $region20
        $region19: #{wm811k_encoder_ae_forward.1} parent=11 // pred_region
          _
        $region20: #{wm811k_encoder_ae_forward.1} parent=11 // pred_fallthru
          _
        // Predicated region
        $region21: #{wm811k_encoder_ae_forward.1} parent=11 // pred_check
          %p259 = pneg %p107
        $region22: #{wm811k_encoder_ae_forward.1} parent=11 // pred_check_branch
          %261 = sbr.rel (%p259) target = $region24
        $region23: #{wm811k_encoder_ae_forward.1} parent=11 // pred_region
          _
        $region24: #{wm811k_encoder_ae_forward.1} parent=11 // pred_fallthru
          _
        // Predicated region
        $region25: #{wm811k_encoder_ae_forward.1} parent=11 // pred_check
          %p262 = pneg %p128
        $region26: #{wm811k_encoder_ae_forward.1} parent=11 // pred_check_branch
          %264 = sbr.rel (%p262) target = $region28
        $region27: #{wm811k_encoder_ae_forward.1} parent=11 // pred_region
          _
        $region28: #{wm811k_encoder_ae_forward.1} parent=11 // pred_fallthru
          _
        // Predicated region
        $region29: #{wm811k_encoder_ae_forward.1} parent=11 // pred_check
          %p265 = pneg %p149
        $region30: #{wm811k_encoder_ae_forward.1} parent=11 // pred_check_branch
          %267 = sbr.rel (%p265) target = $region32
        $region31: #{wm811k_encoder_ae_forward.1} parent=11 // pred_region
          _
        $region32: #{wm811k_encoder_ae_forward.1} parent=11 // pred_fallthru
          _
        // Predicated region
        $region33: #{wm811k_encoder_ae_forward.1} parent=11 // pred_check
          %p268 = pneg %p170
        $region34: #{wm811k_encoder_ae_forward.1} parent=11 // pred_check_branch
          %270 = sbr.rel (%p268) target = $region36
        $region35: #{wm811k_encoder_ae_forward.1} parent=11 // pred_region
          _
        $region36: #{wm811k_encoder_ae_forward.1} parent=11 // pred_fallthru
          _
        // Predicated region
        $region37: #{wm811k_encoder_ae_forward.1} parent=11 // pred_check
          %p271 = pneg %p191
        $region38: #{wm811k_encoder_ae_forward.1} parent=11 // pred_check_branch
          %273 = sbr.rel (%p271) target = $region40
        $region39: #{wm811k_encoder_ae_forward.1} parent=11 // pred_region
          _
        $region40: #{wm811k_encoder_ae_forward.1} parent=11 // pred_fallthru
          _
        // Predicated region
        $region41: #{wm811k_encoder_ae_forward.1} parent=11 // pred_check
          %p274 = pneg %p212
        $region42: #{wm811k_encoder_ae_forward.1} parent=11 // pred_check_branch
          %276 = sbr.rel (%p274) target = $region44
        $region43: #{wm811k_encoder_ae_forward.1} parent=11 // pred_region
          _
        $region44: #{wm811k_encoder_ae_forward.1} parent=11 // pred_fallthru
          _
      $region12: #{wm811k_encoder_ae_forward.1} parent=5 // pred_fallthru
        _
      %p277 = scmp.lt.s32.totalorder %s18, 2
      // Predicated region
      $region45: #{wm811k_encoder_ae_forward.1} parent=5 // pred_check
        %p278 = pneg %p277
      $region46: #{wm811k_encoder_ae_forward.1} parent=5 // pred_check_branch
        %280 = sbr.rel (%p278) target = $region48
      $region47: #{wm811k_encoder_ae_forward.1} parent=5 // pred_region
        // Predicated region
        $region49: #{wm811k_encoder_ae_forward.1} parent=47 // pred_check
          %p281 = pneg %p38
        $region50: #{wm811k_encoder_ae_forward.1} parent=47 // pred_check_branch
          %283 = sbr.rel (%p281) target = $region52
        $region51: #{wm811k_encoder_ae_forward.1} parent=47 // pred_region
          %p284 = scmp.lt.s32.totalorder %s18, 1
          %s285 = scalar_select %p284, %s18, 1
          %s286 = smul.addr %s285, 32
          %s287 = smul.addr %s286, 8
          %s288 = scalar_lea.vmem %s0, %s287
        $region52: #{wm811k_encoder_ae_forward.1} parent=47 // pred_fallthru
          _
      $region48: #{wm811k_encoder_ae_forward.1} parent=5 // pred_fallthru
        _
      %p289 = scmp.le.s32.totalorder 1, %s18
      %p290 = scmp.lt.s32.totalorder %s18, 3
      %p291 = pnand %p289, %p290
      %p292 = pneg %p291
      // Predicated region
      $region53: #{wm811k_encoder_ae_forward.1} parent=5 // pred_check
        _
      $region54: #{wm811k_encoder_ae_forward.1} parent=5 // pred_check_branch
        %294 = sbr.rel (%p291) target = $region56
      $region55: #{wm811k_encoder_ae_forward.1} parent=5 // pred_region
        %s295 = ssub.s32 %s18, 1
        %p296 = scmp.lt.s32.totalorder %s23, 1
        %s297 = scalar_select %p296, %s23, 1
        %s298 = smul.addr %s297, 32
        %s299 = smul.addr %s298, 8
        %s300 = scalar_lea.vmem %s0, %s299
        %p301 = pneg %p44
        %p302 = pneg %p41
        %p303 = pneg %p65
        %p304 = pneg %p62
        %p305 = pneg %p86
        %p306 = pneg %p83
        %p307 = pneg %p107
        %p308 = pneg %p104
        %p309 = pneg %p128
        %p310 = pneg %p125
        %p311 = pneg %p149
        %p312 = pneg %p146
        %p313 = pneg %p170
        %p314 = pneg %p167
        %p315 = pneg %p191
        %p316 = pneg %p188
        %p317 = pneg %p212
        %p318 = pneg %p209
        %p319 = pneg %p238
        %p320 = pneg %p235
        %s321 = sand.u32 %s225, 1
        %s322 = scalar_lea.sflag [#allocation9], %s321
        %s323 = sand.u32 %s225, 1
        %s324 = scalar_lea.vmem [#allocation8], %s323
        %p325 = scmp.lt.s32.totalorder %s23, 1
        %s326 = scalar_select %p325, %s23, 1
        %s327 = smul.addr %s326, 32
        %s328 = smul.addr %s327, 8
        %s329 = scalar_lea.vmem %s0, %s328
        %vm330 = vcmask 7168
        %331 = vst.msk [vmem:[#allocation2] sm:$0xff] %vm330, 0.0
        %332 = vst.msk [vmem:[#allocation2 + $0x8] sm:$0xff] %vm330, 0.0
        %vm333 = vcmask 3072
        %334 = vst.msk [vmem:[#allocation2 + $0x10] sm:$0xf] %vm333, 0.0
        %335 = vst.msk [vmem:[#allocation2 + $0x18] sm:$0xff] %vm330, 0.0
        %336 = vst.msk [vmem:[#allocation2 + $0x20] sm:$0xff] %vm330, 0.0
        %337 = vst.msk [vmem:[#allocation2 + $0x28] sm:$0xf] %vm333, 0.0
        %338 = vst.msk [vmem:[#allocation2 + $0x30] sm:$0xff] %vm330, 0.0
        %339 = vst.msk [vmem:[#allocation2 + $0x38] sm:$0xff] %vm330, 0.0
        %340 = vst.msk [vmem:[#allocation2 + $0x40] sm:$0xf] %vm333, 0.0
        %341 = vst.msk [vmem:[#allocation2 + $0x48] sm:$0xff] %vm330, 0.0
        %342 = vst.msk [vmem:[#allocation2 + $0x50] sm:$0xff] %vm330, 0.0
        %343 = vst.msk [vmem:[#allocation2 + $0x58] sm:$0xf] %vm333, 0.0
        %344 = vst.msk [vmem:[#allocation2 + $0x60] sm:$0xff] %vm330, 0.0
        %345 = vst.msk [vmem:[#allocation2 + $0x68] sm:$0xff] %vm330, 0.0
        %346 = vst.msk [vmem:[#allocation2 + $0x70] sm:$0xf] %vm333, 0.0
        %347 = vst.msk [vmem:[#allocation2 + $0x78] sm:$0xff] %vm330, 0.0
        %348 = vst.msk [vmem:[#allocation2 + $0x80] sm:$0xff] %vm330, 0.0
        %349 = vst.msk [vmem:[#allocation2 + $0x88] sm:$0xf] %vm333, 0.0
        %350 = vst.msk [vmem:[#allocation2 + $0x90] sm:$0xff] %vm330, 0.0
        %351 = vst.msk [vmem:[#allocation2 + $0x98] sm:$0xff] %vm330, 0.0
        %352 = vst.msk [vmem:[#allocation2 + $0xa0] sm:$0xf] %vm333, 0.0
        %353 = vst.msk [vmem:[#allocation2 + $0xa8] sm:$0xff] %vm330, 0.0
        %354 = vst.msk [vmem:[#allocation2 + $0xb0] sm:$0xff] %vm330, 0.0
        %355 = vst.msk [vmem:[#allocation2 + $0xb8] sm:$0xf] %vm333, 0.0
        %356 = vst.msk [vmem:[#allocation2 + $0xc0] sm:$0xff] %vm330, 0.0
        %357 = vst.msk [vmem:[#allocation2 + $0xc8] sm:$0xff] %vm330, 0.0
        %358 = vst.msk [vmem:[#allocation2 + $0xd0] sm:$0xf] %vm333, 0.0
        %359 = vst.msk [vmem:[#allocation2 + $0xd8] sm:$0xff] %vm330, 0.0
        %360 = vst.msk [vmem:[#allocation2 + $0xe0] sm:$0xff] %vm330, 0.0
        %361 = vst.msk [vmem:[#allocation2 + $0xe8] sm:$0xf] %vm333, 0.0
        %362 = vst.msk [vmem:[#allocation2 + $0xf0] sm:$0xff] %vm330, 0.0
        %363 = vst.msk [vmem:[#allocation2 + $0xf8] sm:$0xff] %vm330, 0.0
        %364 = vst.msk [vmem:[#allocation2 + $0x100] sm:$0xf] %vm333, 0.0
        %365 = vst.msk [vmem:[#allocation2 + $0x108] sm:$0xff] %vm330, 0.0
        %366 = vst.msk [vmem:[#allocation2 + $0x110] sm:$0xff] %vm330, 0.0
        %367 = vst.msk [vmem:[#allocation2 + $0x118] sm:$0xf] %vm333, 0.0
        %368 = vst.msk [vmem:[#allocation2 + $0x120] sm:$0xff] %vm330, 0.0
        %369 = vst.msk [vmem:[#allocation2 + $0x128] sm:$0xff] %vm330, 0.0
        %370 = vst.msk [vmem:[#allocation2 + $0x130] sm:$0xf] %vm333, 0.0
        %371 = vst.msk [vmem:[#allocation2 + $0x138] sm:$0xff] %vm330, 0.0
        %372 = vst.msk [vmem:[#allocation2 + $0x140] sm:$0xff] %vm330, 0.0
        %373 = vst.msk [vmem:[#allocation2 + $0x148] sm:$0xf] %vm333, 0.0
        %374 = vst.msk [vmem:[#allocation2 + $0x150] sm:$0xff] %vm330, 0.0
        %375 = vst.msk [vmem:[#allocation2 + $0x158] sm:$0xff] %vm330, 0.0
        %376 = vst.msk [vmem:[#allocation2 + $0x160] sm:$0xf] %vm333, 0.0
        %377 = vst.msk [vmem:[#allocation2 + $0x168] sm:$0xff] %vm330, 0.0
        %378 = vst.msk [vmem:[#allocation2 + $0x170] sm:$0xff] %vm330, 0.0
        %379 = vst.msk [vmem:[#allocation2 + $0x178] sm:$0xf] %vm333, 0.0
        %380 = vst.msk [vmem:[#allocation2 + $0x180] sm:$0xff] %vm330, 0.0
        %381 = vst.msk [vmem:[#allocation2 + $0x188] sm:$0xff] %vm330, 0.0
        %382 = vst.msk [vmem:[#allocation2 + $0x190] sm:$0xf] %vm333, 0.0
        %383 = vst.msk [vmem:[#allocation2 + $0x198] sm:$0xff] %vm330, 0.0
        %384 = vst.msk [vmem:[#allocation2 + $0x1a0] sm:$0xff] %vm330, 0.0
        %385 = vst.msk [vmem:[#allocation2 + $0x1a8] sm:$0xf] %vm333, 0.0
        %386 = vst.msk [vmem:[#allocation2 + $0x1b0] sm:$0xff] %vm330, 0.0
        %387 = vst.msk [vmem:[#allocation2 + $0x1b8] sm:$0xff] %vm330, 0.0
        %388 = vst.msk [vmem:[#allocation2 + $0x1c0] sm:$0xf] %vm333, 0.0
        %389 = vst.msk [vmem:[#allocation2 + $0x1c8] sm:$0xff] %vm330, 0.0
        %390 = vst.msk [vmem:[#allocation2 + $0x1d0] sm:$0xff] %vm330, 0.0
        %391 = vst.msk [vmem:[#allocation2 + $0x1d8] sm:$0xf] %vm333, 0.0
        %v392 = vld [vmem:[%s329] sm:$0xff]
        %v393 = vld [vmem:[%s329 + $0x8] sm:$0xff]
        %v394 = vld [vmem:[%s329 + $0x10] sm:$0xff]
        %v395 = vld [vmem:[%s329 + $0x18] sm:$0xff]
        %v396 = vld [vmem:[%s329 + $0x20] sm:$0xff]
        %v397 = vld [vmem:[%s329 + $0x28] sm:$0xff]
        %v398 = vld [vmem:[%s329 + $0x30] sm:$0xff]
        %v399 = vld [vmem:[%s329 + $0x38] sm:$0xff]
        %v400 = vld [vmem:[%s329 + $0x40] sm:$0xff]
        %v401 = vld [vmem:[%s329 + $0x48] sm:$0xff]
        %v402 = vld [vmem:[%s329 + $0x50] sm:$0xff]
        %v403 = vld [vmem:[%s329 + $0x58] sm:$0xff]
        %v404 = vld [vmem:[%s329 + $0x60] sm:$0xff]
        %v405 = vld [vmem:[%s329 + $0x68] sm:$0xff]
        %v406 = vld [vmem:[%s329 + $0x70] sm:$0xff]
        %v407 = vld [vmem:[%s329 + $0x78] sm:$0xff]
        %v408 = vld [vmem:[%s329 + $0x80] sm:$0xff]
        %v409 = vld [vmem:[%s329 + $0x88] sm:$0xff]
        %v410 = vld [vmem:[%s329 + $0x90] sm:$0xff]
        %v411 = vld [vmem:[%s329 + $0x98] sm:$0xff]
        %v412 = vld [vmem:[%s329 + $0xa0] sm:$0xff]
        %v413 = vld [vmem:[%s329 + $0xa8] sm:$0xff]
        %v414 = vld [vmem:[%s329 + $0xb0] sm:$0xff]
        %v415 = vld [vmem:[%s329 + $0xb8] sm:$0xff]
        %v416 = vld [vmem:[%s329 + $0xc0] sm:$0xff]
        %v417 = vld [vmem:[%s329 + $0xc8] sm:$0xff]
        %v418 = vld [vmem:[%s329 + $0xd0] sm:$0xff]
        %v419 = vld [vmem:[%s329 + $0xd8] sm:$0xff]
        %v420 = vld [vmem:[%s329 + $0xe0] sm:$0xff]
        %v421 = vld [vmem:[%s329 + $0xe8] sm:$0xff]
        %v422 = vld [vmem:[%s329 + $0xf0] sm:$0xff]
        %v423 = vld [vmem:[%s329 + $0xf8] sm:$0xff]
        %s424 = scalar_lea.vmem [#allocation2], 48
        %425 = vst.msk [vmem:[%s424 + $0x2] sm:$0xff] %vm330, %v392
        %426 = vst.msk [vmem:[%s424 + $0xa] sm:$0xff] %vm330, %v393
        %427 = vst.msk [vmem:[%s424 + $0x1a] sm:$0xff] %vm330, %v394
        %428 = vst.msk [vmem:[%s424 + $0x22] sm:$0xff] %vm330, %v395
        %429 = vst.msk [vmem:[%s424 + $0x32] sm:$0xff] %vm330, %v396
        %430 = vst.msk [vmem:[%s424 + $0x3a] sm:$0xff] %vm330, %v397
        %431 = vst.msk [vmem:[%s424 + $0x4a] sm:$0xff] %vm330, %v398
        %432 = vst.msk [vmem:[%s424 + $0x52] sm:$0xff] %vm330, %v399
        %433 = vst.msk [vmem:[%s424 + $0x62] sm:$0xff] %vm330, %v400
        %434 = vst.msk [vmem:[%s424 + $0x6a] sm:$0xff] %vm330, %v401
        %435 = vst.msk [vmem:[%s424 + $0x7a] sm:$0xff] %vm330, %v402
        %436 = vst.msk [vmem:[%s424 + $0x82] sm:$0xff] %vm330, %v403
        %437 = vst.msk [vmem:[%s424 + $0x92] sm:$0xff] %vm330, %v404
        %438 = vst.msk [vmem:[%s424 + $0x9a] sm:$0xff] %vm330, %v405
        %439 = vst.msk [vmem:[%s424 + $0xaa] sm:$0xff] %vm330, %v406
        %440 = vst.msk [vmem:[%s424 + $0xb2] sm:$0xff] %vm330, %v407
        %441 = vst.msk [vmem:[%s424 + $0xc2] sm:$0xff] %vm330, %v408
        %442 = vst.msk [vmem:[%s424 + $0xca] sm:$0xff] %vm330, %v409
        %443 = vst.msk [vmem:[%s424 + $0xda] sm:$0xff] %vm330, %v410
        %444 = vst.msk [vmem:[%s424 + $0xe2] sm:$0xff] %vm330, %v411
        %445 = vst.msk [vmem:[%s424 + $0xf2] sm:$0xff] %vm330, %v412
        %446 = vst.msk [vmem:[%s424 + $0xfa] sm:$0xff] %vm330, %v413
        %447 = vst.msk [vmem:[%s424 + $0x10a] sm:$0xff] %vm330, %v414
        %448 = vst.msk [vmem:[%s424 + $0x112] sm:$0xff] %vm330, %v415
        %449 = vst.msk [vmem:[%s424 + $0x122] sm:$0xff] %vm330, %v416
        %450 = vst.msk [vmem:[%s424 + $0x12a] sm:$0xff] %vm330, %v417
        %451 = vst.msk [vmem:[%s424 + $0x13a] sm:$0xff] %vm330, %v418
        %452 = vst.msk [vmem:[%s424 + $0x142] sm:$0xff] %vm330, %v419
        %453 = vst.msk [vmem:[%s424 + $0x152] sm:$0xff] %vm330, %v420
        %454 = vst.msk [vmem:[%s424 + $0x15a] sm:$0xff] %vm330, %v421
        %455 = vst.msk [vmem:[%s424 + $0x16a] sm:$0xff] %vm330, %v422
        %456 = vst.msk [vmem:[%s424 + $0x172] sm:$0xff] %vm330, %v423
        %v457 = vld [vmem:[#allocation2] sm:$0xff]
        %v458 = vld [vmem:[#allocation2 + $0x8] sm:$0xff]
        %v459 = vld [vmem:[#allocation2 + $0x18] sm:$0xff]
        %v460 = vld [vmem:[#allocation2 + $0x20] sm:$0xff]
        %v461 = vld [vmem:[#allocation2 + $0x30] sm:$0xff]
        %v462 = vld [vmem:[#allocation2 + $0x38] sm:$0xff]
        %v463 = vld [vmem:[#allocation2 + $0x48] sm:$0xff]
        %v464 = vld [vmem:[#allocation2 + $0x50] sm:$0xff]
        %v465 = vld [vmem:[#allocation2 + $0x60] sm:$0xff]
        %v466 = vld [vmem:[#allocation2 + $0x68] sm:$0xff]
        %v467 = vld [vmem:[#allocation2 + $0x78] sm:$0xff]
        %v468 = vld [vmem:[#allocation2 + $0x80] sm:$0xff]
        %v469 = vld [vmem:[#allocation2 + $0x90] sm:$0xff]
        %v470 = vld [vmem:[#allocation2 + $0x98] sm:$0xff]
        %v471 = vld [vmem:[#allocation2 + $0xa8] sm:$0xff]
        %v472 = vld [vmem:[#allocation2 + $0xb0] sm:$0xff]
        %v473 = vld [vmem:[#allocation2 + $0xc0] sm:$0xff]
        %v474 = vld [vmem:[#allocation2 + $0xc8] sm:$0xff]
        %v475 = vld [vmem:[#allocation2 + $0xd8] sm:$0xff]
        %v476 = vld [vmem:[#allocation2 + $0xe0] sm:$0xff]
        %v477 = vld [vmem:[#allocation2 + $0xf0] sm:$0xff]
        %v478 = vld [vmem:[#allocation2 + $0xf8] sm:$0xff]
        %v479 = vld [vmem:[#allocation2 + $0x108] sm:$0xff]
        %v480 = vld [vmem:[#allocation2 + $0x110] sm:$0xff]
        %v481 = vld [vmem:[#allocation2 + $0x120] sm:$0xff]
        %v482 = vld [vmem:[#allocation2 + $0x128] sm:$0xff]
        %v483 = vld [vmem:[#allocation2 + $0x138] sm:$0xff]
        %v484 = vld [vmem:[#allocation2 + $0x140] sm:$0xff]
        %v485 = vld [vmem:[#allocation2 + $0x150] sm:$0xff]
        %v486 = vld [vmem:[#allocation2 + $0x158] sm:$0xff]
        %v487 = vld [vmem:[#allocation2 + $0x168] sm:$0xff]
        %v488 = vld [vmem:[#allocation2 + $0x170] sm:$0xff]
        %v489 = vld [vmem:[%s1] sm:$0x1]
        %491 = vset.pattern.permute.xlu0 0
        %492 = vperm.xlu0 %491, %v457
        %v493 = vpop.permute.xlu0 %492
        %496 = vset.pattern.permute.xlu0 0
        %497 = vperm.xlu0 %496, %v458
        %v498 = vpop.permute.xlu0 %497
        %501 = vset.pattern.permute.xlu0 0
        %502 = vperm.xlu0 %501, %v459
        %v503 = vpop.permute.xlu0 %502
        %506 = vset.pattern.permute.xlu0 0
        %507 = vperm.xlu0 %506, %v460
        %v508 = vpop.permute.xlu0 %507
        %511 = vset.pattern.permute.xlu0 0
        %512 = vperm.xlu0 %511, %v461
        %v513 = vpop.permute.xlu0 %512
        %516 = vset.pattern.permute.xlu0 0
        %517 = vperm.xlu0 %516, %v462
        %v518 = vpop.permute.xlu0 %517
        %521 = vset.pattern.permute.xlu0 0
        %522 = vperm.xlu0 %521, %v463
        %v523 = vpop.permute.xlu0 %522
        %526 = vset.pattern.permute.xlu0 0
        %527 = vperm.xlu0 %526, %v464
        %v528 = vpop.permute.xlu0 %527
        %531 = vset.pattern.permute.xlu0 0
        %532 = vperm.xlu0 %531, %v465
        %v533 = vpop.permute.xlu0 %532
        %536 = vset.pattern.permute.xlu0 0
        %537 = vperm.xlu0 %536, %v466
        %v538 = vpop.permute.xlu0 %537
        %541 = vset.pattern.permute.xlu0 0
        %542 = vperm.xlu0 %541, %v467
        %v543 = vpop.permute.xlu0 %542
        %546 = vset.pattern.permute.xlu0 0
        %547 = vperm.xlu0 %546, %v468
        %v548 = vpop.permute.xlu0 %547
        %551 = vset.pattern.permute.xlu0 0
        %552 = vperm.xlu0 %551, %v469
        %v553 = vpop.permute.xlu0 %552
        %556 = vset.pattern.permute.xlu0 0
        %557 = vperm.xlu0 %556, %v470
        %v558 = vpop.permute.xlu0 %557
        %561 = vset.pattern.permute.xlu0 0
        %562 = vperm.xlu0 %561, %v471
        %v563 = vpop.permute.xlu0 %562
        %566 = vset.pattern.permute.xlu0 0
        %567 = vperm.xlu0 %566, %v472
        %v568 = vpop.permute.xlu0 %567
        %571 = vset.pattern.permute.xlu0 0
        %572 = vperm.xlu0 %571, %v473
        %v573 = vpop.permute.xlu0 %572
        %576 = vset.pattern.permute.xlu0 0
        %577 = vperm.xlu0 %576, %v474
        %v578 = vpop.permute.xlu0 %577
        %581 = vset.pattern.permute.xlu0 0
        %582 = vperm.xlu0 %581, %v475
        %v583 = vpop.permute.xlu0 %582
        %586 = vset.pattern.permute.xlu0 0
        %587 = vperm.xlu0 %586, %v476
        %v588 = vpop.permute.xlu0 %587
        %591 = vset.pattern.permute.xlu0 0
        %592 = vperm.xlu0 %591, %v477
        %v593 = vpop.permute.xlu0 %592
        %596 = vset.pattern.permute.xlu0 0
        %597 = vperm.xlu0 %596, %v478
        %v598 = vpop.permute.xlu0 %597
        %601 = vset.pattern.permute.xlu0 0
        %602 = vperm.xlu0 %601, %v479
        %v603 = vpop.permute.xlu0 %602
        %606 = vset.pattern.permute.xlu0 0
        %607 = vperm.xlu0 %606, %v480
        %v608 = vpop.permute.xlu0 %607
        %611 = vset.pattern.permute.xlu0 0
        %612 = vperm.xlu0 %611, %v481
        %v613 = vpop.permute.xlu0 %612
        %616 = vset.pattern.permute.xlu0 0
        %617 = vperm.xlu0 %616, %v482
        %v618 = vpop.permute.xlu0 %617
        %621 = vset.pattern.permute.xlu0 0
        %622 = vperm.xlu0 %621, %v483
        %v623 = vpop.permute.xlu0 %622
        %626 = vset.pattern.permute.xlu0 0
        %627 = vperm.xlu0 %626, %v484
        %v628 = vpop.permute.xlu0 %627
        %631 = vset.pattern.permute.xlu0 0
        %632 = vperm.xlu0 %631, %v485
        %v633 = vpop.permute.xlu0 %632
        %636 = vset.pattern.permute.xlu0 0
        %637 = vperm.xlu0 %636, %v486
        %v638 = vpop.permute.xlu0 %637
        %641 = vset.pattern.permute.xlu0 0
        %642 = vperm.xlu0 %641, %v487
        %v643 = vpop.permute.xlu0 %642
        %646 = vset.pattern.permute.xlu0 0
        %647 = vperm.xlu0 %646, %v488
        %v648 = vpop.permute.xlu0 %647
        %v650 = vlaneseq
        %v651 = vshrl.u32 %v650, 7
        %v652 = vsub.s32 0, %v651
        %v653 = vrot.slane %v489, %v652
        %v654 = vmul.f32 %v493, %v653
        %v655 = vmul.f32 %v498, %v653
        %v656 = vmul.f32 %v503, %v653
        %v657 = vmul.f32 %v508, %v653
        %v658 = vmul.f32 %v513, %v653
        %v659 = vmul.f32 %v518, %v653
        %v660 = vmul.f32 %v523, %v653
        %v661 = vmul.f32 %v528, %v653
        %v662 = vmul.f32 %v533, %v653
        %v663 = vmul.f32 %v538, %v653
        %v664 = vmul.f32 %v543, %v653
        %v665 = vmul.f32 %v548, %v653
        %v666 = vmul.f32 %v553, %v653
        %v667 = vmul.f32 %v558, %v653
        %v668 = vmul.f32 %v563, %v653
        %v669 = vmul.f32 %v568, %v653
        %v670 = vmul.f32 %v573, %v653
        %v671 = vmul.f32 %v578, %v653
        %v672 = vmul.f32 %v583, %v653
        %v673 = vmul.f32 %v588, %v653
        %v674 = vmul.f32 %v593, %v653
        %v675 = vmul.f32 %v598, %v653
        %v676 = vmul.f32 %v603, %v653
        %v677 = vmul.f32 %v608, %v653
        %v678 = vmul.f32 %v613, %v653
        %v679 = vmul.f32 %v618, %v653
        %v680 = vmul.f32 %v623, %v653
        %v681 = vmul.f32 %v628, %v653
        %v682 = vmul.f32 %v633, %v653
        %v683 = vmul.f32 %v638, %v653
        %v684 = vmul.f32 %v643, %v653
        %v685 = vmul.f32 %v648, %v653
        %v686 = vadd.f32 %v654, 0.0
        %v687 = vadd.f32 %v655, 0.0
        %v688 = vadd.f32 %v656, 0.0
        %v689 = vadd.f32 %v657, 0.0
        %v690 = vadd.f32 %v658, 0.0
        %v691 = vadd.f32 %v659, 0.0
        %v692 = vadd.f32 %v660, 0.0
        %v693 = vadd.f32 %v661, 0.0
        %v694 = vadd.f32 %v662, 0.0
        %v695 = vadd.f32 %v663, 0.0
        %v696 = vadd.f32 %v664, 0.0
        %v697 = vadd.f32 %v665, 0.0
        %v698 = vadd.f32 %v666, 0.0
        %v699 = vadd.f32 %v667, 0.0
        %v700 = vadd.f32 %v668, 0.0
        %v701 = vadd.f32 %v669, 0.0
        %v702 = vadd.f32 %v670, 0.0
        %v703 = vadd.f32 %v671, 0.0
        %v704 = vadd.f32 %v672, 0.0
        %v705 = vadd.f32 %v673, 0.0
        %v706 = vadd.f32 %v674, 0.0
        %v707 = vadd.f32 %v675, 0.0
        %v708 = vadd.f32 %v676, 0.0
        %v709 = vadd.f32 %v677, 0.0
        %v710 = vadd.f32 %v678, 0.0
        %v711 = vadd.f32 %v679, 0.0
        %v712 = vadd.f32 %v680, 0.0
        %v713 = vadd.f32 %v681, 0.0
        %v714 = vadd.f32 %v682, 0.0
        %v715 = vadd.f32 %v683, 0.0
        %v716 = vadd.f32 %v684, 0.0
        %v717 = vadd.f32 %v685, 0.0
        %v718 = vld [vmem:[#allocation2 + $0x1] sm:$0xff]
        %v719 = vld [vmem:[#allocation2 + $0x9] sm:$0xff]
        %v720 = vld [vmem:[#allocation2 + $0x19] sm:$0xff]
        %v721 = vld [vmem:[#allocation2 + $0x21] sm:$0xff]
        %v722 = vld [vmem:[#allocation2 + $0x31] sm:$0xff]
        %v723 = vld [vmem:[#allocation2 + $0x39] sm:$0xff]
        %v724 = vld [vmem:[#allocation2 + $0x49] sm:$0xff]
        %v725 = vld [vmem:[#allocation2 + $0x51] sm:$0xff]
        %v726 = vld [vmem:[#allocation2 + $0x61] sm:$0xff]
        %v727 = vld [vmem:[#allocation2 + $0x69] sm:$0xff]
        %v728 = vld [vmem:[#allocation2 + $0x79] sm:$0xff]
        %v729 = vld [vmem:[#allocation2 + $0x81] sm:$0xff]
        %v730 = vld [vmem:[#allocation2 + $0x91] sm:$0xff]
        %v731 = vld [vmem:[#allocation2 + $0x99] sm:$0xff]
        %v732 = vld [vmem:[#allocation2 + $0xa9] sm:$0xff]
        %v733 = vld [vmem:[#allocation2 + $0xb1] sm:$0xff]
        %v734 = vld [vmem:[#allocation2 + $0xc1] sm:$0xff]
        %v735 = vld [vmem:[#allocation2 + $0xc9] sm:$0xff]
        %v736 = vld [vmem:[#allocation2 + $0xd9] sm:$0xff]
        %v737 = vld [vmem:[#allocation2 + $0xe1] sm:$0xff]
        %v738 = vld [vmem:[#allocation2 + $0xf1] sm:$0xff]
        %v739 = vld [vmem:[#allocation2 + $0xf9] sm:$0xff]
        %v740 = vld [vmem:[#allocation2 + $0x109] sm:$0xff]
        %v741 = vld [vmem:[#allocation2 + $0x111] sm:$0xff]
        %v742 = vld [vmem:[#allocation2 + $0x121] sm:$0xff]
        %v743 = vld [vmem:[#allocation2 + $0x129] sm:$0xff]
        %v744 = vld [vmem:[#allocation2 + $0x139] sm:$0xff]
        %v745 = vld [vmem:[#allocation2 + $0x141] sm:$0xff]
        %v746 = vld [vmem:[#allocation2 + $0x151] sm:$0xff]
        %v747 = vld [vmem:[#allocation2 + $0x159] sm:$0xff]
        %v748 = vld [vmem:[#allocation2 + $0x169] sm:$0xff]
        %v749 = vld [vmem:[#allocation2 + $0x171] sm:$0xff]
        %v750 = vld [vmem:[%s1 + $0x1] sm:$0x1]
        %752 = vset.pattern.permute.xlu0 0
        %753 = vperm.xlu0 %752, %v718
        %v754 = vpop.permute.xlu0 %753
        %757 = vset.pattern.permute.xlu0 0
        %758 = vperm.xlu0 %757, %v719
        %v759 = vpop.permute.xlu0 %758
        %762 = vset.pattern.permute.xlu0 0
        %763 = vperm.xlu0 %762, %v720
        %v764 = vpop.permute.xlu0 %763
        %767 = vset.pattern.permute.xlu0 0
        %768 = vperm.xlu0 %767, %v721
        %v769 = vpop.permute.xlu0 %768
        %772 = vset.pattern.permute.xlu0 0
        %773 = vperm.xlu0 %772, %v722
        %v774 = vpop.permute.xlu0 %773
        %777 = vset.pattern.permute.xlu0 0
        %778 = vperm.xlu0 %777, %v723
        %v779 = vpop.permute.xlu0 %778
        %782 = vset.pattern.permute.xlu0 0
        %783 = vperm.xlu0 %782, %v724
        %v784 = vpop.permute.xlu0 %783
        %787 = vset.pattern.permute.xlu0 0
        %788 = vperm.xlu0 %787, %v725
        %v789 = vpop.permute.xlu0 %788
        %792 = vset.pattern.permute.xlu0 0
        %793 = vperm.xlu0 %792, %v726
        %v794 = vpop.permute.xlu0 %793
        %797 = vset.pattern.permute.xlu0 0
        %798 = vperm.xlu0 %797, %v727
        %v799 = vpop.permute.xlu0 %798
        %802 = vset.pattern.permute.xlu0 0
        %803 = vperm.xlu0 %802, %v728
        %v804 = vpop.permute.xlu0 %803
        %807 = vset.pattern.permute.xlu0 0
        %808 = vperm.xlu0 %807, %v729
        %v809 = vpop.permute.xlu0 %808
        %812 = vset.pattern.permute.xlu0 0
        %813 = vperm.xlu0 %812, %v730
        %v814 = vpop.permute.xlu0 %813
        %817 = vset.pattern.permute.xlu0 0
        %818 = vperm.xlu0 %817, %v731
        %v819 = vpop.permute.xlu0 %818
        %822 = vset.pattern.permute.xlu0 0
        %823 = vperm.xlu0 %822, %v732
        %v824 = vpop.permute.xlu0 %823
        %827 = vset.pattern.permute.xlu0 0
        %828 = vperm.xlu0 %827, %v733
        %v829 = vpop.permute.xlu0 %828
        %832 = vset.pattern.permute.xlu0 0
        %833 = vperm.xlu0 %832, %v734
        %v834 = vpop.permute.xlu0 %833
        %837 = vset.pattern.permute.xlu0 0
        %838 = vperm.xlu0 %837, %v735
        %v839 = vpop.permute.xlu0 %838
        %842 = vset.pattern.permute.xlu0 0
        %843 = vperm.xlu0 %842, %v736
        %v844 = vpop.permute.xlu0 %843
        %847 = vset.pattern.permute.xlu0 0
        %848 = vperm.xlu0 %847, %v737
        %v849 = vpop.permute.xlu0 %848
        %852 = vset.pattern.permute.xlu0 0
        %853 = vperm.xlu0 %852, %v738
        %v854 = vpop.permute.xlu0 %853
        %857 = vset.pattern.permute.xlu0 0
        %858 = vperm.xlu0 %857, %v739
        %v859 = vpop.permute.xlu0 %858
        %862 = vset.pattern.permute.xlu0 0
        %863 = vperm.xlu0 %862, %v740
        %v864 = vpop.permute.xlu0 %863
        %867 = vset.pattern.permute.xlu0 0
        %868 = vperm.xlu0 %867, %v741
        %v869 = vpop.permute.xlu0 %868
        %872 = vset.pattern.permute.xlu0 0
        %873 = vperm.xlu0 %872, %v742
        %v874 = vpop.permute.xlu0 %873
        %877 = vset.pattern.permute.xlu0 0
        %878 = vperm.xlu0 %877, %v743
        %v879 = vpop.permute.xlu0 %878
        %882 = vset.pattern.permute.xlu0 0
        %883 = vperm.xlu0 %882, %v744
        %v884 = vpop.permute.xlu0 %883
        %887 = vset.pattern.permute.xlu0 0
        %888 = vperm.xlu0 %887, %v745
        %v889 = vpop.permute.xlu0 %888
        %892 = vset.pattern.permute.xlu0 0
        %893 = vperm.xlu0 %892, %v746
        %v894 = vpop.permute.xlu0 %893
        %897 = vset.pattern.permute.xlu0 0
        %898 = vperm.xlu0 %897, %v747
        %v899 = vpop.permute.xlu0 %898
        %902 = vset.pattern.permute.xlu0 0
        %903 = vperm.xlu0 %902, %v748
        %v904 = vpop.permute.xlu0 %903
        %907 = vset.pattern.permute.xlu0 0
        %908 = vperm.xlu0 %907, %v749
        %v909 = vpop.permute.xlu0 %908
        %v911 = vlaneseq
        %v912 = vshrl.u32 %v911, 7
        %v913 = vsub.s32 0, %v912
        %v914 = vrot.slane %v750, %v913
        %v915 = vmul.f32 %v754, %v914
        %v916 = vmul.f32 %v759, %v914
        %v917 = vmul.f32 %v764, %v914
        %v918 = vmul.f32 %v769, %v914
        %v919 = vmul.f32 %v774, %v914
        %v920 = vmul.f32 %v779, %v914
        %v921 = vmul.f32 %v784, %v914
        %v922 = vmul.f32 %v789, %v914
        %v923 = vmul.f32 %v794, %v914
        %v924 = vmul.f32 %v799, %v914
        %v925 = vmul.f32 %v804, %v914
        %v926 = vmul.f32 %v809, %v914
        %v927 = vmul.f32 %v814, %v914
        %v928 = vmul.f32 %v819, %v914
        %v929 = vmul.f32 %v824, %v914
        %v930 = vmul.f32 %v829, %v914
        %v931 = vmul.f32 %v834, %v914
        %v932 = vmul.f32 %v839, %v914
        %v933 = vmul.f32 %v844, %v914
        %v934 = vmul.f32 %v849, %v914
        %v935 = vmul.f32 %v854, %v914
        %v936 = vmul.f32 %v859, %v914
        %v937 = vmul.f32 %v864, %v914
        %v938 = vmul.f32 %v869, %v914
        %v939 = vmul.f32 %v874, %v914
        %v940 = vmul.f32 %v879, %v914
        %v941 = vmul.f32 %v884, %v914
        %v942 = vmul.f32 %v889, %v914
        %v943 = vmul.f32 %v894, %v914
        %v944 = vmul.f32 %v899, %v914
        %v945 = vmul.f32 %v904, %v914
        %v946 = vmul.f32 %v909, %v914
        %v947 = vadd.f32 %v686, %v915
        %v948 = vadd.f32 %v687, %v916
        %v949 = vadd.f32 %v688, %v917
        %v950 = vadd.f32 %v689, %v918
        %v951 = vadd.f32 %v690, %v919
        %v952 = vadd.f32 %v691, %v920
        %v953 = vadd.f32 %v692, %v921
        %v954 = vadd.f32 %v693, %v922
        %v955 = vadd.f32 %v694, %v923
        %v956 = vadd.f32 %v695, %v924
        %v957 = vadd.f32 %v696, %v925
        %v958 = vadd.f32 %v697, %v926
        %v959 = vadd.f32 %v698, %v927
        %v960 = vadd.f32 %v699, %v928
        %v961 = vadd.f32 %v700, %v929
        %v962 = vadd.f32 %v701, %v930
        %v963 = vadd.f32 %v702, %v931
        %v964 = vadd.f32 %v703, %v932
        %v965 = vadd.f32 %v704, %v933
        %v966 = vadd.f32 %v705, %v934
        %v967 = vadd.f32 %v706, %v935
        %v968 = vadd.f32 %v707, %v936
        %v969 = vadd.f32 %v708, %v937
        %v970 = vadd.f32 %v709, %v938
        %v971 = vadd.f32 %v710, %v939
        %v972 = vadd.f32 %v711, %v940
        %v973 = vadd.f32 %v712, %v941
        %v974 = vadd.f32 %v713, %v942
        %v975 = vadd.f32 %v714, %v943
        %v976 = vadd.f32 %v715, %v944
        %v977 = vadd.f32 %v716, %v945
        %v978 = vadd.f32 %v717, %v946
        %v979 = vld [vmem:[#allocation2 + $0x2] sm:$0xff]
        %v980 = vld [vmem:[#allocation2 + $0xa] sm:$0xff]
        %v981 = vld [vmem:[#allocation2 + $0x1a] sm:$0xff]
        %v982 = vld [vmem:[#allocation2 + $0x22] sm:$0xff]
        %v983 = vld [vmem:[#allocation2 + $0x32] sm:$0xff]
        %v984 = vld [vmem:[#allocation2 + $0x3a] sm:$0xff]
        %v985 = vld [vmem:[#allocation2 + $0x4a] sm:$0xff]
        %v986 = vld [vmem:[#allocation2 + $0x52] sm:$0xff]
        %v987 = vld [vmem:[#allocation2 + $0x62] sm:$0xff]
        %v988 = vld [vmem:[#allocation2 + $0x6a] sm:$0xff]
        %v989 = vld [vmem:[#allocation2 + $0x7a] sm:$0xff]
        %v990 = vld [vmem:[#allocation2 + $0x82] sm:$0xff]
        %v991 = vld [vmem:[#allocation2 + $0x92] sm:$0xff]
        %v992 = vld [vmem:[#allocation2 + $0x9a] sm:$0xff]
        %v993 = vld [vmem:[#allocation2 + $0xaa] sm:$0xff]
        %v994 = vld [vmem:[#allocation2 + $0xb2] sm:$0xff]
        %v995 = vld [vmem:[#allocation2 + $0xc2] sm:$0xff]
        %v996 = vld [vmem:[#allocation2 + $0xca] sm:$0xff]
        %v997 = vld [vmem:[#allocation2 + $0xda] sm:$0xff]
        %v998 = vld [vmem:[#allocation2 + $0xe2] sm:$0xff]
        %v999 = vld [vmem:[#allocation2 + $0xf2] sm:$0xff]
        %v1000 = vld [vmem:[#allocation2 + $0xfa] sm:$0xff]
        %v1001 = vld [vmem:[#allocation2 + $0x10a] sm:$0xff]
        %v1002 = vld [vmem:[#allocation2 + $0x112] sm:$0xff]
        %v1003 = vld [vmem:[#allocation2 + $0x122] sm:$0xff]
        %v1004 = vld [vmem:[#allocation2 + $0x12a] sm:$0xff]
        %v1005 = vld [vmem:[#allocation2 + $0x13a] sm:$0xff]
        %v1006 = vld [vmem:[#allocation2 + $0x142] sm:$0xff]
        %v1007 = vld [vmem:[#allocation2 + $0x152] sm:$0xff]
        %v1008 = vld [vmem:[#allocation2 + $0x15a] sm:$0xff]
        %v1009 = vld [vmem:[#allocation2 + $0x16a] sm:$0xff]
        %v1010 = vld [vmem:[#allocation2 + $0x172] sm:$0xff]
        %v1011 = vld [vmem:[%s1 + $0x2] sm:$0x1]
        %1013 = vset.pattern.permute.xlu0 0
        %1014 = vperm.xlu0 %1013, %v979
        %v1015 = vpop.permute.xlu0 %1014
        %1018 = vset.pattern.permute.xlu0 0
        %1019 = vperm.xlu0 %1018, %v980
        %v1020 = vpop.permute.xlu0 %1019
        %1023 = vset.pattern.permute.xlu0 0
        %1024 = vperm.xlu0 %1023, %v981
        %v1025 = vpop.permute.xlu0 %1024
        %1028 = vset.pattern.permute.xlu0 0
        %1029 = vperm.xlu0 %1028, %v982
        %v1030 = vpop.permute.xlu0 %1029
        %1033 = vset.pattern.permute.xlu0 0
        %1034 = vperm.xlu0 %1033, %v983
        %v1035 = vpop.permute.xlu0 %1034
        %1038 = vset.pattern.permute.xlu0 0
        %1039 = vperm.xlu0 %1038, %v984
        %v1040 = vpop.permute.xlu0 %1039
        %1043 = vset.pattern.permute.xlu0 0
        %1044 = vperm.xlu0 %1043, %v985
        %v1045 = vpop.permute.xlu0 %1044
        %1048 = vset.pattern.permute.xlu0 0
        %1049 = vperm.xlu0 %1048, %v986
        %v1050 = vpop.permute.xlu0 %1049
        %1053 = vset.pattern.permute.xlu0 0
        %1054 = vperm.xlu0 %1053, %v987
        %v1055 = vpop.permute.xlu0 %1054
        %1058 = vset.pattern.permute.xlu0 0
        %1059 = vperm.xlu0 %1058, %v988
        %v1060 = vpop.permute.xlu0 %1059
        %1063 = vset.pattern.permute.xlu0 0
        %1064 = vperm.xlu0 %1063, %v989
        %v1065 = vpop.permute.xlu0 %1064
        %1068 = vset.pattern.permute.xlu0 0
        %1069 = vperm.xlu0 %1068, %v990
        %v1070 = vpop.permute.xlu0 %1069
        %1073 = vset.pattern.permute.xlu0 0
        %1074 = vperm.xlu0 %1073, %v991
        %v1075 = vpop.permute.xlu0 %1074
        %1078 = vset.pattern.permute.xlu0 0
        %1079 = vperm.xlu0 %1078, %v992
        %v1080 = vpop.permute.xlu0 %1079
        %1083 = vset.pattern.permute.xlu0 0
        %1084 = vperm.xlu0 %1083, %v993
        %v1085 = vpop.permute.xlu0 %1084
        %1088 = vset.pattern.permute.xlu0 0
        %1089 = vperm.xlu0 %1088, %v994
        %v1090 = vpop.permute.xlu0 %1089
        %1093 = vset.pattern.permute.xlu0 0
        %1094 = vperm.xlu0 %1093, %v995
        %v1095 = vpop.permute.xlu0 %1094
        %1098 = vset.pattern.permute.xlu0 0
        %1099 = vperm.xlu0 %1098, %v996
        %v1100 = vpop.permute.xlu0 %1099
        %1103 = vset.pattern.permute.xlu0 0
        %1104 = vperm.xlu0 %1103, %v997
        %v1105 = vpop.permute.xlu0 %1104
        %1108 = vset.pattern.permute.xlu0 0
        %1109 = vperm.xlu0 %1108, %v998
        %v1110 = vpop.permute.xlu0 %1109
        %1113 = vset.pattern.permute.xlu0 0
        %1114 = vperm.xlu0 %1113, %v999
        %v1115 = vpop.permute.xlu0 %1114
        %1118 = vset.pattern.permute.xlu0 0
        %1119 = vperm.xlu0 %1118, %v1000
        %v1120 = vpop.permute.xlu0 %1119
        %1123 = vset.pattern.permute.xlu0 0
        %1124 = vperm.xlu0 %1123, %v1001
        %v1125 = vpop.permute.xlu0 %1124
        %1128 = vset.pattern.permute.xlu0 0
        %1129 = vperm.xlu0 %1128, %v1002
        %v1130 = vpop.permute.xlu0 %1129
        %1133 = vset.pattern.permute.xlu0 0
        %1134 = vperm.xlu0 %1133, %v1003
        %v1135 = vpop.permute.xlu0 %1134
        %1138 = vset.pattern.permute.xlu0 0
        %1139 = vperm.xlu0 %1138, %v1004
        %v1140 = vpop.permute.xlu0 %1139
        %1143 = vset.pattern.permute.xlu0 0
        %1144 = vperm.xlu0 %1143, %v1005
        %v1145 = vpop.permute.xlu0 %1144
        %1148 = vset.pattern.permute.xlu0 0
        %1149 = vperm.xlu0 %1148, %v1006
        %v1150 = vpop.permute.xlu0 %1149
        %1153 = vset.pattern.permute.xlu0 0
        %1154 = vperm.xlu0 %1153, %v1007
        %v1155 = vpop.permute.xlu0 %1154
        %1158 = vset.pattern.permute.xlu0 0
        %1159 = vperm.xlu0 %1158, %v1008
        %v1160 = vpop.permute.xlu0 %1159
        %1163 = vset.pattern.permute.xlu0 0
        %1164 = vperm.xlu0 %1163, %v1009
        %v1165 = vpop.permute.xlu0 %1164
        %1168 = vset.pattern.permute.xlu0 0
        %1169 = vperm.xlu0 %1168, %v1010
        %v1170 = vpop.permute.xlu0 %1169
        %v1172 = vlaneseq
        %v1173 = vshrl.u32 %v1172, 7
        %v1174 = vsub.s32 0, %v1173
        %v1175 = vrot.slane %v1011, %v1174
        %v1176 = vmul.f32 %v1015, %v1175
        %v1177 = vmul.f32 %v1020, %v1175
        %v1178 = vmul.f32 %v1025, %v1175
        %v1179 = vmul.f32 %v1030, %v1175
        %v1180 = vmul.f32 %v1035, %v1175
        %v1181 = vmul.f32 %v1040, %v1175
        %v1182 = vmul.f32 %v1045, %v1175
        %v1183 = vmul.f32 %v1050, %v1175
        %v1184 = vmul.f32 %v1055, %v1175
        %v1185 = vmul.f32 %v1060, %v1175
        %v1186 = vmul.f32 %v1065, %v1175
        %v1187 = vmul.f32 %v1070, %v1175
        %v1188 = vmul.f32 %v1075, %v1175
        %v1189 = vmul.f32 %v1080, %v1175
        %v1190 = vmul.f32 %v1085, %v1175
        %v1191 = vmul.f32 %v1090, %v1175
        %v1192 = vmul.f32 %v1095, %v1175
        %v1193 = vmul.f32 %v1100, %v1175
        %v1194 = vmul.f32 %v1105, %v1175
        %v1195 = vmul.f32 %v1110, %v1175
        %v1196 = vmul.f32 %v1115, %v1175
        %v1197 = vmul.f32 %v1120, %v1175
        %v1198 = vmul.f32 %v1125, %v1175
        %v1199 = vmul.f32 %v1130, %v1175
        %v1200 = vmul.f32 %v1135, %v1175
        %v1201 = vmul.f32 %v1140, %v1175
        %v1202 = vmul.f32 %v1145, %v1175
        %v1203 = vmul.f32 %v1150, %v1175
        %v1204 = vmul.f32 %v1155, %v1175
        %v1205 = vmul.f32 %v1160, %v1175
        %v1206 = vmul.f32 %v1165, %v1175
        %v1207 = vmul.f32 %v1170, %v1175
        %v1208 = vadd.f32 %v947, %v1176
        %v1209 = vadd.f32 %v948, %v1177
        %v1210 = vadd.f32 %v949, %v1178
        %v1211 = vadd.f32 %v950, %v1179
        %v1212 = vadd.f32 %v951, %v1180
        %v1213 = vadd.f32 %v952, %v1181
        %v1214 = vadd.f32 %v953, %v1182
        %v1215 = vadd.f32 %v954, %v1183
        %v1216 = vadd.f32 %v955, %v1184
        %v1217 = vadd.f32 %v956, %v1185
        %v1218 = vadd.f32 %v957, %v1186
        %v1219 = vadd.f32 %v958, %v1187
        %v1220 = vadd.f32 %v959, %v1188
        %v1221 = vadd.f32 %v960, %v1189
        %v1222 = vadd.f32 %v961, %v1190
        %v1223 = vadd.f32 %v962, %v1191
        %v1224 = vadd.f32 %v963, %v1192
        %v1225 = vadd.f32 %v964, %v1193
        %v1226 = vadd.f32 %v965, %v1194
        %v1227 = vadd.f32 %v966, %v1195
        %v1228 = vadd.f32 %v967, %v1196
        %v1229 = vadd.f32 %v968, %v1197
        %v1230 = vadd.f32 %v969, %v1198
        %v1231 = vadd.f32 %v970, %v1199
        %v1232 = vadd.f32 %v971, %v1200
        %v1233 = vadd.f32 %v972, %v1201
        %v1234 = vadd.f32 %v973, %v1202
        %v1235 = vadd.f32 %v974, %v1203
        %v1236 = vadd.f32 %v975, %v1204
        %v1237 = vadd.f32 %v976, %v1205
        %v1238 = vadd.f32 %v977, %v1206
        %v1239 = vadd.f32 %v978, %v1207
        %v1240 = vld [vmem:[#allocation2 + $0x3] sm:$0xff]
        %v1241 = vld [vmem:[#allocation2 + $0xb] sm:$0xff]
        %v1242 = vld [vmem:[#allocation2 + $0x1b] sm:$0xff]
        %v1243 = vld [vmem:[#allocation2 + $0x23] sm:$0xff]
        %v1244 = vld [vmem:[#allocation2 + $0x33] sm:$0xff]
        %v1245 = vld [vmem:[#allocation2 + $0x3b] sm:$0xff]
        %v1246 = vld [vmem:[#allocation2 + $0x4b] sm:$0xff]
        %v1247 = vld [vmem:[#allocation2 + $0x53] sm:$0xff]
        %v1248 = vld [vmem:[#allocation2 + $0x63] sm:$0xff]
        %v1249 = vld [vmem:[#allocation2 + $0x6b] sm:$0xff]
        %v1250 = vld [vmem:[#allocation2 + $0x7b] sm:$0xff]
        %v1251 = vld [vmem:[#allocation2 + $0x83] sm:$0xff]
        %v1252 = vld [vmem:[#allocation2 + $0x93] sm:$0xff]
        %v1253 = vld [vmem:[#allocation2 + $0x9b] sm:$0xff]
        %v1254 = vld [vmem:[#allocation2 + $0xab] sm:$0xff]
        %v1255 = vld [vmem:[#allocation2 + $0xb3] sm:$0xff]
        %v1256 = vld [vmem:[#allocation2 + $0xc3] sm:$0xff]
        %v1257 = vld [vmem:[#allocation2 + $0xcb] sm:$0xff]
        %v1258 = vld [vmem:[#allocation2 + $0xdb] sm:$0xff]
        %v1259 = vld [vmem:[#allocation2 + $0xe3] sm:$0xff]
        %v1260 = vld [vmem:[#allocation2 + $0xf3] sm:$0xff]
        %v1261 = vld [vmem:[#allocation2 + $0xfb] sm:$0xff]
        %v1262 = vld [vmem:[#allocation2 + $0x10b] sm:$0xff]
        %v1263 = vld [vmem:[#allocation2 + $0x113] sm:$0xff]
        %v1264 = vld [vmem:[#allocation2 + $0x123] sm:$0xff]
        %v1265 = vld [vmem:[#allocation2 + $0x12b] sm:$0xff]
        %v1266 = vld [vmem:[#allocation2 + $0x13b] sm:$0xff]
        %v1267 = vld [vmem:[#allocation2 + $0x143] sm:$0xff]
        %v1268 = vld [vmem:[#allocation2 + $0x153] sm:$0xff]
        %v1269 = vld [vmem:[#allocation2 + $0x15b] sm:$0xff]
        %v1270 = vld [vmem:[#allocation2 + $0x16b] sm:$0xff]
        %v1271 = vld [vmem:[#allocation2 + $0x173] sm:$0xff]
        %v1272 = vld [vmem:[%s1 + $0x3] sm:$0x1]
        %1274 = vset.pattern.permute.xlu0 0
        %1275 = vperm.xlu0 %1274, %v1240
        %v1276 = vpop.permute.xlu0 %1275
        %1279 = vset.pattern.permute.xlu0 0
        %1280 = vperm.xlu0 %1279, %v1241
        %v1281 = vpop.permute.xlu0 %1280
        %1284 = vset.pattern.permute.xlu0 0
        %1285 = vperm.xlu0 %1284, %v1242
        %v1286 = vpop.permute.xlu0 %1285
        %1289 = vset.pattern.permute.xlu0 0
        %1290 = vperm.xlu0 %1289, %v1243
        %v1291 = vpop.permute.xlu0 %1290
        %1294 = vset.pattern.permute.xlu0 0
        %1295 = vperm.xlu0 %1294, %v1244
        %v1296 = vpop.permute.xlu0 %1295
        %1299 = vset.pattern.permute.xlu0 0
        %1300 = vperm.xlu0 %1299, %v1245
        %v1301 = vpop.permute.xlu0 %1300
        %1304 = vset.pattern.permute.xlu0 0
        %1305 = vperm.xlu0 %1304, %v1246
        %v1306 = vpop.permute.xlu0 %1305
        %1309 = vset.pattern.permute.xlu0 0
        %1310 = vperm.xlu0 %1309, %v1247
        %v1311 = vpop.permute.xlu0 %1310
        %1314 = vset.pattern.permute.xlu0 0
        %1315 = vperm.xlu0 %1314, %v1248
        %v1316 = vpop.permute.xlu0 %1315
        %1319 = vset.pattern.permute.xlu0 0
        %1320 = vperm.xlu0 %1319, %v1249
        %v1321 = vpop.permute.xlu0 %1320
        %1324 = vset.pattern.permute.xlu0 0
        %1325 = vperm.xlu0 %1324, %v1250
        %v1326 = vpop.permute.xlu0 %1325
        %1329 = vset.pattern.permute.xlu0 0
        %1330 = vperm.xlu0 %1329, %v1251
        %v1331 = vpop.permute.xlu0 %1330
        %1334 = vset.pattern.permute.xlu0 0
        %1335 = vperm.xlu0 %1334, %v1252
        %v1336 = vpop.permute.xlu0 %1335
        %1339 = vset.pattern.permute.xlu0 0
        %1340 = vperm.xlu0 %1339, %v1253
        %v1341 = vpop.permute.xlu0 %1340
        %1344 = vset.pattern.permute.xlu0 0
        %1345 = vperm.xlu0 %1344, %v1254
        %v1346 = vpop.permute.xlu0 %1345
        %1349 = vset.pattern.permute.xlu0 0
        %1350 = vperm.xlu0 %1349, %v1255
        %v1351 = vpop.permute.xlu0 %1350
        %1354 = vset.pattern.permute.xlu0 0
        %1355 = vperm.xlu0 %1354, %v1256
        %v1356 = vpop.permute.xlu0 %1355
        %1359 = vset.pattern.permute.xlu0 0
        %1360 = vperm.xlu0 %1359, %v1257
        %v1361 = vpop.permute.xlu0 %1360
        %1364 = vset.pattern.permute.xlu0 0
        %1365 = vperm.xlu0 %1364, %v1258
        %v1366 = vpop.permute.xlu0 %1365
        %1369 = vset.pattern.permute.xlu0 0
        %1370 = vperm.xlu0 %1369, %v1259
        %v1371 = vpop.permute.xlu0 %1370
        %1374 = vset.pattern.permute.xlu0 0
        %1375 = vperm.xlu0 %1374, %v1260
        %v1376 = vpop.permute.xlu0 %1375
        %1379 = vset.pattern.permute.xlu0 0
        %1380 = vperm.xlu0 %1379, %v1261
        %v1381 = vpop.permute.xlu0 %1380
        %1384 = vset.pattern.permute.xlu0 0
        %1385 = vperm.xlu0 %1384, %v1262
        %v1386 = vpop.permute.xlu0 %1385
        %1389 = vset.pattern.permute.xlu0 0
        %1390 = vperm.xlu0 %1389, %v1263
        %v1391 = vpop.permute.xlu0 %1390
        %1394 = vset.pattern.permute.xlu0 0
        %1395 = vperm.xlu0 %1394, %v1264
        %v1396 = vpop.permute.xlu0 %1395
        %1399 = vset.pattern.permute.xlu0 0
        %1400 = vperm.xlu0 %1399, %v1265
        %v1401 = vpop.permute.xlu0 %1400
        %1404 = vset.pattern.permute.xlu0 0
        %1405 = vperm.xlu0 %1404, %v1266
        %v1406 = vpop.permute.xlu0 %1405
        %1409 = vset.pattern.permute.xlu0 0
        %1410 = vperm.xlu0 %1409, %v1267
        %v1411 = vpop.permute.xlu0 %1410
        %1414 = vset.pattern.permute.xlu0 0
        %1415 = vperm.xlu0 %1414, %v1268
        %v1416 = vpop.permute.xlu0 %1415
        %1419 = vset.pattern.permute.xlu0 0
        %1420 = vperm.xlu0 %1419, %v1269
        %v1421 = vpop.permute.xlu0 %1420
        %1424 = vset.pattern.permute.xlu0 0
        %1425 = vperm.xlu0 %1424, %v1270
        %v1426 = vpop.permute.xlu0 %1425
        %1429 = vset.pattern.permute.xlu0 0
        %1430 = vperm.xlu0 %1429, %v1271
        %v1431 = vpop.permute.xlu0 %1430
        %v1433 = vlaneseq
        %v1434 = vshrl.u32 %v1433, 7
        %v1435 = vsub.s32 0, %v1434
        %v1436 = vrot.slane %v1272, %v1435
        %v1437 = vmul.f32 %v1276, %v1436
        %v1438 = vmul.f32 %v1281, %v1436
        %v1439 = vmul.f32 %v1286, %v1436
        %v1440 = vmul.f32 %v1291, %v1436
        %v1441 = vmul.f32 %v1296, %v1436
        %v1442 = vmul.f32 %v1301, %v1436
        %v1443 = vmul.f32 %v1306, %v1436
        %v1444 = vmul.f32 %v1311, %v1436
        %v1445 = vmul.f32 %v1316, %v1436
        %v1446 = vmul.f32 %v1321, %v1436
        %v1447 = vmul.f32 %v1326, %v1436
        %v1448 = vmul.f32 %v1331, %v1436
        %v1449 = vmul.f32 %v1336, %v1436
        %v1450 = vmul.f32 %v1341, %v1436
        %v1451 = vmul.f32 %v1346, %v1436
        %v1452 = vmul.f32 %v1351, %v1436
        %v1453 = vmul.f32 %v1356, %v1436
        %v1454 = vmul.f32 %v1361, %v1436
        %v1455 = vmul.f32 %v1366, %v1436
        %v1456 = vmul.f32 %v1371, %v1436
        %v1457 = vmul.f32 %v1376, %v1436
        %v1458 = vmul.f32 %v1381, %v1436
        %v1459 = vmul.f32 %v1386, %v1436
        %v1460 = vmul.f32 %v1391, %v1436
        %v1461 = vmul.f32 %v1396, %v1436
        %v1462 = vmul.f32 %v1401, %v1436
        %v1463 = vmul.f32 %v1406, %v1436
        %v1464 = vmul.f32 %v1411, %v1436
        %v1465 = vmul.f32 %v1416, %v1436
        %v1466 = vmul.f32 %v1421, %v1436
        %v1467 = vmul.f32 %v1426, %v1436
        %v1468 = vmul.f32 %v1431, %v1436
        %v1469 = vadd.f32 %v1208, %v1437
        %v1470 = vadd.f32 %v1209, %v1438
        %v1471 = vadd.f32 %v1210, %v1439
        %v1472 = vadd.f32 %v1211, %v1440
        %v1473 = vadd.f32 %v1212, %v1441
        %v1474 = vadd.f32 %v1213, %v1442
        %v1475 = vadd.f32 %v1214, %v1443
        %v1476 = vadd.f32 %v1215, %v1444
        %v1477 = vadd.f32 %v1216, %v1445
        %v1478 = vadd.f32 %v1217, %v1446
        %v1479 = vadd.f32 %v1218, %v1447
        %v1480 = vadd.f32 %v1219, %v1448
        %v1481 = vadd.f32 %v1220, %v1449
        %v1482 = vadd.f32 %v1221, %v1450
        %v1483 = vadd.f32 %v1222, %v1451
        %v1484 = vadd.f32 %v1223, %v1452
        %v1485 = vadd.f32 %v1224, %v1453
        %v1486 = vadd.f32 %v1225, %v1454
        %v1487 = vadd.f32 %v1226, %v1455
        %v1488 = vadd.f32 %v1227, %v1456
        %v1489 = vadd.f32 %v1228, %v1457
        %v1490 = vadd.f32 %v1229, %v1458
        %v1491 = vadd.f32 %v1230, %v1459
        %v1492 = vadd.f32 %v1231, %v1460
        %v1493 = vadd.f32 %v1232, %v1461
        %v1494 = vadd.f32 %v1233, %v1462
        %v1495 = vadd.f32 %v1234, %v1463
        %v1496 = vadd.f32 %v1235, %v1464
        %v1497 = vadd.f32 %v1236, %v1465
        %v1498 = vadd.f32 %v1237, %v1466
        %v1499 = vadd.f32 %v1238, %v1467
        %v1500 = vadd.f32 %v1239, %v1468
        %v1501 = vld [vmem:[#allocation2 + $0x4] sm:$0xff]
        %v1502 = vld [vmem:[#allocation2 + $0xc] sm:$0xff]
        %v1503 = vld [vmem:[#allocation2 + $0x1c] sm:$0xff]
        %v1504 = vld [vmem:[#allocation2 + $0x24] sm:$0xff]
        %v1505 = vld [vmem:[#allocation2 + $0x34] sm:$0xff]
        %v1506 = vld [vmem:[#allocation2 + $0x3c] sm:$0xff]
        %v1507 = vld [vmem:[#allocation2 + $0x4c] sm:$0xff]
        %v1508 = vld [vmem:[#allocation2 + $0x54] sm:$0xff]
        %v1509 = vld [vmem:[#allocation2 + $0x64] sm:$0xff]
        %v1510 = vld [vmem:[#allocation2 + $0x6c] sm:$0xff]
        %v1511 = vld [vmem:[#allocation2 + $0x7c] sm:$0xff]
        %v1512 = vld [vmem:[#allocation2 + $0x84] sm:$0xff]
        %v1513 = vld [vmem:[#allocation2 + $0x94] sm:$0xff]
        %v1514 = vld [vmem:[#allocation2 + $0x9c] sm:$0xff]
        %v1515 = vld [vmem:[#allocation2 + $0xac] sm:$0xff]
        %v1516 = vld [vmem:[#allocation2 + $0xb4] sm:$0xff]
        %v1517 = vld [vmem:[#allocation2 + $0xc4] sm:$0xff]
        %v1518 = vld [vmem:[#allocation2 + $0xcc] sm:$0xff]
        %v1519 = vld [vmem:[#allocation2 + $0xdc] sm:$0xff]
        %v1520 = vld [vmem:[#allocation2 + $0xe4] sm:$0xff]
        %v1521 = vld [vmem:[#allocation2 + $0xf4] sm:$0xff]
        %v1522 = vld [vmem:[#allocation2 + $0xfc] sm:$0xff]
        %v1523 = vld [vmem:[#allocation2 + $0x10c] sm:$0xff]
        %v1524 = vld [vmem:[#allocation2 + $0x114] sm:$0xff]
        %v1525 = vld [vmem:[#allocation2 + $0x124] sm:$0xff]
        %v1526 = vld [vmem:[#allocation2 + $0x12c] sm:$0xff]
        %v1527 = vld [vmem:[#allocation2 + $0x13c] sm:$0xff]
        %v1528 = vld [vmem:[#allocation2 + $0x144] sm:$0xff]
        %v1529 = vld [vmem:[#allocation2 + $0x154] sm:$0xff]
        %v1530 = vld [vmem:[#allocation2 + $0x15c] sm:$0xff]
        %v1531 = vld [vmem:[#allocation2 + $0x16c] sm:$0xff]
        %v1532 = vld [vmem:[#allocation2 + $0x174] sm:$0xff]
        %v1533 = vld [vmem:[%s1 + $0x4] sm:$0x1]
        %1535 = vset.pattern.permute.xlu0 0
        %1536 = vperm.xlu0 %1535, %v1501
        %v1537 = vpop.permute.xlu0 %1536
        %1540 = vset.pattern.permute.xlu0 0
        %1541 = vperm.xlu0 %1540, %v1502
        %v1542 = vpop.permute.xlu0 %1541
        %1545 = vset.pattern.permute.xlu0 0
        %1546 = vperm.xlu0 %1545, %v1503
        %v1547 = vpop.permute.xlu0 %1546
        %1550 = vset.pattern.permute.xlu0 0
        %1551 = vperm.xlu0 %1550, %v1504
        %v1552 = vpop.permute.xlu0 %1551
        %1555 = vset.pattern.permute.xlu0 0
        %1556 = vperm.xlu0 %1555, %v1505
        %v1557 = vpop.permute.xlu0 %1556
        %1560 = vset.pattern.permute.xlu0 0
        %1561 = vperm.xlu0 %1560, %v1506
        %v1562 = vpop.permute.xlu0 %1561
        %1565 = vset.pattern.permute.xlu0 0
        %1566 = vperm.xlu0 %1565, %v1507
        %v1567 = vpop.permute.xlu0 %1566
        %1570 = vset.pattern.permute.xlu0 0
        %1571 = vperm.xlu0 %1570, %v1508
        %v1572 = vpop.permute.xlu0 %1571
        %1575 = vset.pattern.permute.xlu0 0
        %1576 = vperm.xlu0 %1575, %v1509
        %v1577 = vpop.permute.xlu0 %1576
        %1580 = vset.pattern.permute.xlu0 0
        %1581 = vperm.xlu0 %1580, %v1510
        %v1582 = vpop.permute.xlu0 %1581
        %1585 = vset.pattern.permute.xlu0 0
        %1586 = vperm.xlu0 %1585, %v1511
        %v1587 = vpop.permute.xlu0 %1586
        %1590 = vset.pattern.permute.xlu0 0
        %1591 = vperm.xlu0 %1590, %v1512
        %v1592 = vpop.permute.xlu0 %1591
        %1595 = vset.pattern.permute.xlu0 0
        %1596 = vperm.xlu0 %1595, %v1513
        %v1597 = vpop.permute.xlu0 %1596
        %1600 = vset.pattern.permute.xlu0 0
        %1601 = vperm.xlu0 %1600, %v1514
        %v1602 = vpop.permute.xlu0 %1601
        %1605 = vset.pattern.permute.xlu0 0
        %1606 = vperm.xlu0 %1605, %v1515
        %v1607 = vpop.permute.xlu0 %1606
        %1610 = vset.pattern.permute.xlu0 0
        %1611 = vperm.xlu0 %1610, %v1516
        %v1612 = vpop.permute.xlu0 %1611
        %1615 = vset.pattern.permute.xlu0 0
        %1616 = vperm.xlu0 %1615, %v1517
        %v1617 = vpop.permute.xlu0 %1616
        %1620 = vset.pattern.permute.xlu0 0
        %1621 = vperm.xlu0 %1620, %v1518
        %v1622 = vpop.permute.xlu0 %1621
        %1625 = vset.pattern.permute.xlu0 0
        %1626 = vperm.xlu0 %1625, %v1519
        %v1627 = vpop.permute.xlu0 %1626
        %1630 = vset.pattern.permute.xlu0 0
        %1631 = vperm.xlu0 %1630, %v1520
        %v1632 = vpop.permute.xlu0 %1631
        %1635 = vset.pattern.permute.xlu0 0
        %1636 = vperm.xlu0 %1635, %v1521
        %v1637 = vpop.permute.xlu0 %1636
        %1640 = vset.pattern.permute.xlu0 0
        %1641 = vperm.xlu0 %1640, %v1522
        %v1642 = vpop.permute.xlu0 %1641
        %1645 = vset.pattern.permute.xlu0 0
        %1646 = vperm.xlu0 %1645, %v1523
        %v1647 = vpop.permute.xlu0 %1646
        %1650 = vset.pattern.permute.xlu0 0
        %1651 = vperm.xlu0 %1650, %v1524
        %v1652 = vpop.permute.xlu0 %1651
        %1655 = vset.pattern.permute.xlu0 0
        %1656 = vperm.xlu0 %1655, %v1525
        %v1657 = vpop.permute.xlu0 %1656
        %1660 = vset.pattern.permute.xlu0 0
        %1661 = vperm.xlu0 %1660, %v1526
        %v1662 = vpop.permute.xlu0 %1661
        %1665 = vset.pattern.permute.xlu0 0
        %1666 = vperm.xlu0 %1665, %v1527
        %v1667 = vpop.permute.xlu0 %1666
        %1670 = vset.pattern.permute.xlu0 0
        %1671 = vperm.xlu0 %1670, %v1528
        %v1672 = vpop.permute.xlu0 %1671
        %1675 = vset.pattern.permute.xlu0 0
        %1676 = vperm.xlu0 %1675, %v1529
        %v1677 = vpop.permute.xlu0 %1676
        %1680 = vset.pattern.permute.xlu0 0
        %1681 = vperm.xlu0 %1680, %v1530
        %v1682 = vpop.permute.xlu0 %1681
        %1685 = vset.pattern.permute.xlu0 0
        %1686 = vperm.xlu0 %1685, %v1531
        %v1687 = vpop.permute.xlu0 %1686
        %1690 = vset.pattern.permute.xlu0 0
        %1691 = vperm.xlu0 %1690, %v1532
        %v1692 = vpop.permute.xlu0 %1691
        %v1694 = vlaneseq
        %v1695 = vshrl.u32 %v1694, 7
        %v1696 = vsub.s32 0, %v1695
        %v1697 = vrot.slane %v1533, %v1696
        %v1698 = vmul.f32 %v1537, %v1697
        %v1699 = vmul.f32 %v1542, %v1697
        %v1700 = vmul.f32 %v1547, %v1697
        %v1701 = vmul.f32 %v1552, %v1697
        %v1702 = vmul.f32 %v1557, %v1697
        %v1703 = vmul.f32 %v1562, %v1697
        %v1704 = vmul.f32 %v1567, %v1697
        %v1705 = vmul.f32 %v1572, %v1697
        %v1706 = vmul.f32 %v1577, %v1697
        %v1707 = vmul.f32 %v1582, %v1697
        %v1708 = vmul.f32 %v1587, %v1697
        %v1709 = vmul.f32 %v1592, %v1697
        %v1710 = vmul.f32 %v1597, %v1697
        %v1711 = vmul.f32 %v1602, %v1697
        %v1712 = vmul.f32 %v1607, %v1697
        %v1713 = vmul.f32 %v1612, %v1697
        %v1714 = vmul.f32 %v1617, %v1697
        %v1715 = vmul.f32 %v1622, %v1697
        %v1716 = vmul.f32 %v1627, %v1697
        %v1717 = vmul.f32 %v1632, %v1697
        %v1718 = vmul.f32 %v1637, %v1697
        %v1719 = vmul.f32 %v1642, %v1697
        %v1720 = vmul.f32 %v1647, %v1697
        %v1721 = vmul.f32 %v1652, %v1697
        %v1722 = vmul.f32 %v1657, %v1697
        %v1723 = vmul.f32 %v1662, %v1697
        %v1724 = vmul.f32 %v1667, %v1697
        %v1725 = vmul.f32 %v1672, %v1697
        %v1726 = vmul.f32 %v1677, %v1697
        %v1727 = vmul.f32 %v1682, %v1697
        %v1728 = vmul.f32 %v1687, %v1697
        %v1729 = vmul.f32 %v1692, %v1697
        %v1730 = vadd.f32 %v1469, %v1698
        %v1731 = vadd.f32 %v1470, %v1699
        %v1732 = vadd.f32 %v1471, %v1700
        %v1733 = vadd.f32 %v1472, %v1701
        %v1734 = vadd.f32 %v1473, %v1702
        %v1735 = vadd.f32 %v1474, %v1703
        %v1736 = vadd.f32 %v1475, %v1704
        %v1737 = vadd.f32 %v1476, %v1705
        %v1738 = vadd.f32 %v1477, %v1706
        %v1739 = vadd.f32 %v1478, %v1707
        %v1740 = vadd.f32 %v1479, %v1708
        %v1741 = vadd.f32 %v1480, %v1709
        %v1742 = vadd.f32 %v1481, %v1710
        %v1743 = vadd.f32 %v1482, %v1711
        %v1744 = vadd.f32 %v1483, %v1712
        %v1745 = vadd.f32 %v1484, %v1713
        %v1746 = vadd.f32 %v1485, %v1714
        %v1747 = vadd.f32 %v1486, %v1715
        %v1748 = vadd.f32 %v1487, %v1716
        %v1749 = vadd.f32 %v1488, %v1717
        %v1750 = vadd.f32 %v1489, %v1718
        %v1751 = vadd.f32 %v1490, %v1719
        %v1752 = vadd.f32 %v1491, %v1720
        %v1753 = vadd.f32 %v1492, %v1721
        %v1754 = vadd.f32 %v1493, %v1722
        %v1755 = vadd.f32 %v1494, %v1723
        %v1756 = vadd.f32 %v1495, %v1724
        %v1757 = vadd.f32 %v1496, %v1725
        %v1758 = vadd.f32 %v1497, %v1726
        %v1759 = vadd.f32 %v1498, %v1727
        %v1760 = vadd.f32 %v1499, %v1728
        %v1761 = vadd.f32 %v1500, %v1729
        %s1762 = scalar_lea.vmem [#allocation2], 24
        %v1763 = vld [vmem:[%s1762] sm:$0xff]
        %v1764 = vld [vmem:[%s1762 + $0x8] sm:$0xff]
        %v1765 = vld [vmem:[%s1762 + $0x18] sm:$0xff]
        %v1766 = vld [vmem:[%s1762 + $0x20] sm:$0xff]
        %v1767 = vld [vmem:[%s1762 + $0x30] sm:$0xff]
        %v1768 = vld [vmem:[%s1762 + $0x38] sm:$0xff]
        %v1769 = vld [vmem:[%s1762 + $0x48] sm:$0xff]
        %v1770 = vld [vmem:[%s1762 + $0x50] sm:$0xff]
        %v1771 = vld [vmem:[%s1762 + $0x60] sm:$0xff]
        %v1772 = vld [vmem:[%s1762 + $0x68] sm:$0xff]
        %v1773 = vld [vmem:[%s1762 + $0x78] sm:$0xff]
        %v1774 = vld [vmem:[%s1762 + $0x80] sm:$0xff]
        %v1775 = vld [vmem:[%s1762 + $0x90] sm:$0xff]
        %v1776 = vld [vmem:[%s1762 + $0x98] sm:$0xff]
        %v1777 = vld [vmem:[%s1762 + $0xa8] sm:$0xff]
        %v1778 = vld [vmem:[%s1762 + $0xb0] sm:$0xff]
        %v1779 = vld [vmem:[%s1762 + $0xc0] sm:$0xff]
        %v1780 = vld [vmem:[%s1762 + $0xc8] sm:$0xff]
        %v1781 = vld [vmem:[%s1762 + $0xd8] sm:$0xff]
        %v1782 = vld [vmem:[%s1762 + $0xe0] sm:$0xff]
        %v1783 = vld [vmem:[%s1762 + $0xf0] sm:$0xff]
        %v1784 = vld [vmem:[%s1762 + $0xf8] sm:$0xff]
        %v1785 = vld [vmem:[%s1762 + $0x108] sm:$0xff]
        %v1786 = vld [vmem:[%s1762 + $0x110] sm:$0xff]
        %v1787 = vld [vmem:[%s1762 + $0x120] sm:$0xff]
        %v1788 = vld [vmem:[%s1762 + $0x128] sm:$0xff]
        %v1789 = vld [vmem:[%s1762 + $0x138] sm:$0xff]
        %v1790 = vld [vmem:[%s1762 + $0x140] sm:$0xff]
        %v1791 = vld [vmem:[%s1762 + $0x150] sm:$0xff]
        %v1792 = vld [vmem:[%s1762 + $0x158] sm:$0xff]
        %v1793 = vld [vmem:[%s1762 + $0x168] sm:$0xff]
        %v1794 = vld [vmem:[%s1762 + $0x170] sm:$0xff]
        %s1795 = scalar_lea.vmem %s1, 8
        %v1796 = vld [vmem:[%s1795] sm:$0x1]
        %1798 = vset.pattern.permute.xlu0 0
        %1799 = vperm.xlu0 %1798, %v1763
        %v1800 = vpop.permute.xlu0 %1799
        %1803 = vset.pattern.permute.xlu0 0
        %1804 = vperm.xlu0 %1803, %v1764
        %v1805 = vpop.permute.xlu0 %1804
        %1808 = vset.pattern.permute.xlu0 0
        %1809 = vperm.xlu0 %1808, %v1765
        %v1810 = vpop.permute.xlu0 %1809
        %1813 = vset.pattern.permute.xlu0 0
        %1814 = vperm.xlu0 %1813, %v1766
        %v1815 = vpop.permute.xlu0 %1814
        %1818 = vset.pattern.permute.xlu0 0
        %1819 = vperm.xlu0 %1818, %v1767
        %v1820 = vpop.permute.xlu0 %1819
        %1823 = vset.pattern.permute.xlu0 0
        %1824 = vperm.xlu0 %1823, %v1768
        %v1825 = vpop.permute.xlu0 %1824
        %1828 = vset.pattern.permute.xlu0 0
        %1829 = vperm.xlu0 %1828, %v1769
        %v1830 = vpop.permute.xlu0 %1829
        %1833 = vset.pattern.permute.xlu0 0
        %1834 = vperm.xlu0 %1833, %v1770
        %v1835 = vpop.permute.xlu0 %1834
        %1838 = vset.pattern.permute.xlu0 0
        %1839 = vperm.xlu0 %1838, %v1771
        %v1840 = vpop.permute.xlu0 %1839
        %1843 = vset.pattern.permute.xlu0 0
        %1844 = vperm.xlu0 %1843, %v1772
        %v1845 = vpop.permute.xlu0 %1844
        %1848 = vset.pattern.permute.xlu0 0
        %1849 = vperm.xlu0 %1848, %v1773
        %v1850 = vpop.permute.xlu0 %1849
        %1853 = vset.pattern.permute.xlu0 0
        %1854 = vperm.xlu0 %1853, %v1774
        %v1855 = vpop.permute.xlu0 %1854
        %1858 = vset.pattern.permute.xlu0 0
        %1859 = vperm.xlu0 %1858, %v1775
        %v1860 = vpop.permute.xlu0 %1859
        %1863 = vset.pattern.permute.xlu0 0
        %1864 = vperm.xlu0 %1863, %v1776
        %v1865 = vpop.permute.xlu0 %1864
        %1868 = vset.pattern.permute.xlu0 0
        %1869 = vperm.xlu0 %1868, %v1777
        %v1870 = vpop.permute.xlu0 %1869
        %1873 = vset.pattern.permute.xlu0 0
        %1874 = vperm.xlu0 %1873, %v1778
        %v1875 = vpop.permute.xlu0 %1874
        %1878 = vset.pattern.permute.xlu0 0
        %1879 = vperm.xlu0 %1878, %v1779
        %v1880 = vpop.permute.xlu0 %1879
        %1883 = vset.pattern.permute.xlu0 0
        %1884 = vperm.xlu0 %1883, %v1780
        %v1885 = vpop.permute.xlu0 %1884
        %1888 = vset.pattern.permute.xlu0 0
        %1889 = vperm.xlu0 %1888, %v1781
        %v1890 = vpop.permute.xlu0 %1889
        %1893 = vset.pattern.permute.xlu0 0
        %1894 = vperm.xlu0 %1893, %v1782
        %v1895 = vpop.permute.xlu0 %1894
        %1898 = vset.pattern.permute.xlu0 0
        %1899 = vperm.xlu0 %1898, %v1783
        %v1900 = vpop.permute.xlu0 %1899
        %1903 = vset.pattern.permute.xlu0 0
        %1904 = vperm.xlu0 %1903, %v1784
        %v1905 = vpop.permute.xlu0 %1904
        %1908 = vset.pattern.permute.xlu0 0
        %1909 = vperm.xlu0 %1908, %v1785
        %v1910 = vpop.permute.xlu0 %1909
        %1913 = vset.pattern.permute.xlu0 0
        %1914 = vperm.xlu0 %1913, %v1786
        %v1915 = vpop.permute.xlu0 %1914
        %1918 = vset.pattern.permute.xlu0 0
        %1919 = vperm.xlu0 %1918, %v1787
        %v1920 = vpop.permute.xlu0 %1919
        %1923 = vset.pattern.permute.xlu0 0
        %1924 = vperm.xlu0 %1923, %v1788
        %v1925 = vpop.permute.xlu0 %1924
        %1928 = vset.pattern.permute.xlu0 0
        %1929 = vperm.xlu0 %1928, %v1789
        %v1930 = vpop.permute.xlu0 %1929
        %1933 = vset.pattern.permute.xlu0 0
        %1934 = vperm.xlu0 %1933, %v1790
        %v1935 = vpop.permute.xlu0 %1934
        %1938 = vset.pattern.permute.xlu0 0
        %1939 = vperm.xlu0 %1938, %v1791
        %v1940 = vpop.permute.xlu0 %1939
        %1943 = vset.pattern.permute.xlu0 0
        %1944 = vperm.xlu0 %1943, %v1792
        %v1945 = vpop.permute.xlu0 %1944
        %1948 = vset.pattern.permute.xlu0 0
        %1949 = vperm.xlu0 %1948, %v1793
        %v1950 = vpop.permute.xlu0 %1949
        %1953 = vset.pattern.permute.xlu0 0
        %1954 = vperm.xlu0 %1953, %v1794
        %v1955 = vpop.permute.xlu0 %1954
        %v1957 = vlaneseq
        %v1958 = vshrl.u32 %v1957, 7
        %v1959 = vsub.s32 0, %v1958
        %v1960 = vrot.slane %v1796, %v1959
        %v1961 = vmul.f32 %v1800, %v1960
        %v1962 = vmul.f32 %v1805, %v1960
        %v1963 = vmul.f32 %v1810, %v1960
        %v1964 = vmul.f32 %v1815, %v1960
        %v1965 = vmul.f32 %v1820, %v1960
        %v1966 = vmul.f32 %v1825, %v1960
        %v1967 = vmul.f32 %v1830, %v1960
        %v1968 = vmul.f32 %v1835, %v1960
        %v1969 = vmul.f32 %v1840, %v1960
        %v1970 = vmul.f32 %v1845, %v1960
        %v1971 = vmul.f32 %v1850, %v1960
        %v1972 = vmul.f32 %v1855, %v1960
        %v1973 = vmul.f32 %v1860, %v1960
        %v1974 = vmul.f32 %v1865, %v1960
        %v1975 = vmul.f32 %v1870, %v1960
        %v1976 = vmul.f32 %v1875, %v1960
        %v1977 = vmul.f32 %v1880, %v1960
        %v1978 = vmul.f32 %v1885, %v1960
        %v1979 = vmul.f32 %v1890, %v1960
        %v1980 = vmul.f32 %v1895, %v1960
        %v1981 = vmul.f32 %v1900, %v1960
        %v1982 = vmul.f32 %v1905, %v1960
        %v1983 = vmul.f32 %v1910, %v1960
        %v1984 = vmul.f32 %v1915, %v1960
        %v1985 = vmul.f32 %v1920, %v1960
        %v1986 = vmul.f32 %v1925, %v1960
        %v1987 = vmul.f32 %v1930, %v1960
        %v1988 = vmul.f32 %v1935, %v1960
        %v1989 = vmul.f32 %v1940, %v1960
        %v1990 = vmul.f32 %v1945, %v1960
        %v1991 = vmul.f32 %v1950, %v1960
        %v1992 = vmul.f32 %v1955, %v1960
        %v1993 = vadd.f32 %v1730, %v1961
        %v1994 = vadd.f32 %v1731, %v1962
        %v1995 = vadd.f32 %v1732, %v1963
        %v1996 = vadd.f32 %v1733, %v1964
        %v1997 = vadd.f32 %v1734, %v1965
        %v1998 = vadd.f32 %v1735, %v1966
        %v1999 = vadd.f32 %v1736, %v1967
        %v2000 = vadd.f32 %v1737, %v1968
        %v2001 = vadd.f32 %v1738, %v1969
        %v2002 = vadd.f32 %v1739, %v1970
        %v2003 = vadd.f32 %v1740, %v1971
        %v2004 = vadd.f32 %v1741, %v1972
        %v2005 = vadd.f32 %v1742, %v1973
        %v2006 = vadd.f32 %v1743, %v1974
        %v2007 = vadd.f32 %v1744, %v1975
        %v2008 = vadd.f32 %v1745, %v1976
        %v2009 = vadd.f32 %v1746, %v1977
        %v2010 = vadd.f32 %v1747, %v1978
        %v2011 = vadd.f32 %v1748, %v1979
        %v2012 = vadd.f32 %v1749, %v1980
        %v2013 = vadd.f32 %v1750, %v1981
        %v2014 = vadd.f32 %v1751, %v1982
        %v2015 = vadd.f32 %v1752, %v1983
        %v2016 = vadd.f32 %v1753, %v1984
        %v2017 = vadd.f32 %v1754, %v1985
        %v2018 = vadd.f32 %v1755, %v1986
        %v2019 = vadd.f32 %v1756, %v1987
        %v2020 = vadd.f32 %v1757, %v1988
        %v2021 = vadd.f32 %v1758, %v1989
        %v2022 = vadd.f32 %v1759, %v1990
        %v2023 = vadd.f32 %v1760, %v1991
        %v2024 = vadd.f32 %v1761, %v1992
        %v2025 = vld [vmem:[%s1762 + $0x1] sm:$0xff]
        %v2026 = vld [vmem:[%s1762 + $0x9] sm:$0xff]
        %v2027 = vld [vmem:[%s1762 + $0x19] sm:$0xff]
        %v2028 = vld [vmem:[%s1762 + $0x21] sm:$0xff]
        %v2029 = vld [vmem:[%s1762 + $0x31] sm:$0xff]
        %v2030 = vld [vmem:[%s1762 + $0x39] sm:$0xff]
        %v2031 = vld [vmem:[%s1762 + $0x49] sm:$0xff]
        %v2032 = vld [vmem:[%s1762 + $0x51] sm:$0xff]
        %v2033 = vld [vmem:[%s1762 + $0x61] sm:$0xff]
        %v2034 = vld [vmem:[%s1762 + $0x69] sm:$0xff]
        %v2035 = vld [vmem:[%s1762 + $0x79] sm:$0xff]
        %v2036 = vld [vmem:[%s1762 + $0x81] sm:$0xff]
        %v2037 = vld [vmem:[%s1762 + $0x91] sm:$0xff]
        %v2038 = vld [vmem:[%s1762 + $0x99] sm:$0xff]
        %v2039 = vld [vmem:[%s1762 + $0xa9] sm:$0xff]
        %v2040 = vld [vmem:[%s1762 + $0xb1] sm:$0xff]
        %v2041 = vld [vmem:[%s1762 + $0xc1] sm:$0xff]
        %v2042 = vld [vmem:[%s1762 + $0xc9] sm:$0xff]
        %v2043 = vld [vmem:[%s1762 + $0xd9] sm:$0xff]
        %v2044 = vld [vmem:[%s1762 + $0xe1] sm:$0xff]
        %v2045 = vld [vmem:[%s1762 + $0xf1] sm:$0xff]
        %v2046 = vld [vmem:[%s1762 + $0xf9] sm:$0xff]
        %v2047 = vld [vmem:[%s1762 + $0x109] sm:$0xff]
        %v2048 = vld [vmem:[%s1762 + $0x111] sm:$0xff]
        %v2049 = vld [vmem:[%s1762 + $0x121] sm:$0xff]
        %v2050 = vld [vmem:[%s1762 + $0x129] sm:$0xff]
        %v2051 = vld [vmem:[%s1762 + $0x139] sm:$0xff]
        %v2052 = vld [vmem:[%s1762 + $0x141] sm:$0xff]
        %v2053 = vld [vmem:[%s1762 + $0x151] sm:$0xff]
        %v2054 = vld [vmem:[%s1762 + $0x159] sm:$0xff]
        %v2055 = vld [vmem:[%s1762 + $0x169] sm:$0xff]
        %v2056 = vld [vmem:[%s1762 + $0x171] sm:$0xff]
        %v2057 = vld [vmem:[%s1795 + $0x1] sm:$0x1]
        %2059 = vset.pattern.permute.xlu0 0
        %2060 = vperm.xlu0 %2059, %v2025
        %v2061 = vpop.permute.xlu0 %2060
        %2064 = vset.pattern.permute.xlu0 0
        %2065 = vperm.xlu0 %2064, %v2026
        %v2066 = vpop.permute.xlu0 %2065
        %2069 = vset.pattern.permute.xlu0 0
        %2070 = vperm.xlu0 %2069, %v2027
        %v2071 = vpop.permute.xlu0 %2070
        %2074 = vset.pattern.permute.xlu0 0
        %2075 = vperm.xlu0 %2074, %v2028
        %v2076 = vpop.permute.xlu0 %2075
        %2079 = vset.pattern.permute.xlu0 0
        %2080 = vperm.xlu0 %2079, %v2029
        %v2081 = vpop.permute.xlu0 %2080
        %2084 = vset.pattern.permute.xlu0 0
        %2085 = vperm.xlu0 %2084, %v2030
        %v2086 = vpop.permute.xlu0 %2085
        %2089 = vset.pattern.permute.xlu0 0
        %2090 = vperm.xlu0 %2089, %v2031
        %v2091 = vpop.permute.xlu0 %2090
        %2094 = vset.pattern.permute.xlu0 0
        %2095 = vperm.xlu0 %2094, %v2032
        %v2096 = vpop.permute.xlu0 %2095
        %2099 = vset.pattern.permute.xlu0 0
        %2100 = vperm.xlu0 %2099, %v2033
        %v2101 = vpop.permute.xlu0 %2100
        %2104 = vset.pattern.permute.xlu0 0
        %2105 = vperm.xlu0 %2104, %v2034
        %v2106 = vpop.permute.xlu0 %2105
        %2109 = vset.pattern.permute.xlu0 0
        %2110 = vperm.xlu0 %2109, %v2035
        %v2111 = vpop.permute.xlu0 %2110
        %2114 = vset.pattern.permute.xlu0 0
        %2115 = vperm.xlu0 %2114, %v2036
        %v2116 = vpop.permute.xlu0 %2115
        %2119 = vset.pattern.permute.xlu0 0
        %2120 = vperm.xlu0 %2119, %v2037
        %v2121 = vpop.permute.xlu0 %2120
        %2124 = vset.pattern.permute.xlu0 0
        %2125 = vperm.xlu0 %2124, %v2038
        %v2126 = vpop.permute.xlu0 %2125
        %2129 = vset.pattern.permute.xlu0 0
        %2130 = vperm.xlu0 %2129, %v2039
        %v2131 = vpop.permute.xlu0 %2130
        %2134 = vset.pattern.permute.xlu0 0
        %2135 = vperm.xlu0 %2134, %v2040
        %v2136 = vpop.permute.xlu0 %2135
        %2139 = vset.pattern.permute.xlu0 0
        %2140 = vperm.xlu0 %2139, %v2041
        %v2141 = vpop.permute.xlu0 %2140
        %2144 = vset.pattern.permute.xlu0 0
        %2145 = vperm.xlu0 %2144, %v2042
        %v2146 = vpop.permute.xlu0 %2145
        %2149 = vset.pattern.permute.xlu0 0
        %2150 = vperm.xlu0 %2149, %v2043
        %v2151 = vpop.permute.xlu0 %2150
        %2154 = vset.pattern.permute.xlu0 0
        %2155 = vperm.xlu0 %2154, %v2044
        %v2156 = vpop.permute.xlu0 %2155
        %2159 = vset.pattern.permute.xlu0 0
        %2160 = vperm.xlu0 %2159, %v2045
        %v2161 = vpop.permute.xlu0 %2160
        %2164 = vset.pattern.permute.xlu0 0
        %2165 = vperm.xlu0 %2164, %v2046
        %v2166 = vpop.permute.xlu0 %2165
        %2169 = vset.pattern.permute.xlu0 0
        %2170 = vperm.xlu0 %2169, %v2047
        %v2171 = vpop.permute.xlu0 %2170
        %2174 = vset.pattern.permute.xlu0 0
        %2175 = vperm.xlu0 %2174, %v2048
        %v2176 = vpop.permute.xlu0 %2175
        %2179 = vset.pattern.permute.xlu0 0
        %2180 = vperm.xlu0 %2179, %v2049
        %v2181 = vpop.permute.xlu0 %2180
        %2184 = vset.pattern.permute.xlu0 0
        %2185 = vperm.xlu0 %2184, %v2050
        %v2186 = vpop.permute.xlu0 %2185
        %2189 = vset.pattern.permute.xlu0 0
        %2190 = vperm.xlu0 %2189, %v2051
        %v2191 = vpop.permute.xlu0 %2190
        %2194 = vset.pattern.permute.xlu0 0
        %2195 = vperm.xlu0 %2194, %v2052
        %v2196 = vpop.permute.xlu0 %2195
        %2199 = vset.pattern.permute.xlu0 0
        %2200 = vperm.xlu0 %2199, %v2053
        %v2201 = vpop.permute.xlu0 %2200
        %2204 = vset.pattern.permute.xlu0 0
        %2205 = vperm.xlu0 %2204, %v2054
        %v2206 = vpop.permute.xlu0 %2205
        %2209 = vset.pattern.permute.xlu0 0
        %2210 = vperm.xlu0 %2209, %v2055
        %v2211 = vpop.permute.xlu0 %2210
        %2214 = vset.pattern.permute.xlu0 0
        %2215 = vperm.xlu0 %2214, %v2056
        %v2216 = vpop.permute.xlu0 %2215
        %v2218 = vlaneseq
        %v2219 = vshrl.u32 %v2218, 7
        %v2220 = vsub.s32 0, %v2219
        %v2221 = vrot.slane %v2057, %v2220
        %v2222 = vmul.f32 %v2061, %v2221
        %v2223 = vmul.f32 %v2066, %v2221
        %v2224 = vmul.f32 %v2071, %v2221
        %v2225 = vmul.f32 %v2076, %v2221
        %v2226 = vmul.f32 %v2081, %v2221
        %v2227 = vmul.f32 %v2086, %v2221
        %v2228 = vmul.f32 %v2091, %v2221
        %v2229 = vmul.f32 %v2096, %v2221
        %v2230 = vmul.f32 %v2101, %v2221
        %v2231 = vmul.f32 %v2106, %v2221
        %v2232 = vmul.f32 %v2111, %v2221
        %v2233 = vmul.f32 %v2116, %v2221
        %v2234 = vmul.f32 %v2121, %v2221
        %v2235 = vmul.f32 %v2126, %v2221
        %v2236 = vmul.f32 %v2131, %v2221
        %v2237 = vmul.f32 %v2136, %v2221
        %v2238 = vmul.f32 %v2141, %v2221
        %v2239 = vmul.f32 %v2146, %v2221
        %v2240 = vmul.f32 %v2151, %v2221
        %v2241 = vmul.f32 %v2156, %v2221
        %v2242 = vmul.f32 %v2161, %v2221
        %v2243 = vmul.f32 %v2166, %v2221
        %v2244 = vmul.f32 %v2171, %v2221
        %v2245 = vmul.f32 %v2176, %v2221
        %v2246 = vmul.f32 %v2181, %v2221
        %v2247 = vmul.f32 %v2186, %v2221
        %v2248 = vmul.f32 %v2191, %v2221
        %v2249 = vmul.f32 %v2196, %v2221
        %v2250 = vmul.f32 %v2201, %v2221
        %v2251 = vmul.f32 %v2206, %v2221
        %v2252 = vmul.f32 %v2211, %v2221
        %v2253 = vmul.f32 %v2216, %v2221
        %v2254 = vadd.f32 %v1993, %v2222
        %v2255 = vadd.f32 %v1994, %v2223
        %v2256 = vadd.f32 %v1995, %v2224
        %v2257 = vadd.f32 %v1996, %v2225
        %v2258 = vadd.f32 %v1997, %v2226
        %v2259 = vadd.f32 %v1998, %v2227
        %v2260 = vadd.f32 %v1999, %v2228
        %v2261 = vadd.f32 %v2000, %v2229
        %v2262 = vadd.f32 %v2001, %v2230
        %v2263 = vadd.f32 %v2002, %v2231
        %v2264 = vadd.f32 %v2003, %v2232
        %v2265 = vadd.f32 %v2004, %v2233
        %v2266 = vadd.f32 %v2005, %v2234
        %v2267 = vadd.f32 %v2006, %v2235
        %v2268 = vadd.f32 %v2007, %v2236
        %v2269 = vadd.f32 %v2008, %v2237
        %v2270 = vadd.f32 %v2009, %v2238
        %v2271 = vadd.f32 %v2010, %v2239
        %v2272 = vadd.f32 %v2011, %v2240
        %v2273 = vadd.f32 %v2012, %v2241
        %v2274 = vadd.f32 %v2013, %v2242
        %v2275 = vadd.f32 %v2014, %v2243
        %v2276 = vadd.f32 %v2015, %v2244
        %v2277 = vadd.f32 %v2016, %v2245
        %v2278 = vadd.f32 %v2017, %v2246
        %v2279 = vadd.f32 %v2018, %v2247
        %v2280 = vadd.f32 %v2019, %v2248
        %v2281 = vadd.f32 %v2020, %v2249
        %v2282 = vadd.f32 %v2021, %v2250
        %v2283 = vadd.f32 %v2022, %v2251
        %v2284 = vadd.f32 %v2023, %v2252
        %v2285 = vadd.f32 %v2024, %v2253
        %v2286 = vld [vmem:[%s1762 + $0x2] sm:$0xff]
        %v2287 = vld [vmem:[%s1762 + $0xa] sm:$0xff]
        %v2288 = vld [vmem:[%s1762 + $0x1a] sm:$0xff]
        %v2289 = vld [vmem:[%s1762 + $0x22] sm:$0xff]
        %v2290 = vld [vmem:[%s1762 + $0x32] sm:$0xff]
        %v2291 = vld [vmem:[%s1762 + $0x3a] sm:$0xff]
        %v2292 = vld [vmem:[%s1762 + $0x4a] sm:$0xff]
        %v2293 = vld [vmem:[%s1762 + $0x52] sm:$0xff]
        %v2294 = vld [vmem:[%s1762 + $0x62] sm:$0xff]
        %v2295 = vld [vmem:[%s1762 + $0x6a] sm:$0xff]
        %v2296 = vld [vmem:[%s1762 + $0x7a] sm:$0xff]
        %v2297 = vld [vmem:[%s1762 + $0x82] sm:$0xff]
        %v2298 = vld [vmem:[%s1762 + $0x92] sm:$0xff]
        %v2299 = vld [vmem:[%s1762 + $0x9a] sm:$0xff]
        %v2300 = vld [vmem:[%s1762 + $0xaa] sm:$0xff]
        %v2301 = vld [vmem:[%s1762 + $0xb2] sm:$0xff]
        %v2302 = vld [vmem:[%s1762 + $0xc2] sm:$0xff]
        %v2303 = vld [vmem:[%s1762 + $0xca] sm:$0xff]
        %v2304 = vld [vmem:[%s1762 + $0xda] sm:$0xff]
        %v2305 = vld [vmem:[%s1762 + $0xe2] sm:$0xff]
        %v2306 = vld [vmem:[%s1762 + $0xf2] sm:$0xff]
        %v2307 = vld [vmem:[%s1762 + $0xfa] sm:$0xff]
        %v2308 = vld [vmem:[%s1762 + $0x10a] sm:$0xff]
        %v2309 = vld [vmem:[%s1762 + $0x112] sm:$0xff]
        %v2310 = vld [vmem:[%s1762 + $0x122] sm:$0xff]
        %v2311 = vld [vmem:[%s1762 + $0x12a] sm:$0xff]
        %v2312 = vld [vmem:[%s1762 + $0x13a] sm:$0xff]
        %v2313 = vld [vmem:[%s1762 + $0x142] sm:$0xff]
        %v2314 = vld [vmem:[%s1762 + $0x152] sm:$0xff]
        %v2315 = vld [vmem:[%s1762 + $0x15a] sm:$0xff]
        %v2316 = vld [vmem:[%s1762 + $0x16a] sm:$0xff]
        %v2317 = vld [vmem:[%s1762 + $0x172] sm:$0xff]
        %v2318 = vld [vmem:[%s1795 + $0x2] sm:$0x1]
        %2320 = vset.pattern.permute.xlu0 0
        %2321 = vperm.xlu0 %2320, %v2286
        %v2322 = vpop.permute.xlu0 %2321
        %2325 = vset.pattern.permute.xlu0 0
        %2326 = vperm.xlu0 %2325, %v2287
        %v2327 = vpop.permute.xlu0 %2326
        %2330 = vset.pattern.permute.xlu0 0
        %2331 = vperm.xlu0 %2330, %v2288
        %v2332 = vpop.permute.xlu0 %2331
        %2335 = vset.pattern.permute.xlu0 0
        %2336 = vperm.xlu0 %2335, %v2289
        %v2337 = vpop.permute.xlu0 %2336
        %2340 = vset.pattern.permute.xlu0 0
        %2341 = vperm.xlu0 %2340, %v2290
        %v2342 = vpop.permute.xlu0 %2341
        %2345 = vset.pattern.permute.xlu0 0
        %2346 = vperm.xlu0 %2345, %v2291
        %v2347 = vpop.permute.xlu0 %2346
        %2350 = vset.pattern.permute.xlu0 0
        %2351 = vperm.xlu0 %2350, %v2292
        %v2352 = vpop.permute.xlu0 %2351
        %2355 = vset.pattern.permute.xlu0 0
        %2356 = vperm.xlu0 %2355, %v2293
        %v2357 = vpop.permute.xlu0 %2356
        %2360 = vset.pattern.permute.xlu0 0
        %2361 = vperm.xlu0 %2360, %v2294
        %v2362 = vpop.permute.xlu0 %2361
        %2365 = vset.pattern.permute.xlu0 0
        %2366 = vperm.xlu0 %2365, %v2295
        %v2367 = vpop.permute.xlu0 %2366
        %2370 = vset.pattern.permute.xlu0 0
        %2371 = vperm.xlu0 %2370, %v2296
        %v2372 = vpop.permute.xlu0 %2371
        %2375 = vset.pattern.permute.xlu0 0
        %2376 = vperm.xlu0 %2375, %v2297
        %v2377 = vpop.permute.xlu0 %2376
        %2380 = vset.pattern.permute.xlu0 0
        %2381 = vperm.xlu0 %2380, %v2298
        %v2382 = vpop.permute.xlu0 %2381
        %2385 = vset.pattern.permute.xlu0 0
        %2386 = vperm.xlu0 %2385, %v2299
        %v2387 = vpop.permute.xlu0 %2386
        %2390 = vset.pattern.permute.xlu0 0
        %2391 = vperm.xlu0 %2390, %v2300
        %v2392 = vpop.permute.xlu0 %2391
        %2395 = vset.pattern.permute.xlu0 0
        %2396 = vperm.xlu0 %2395, %v2301
        %v2397 = vpop.permute.xlu0 %2396
        %2400 = vset.pattern.permute.xlu0 0
        %2401 = vperm.xlu0 %2400, %v2302
        %v2402 = vpop.permute.xlu0 %2401
        %2405 = vset.pattern.permute.xlu0 0
        %2406 = vperm.xlu0 %2405, %v2303
        %v2407 = vpop.permute.xlu0 %2406
        %2410 = vset.pattern.permute.xlu0 0
        %2411 = vperm.xlu0 %2410, %v2304
        %v2412 = vpop.permute.xlu0 %2411
        %2415 = vset.pattern.permute.xlu0 0
        %2416 = vperm.xlu0 %2415, %v2305
        %v2417 = vpop.permute.xlu0 %2416
        %2420 = vset.pattern.permute.xlu0 0
        %2421 = vperm.xlu0 %2420, %v2306
        %v2422 = vpop.permute.xlu0 %2421
        %2425 = vset.pattern.permute.xlu0 0
        %2426 = vperm.xlu0 %2425, %v2307
        %v2427 = vpop.permute.xlu0 %2426
        %2430 = vset.pattern.permute.xlu0 0
        %2431 = vperm.xlu0 %2430, %v2308
        %v2432 = vpop.permute.xlu0 %2431
        %2435 = vset.pattern.permute.xlu0 0
        %2436 = vperm.xlu0 %2435, %v2309
        %v2437 = vpop.permute.xlu0 %2436
        %2440 = vset.pattern.permute.xlu0 0
        %2441 = vperm.xlu0 %2440, %v2310
        %v2442 = vpop.permute.xlu0 %2441
        %2445 = vset.pattern.permute.xlu0 0
        %2446 = vperm.xlu0 %2445, %v2311
        %v2447 = vpop.permute.xlu0 %2446
        %2450 = vset.pattern.permute.xlu0 0
        %2451 = vperm.xlu0 %2450, %v2312
        %v2452 = vpop.permute.xlu0 %2451
        %2455 = vset.pattern.permute.xlu0 0
        %2456 = vperm.xlu0 %2455, %v2313
        %v2457 = vpop.permute.xlu0 %2456
        %2460 = vset.pattern.permute.xlu0 0
        %2461 = vperm.xlu0 %2460, %v2314
        %v2462 = vpop.permute.xlu0 %2461
        %2465 = vset.pattern.permute.xlu0 0
        %2466 = vperm.xlu0 %2465, %v2315
        %v2467 = vpop.permute.xlu0 %2466
        %2470 = vset.pattern.permute.xlu0 0
        %2471 = vperm.xlu0 %2470, %v2316
        %v2472 = vpop.permute.xlu0 %2471
        %2475 = vset.pattern.permute.xlu0 0
        %2476 = vperm.xlu0 %2475, %v2317
        %v2477 = vpop.permute.xlu0 %2476
        %v2479 = vlaneseq
        %v2480 = vshrl.u32 %v2479, 7
        %v2481 = vsub.s32 0, %v2480
        %v2482 = vrot.slane %v2318, %v2481
        %v2483 = vmul.f32 %v2322, %v2482
        %v2484 = vmul.f32 %v2327, %v2482
        %v2485 = vmul.f32 %v2332, %v2482
        %v2486 = vmul.f32 %v2337, %v2482
        %v2487 = vmul.f32 %v2342, %v2482
        %v2488 = vmul.f32 %v2347, %v2482
        %v2489 = vmul.f32 %v2352, %v2482
        %v2490 = vmul.f32 %v2357, %v2482
        %v2491 = vmul.f32 %v2362, %v2482
        %v2492 = vmul.f32 %v2367, %v2482
        %v2493 = vmul.f32 %v2372, %v2482
        %v2494 = vmul.f32 %v2377, %v2482
        %v2495 = vmul.f32 %v2382, %v2482
        %v2496 = vmul.f32 %v2387, %v2482
        %v2497 = vmul.f32 %v2392, %v2482
        %v2498 = vmul.f32 %v2397, %v2482
        %v2499 = vmul.f32 %v2402, %v2482
        %v2500 = vmul.f32 %v2407, %v2482
        %v2501 = vmul.f32 %v2412, %v2482
        %v2502 = vmul.f32 %v2417, %v2482
        %v2503 = vmul.f32 %v2422, %v2482
        %v2504 = vmul.f32 %v2427, %v2482
        %v2505 = vmul.f32 %v2432, %v2482
        %v2506 = vmul.f32 %v2437, %v2482
        %v2507 = vmul.f32 %v2442, %v2482
        %v2508 = vmul.f32 %v2447, %v2482
        %v2509 = vmul.f32 %v2452, %v2482
        %v2510 = vmul.f32 %v2457, %v2482
        %v2511 = vmul.f32 %v2462, %v2482
        %v2512 = vmul.f32 %v2467, %v2482
        %v2513 = vmul.f32 %v2472, %v2482
        %v2514 = vmul.f32 %v2477, %v2482
        %v2515 = vadd.f32 %v2254, %v2483
        %v2516 = vadd.f32 %v2255, %v2484
        %v2517 = vadd.f32 %v2256, %v2485
        %v2518 = vadd.f32 %v2257, %v2486
        %v2519 = vadd.f32 %v2258, %v2487
        %v2520 = vadd.f32 %v2259, %v2488
        %v2521 = vadd.f32 %v2260, %v2489
        %v2522 = vadd.f32 %v2261, %v2490
        %v2523 = vadd.f32 %v2262, %v2491
        %v2524 = vadd.f32 %v2263, %v2492
        %v2525 = vadd.f32 %v2264, %v2493
        %v2526 = vadd.f32 %v2265, %v2494
        %v2527 = vadd.f32 %v2266, %v2495
        %v2528 = vadd.f32 %v2267, %v2496
        %v2529 = vadd.f32 %v2268, %v2497
        %v2530 = vadd.f32 %v2269, %v2498
        %v2531 = vadd.f32 %v2270, %v2499
        %v2532 = vadd.f32 %v2271, %v2500
        %v2533 = vadd.f32 %v2272, %v2501
        %v2534 = vadd.f32 %v2273, %v2502
        %v2535 = vadd.f32 %v2274, %v2503
        %v2536 = vadd.f32 %v2275, %v2504
        %v2537 = vadd.f32 %v2276, %v2505
        %v2538 = vadd.f32 %v2277, %v2506
        %v2539 = vadd.f32 %v2278, %v2507
        %v2540 = vadd.f32 %v2279, %v2508
        %v2541 = vadd.f32 %v2280, %v2509
        %v2542 = vadd.f32 %v2281, %v2510
        %v2543 = vadd.f32 %v2282, %v2511
        %v2544 = vadd.f32 %v2283, %v2512
        %v2545 = vadd.f32 %v2284, %v2513
        %v2546 = vadd.f32 %v2285, %v2514
        %v2547 = vld [vmem:[%s1762 + $0x3] sm:$0xff]
        %v2548 = vld [vmem:[%s1762 + $0xb] sm:$0xff]
        %v2549 = vld [vmem:[%s1762 + $0x1b] sm:$0xff]
        %v2550 = vld [vmem:[%s1762 + $0x23] sm:$0xff]
        %v2551 = vld [vmem:[%s1762 + $0x33] sm:$0xff]
        %v2552 = vld [vmem:[%s1762 + $0x3b] sm:$0xff]
        %v2553 = vld [vmem:[%s1762 + $0x4b] sm:$0xff]
        %v2554 = vld [vmem:[%s1762 + $0x53] sm:$0xff]
        %v2555 = vld [vmem:[%s1762 + $0x63] sm:$0xff]
        %v2556 = vld [vmem:[%s1762 + $0x6b] sm:$0xff]
        %v2557 = vld [vmem:[%s1762 + $0x7b] sm:$0xff]
        %v2558 = vld [vmem:[%s1762 + $0x83] sm:$0xff]
        %v2559 = vld [vmem:[%s1762 + $0x93] sm:$0xff]
        %v2560 = vld [vmem:[%s1762 + $0x9b] sm:$0xff]
        %v2561 = vld [vmem:[%s1762 + $0xab] sm:$0xff]
        %v2562 = vld [vmem:[%s1762 + $0xb3] sm:$0xff]
        %v2563 = vld [vmem:[%s1762 + $0xc3] sm:$0xff]
        %v2564 = vld [vmem:[%s1762 + $0xcb] sm:$0xff]
        %v2565 = vld [vmem:[%s1762 + $0xdb] sm:$0xff]
        %v2566 = vld [vmem:[%s1762 + $0xe3] sm:$0xff]
        %v2567 = vld [vmem:[%s1762 + $0xf3] sm:$0xff]
        %v2568 = vld [vmem:[%s1762 + $0xfb] sm:$0xff]
        %v2569 = vld [vmem:[%s1762 + $0x10b] sm:$0xff]
        %v2570 = vld [vmem:[%s1762 + $0x113] sm:$0xff]
        %v2571 = vld [vmem:[%s1762 + $0x123] sm:$0xff]
        %v2572 = vld [vmem:[%s1762 + $0x12b] sm:$0xff]
        %v2573 = vld [vmem:[%s1762 + $0x13b] sm:$0xff]
        %v2574 = vld [vmem:[%s1762 + $0x143] sm:$0xff]
        %v2575 = vld [vmem:[%s1762 + $0x153] sm:$0xff]
        %v2576 = vld [vmem:[%s1762 + $0x15b] sm:$0xff]
        %v2577 = vld [vmem:[%s1762 + $0x16b] sm:$0xff]
        %v2578 = vld [vmem:[%s1762 + $0x173] sm:$0xff]
        %v2579 = vld [vmem:[%s1795 + $0x3] sm:$0x1]
        %2581 = vset.pattern.permute.xlu0 0
        %2582 = vperm.xlu0 %2581, %v2547
        %v2583 = vpop.permute.xlu0 %2582
        %2586 = vset.pattern.permute.xlu0 0
        %2587 = vperm.xlu0 %2586, %v2548
        %v2588 = vpop.permute.xlu0 %2587
        %2591 = vset.pattern.permute.xlu0 0
        %2592 = vperm.xlu0 %2591, %v2549
        %v2593 = vpop.permute.xlu0 %2592
        %2596 = vset.pattern.permute.xlu0 0
        %2597 = vperm.xlu0 %2596, %v2550
        %v2598 = vpop.permute.xlu0 %2597
        %2601 = vset.pattern.permute.xlu0 0
        %2602 = vperm.xlu0 %2601, %v2551
        %v2603 = vpop.permute.xlu0 %2602
        %2606 = vset.pattern.permute.xlu0 0
        %2607 = vperm.xlu0 %2606, %v2552
        %v2608 = vpop.permute.xlu0 %2607
        %2611 = vset.pattern.permute.xlu0 0
        %2612 = vperm.xlu0 %2611, %v2553
        %v2613 = vpop.permute.xlu0 %2612
        %2616 = vset.pattern.permute.xlu0 0
        %2617 = vperm.xlu0 %2616, %v2554
        %v2618 = vpop.permute.xlu0 %2617
        %2621 = vset.pattern.permute.xlu0 0
        %2622 = vperm.xlu0 %2621, %v2555
        %v2623 = vpop.permute.xlu0 %2622
        %2626 = vset.pattern.permute.xlu0 0
        %2627 = vperm.xlu0 %2626, %v2556
        %v2628 = vpop.permute.xlu0 %2627
        %2631 = vset.pattern.permute.xlu0 0
        %2632 = vperm.xlu0 %2631, %v2557
        %v2633 = vpop.permute.xlu0 %2632
        %2636 = vset.pattern.permute.xlu0 0
        %2637 = vperm.xlu0 %2636, %v2558
        %v2638 = vpop.permute.xlu0 %2637
        %2641 = vset.pattern.permute.xlu0 0
        %2642 = vperm.xlu0 %2641, %v2559
        %v2643 = vpop.permute.xlu0 %2642
        %2646 = vset.pattern.permute.xlu0 0
        %2647 = vperm.xlu0 %2646, %v2560
        %v2648 = vpop.permute.xlu0 %2647
        %2651 = vset.pattern.permute.xlu0 0
        %2652 = vperm.xlu0 %2651, %v2561
        %v2653 = vpop.permute.xlu0 %2652
        %2656 = vset.pattern.permute.xlu0 0
        %2657 = vperm.xlu0 %2656, %v2562
        %v2658 = vpop.permute.xlu0 %2657
        %2661 = vset.pattern.permute.xlu0 0
        %2662 = vperm.xlu0 %2661, %v2563
        %v2663 = vpop.permute.xlu0 %2662
        %2666 = vset.pattern.permute.xlu0 0
        %2667 = vperm.xlu0 %2666, %v2564
        %v2668 = vpop.permute.xlu0 %2667
        %2671 = vset.pattern.permute.xlu0 0
        %2672 = vperm.xlu0 %2671, %v2565
        %v2673 = vpop.permute.xlu0 %2672
        %2676 = vset.pattern.permute.xlu0 0
        %2677 = vperm.xlu0 %2676, %v2566
        %v2678 = vpop.permute.xlu0 %2677
        %2681 = vset.pattern.permute.xlu0 0
        %2682 = vperm.xlu0 %2681, %v2567
        %v2683 = vpop.permute.xlu0 %2682
        %2686 = vset.pattern.permute.xlu0 0
        %2687 = vperm.xlu0 %2686, %v2568
        %v2688 = vpop.permute.xlu0 %2687
        %2691 = vset.pattern.permute.xlu0 0
        %2692 = vperm.xlu0 %2691, %v2569
        %v2693 = vpop.permute.xlu0 %2692
        %2696 = vset.pattern.permute.xlu0 0
        %2697 = vperm.xlu0 %2696, %v2570
        %v2698 = vpop.permute.xlu0 %2697
        %2701 = vset.pattern.permute.xlu0 0
        %2702 = vperm.xlu0 %2701, %v2571
        %v2703 = vpop.permute.xlu0 %2702
        %2706 = vset.pattern.permute.xlu0 0
        %2707 = vperm.xlu0 %2706, %v2572
        %v2708 = vpop.permute.xlu0 %2707
        %2711 = vset.pattern.permute.xlu0 0
        %2712 = vperm.xlu0 %2711, %v2573
        %v2713 = vpop.permute.xlu0 %2712
        %2716 = vset.pattern.permute.xlu0 0
        %2717 = vperm.xlu0 %2716, %v2574
        %v2718 = vpop.permute.xlu0 %2717
        %2721 = vset.pattern.permute.xlu0 0
        %2722 = vperm.xlu0 %2721, %v2575
        %v2723 = vpop.permute.xlu0 %2722
        %2726 = vset.pattern.permute.xlu0 0
        %2727 = vperm.xlu0 %2726, %v2576
        %v2728 = vpop.permute.xlu0 %2727
        %2731 = vset.pattern.permute.xlu0 0
        %2732 = vperm.xlu0 %2731, %v2577
        %v2733 = vpop.permute.xlu0 %2732
        %2736 = vset.pattern.permute.xlu0 0
        %2737 = vperm.xlu0 %2736, %v2578
        %v2738 = vpop.permute.xlu0 %2737
        %v2740 = vlaneseq
        %v2741 = vshrl.u32 %v2740, 7
        %v2742 = vsub.s32 0, %v2741
        %v2743 = vrot.slane %v2579, %v2742
        %v2744 = vmul.f32 %v2583, %v2743
        %v2745 = vmul.f32 %v2588, %v2743
        %v2746 = vmul.f32 %v2593, %v2743
        %v2747 = vmul.f32 %v2598, %v2743
        %v2748 = vmul.f32 %v2603, %v2743
        %v2749 = vmul.f32 %v2608, %v2743
        %v2750 = vmul.f32 %v2613, %v2743
        %v2751 = vmul.f32 %v2618, %v2743
        %v2752 = vmul.f32 %v2623, %v2743
        %v2753 = vmul.f32 %v2628, %v2743
        %v2754 = vmul.f32 %v2633, %v2743
        %v2755 = vmul.f32 %v2638, %v2743
        %v2756 = vmul.f32 %v2643, %v2743
        %v2757 = vmul.f32 %v2648, %v2743
        %v2758 = vmul.f32 %v2653, %v2743
        %v2759 = vmul.f32 %v2658, %v2743
        %v2760 = vmul.f32 %v2663, %v2743
        %v2761 = vmul.f32 %v2668, %v2743
        %v2762 = vmul.f32 %v2673, %v2743
        %v2763 = vmul.f32 %v2678, %v2743
        %v2764 = vmul.f32 %v2683, %v2743
        %v2765 = vmul.f32 %v2688, %v2743
        %v2766 = vmul.f32 %v2693, %v2743
        %v2767 = vmul.f32 %v2698, %v2743
        %v2768 = vmul.f32 %v2703, %v2743
        %v2769 = vmul.f32 %v2708, %v2743
        %v2770 = vmul.f32 %v2713, %v2743
        %v2771 = vmul.f32 %v2718, %v2743
        %v2772 = vmul.f32 %v2723, %v2743
        %v2773 = vmul.f32 %v2728, %v2743
        %v2774 = vmul.f32 %v2733, %v2743
        %v2775 = vmul.f32 %v2738, %v2743
        %v2776 = vadd.f32 %v2515, %v2744
        %v2777 = vadd.f32 %v2516, %v2745
        %v2778 = vadd.f32 %v2517, %v2746
        %v2779 = vadd.f32 %v2518, %v2747
        %v2780 = vadd.f32 %v2519, %v2748
        %v2781 = vadd.f32 %v2520, %v2749
        %v2782 = vadd.f32 %v2521, %v2750
        %v2783 = vadd.f32 %v2522, %v2751
        %v2784 = vadd.f32 %v2523, %v2752
        %v2785 = vadd.f32 %v2524, %v2753
        %v2786 = vadd.f32 %v2525, %v2754
        %v2787 = vadd.f32 %v2526, %v2755
        %v2788 = vadd.f32 %v2527, %v2756
        %v2789 = vadd.f32 %v2528, %v2757
        %v2790 = vadd.f32 %v2529, %v2758
        %v2791 = vadd.f32 %v2530, %v2759
        %v2792 = vadd.f32 %v2531, %v2760
        %v2793 = vadd.f32 %v2532, %v2761
        %v2794 = vadd.f32 %v2533, %v2762
        %v2795 = vadd.f32 %v2534, %v2763
        %v2796 = vadd.f32 %v2535, %v2764
        %v2797 = vadd.f32 %v2536, %v2765
        %v2798 = vadd.f32 %v2537, %v2766
        %v2799 = vadd.f32 %v2538, %v2767
        %v2800 = vadd.f32 %v2539, %v2768
        %v2801 = vadd.f32 %v2540, %v2769
        %v2802 = vadd.f32 %v2541, %v2770
        %v2803 = vadd.f32 %v2542, %v2771
        %v2804 = vadd.f32 %v2543, %v2772
        %v2805 = vadd.f32 %v2544, %v2773
        %v2806 = vadd.f32 %v2545, %v2774
        %v2807 = vadd.f32 %v2546, %v2775
        %v2808 = vld [vmem:[%s1762 + $0x4] sm:$0xff]
        %v2809 = vld [vmem:[%s1762 + $0xc] sm:$0xff]
        %v2810 = vld [vmem:[%s1762 + $0x1c] sm:$0xff]
        %v2811 = vld [vmem:[%s1762 + $0x24] sm:$0xff]
        %v2812 = vld [vmem:[%s1762 + $0x34] sm:$0xff]
        %v2813 = vld [vmem:[%s1762 + $0x3c] sm:$0xff]
        %v2814 = vld [vmem:[%s1762 + $0x4c] sm:$0xff]
        %v2815 = vld [vmem:[%s1762 + $0x54] sm:$0xff]
        %v2816 = vld [vmem:[%s1762 + $0x64] sm:$0xff]
        %v2817 = vld [vmem:[%s1762 + $0x6c] sm:$0xff]
        %v2818 = vld [vmem:[%s1762 + $0x7c] sm:$0xff]
        %v2819 = vld [vmem:[%s1762 + $0x84] sm:$0xff]
        %v2820 = vld [vmem:[%s1762 + $0x94] sm:$0xff]
        %v2821 = vld [vmem:[%s1762 + $0x9c] sm:$0xff]
        %v2822 = vld [vmem:[%s1762 + $0xac] sm:$0xff]
        %v2823 = vld [vmem:[%s1762 + $0xb4] sm:$0xff]
        %v2824 = vld [vmem:[%s1762 + $0xc4] sm:$0xff]
        %v2825 = vld [vmem:[%s1762 + $0xcc] sm:$0xff]
        %v2826 = vld [vmem:[%s1762 + $0xdc] sm:$0xff]
        %v2827 = vld [vmem:[%s1762 + $0xe4] sm:$0xff]
        %v2828 = vld [vmem:[%s1762 + $0xf4] sm:$0xff]
        %v2829 = vld [vmem:[%s1762 + $0xfc] sm:$0xff]
        %v2830 = vld [vmem:[%s1762 + $0x10c] sm:$0xff]
        %v2831 = vld [vmem:[%s1762 + $0x114] sm:$0xff]
        %v2832 = vld [vmem:[%s1762 + $0x124] sm:$0xff]
        %v2833 = vld [vmem:[%s1762 + $0x12c] sm:$0xff]
        %v2834 = vld [vmem:[%s1762 + $0x13c] sm:$0xff]
        %v2835 = vld [vmem:[%s1762 + $0x144] sm:$0xff]
        %v2836 = vld [vmem:[%s1762 + $0x154] sm:$0xff]
        %v2837 = vld [vmem:[%s1762 + $0x15c] sm:$0xff]
        %v2838 = vld [vmem:[%s1762 + $0x16c] sm:$0xff]
        %v2839 = vld [vmem:[%s1762 + $0x174] sm:$0xff]
        %v2840 = vld [vmem:[%s1795 + $0x4] sm:$0x1]
        %2842 = vset.pattern.permute.xlu0 0
        %2843 = vperm.xlu0 %2842, %v2808
        %v2844 = vpop.permute.xlu0 %2843
        %2847 = vset.pattern.permute.xlu0 0
        %2848 = vperm.xlu0 %2847, %v2809
        %v2849 = vpop.permute.xlu0 %2848
        %2852 = vset.pattern.permute.xlu0 0
        %2853 = vperm.xlu0 %2852, %v2810
        %v2854 = vpop.permute.xlu0 %2853
        %2857 = vset.pattern.permute.xlu0 0
        %2858 = vperm.xlu0 %2857, %v2811
        %v2859 = vpop.permute.xlu0 %2858
        %2862 = vset.pattern.permute.xlu0 0
        %2863 = vperm.xlu0 %2862, %v2812
        %v2864 = vpop.permute.xlu0 %2863
        %2867 = vset.pattern.permute.xlu0 0
        %2868 = vperm.xlu0 %2867, %v2813
        %v2869 = vpop.permute.xlu0 %2868
        %2872 = vset.pattern.permute.xlu0 0
        %2873 = vperm.xlu0 %2872, %v2814
        %v2874 = vpop.permute.xlu0 %2873
        %2877 = vset.pattern.permute.xlu0 0
        %2878 = vperm.xlu0 %2877, %v2815
        %v2879 = vpop.permute.xlu0 %2878
        %2882 = vset.pattern.permute.xlu0 0
        %2883 = vperm.xlu0 %2882, %v2816
        %v2884 = vpop.permute.xlu0 %2883
        %2887 = vset.pattern.permute.xlu0 0
        %2888 = vperm.xlu0 %2887, %v2817
        %v2889 = vpop.permute.xlu0 %2888
        %2892 = vset.pattern.permute.xlu0 0
        %2893 = vperm.xlu0 %2892, %v2818
        %v2894 = vpop.permute.xlu0 %2893
        %2897 = vset.pattern.permute.xlu0 0
        %2898 = vperm.xlu0 %2897, %v2819
        %v2899 = vpop.permute.xlu0 %2898
        %2902 = vset.pattern.permute.xlu0 0
        %2903 = vperm.xlu0 %2902, %v2820
        %v2904 = vpop.permute.xlu0 %2903
        %2907 = vset.pattern.permute.xlu0 0
        %2908 = vperm.xlu0 %2907, %v2821
        %v2909 = vpop.permute.xlu0 %2908
        %2912 = vset.pattern.permute.xlu0 0
        %2913 = vperm.xlu0 %2912, %v2822
        %v2914 = vpop.permute.xlu0 %2913
        %2917 = vset.pattern.permute.xlu0 0
        %2918 = vperm.xlu0 %2917, %v2823
        %v2919 = vpop.permute.xlu0 %2918
        %2922 = vset.pattern.permute.xlu0 0
        %2923 = vperm.xlu0 %2922, %v2824
        %v2924 = vpop.permute.xlu0 %2923
        %2927 = vset.pattern.permute.xlu0 0
        %2928 = vperm.xlu0 %2927, %v2825
        %v2929 = vpop.permute.xlu0 %2928
        %2932 = vset.pattern.permute.xlu0 0
        %2933 = vperm.xlu0 %2932, %v2826
        %v2934 = vpop.permute.xlu0 %2933
        %2937 = vset.pattern.permute.xlu0 0
        %2938 = vperm.xlu0 %2937, %v2827
        %v2939 = vpop.permute.xlu0 %2938
        %2942 = vset.pattern.permute.xlu0 0
        %2943 = vperm.xlu0 %2942, %v2828
        %v2944 = vpop.permute.xlu0 %2943
        %2947 = vset.pattern.permute.xlu0 0
        %2948 = vperm.xlu0 %2947, %v2829
        %v2949 = vpop.permute.xlu0 %2948
        %2952 = vset.pattern.permute.xlu0 0
        %2953 = vperm.xlu0 %2952, %v2830
        %v2954 = vpop.permute.xlu0 %2953
        %2957 = vset.pattern.permute.xlu0 0
        %2958 = vperm.xlu0 %2957, %v2831
        %v2959 = vpop.permute.xlu0 %2958
        %2962 = vset.pattern.permute.xlu0 0
        %2963 = vperm.xlu0 %2962, %v2832
        %v2964 = vpop.permute.xlu0 %2963
        %2967 = vset.pattern.permute.xlu0 0
        %2968 = vperm.xlu0 %2967, %v2833
        %v2969 = vpop.permute.xlu0 %2968
        %2972 = vset.pattern.permute.xlu0 0
        %2973 = vperm.xlu0 %2972, %v2834
        %v2974 = vpop.permute.xlu0 %2973
        %2977 = vset.pattern.permute.xlu0 0
        %2978 = vperm.xlu0 %2977, %v2835
        %v2979 = vpop.permute.xlu0 %2978
        %2982 = vset.pattern.permute.xlu0 0
        %2983 = vperm.xlu0 %2982, %v2836
        %v2984 = vpop.permute.xlu0 %2983
        %2987 = vset.pattern.permute.xlu0 0
        %2988 = vperm.xlu0 %2987, %v2837
        %v2989 = vpop.permute.xlu0 %2988
        %2992 = vset.pattern.permute.xlu0 0
        %2993 = vperm.xlu0 %2992, %v2838
        %v2994 = vpop.permute.xlu0 %2993
        %2997 = vset.pattern.permute.xlu0 0
        %2998 = vperm.xlu0 %2997, %v2839
        %v2999 = vpop.permute.xlu0 %2998
        %v3001 = vlaneseq
        %v3002 = vshrl.u32 %v3001, 7
        %v3003 = vsub.s32 0, %v3002
        %v3004 = vrot.slane %v2840, %v3003
        %v3005 = vmul.f32 %v2844, %v3004
        %v3006 = vmul.f32 %v2849, %v3004
        %v3007 = vmul.f32 %v2854, %v3004
        %v3008 = vmul.f32 %v2859, %v3004
        %v3009 = vmul.f32 %v2864, %v3004
        %v3010 = vmul.f32 %v2869, %v3004
        %v3011 = vmul.f32 %v2874, %v3004
        %v3012 = vmul.f32 %v2879, %v3004
        %v3013 = vmul.f32 %v2884, %v3004
        %v3014 = vmul.f32 %v2889, %v3004
        %v3015 = vmul.f32 %v2894, %v3004
        %v3016 = vmul.f32 %v2899, %v3004
        %v3017 = vmul.f32 %v2904, %v3004
        %v3018 = vmul.f32 %v2909, %v3004
        %v3019 = vmul.f32 %v2914, %v3004
        %v3020 = vmul.f32 %v2919, %v3004
        %v3021 = vmul.f32 %v2924, %v3004
        %v3022 = vmul.f32 %v2929, %v3004
        %v3023 = vmul.f32 %v2934, %v3004
        %v3024 = vmul.f32 %v2939, %v3004
        %v3025 = vmul.f32 %v2944, %v3004
        %v3026 = vmul.f32 %v2949, %v3004
        %v3027 = vmul.f32 %v2954, %v3004
        %v3028 = vmul.f32 %v2959, %v3004
        %v3029 = vmul.f32 %v2964, %v3004
        %v3030 = vmul.f32 %v2969, %v3004
        %v3031 = vmul.f32 %v2974, %v3004
        %v3032 = vmul.f32 %v2979, %v3004
        %v3033 = vmul.f32 %v2984, %v3004
        %v3034 = vmul.f32 %v2989, %v3004
        %v3035 = vmul.f32 %v2994, %v3004
        %v3036 = vmul.f32 %v2999, %v3004
        %v3037 = vadd.f32 %v2776, %v3005
        %v3038 = vadd.f32 %v2777, %v3006
        %v3039 = vadd.f32 %v2778, %v3007
        %v3040 = vadd.f32 %v2779, %v3008
        %v3041 = vadd.f32 %v2780, %v3009
        %v3042 = vadd.f32 %v2781, %v3010
        %v3043 = vadd.f32 %v2782, %v3011
        %v3044 = vadd.f32 %v2783, %v3012
        %v3045 = vadd.f32 %v2784, %v3013
        %v3046 = vadd.f32 %v2785, %v3014
        %v3047 = vadd.f32 %v2786, %v3015
        %v3048 = vadd.f32 %v2787, %v3016
        %v3049 = vadd.f32 %v2788, %v3017
        %v3050 = vadd.f32 %v2789, %v3018
        %v3051 = vadd.f32 %v2790, %v3019
        %v3052 = vadd.f32 %v2791, %v3020
        %v3053 = vadd.f32 %v2792, %v3021
        %v3054 = vadd.f32 %v2793, %v3022
        %v3055 = vadd.f32 %v2794, %v3023
        %v3056 = vadd.f32 %v2795, %v3024
        %v3057 = vadd.f32 %v2796, %v3025
        %v3058 = vadd.f32 %v2797, %v3026
        %v3059 = vadd.f32 %v2798, %v3027
        %v3060 = vadd.f32 %v2799, %v3028
        %v3061 = vadd.f32 %v2800, %v3029
        %v3062 = vadd.f32 %v2801, %v3030
        %v3063 = vadd.f32 %v2802, %v3031
        %v3064 = vadd.f32 %v2803, %v3032
        %v3065 = vadd.f32 %v2804, %v3033
        %v3066 = vadd.f32 %v2805, %v3034
        %v3067 = vadd.f32 %v2806, %v3035
        %v3068 = vadd.f32 %v2807, %v3036
        %v3069 = vld [vmem:[%s424] sm:$0xff]
        %v3070 = vld [vmem:[%s424 + $0x8] sm:$0xff]
        %v3071 = vld [vmem:[%s424 + $0x18] sm:$0xff]
        %v3072 = vld [vmem:[%s424 + $0x20] sm:$0xff]
        %v3073 = vld [vmem:[%s424 + $0x30] sm:$0xff]
        %v3074 = vld [vmem:[%s424 + $0x38] sm:$0xff]
        %v3075 = vld [vmem:[%s424 + $0x48] sm:$0xff]
        %v3076 = vld [vmem:[%s424 + $0x50] sm:$0xff]
        %v3077 = vld [vmem:[%s424 + $0x60] sm:$0xff]
        %v3078 = vld [vmem:[%s424 + $0x68] sm:$0xff]
        %v3079 = vld [vmem:[%s424 + $0x78] sm:$0xff]
        %v3080 = vld [vmem:[%s424 + $0x80] sm:$0xff]
        %v3081 = vld [vmem:[%s424 + $0x90] sm:$0xff]
        %v3082 = vld [vmem:[%s424 + $0x98] sm:$0xff]
        %v3083 = vld [vmem:[%s424 + $0xa8] sm:$0xff]
        %v3084 = vld [vmem:[%s424 + $0xb0] sm:$0xff]
        %v3085 = vld [vmem:[%s424 + $0xc0] sm:$0xff]
        %v3086 = vld [vmem:[%s424 + $0xc8] sm:$0xff]
        %v3087 = vld [vmem:[%s424 + $0xd8] sm:$0xff]
        %v3088 = vld [vmem:[%s424 + $0xe0] sm:$0xff]
        %v3089 = vld [vmem:[%s424 + $0xf0] sm:$0xff]
        %v3090 = vld [vmem:[%s424 + $0xf8] sm:$0xff]
        %v3091 = vld [vmem:[%s424 + $0x108] sm:$0xff]
        %v3092 = vld [vmem:[%s424 + $0x110] sm:$0xff]
        %v3093 = vld [vmem:[%s424 + $0x120] sm:$0xff]
        %v3094 = vld [vmem:[%s424 + $0x128] sm:$0xff]
        %v3095 = vld [vmem:[%s424 + $0x138] sm:$0xff]
        %v3096 = vld [vmem:[%s424 + $0x140] sm:$0xff]
        %v3097 = vld [vmem:[%s424 + $0x150] sm:$0xff]
        %v3098 = vld [vmem:[%s424 + $0x158] sm:$0xff]
        %v3099 = vld [vmem:[%s424 + $0x168] sm:$0xff]
        %v3100 = vld [vmem:[%s424 + $0x170] sm:$0xff]
        %s3101 = scalar_lea.vmem %s1, 16
        %v3102 = vld [vmem:[%s3101] sm:$0x1]
        %3104 = vset.pattern.permute.xlu0 0
        %3105 = vperm.xlu0 %3104, %v3069
        %v3106 = vpop.permute.xlu0 %3105
        %3109 = vset.pattern.permute.xlu0 0
        %3110 = vperm.xlu0 %3109, %v3070
        %v3111 = vpop.permute.xlu0 %3110
        %3114 = vset.pattern.permute.xlu0 0
        %3115 = vperm.xlu0 %3114, %v3071
        %v3116 = vpop.permute.xlu0 %3115
        %3119 = vset.pattern.permute.xlu0 0
        %3120 = vperm.xlu0 %3119, %v3072
        %v3121 = vpop.permute.xlu0 %3120
        %3124 = vset.pattern.permute.xlu0 0
        %3125 = vperm.xlu0 %3124, %v3073
        %v3126 = vpop.permute.xlu0 %3125
        %3129 = vset.pattern.permute.xlu0 0
        %3130 = vperm.xlu0 %3129, %v3074
        %v3131 = vpop.permute.xlu0 %3130
        %3134 = vset.pattern.permute.xlu0 0
        %3135 = vperm.xlu0 %3134, %v3075
        %v3136 = vpop.permute.xlu0 %3135
        %3139 = vset.pattern.permute.xlu0 0
        %3140 = vperm.xlu0 %3139, %v3076
        %v3141 = vpop.permute.xlu0 %3140
        %3144 = vset.pattern.permute.xlu0 0
        %3145 = vperm.xlu0 %3144, %v3077
        %v3146 = vpop.permute.xlu0 %3145
        %3149 = vset.pattern.permute.xlu0 0
        %3150 = vperm.xlu0 %3149, %v3078
        %v3151 = vpop.permute.xlu0 %3150
        %3154 = vset.pattern.permute.xlu0 0
        %3155 = vperm.xlu0 %3154, %v3079
        %v3156 = vpop.permute.xlu0 %3155
        %3159 = vset.pattern.permute.xlu0 0
        %3160 = vperm.xlu0 %3159, %v3080
        %v3161 = vpop.permute.xlu0 %3160
        %3164 = vset.pattern.permute.xlu0 0
        %3165 = vperm.xlu0 %3164, %v3081
        %v3166 = vpop.permute.xlu0 %3165
        %3169 = vset.pattern.permute.xlu0 0
        %3170 = vperm.xlu0 %3169, %v3082
        %v3171 = vpop.permute.xlu0 %3170
        %3174 = vset.pattern.permute.xlu0 0
        %3175 = vperm.xlu0 %3174, %v3083
        %v3176 = vpop.permute.xlu0 %3175
        %3179 = vset.pattern.permute.xlu0 0
        %3180 = vperm.xlu0 %3179, %v3084
        %v3181 = vpop.permute.xlu0 %3180
        %3184 = vset.pattern.permute.xlu0 0
        %3185 = vperm.xlu0 %3184, %v3085
        %v3186 = vpop.permute.xlu0 %3185
        %3189 = vset.pattern.permute.xlu0 0
        %3190 = vperm.xlu0 %3189, %v3086
        %v3191 = vpop.permute.xlu0 %3190
        %3194 = vset.pattern.permute.xlu0 0
        %3195 = vperm.xlu0 %3194, %v3087
        %v3196 = vpop.permute.xlu0 %3195
        %3199 = vset.pattern.permute.xlu0 0
        %3200 = vperm.xlu0 %3199, %v3088
        %v3201 = vpop.permute.xlu0 %3200
        %3204 = vset.pattern.permute.xlu0 0
        %3205 = vperm.xlu0 %3204, %v3089
        %v3206 = vpop.permute.xlu0 %3205
        %3209 = vset.pattern.permute.xlu0 0
        %3210 = vperm.xlu0 %3209, %v3090
        %v3211 = vpop.permute.xlu0 %3210
        %3214 = vset.pattern.permute.xlu0 0
        %3215 = vperm.xlu0 %3214, %v3091
        %v3216 = vpop.permute.xlu0 %3215
        %3219 = vset.pattern.permute.xlu0 0
        %3220 = vperm.xlu0 %3219, %v3092
        %v3221 = vpop.permute.xlu0 %3220
        %3224 = vset.pattern.permute.xlu0 0
        %3225 = vperm.xlu0 %3224, %v3093
        %v3226 = vpop.permute.xlu0 %3225
        %3229 = vset.pattern.permute.xlu0 0
        %3230 = vperm.xlu0 %3229, %v3094
        %v3231 = vpop.permute.xlu0 %3230
        %3234 = vset.pattern.permute.xlu0 0
        %3235 = vperm.xlu0 %3234, %v3095
        %v3236 = vpop.permute.xlu0 %3235
        %3239 = vset.pattern.permute.xlu0 0
        %3240 = vperm.xlu0 %3239, %v3096
        %v3241 = vpop.permute.xlu0 %3240
        %3244 = vset.pattern.permute.xlu0 0
        %3245 = vperm.xlu0 %3244, %v3097
        %v3246 = vpop.permute.xlu0 %3245
        %3249 = vset.pattern.permute.xlu0 0
        %3250 = vperm.xlu0 %3249, %v3098
        %v3251 = vpop.permute.xlu0 %3250
        %3254 = vset.pattern.permute.xlu0 0
        %3255 = vperm.xlu0 %3254, %v3099
        %v3256 = vpop.permute.xlu0 %3255
        %3259 = vset.pattern.permute.xlu0 0
        %3260 = vperm.xlu0 %3259, %v3100
        %v3261 = vpop.permute.xlu0 %3260
        %v3263 = vlaneseq
        %v3264 = vshrl.u32 %v3263, 7
        %v3265 = vsub.s32 0, %v3264
        %v3266 = vrot.slane %v3102, %v3265
        %v3267 = vmul.f32 %v3106, %v3266
        %v3268 = vmul.f32 %v3111, %v3266
        %v3269 = vmul.f32 %v3116, %v3266
        %v3270 = vmul.f32 %v3121, %v3266
        %v3271 = vmul.f32 %v3126, %v3266
        %v3272 = vmul.f32 %v3131, %v3266
        %v3273 = vmul.f32 %v3136, %v3266
        %v3274 = vmul.f32 %v3141, %v3266
        %v3275 = vmul.f32 %v3146, %v3266
        %v3276 = vmul.f32 %v3151, %v3266
        %v3277 = vmul.f32 %v3156, %v3266
        %v3278 = vmul.f32 %v3161, %v3266
        %v3279 = vmul.f32 %v3166, %v3266
        %v3280 = vmul.f32 %v3171, %v3266
        %v3281 = vmul.f32 %v3176, %v3266
        %v3282 = vmul.f32 %v3181, %v3266
        %v3283 = vmul.f32 %v3186, %v3266
        %v3284 = vmul.f32 %v3191, %v3266
        %v3285 = vmul.f32 %v3196, %v3266
        %v3286 = vmul.f32 %v3201, %v3266
        %v3287 = vmul.f32 %v3206, %v3266
        %v3288 = vmul.f32 %v3211, %v3266
        %v3289 = vmul.f32 %v3216, %v3266
        %v3290 = vmul.f32 %v3221, %v3266
        %v3291 = vmul.f32 %v3226, %v3266
        %v3292 = vmul.f32 %v3231, %v3266
        %v3293 = vmul.f32 %v3236, %v3266
        %v3294 = vmul.f32 %v3241, %v3266
        %v3295 = vmul.f32 %v3246, %v3266
        %v3296 = vmul.f32 %v3251, %v3266
        %v3297 = vmul.f32 %v3256, %v3266
        %v3298 = vmul.f32 %v3261, %v3266
        %v3299 = vadd.f32 %v3037, %v3267
        %v3300 = vadd.f32 %v3038, %v3268
        %v3301 = vadd.f32 %v3039, %v3269
        %v3302 = vadd.f32 %v3040, %v3270
        %v3303 = vadd.f32 %v3041, %v3271
        %v3304 = vadd.f32 %v3042, %v3272
        %v3305 = vadd.f32 %v3043, %v3273
        %v3306 = vadd.f32 %v3044, %v3274
        %v3307 = vadd.f32 %v3045, %v3275
        %v3308 = vadd.f32 %v3046, %v3276
        %v3309 = vadd.f32 %v3047, %v3277
        %v3310 = vadd.f32 %v3048, %v3278
        %v3311 = vadd.f32 %v3049, %v3279
        %v3312 = vadd.f32 %v3050, %v3280
        %v3313 = vadd.f32 %v3051, %v3281
        %v3314 = vadd.f32 %v3052, %v3282
        %v3315 = vadd.f32 %v3053, %v3283
        %v3316 = vadd.f32 %v3054, %v3284
        %v3317 = vadd.f32 %v3055, %v3285
        %v3318 = vadd.f32 %v3056, %v3286
        %v3319 = vadd.f32 %v3057, %v3287
        %v3320 = vadd.f32 %v3058, %v3288
        %v3321 = vadd.f32 %v3059, %v3289
        %v3322 = vadd.f32 %v3060, %v3290
        %v3323 = vadd.f32 %v3061, %v3291
        %v3324 = vadd.f32 %v3062, %v3292
        %v3325 = vadd.f32 %v3063, %v3293
        %v3326 = vadd.f32 %v3064, %v3294
        %v3327 = vadd.f32 %v3065, %v3295
        %v3328 = vadd.f32 %v3066, %v3296
        %v3329 = vadd.f32 %v3067, %v3297
        %v3330 = vadd.f32 %v3068, %v3298
        %v3331 = vld [vmem:[%s424 + $0x1] sm:$0xff]
        %v3332 = vld [vmem:[%s424 + $0x9] sm:$0xff]
        %v3333 = vld [vmem:[%s424 + $0x19] sm:$0xff]
        %v3334 = vld [vmem:[%s424 + $0x21] sm:$0xff]
        %v3335 = vld [vmem:[%s424 + $0x31] sm:$0xff]
        %v3336 = vld [vmem:[%s424 + $0x39] sm:$0xff]
        %v3337 = vld [vmem:[%s424 + $0x49] sm:$0xff]
        %v3338 = vld [vmem:[%s424 + $0x51] sm:$0xff]
        %v3339 = vld [vmem:[%s424 + $0x61] sm:$0xff]
        %v3340 = vld [vmem:[%s424 + $0x69] sm:$0xff]
        %v3341 = vld [vmem:[%s424 + $0x79] sm:$0xff]
        %v3342 = vld [vmem:[%s424 + $0x81] sm:$0xff]
        %v3343 = vld [vmem:[%s424 + $0x91] sm:$0xff]
        %v3344 = vld [vmem:[%s424 + $0x99] sm:$0xff]
        %v3345 = vld [vmem:[%s424 + $0xa9] sm:$0xff]
        %v3346 = vld [vmem:[%s424 + $0xb1] sm:$0xff]
        %v3347 = vld [vmem:[%s424 + $0xc1] sm:$0xff]
        %v3348 = vld [vmem:[%s424 + $0xc9] sm:$0xff]
        %v3349 = vld [vmem:[%s424 + $0xd9] sm:$0xff]
        %v3350 = vld [vmem:[%s424 + $0xe1] sm:$0xff]
        %v3351 = vld [vmem:[%s424 + $0xf1] sm:$0xff]
        %v3352 = vld [vmem:[%s424 + $0xf9] sm:$0xff]
        %v3353 = vld [vmem:[%s424 + $0x109] sm:$0xff]
        %v3354 = vld [vmem:[%s424 + $0x111] sm:$0xff]
        %v3355 = vld [vmem:[%s424 + $0x121] sm:$0xff]
        %v3356 = vld [vmem:[%s424 + $0x129] sm:$0xff]
        %v3357 = vld [vmem:[%s424 + $0x139] sm:$0xff]
        %v3358 = vld [vmem:[%s424 + $0x141] sm:$0xff]
        %v3359 = vld [vmem:[%s424 + $0x151] sm:$0xff]
        %v3360 = vld [vmem:[%s424 + $0x159] sm:$0xff]
        %v3361 = vld [vmem:[%s424 + $0x169] sm:$0xff]
        %v3362 = vld [vmem:[%s424 + $0x171] sm:$0xff]
        %v3363 = vld [vmem:[%s3101 + $0x1] sm:$0x1]
        %3365 = vset.pattern.permute.xlu0 0
        %3366 = vperm.xlu0 %3365, %v3331
        %v3367 = vpop.permute.xlu0 %3366
        %3370 = vset.pattern.permute.xlu0 0
        %3371 = vperm.xlu0 %3370, %v3332
        %v3372 = vpop.permute.xlu0 %3371
        %3375 = vset.pattern.permute.xlu0 0
        %3376 = vperm.xlu0 %3375, %v3333
        %v3377 = vpop.permute.xlu0 %3376
        %3380 = vset.pattern.permute.xlu0 0
        %3381 = vperm.xlu0 %3380, %v3334
        %v3382 = vpop.permute.xlu0 %3381
        %3385 = vset.pattern.permute.xlu0 0
        %3386 = vperm.xlu0 %3385, %v3335
        %v3387 = vpop.permute.xlu0 %3386
        %3390 = vset.pattern.permute.xlu0 0
        %3391 = vperm.xlu0 %3390, %v3336
        %v3392 = vpop.permute.xlu0 %3391
        %3395 = vset.pattern.permute.xlu0 0
        %3396 = vperm.xlu0 %3395, %v3337
        %v3397 = vpop.permute.xlu0 %3396
        %3400 = vset.pattern.permute.xlu0 0
        %3401 = vperm.xlu0 %3400, %v3338
        %v3402 = vpop.permute.xlu0 %3401
        %3405 = vset.pattern.permute.xlu0 0
        %3406 = vperm.xlu0 %3405, %v3339
        %v3407 = vpop.permute.xlu0 %3406
        %3410 = vset.pattern.permute.xlu0 0
        %3411 = vperm.xlu0 %3410, %v3340
        %v3412 = vpop.permute.xlu0 %3411
        %3415 = vset.pattern.permute.xlu0 0
        %3416 = vperm.xlu0 %3415, %v3341
        %v3417 = vpop.permute.xlu0 %3416
        %3420 = vset.pattern.permute.xlu0 0
        %3421 = vperm.xlu0 %3420, %v3342
        %v3422 = vpop.permute.xlu0 %3421
        %3425 = vset.pattern.permute.xlu0 0
        %3426 = vperm.xlu0 %3425, %v3343
        %v3427 = vpop.permute.xlu0 %3426
        %3430 = vset.pattern.permute.xlu0 0
        %3431 = vperm.xlu0 %3430, %v3344
        %v3432 = vpop.permute.xlu0 %3431
        %3435 = vset.pattern.permute.xlu0 0
        %3436 = vperm.xlu0 %3435, %v3345
        %v3437 = vpop.permute.xlu0 %3436
        %3440 = vset.pattern.permute.xlu0 0
        %3441 = vperm.xlu0 %3440, %v3346
        %v3442 = vpop.permute.xlu0 %3441
        %3445 = vset.pattern.permute.xlu0 0
        %3446 = vperm.xlu0 %3445, %v3347
        %v3447 = vpop.permute.xlu0 %3446
        %3450 = vset.pattern.permute.xlu0 0
        %3451 = vperm.xlu0 %3450, %v3348
        %v3452 = vpop.permute.xlu0 %3451
        %3455 = vset.pattern.permute.xlu0 0
        %3456 = vperm.xlu0 %3455, %v3349
        %v3457 = vpop.permute.xlu0 %3456
        %3460 = vset.pattern.permute.xlu0 0
        %3461 = vperm.xlu0 %3460, %v3350
        %v3462 = vpop.permute.xlu0 %3461
        %3465 = vset.pattern.permute.xlu0 0
        %3466 = vperm.xlu0 %3465, %v3351
        %v3467 = vpop.permute.xlu0 %3466
        %3470 = vset.pattern.permute.xlu0 0
        %3471 = vperm.xlu0 %3470, %v3352
        %v3472 = vpop.permute.xlu0 %3471
        %3475 = vset.pattern.permute.xlu0 0
        %3476 = vperm.xlu0 %3475, %v3353
        %v3477 = vpop.permute.xlu0 %3476
        %3480 = vset.pattern.permute.xlu0 0
        %3481 = vperm.xlu0 %3480, %v3354
        %v3482 = vpop.permute.xlu0 %3481
        %3485 = vset.pattern.permute.xlu0 0
        %3486 = vperm.xlu0 %3485, %v3355
        %v3487 = vpop.permute.xlu0 %3486
        %3490 = vset.pattern.permute.xlu0 0
        %3491 = vperm.xlu0 %3490, %v3356
        %v3492 = vpop.permute.xlu0 %3491
        %3495 = vset.pattern.permute.xlu0 0
        %3496 = vperm.xlu0 %3495, %v3357
        %v3497 = vpop.permute.xlu0 %3496
        %3500 = vset.pattern.permute.xlu0 0
        %3501 = vperm.xlu0 %3500, %v3358
        %v3502 = vpop.permute.xlu0 %3501
        %3505 = vset.pattern.permute.xlu0 0
        %3506 = vperm.xlu0 %3505, %v3359
        %v3507 = vpop.permute.xlu0 %3506
        %3510 = vset.pattern.permute.xlu0 0
        %3511 = vperm.xlu0 %3510, %v3360
        %v3512 = vpop.permute.xlu0 %3511
        %3515 = vset.pattern.permute.xlu0 0
        %3516 = vperm.xlu0 %3515, %v3361
        %v3517 = vpop.permute.xlu0 %3516
        %3520 = vset.pattern.permute.xlu0 0
        %3521 = vperm.xlu0 %3520, %v3362
        %v3522 = vpop.permute.xlu0 %3521
        %v3524 = vlaneseq
        %v3525 = vshrl.u32 %v3524, 7
        %v3526 = vsub.s32 0, %v3525
        %v3527 = vrot.slane %v3363, %v3526
        %v3528 = vmul.f32 %v3367, %v3527
        %v3529 = vmul.f32 %v3372, %v3527
        %v3530 = vmul.f32 %v3377, %v3527
        %v3531 = vmul.f32 %v3382, %v3527
        %v3532 = vmul.f32 %v3387, %v3527
        %v3533 = vmul.f32 %v3392, %v3527
        %v3534 = vmul.f32 %v3397, %v3527
        %v3535 = vmul.f32 %v3402, %v3527
        %v3536 = vmul.f32 %v3407, %v3527
        %v3537 = vmul.f32 %v3412, %v3527
        %v3538 = vmul.f32 %v3417, %v3527
        %v3539 = vmul.f32 %v3422, %v3527
        %v3540 = vmul.f32 %v3427, %v3527
        %v3541 = vmul.f32 %v3432, %v3527
        %v3542 = vmul.f32 %v3437, %v3527
        %v3543 = vmul.f32 %v3442, %v3527
        %v3544 = vmul.f32 %v3447, %v3527
        %v3545 = vmul.f32 %v3452, %v3527
        %v3546 = vmul.f32 %v3457, %v3527
        %v3547 = vmul.f32 %v3462, %v3527
        %v3548 = vmul.f32 %v3467, %v3527
        %v3549 = vmul.f32 %v3472, %v3527
        %v3550 = vmul.f32 %v3477, %v3527
        %v3551 = vmul.f32 %v3482, %v3527
        %v3552 = vmul.f32 %v3487, %v3527
        %v3553 = vmul.f32 %v3492, %v3527
        %v3554 = vmul.f32 %v3497, %v3527
        %v3555 = vmul.f32 %v3502, %v3527
        %v3556 = vmul.f32 %v3507, %v3527
        %v3557 = vmul.f32 %v3512, %v3527
        %v3558 = vmul.f32 %v3517, %v3527
        %v3559 = vmul.f32 %v3522, %v3527
        %v3560 = vadd.f32 %v3299, %v3528
        %v3561 = vadd.f32 %v3300, %v3529
        %v3562 = vadd.f32 %v3301, %v3530
        %v3563 = vadd.f32 %v3302, %v3531
        %v3564 = vadd.f32 %v3303, %v3532
        %v3565 = vadd.f32 %v3304, %v3533
        %v3566 = vadd.f32 %v3305, %v3534
        %v3567 = vadd.f32 %v3306, %v3535
        %v3568 = vadd.f32 %v3307, %v3536
        %v3569 = vadd.f32 %v3308, %v3537
        %v3570 = vadd.f32 %v3309, %v3538
        %v3571 = vadd.f32 %v3310, %v3539
        %v3572 = vadd.f32 %v3311, %v3540
        %v3573 = vadd.f32 %v3312, %v3541
        %v3574 = vadd.f32 %v3313, %v3542
        %v3575 = vadd.f32 %v3314, %v3543
        %v3576 = vadd.f32 %v3315, %v3544
        %v3577 = vadd.f32 %v3316, %v3545
        %v3578 = vadd.f32 %v3317, %v3546
        %v3579 = vadd.f32 %v3318, %v3547
        %v3580 = vadd.f32 %v3319, %v3548
        %v3581 = vadd.f32 %v3320, %v3549
        %v3582 = vadd.f32 %v3321, %v3550
        %v3583 = vadd.f32 %v3322, %v3551
        %v3584 = vadd.f32 %v3323, %v3552
        %v3585 = vadd.f32 %v3324, %v3553
        %v3586 = vadd.f32 %v3325, %v3554
        %v3587 = vadd.f32 %v3326, %v3555
        %v3588 = vadd.f32 %v3327, %v3556
        %v3589 = vadd.f32 %v3328, %v3557
        %v3590 = vadd.f32 %v3329, %v3558
        %v3591 = vadd.f32 %v3330, %v3559
        %v3592 = vld [vmem:[%s424 + $0x2] sm:$0xff]
        %v3593 = vld [vmem:[%s424 + $0xa] sm:$0xff]
        %v3594 = vld [vmem:[%s424 + $0x1a] sm:$0xff]
        %v3595 = vld [vmem:[%s424 + $0x22] sm:$0xff]
        %v3596 = vld [vmem:[%s424 + $0x32] sm:$0xff]
        %v3597 = vld [vmem:[%s424 + $0x3a] sm:$0xff]
        %v3598 = vld [vmem:[%s424 + $0x4a] sm:$0xff]
        %v3599 = vld [vmem:[%s424 + $0x52] sm:$0xff]
        %v3600 = vld [vmem:[%s424 + $0x62] sm:$0xff]
        %v3601 = vld [vmem:[%s424 + $0x6a] sm:$0xff]
        %v3602 = vld [vmem:[%s424 + $0x7a] sm:$0xff]
        %v3603 = vld [vmem:[%s424 + $0x82] sm:$0xff]
        %v3604 = vld [vmem:[%s424 + $0x92] sm:$0xff]
        %v3605 = vld [vmem:[%s424 + $0x9a] sm:$0xff]
        %v3606 = vld [vmem:[%s424 + $0xaa] sm:$0xff]
        %v3607 = vld [vmem:[%s424 + $0xb2] sm:$0xff]
        %v3608 = vld [vmem:[%s424 + $0xc2] sm:$0xff]
        %v3609 = vld [vmem:[%s424 + $0xca] sm:$0xff]
        %v3610 = vld [vmem:[%s424 + $0xda] sm:$0xff]
        %v3611 = vld [vmem:[%s424 + $0xe2] sm:$0xff]
        %v3612 = vld [vmem:[%s424 + $0xf2] sm:$0xff]
        %v3613 = vld [vmem:[%s424 + $0xfa] sm:$0xff]
        %v3614 = vld [vmem:[%s424 + $0x10a] sm:$0xff]
        %v3615 = vld [vmem:[%s424 + $0x112] sm:$0xff]
        %v3616 = vld [vmem:[%s424 + $0x122] sm:$0xff]
        %v3617 = vld [vmem:[%s424 + $0x12a] sm:$0xff]
        %v3618 = vld [vmem:[%s424 + $0x13a] sm:$0xff]
        %v3619 = vld [vmem:[%s424 + $0x142] sm:$0xff]
        %v3620 = vld [vmem:[%s424 + $0x152] sm:$0xff]
        %v3621 = vld [vmem:[%s424 + $0x15a] sm:$0xff]
        %v3622 = vld [vmem:[%s424 + $0x16a] sm:$0xff]
        %v3623 = vld [vmem:[%s424 + $0x172] sm:$0xff]
        %v3624 = vld [vmem:[%s3101 + $0x2] sm:$0x1]
        %3626 = vset.pattern.permute.xlu0 0
        %3627 = vperm.xlu0 %3626, %v3592
        %v3628 = vpop.permute.xlu0 %3627
        %3631 = vset.pattern.permute.xlu0 0
        %3632 = vperm.xlu0 %3631, %v3593
        %v3633 = vpop.permute.xlu0 %3632
        %3636 = vset.pattern.permute.xlu0 0
        %3637 = vperm.xlu0 %3636, %v3594
        %v3638 = vpop.permute.xlu0 %3637
        %3641 = vset.pattern.permute.xlu0 0
        %3642 = vperm.xlu0 %3641, %v3595
        %v3643 = vpop.permute.xlu0 %3642
        %3646 = vset.pattern.permute.xlu0 0
        %3647 = vperm.xlu0 %3646, %v3596
        %v3648 = vpop.permute.xlu0 %3647
        %3651 = vset.pattern.permute.xlu0 0
        %3652 = vperm.xlu0 %3651, %v3597
        %v3653 = vpop.permute.xlu0 %3652
        %3656 = vset.pattern.permute.xlu0 0
        %3657 = vperm.xlu0 %3656, %v3598
        %v3658 = vpop.permute.xlu0 %3657
        %3661 = vset.pattern.permute.xlu0 0
        %3662 = vperm.xlu0 %3661, %v3599
        %v3663 = vpop.permute.xlu0 %3662
        %3666 = vset.pattern.permute.xlu0 0
        %3667 = vperm.xlu0 %3666, %v3600
        %v3668 = vpop.permute.xlu0 %3667
        %3671 = vset.pattern.permute.xlu0 0
        %3672 = vperm.xlu0 %3671, %v3601
        %v3673 = vpop.permute.xlu0 %3672
        %3676 = vset.pattern.permute.xlu0 0
        %3677 = vperm.xlu0 %3676, %v3602
        %v3678 = vpop.permute.xlu0 %3677
        %3681 = vset.pattern.permute.xlu0 0
        %3682 = vperm.xlu0 %3681, %v3603
        %v3683 = vpop.permute.xlu0 %3682
        %3686 = vset.pattern.permute.xlu0 0
        %3687 = vperm.xlu0 %3686, %v3604
        %v3688 = vpop.permute.xlu0 %3687
        %3691 = vset.pattern.permute.xlu0 0
        %3692 = vperm.xlu0 %3691, %v3605
        %v3693 = vpop.permute.xlu0 %3692
        %3696 = vset.pattern.permute.xlu0 0
        %3697 = vperm.xlu0 %3696, %v3606
        %v3698 = vpop.permute.xlu0 %3697
        %3701 = vset.pattern.permute.xlu0 0
        %3702 = vperm.xlu0 %3701, %v3607
        %v3703 = vpop.permute.xlu0 %3702
        %3706 = vset.pattern.permute.xlu0 0
        %3707 = vperm.xlu0 %3706, %v3608
        %v3708 = vpop.permute.xlu0 %3707
        %3711 = vset.pattern.permute.xlu0 0
        %3712 = vperm.xlu0 %3711, %v3609
        %v3713 = vpop.permute.xlu0 %3712
        %3716 = vset.pattern.permute.xlu0 0
        %3717 = vperm.xlu0 %3716, %v3610
        %v3718 = vpop.permute.xlu0 %3717
        %3721 = vset.pattern.permute.xlu0 0
        %3722 = vperm.xlu0 %3721, %v3611
        %v3723 = vpop.permute.xlu0 %3722
        %3726 = vset.pattern.permute.xlu0 0
        %3727 = vperm.xlu0 %3726, %v3612
        %v3728 = vpop.permute.xlu0 %3727
        %3731 = vset.pattern.permute.xlu0 0
        %3732 = vperm.xlu0 %3731, %v3613
        %v3733 = vpop.permute.xlu0 %3732
        %3736 = vset.pattern.permute.xlu0 0
        %3737 = vperm.xlu0 %3736, %v3614
        %v3738 = vpop.permute.xlu0 %3737
        %3741 = vset.pattern.permute.xlu0 0
        %3742 = vperm.xlu0 %3741, %v3615
        %v3743 = vpop.permute.xlu0 %3742
        %3746 = vset.pattern.permute.xlu0 0
        %3747 = vperm.xlu0 %3746, %v3616
        %v3748 = vpop.permute.xlu0 %3747
        %3751 = vset.pattern.permute.xlu0 0
        %3752 = vperm.xlu0 %3751, %v3617
        %v3753 = vpop.permute.xlu0 %3752
        %3756 = vset.pattern.permute.xlu0 0
        %3757 = vperm.xlu0 %3756, %v3618
        %v3758 = vpop.permute.xlu0 %3757
        %3761 = vset.pattern.permute.xlu0 0
        %3762 = vperm.xlu0 %3761, %v3619
        %v3763 = vpop.permute.xlu0 %3762
        %3766 = vset.pattern.permute.xlu0 0
        %3767 = vperm.xlu0 %3766, %v3620
        %v3768 = vpop.permute.xlu0 %3767
        %3771 = vset.pattern.permute.xlu0 0
        %3772 = vperm.xlu0 %3771, %v3621
        %v3773 = vpop.permute.xlu0 %3772
        %3776 = vset.pattern.permute.xlu0 0
        %3777 = vperm.xlu0 %3776, %v3622
        %v3778 = vpop.permute.xlu0 %3777
        %3781 = vset.pattern.permute.xlu0 0
        %3782 = vperm.xlu0 %3781, %v3623
        %v3783 = vpop.permute.xlu0 %3782
        %v3785 = vlaneseq
        %v3786 = vshrl.u32 %v3785, 7
        %v3787 = vsub.s32 0, %v3786
        %v3788 = vrot.slane %v3624, %v3787
        %v3789 = vmul.f32 %v3628, %v3788
        %v3790 = vmul.f32 %v3633, %v3788
        %v3791 = vmul.f32 %v3638, %v3788
        %v3792 = vmul.f32 %v3643, %v3788
        %v3793 = vmul.f32 %v3648, %v3788
        %v3794 = vmul.f32 %v3653, %v3788
        %v3795 = vmul.f32 %v3658, %v3788
        %v3796 = vmul.f32 %v3663, %v3788
        %v3797 = vmul.f32 %v3668, %v3788
        %v3798 = vmul.f32 %v3673, %v3788
        %v3799 = vmul.f32 %v3678, %v3788
        %v3800 = vmul.f32 %v3683, %v3788
        %v3801 = vmul.f32 %v3688, %v3788
        %v3802 = vmul.f32 %v3693, %v3788
        %v3803 = vmul.f32 %v3698, %v3788
        %v3804 = vmul.f32 %v3703, %v3788
        %v3805 = vmul.f32 %v3708, %v3788
        %v3806 = vmul.f32 %v3713, %v3788
        %v3807 = vmul.f32 %v3718, %v3788
        %v3808 = vmul.f32 %v3723, %v3788
        %v3809 = vmul.f32 %v3728, %v3788
        %v3810 = vmul.f32 %v3733, %v3788
        %v3811 = vmul.f32 %v3738, %v3788
        %v3812 = vmul.f32 %v3743, %v3788
        %v3813 = vmul.f32 %v3748, %v3788
        %v3814 = vmul.f32 %v3753, %v3788
        %v3815 = vmul.f32 %v3758, %v3788
        %v3816 = vmul.f32 %v3763, %v3788
        %v3817 = vmul.f32 %v3768, %v3788
        %v3818 = vmul.f32 %v3773, %v3788
        %v3819 = vmul.f32 %v3778, %v3788
        %v3820 = vmul.f32 %v3783, %v3788
        %v3821 = vadd.f32 %v3560, %v3789
        %v3822 = vadd.f32 %v3561, %v3790
        %v3823 = vadd.f32 %v3562, %v3791
        %v3824 = vadd.f32 %v3563, %v3792
        %v3825 = vadd.f32 %v3564, %v3793
        %v3826 = vadd.f32 %v3565, %v3794
        %v3827 = vadd.f32 %v3566, %v3795
        %v3828 = vadd.f32 %v3567, %v3796
        %v3829 = vadd.f32 %v3568, %v3797
        %v3830 = vadd.f32 %v3569, %v3798
        %v3831 = vadd.f32 %v3570, %v3799
        %v3832 = vadd.f32 %v3571, %v3800
        %v3833 = vadd.f32 %v3572, %v3801
        %v3834 = vadd.f32 %v3573, %v3802
        %v3835 = vadd.f32 %v3574, %v3803
        %v3836 = vadd.f32 %v3575, %v3804
        %v3837 = vadd.f32 %v3576, %v3805
        %v3838 = vadd.f32 %v3577, %v3806
        %v3839 = vadd.f32 %v3578, %v3807
        %v3840 = vadd.f32 %v3579, %v3808
        %v3841 = vadd.f32 %v3580, %v3809
        %v3842 = vadd.f32 %v3581, %v3810
        %v3843 = vadd.f32 %v3582, %v3811
        %v3844 = vadd.f32 %v3583, %v3812
        %v3845 = vadd.f32 %v3584, %v3813
        %v3846 = vadd.f32 %v3585, %v3814
        %v3847 = vadd.f32 %v3586, %v3815
        %v3848 = vadd.f32 %v3587, %v3816
        %v3849 = vadd.f32 %v3588, %v3817
        %v3850 = vadd.f32 %v3589, %v3818
        %v3851 = vadd.f32 %v3590, %v3819
        %v3852 = vadd.f32 %v3591, %v3820
        %v3853 = vld [vmem:[%s424 + $0x3] sm:$0xff]
        %v3854 = vld [vmem:[%s424 + $0xb] sm:$0xff]
        %v3855 = vld [vmem:[%s424 + $0x1b] sm:$0xff]
        %v3856 = vld [vmem:[%s424 + $0x23] sm:$0xff]
        %v3857 = vld [vmem:[%s424 + $0x33] sm:$0xff]
        %v3858 = vld [vmem:[%s424 + $0x3b] sm:$0xff]
        %v3859 = vld [vmem:[%s424 + $0x4b] sm:$0xff]
        %v3860 = vld [vmem:[%s424 + $0x53] sm:$0xff]
        %v3861 = vld [vmem:[%s424 + $0x63] sm:$0xff]
        %v3862 = vld [vmem:[%s424 + $0x6b] sm:$0xff]
        %v3863 = vld [vmem:[%s424 + $0x7b] sm:$0xff]
        %v3864 = vld [vmem:[%s424 + $0x83] sm:$0xff]
        %v3865 = vld [vmem:[%s424 + $0x93] sm:$0xff]
        %v3866 = vld [vmem:[%s424 + $0x9b] sm:$0xff]
        %v3867 = vld [vmem:[%s424 + $0xab] sm:$0xff]
        %v3868 = vld [vmem:[%s424 + $0xb3] sm:$0xff]
        %v3869 = vld [vmem:[%s424 + $0xc3] sm:$0xff]
        %v3870 = vld [vmem:[%s424 + $0xcb] sm:$0xff]
        %v3871 = vld [vmem:[%s424 + $0xdb] sm:$0xff]
        %v3872 = vld [vmem:[%s424 + $0xe3] sm:$0xff]
        %v3873 = vld [vmem:[%s424 + $0xf3] sm:$0xff]
        %v3874 = vld [vmem:[%s424 + $0xfb] sm:$0xff]
        %v3875 = vld [vmem:[%s424 + $0x10b] sm:$0xff]
        %v3876 = vld [vmem:[%s424 + $0x113] sm:$0xff]
        %v3877 = vld [vmem:[%s424 + $0x123] sm:$0xff]
        %v3878 = vld [vmem:[%s424 + $0x12b] sm:$0xff]
        %v3879 = vld [vmem:[%s424 + $0x13b] sm:$0xff]
        %v3880 = vld [vmem:[%s424 + $0x143] sm:$0xff]
        %v3881 = vld [vmem:[%s424 + $0x153] sm:$0xff]
        %v3882 = vld [vmem:[%s424 + $0x15b] sm:$0xff]
        %v3883 = vld [vmem:[%s424 + $0x16b] sm:$0xff]
        %v3884 = vld [vmem:[%s424 + $0x173] sm:$0xff]
        %v3885 = vld [vmem:[%s3101 + $0x3] sm:$0x1]
        %3887 = vset.pattern.permute.xlu0 0
        %3888 = vperm.xlu0 %3887, %v3853
        %v3889 = vpop.permute.xlu0 %3888
        %3892 = vset.pattern.permute.xlu0 0
        %3893 = vperm.xlu0 %3892, %v3854
        %v3894 = vpop.permute.xlu0 %3893
        %3897 = vset.pattern.permute.xlu0 0
        %3898 = vperm.xlu0 %3897, %v3855
        %v3899 = vpop.permute.xlu0 %3898
        %3902 = vset.pattern.permute.xlu0 0
        %3903 = vperm.xlu0 %3902, %v3856
        %v3904 = vpop.permute.xlu0 %3903
        %3907 = vset.pattern.permute.xlu0 0
        %3908 = vperm.xlu0 %3907, %v3857
        %v3909 = vpop.permute.xlu0 %3908
        %3912 = vset.pattern.permute.xlu0 0
        %3913 = vperm.xlu0 %3912, %v3858
        %v3914 = vpop.permute.xlu0 %3913
        %3917 = vset.pattern.permute.xlu0 0
        %3918 = vperm.xlu0 %3917, %v3859
        %v3919 = vpop.permute.xlu0 %3918
        %3922 = vset.pattern.permute.xlu0 0
        %3923 = vperm.xlu0 %3922, %v3860
        %v3924 = vpop.permute.xlu0 %3923
        %3927 = vset.pattern.permute.xlu0 0
        %3928 = vperm.xlu0 %3927, %v3861
        %v3929 = vpop.permute.xlu0 %3928
        %3932 = vset.pattern.permute.xlu0 0
        %3933 = vperm.xlu0 %3932, %v3862
        %v3934 = vpop.permute.xlu0 %3933
        %3937 = vset.pattern.permute.xlu0 0
        %3938 = vperm.xlu0 %3937, %v3863
        %v3939 = vpop.permute.xlu0 %3938
        %3942 = vset.pattern.permute.xlu0 0
        %3943 = vperm.xlu0 %3942, %v3864
        %v3944 = vpop.permute.xlu0 %3943
        %3947 = vset.pattern.permute.xlu0 0
        %3948 = vperm.xlu0 %3947, %v3865
        %v3949 = vpop.permute.xlu0 %3948
        %3952 = vset.pattern.permute.xlu0 0
        %3953 = vperm.xlu0 %3952, %v3866
        %v3954 = vpop.permute.xlu0 %3953
        %3957 = vset.pattern.permute.xlu0 0
        %3958 = vperm.xlu0 %3957, %v3867
        %v3959 = vpop.permute.xlu0 %3958
        %3962 = vset.pattern.permute.xlu0 0
        %3963 = vperm.xlu0 %3962, %v3868
        %v3964 = vpop.permute.xlu0 %3963
        %3967 = vset.pattern.permute.xlu0 0
        %3968 = vperm.xlu0 %3967, %v3869
        %v3969 = vpop.permute.xlu0 %3968
        %3972 = vset.pattern.permute.xlu0 0
        %3973 = vperm.xlu0 %3972, %v3870
        %v3974 = vpop.permute.xlu0 %3973
        %3977 = vset.pattern.permute.xlu0 0
        %3978 = vperm.xlu0 %3977, %v3871
        %v3979 = vpop.permute.xlu0 %3978
        %3982 = vset.pattern.permute.xlu0 0
        %3983 = vperm.xlu0 %3982, %v3872
        %v3984 = vpop.permute.xlu0 %3983
        %3987 = vset.pattern.permute.xlu0 0
        %3988 = vperm.xlu0 %3987, %v3873
        %v3989 = vpop.permute.xlu0 %3988
        %3992 = vset.pattern.permute.xlu0 0
        %3993 = vperm.xlu0 %3992, %v3874
        %v3994 = vpop.permute.xlu0 %3993
        %3997 = vset.pattern.permute.xlu0 0
        %3998 = vperm.xlu0 %3997, %v3875
        %v3999 = vpop.permute.xlu0 %3998
        %4002 = vset.pattern.permute.xlu0 0
        %4003 = vperm.xlu0 %4002, %v3876
        %v4004 = vpop.permute.xlu0 %4003
        %4007 = vset.pattern.permute.xlu0 0
        %4008 = vperm.xlu0 %4007, %v3877
        %v4009 = vpop.permute.xlu0 %4008
        %4012 = vset.pattern.permute.xlu0 0
        %4013 = vperm.xlu0 %4012, %v3878
        %v4014 = vpop.permute.xlu0 %4013
        %4017 = vset.pattern.permute.xlu0 0
        %4018 = vperm.xlu0 %4017, %v3879
        %v4019 = vpop.permute.xlu0 %4018
        %4022 = vset.pattern.permute.xlu0 0
        %4023 = vperm.xlu0 %4022, %v3880
        %v4024 = vpop.permute.xlu0 %4023
        %4027 = vset.pattern.permute.xlu0 0
        %4028 = vperm.xlu0 %4027, %v3881
        %v4029 = vpop.permute.xlu0 %4028
        %4032 = vset.pattern.permute.xlu0 0
        %4033 = vperm.xlu0 %4032, %v3882
        %v4034 = vpop.permute.xlu0 %4033
        %4037 = vset.pattern.permute.xlu0 0
        %4038 = vperm.xlu0 %4037, %v3883
        %v4039 = vpop.permute.xlu0 %4038
        %4042 = vset.pattern.permute.xlu0 0
        %4043 = vperm.xlu0 %4042, %v3884
        %v4044 = vpop.permute.xlu0 %4043
        %v4046 = vlaneseq
        %v4047 = vshrl.u32 %v4046, 7
        %v4048 = vsub.s32 0, %v4047
        %v4049 = vrot.slane %v3885, %v4048
        %v4050 = vmul.f32 %v3889, %v4049
        %v4051 = vmul.f32 %v3894, %v4049
        %v4052 = vmul.f32 %v3899, %v4049
        %v4053 = vmul.f32 %v3904, %v4049
        %v4054 = vmul.f32 %v3909, %v4049
        %v4055 = vmul.f32 %v3914, %v4049
        %v4056 = vmul.f32 %v3919, %v4049
        %v4057 = vmul.f32 %v3924, %v4049
        %v4058 = vmul.f32 %v3929, %v4049
        %v4059 = vmul.f32 %v3934, %v4049
        %v4060 = vmul.f32 %v3939, %v4049
        %v4061 = vmul.f32 %v3944, %v4049
        %v4062 = vmul.f32 %v3949, %v4049
        %v4063 = vmul.f32 %v3954, %v4049
        %v4064 = vmul.f32 %v3959, %v4049
        %v4065 = vmul.f32 %v3964, %v4049
        %v4066 = vmul.f32 %v3969, %v4049
        %v4067 = vmul.f32 %v3974, %v4049
        %v4068 = vmul.f32 %v3979, %v4049
        %v4069 = vmul.f32 %v3984, %v4049
        %v4070 = vmul.f32 %v3989, %v4049
        %v4071 = vmul.f32 %v3994, %v4049
        %v4072 = vmul.f32 %v3999, %v4049
        %v4073 = vmul.f32 %v4004, %v4049
        %v4074 = vmul.f32 %v4009, %v4049
        %v4075 = vmul.f32 %v4014, %v4049
        %v4076 = vmul.f32 %v4019, %v4049
        %v4077 = vmul.f32 %v4024, %v4049
        %v4078 = vmul.f32 %v4029, %v4049
        %v4079 = vmul.f32 %v4034, %v4049
        %v4080 = vmul.f32 %v4039, %v4049
        %v4081 = vmul.f32 %v4044, %v4049
        %v4082 = vadd.f32 %v3821, %v4050
        %v4083 = vadd.f32 %v3822, %v4051
        %v4084 = vadd.f32 %v3823, %v4052
        %v4085 = vadd.f32 %v3824, %v4053
        %v4086 = vadd.f32 %v3825, %v4054
        %v4087 = vadd.f32 %v3826, %v4055
        %v4088 = vadd.f32 %v3827, %v4056
        %v4089 = vadd.f32 %v3828, %v4057
        %v4090 = vadd.f32 %v3829, %v4058
        %v4091 = vadd.f32 %v3830, %v4059
        %v4092 = vadd.f32 %v3831, %v4060
        %v4093 = vadd.f32 %v3832, %v4061
        %v4094 = vadd.f32 %v3833, %v4062
        %v4095 = vadd.f32 %v3834, %v4063
        %v4096 = vadd.f32 %v3835, %v4064
        %v4097 = vadd.f32 %v3836, %v4065
        %v4098 = vadd.f32 %v3837, %v4066
        %v4099 = vadd.f32 %v3838, %v4067
        %v4100 = vadd.f32 %v3839, %v4068
        %v4101 = vadd.f32 %v3840, %v4069
        %v4102 = vadd.f32 %v3841, %v4070
        %v4103 = vadd.f32 %v3842, %v4071
        %v4104 = vadd.f32 %v3843, %v4072
        %v4105 = vadd.f32 %v3844, %v4073
        %v4106 = vadd.f32 %v3845, %v4074
        %v4107 = vadd.f32 %v3846, %v4075
        %v4108 = vadd.f32 %v3847, %v4076
        %v4109 = vadd.f32 %v3848, %v4077
        %v4110 = vadd.f32 %v3849, %v4078
        %v4111 = vadd.f32 %v3850, %v4079
        %v4112 = vadd.f32 %v3851, %v4080
        %v4113 = vadd.f32 %v3852, %v4081
        %v4114 = vld [vmem:[%s424 + $0x4] sm:$0xff]
        %v4115 = vld [vmem:[%s424 + $0xc] sm:$0xff]
        %v4116 = vld [vmem:[%s424 + $0x1c] sm:$0xff]
        %v4117 = vld [vmem:[%s424 + $0x24] sm:$0xff]
        %v4118 = vld [vmem:[%s424 + $0x34] sm:$0xff]
        %v4119 = vld [vmem:[%s424 + $0x3c] sm:$0xff]
        %v4120 = vld [vmem:[%s424 + $0x4c] sm:$0xff]
        %v4121 = vld [vmem:[%s424 + $0x54] sm:$0xff]
        %v4122 = vld [vmem:[%s424 + $0x64] sm:$0xff]
        %v4123 = vld [vmem:[%s424 + $0x6c] sm:$0xff]
        %v4124 = vld [vmem:[%s424 + $0x7c] sm:$0xff]
        %v4125 = vld [vmem:[%s424 + $0x84] sm:$0xff]
        %v4126 = vld [vmem:[%s424 + $0x94] sm:$0xff]
        %v4127 = vld [vmem:[%s424 + $0x9c] sm:$0xff]
        %v4128 = vld [vmem:[%s424 + $0xac] sm:$0xff]
        %v4129 = vld [vmem:[%s424 + $0xb4] sm:$0xff]
        %v4130 = vld [vmem:[%s424 + $0xc4] sm:$0xff]
        %v4131 = vld [vmem:[%s424 + $0xcc] sm:$0xff]
        %v4132 = vld [vmem:[%s424 + $0xdc] sm:$0xff]
        %v4133 = vld [vmem:[%s424 + $0xe4] sm:$0xff]
        %v4134 = vld [vmem:[%s424 + $0xf4] sm:$0xff]
        %v4135 = vld [vmem:[%s424 + $0xfc] sm:$0xff]
        %v4136 = vld [vmem:[%s424 + $0x10c] sm:$0xff]
        %v4137 = vld [vmem:[%s424 + $0x114] sm:$0xff]
        %v4138 = vld [vmem:[%s424 + $0x124] sm:$0xff]
        %v4139 = vld [vmem:[%s424 + $0x12c] sm:$0xff]
        %v4140 = vld [vmem:[%s424 + $0x13c] sm:$0xff]
        %v4141 = vld [vmem:[%s424 + $0x144] sm:$0xff]
        %v4142 = vld [vmem:[%s424 + $0x154] sm:$0xff]
        %v4143 = vld [vmem:[%s424 + $0x15c] sm:$0xff]
        %v4144 = vld [vmem:[%s424 + $0x16c] sm:$0xff]
        %v4145 = vld [vmem:[%s424 + $0x174] sm:$0xff]
        %v4146 = vld [vmem:[%s3101 + $0x4] sm:$0x1]
        %4148 = vset.pattern.permute.xlu0 0
        %4149 = vperm.xlu0 %4148, %v4114
        %v4150 = vpop.permute.xlu0 %4149
        %4153 = vset.pattern.permute.xlu0 0
        %4154 = vperm.xlu0 %4153, %v4115
        %v4155 = vpop.permute.xlu0 %4154
        %4158 = vset.pattern.permute.xlu0 0
        %4159 = vperm.xlu0 %4158, %v4116
        %v4160 = vpop.permute.xlu0 %4159
        %4163 = vset.pattern.permute.xlu0 0
        %4164 = vperm.xlu0 %4163, %v4117
        %v4165 = vpop.permute.xlu0 %4164
        %4168 = vset.pattern.permute.xlu0 0
        %4169 = vperm.xlu0 %4168, %v4118
        %v4170 = vpop.permute.xlu0 %4169
        %4173 = vset.pattern.permute.xlu0 0
        %4174 = vperm.xlu0 %4173, %v4119
        %v4175 = vpop.permute.xlu0 %4174
        %4178 = vset.pattern.permute.xlu0 0
        %4179 = vperm.xlu0 %4178, %v4120
        %v4180 = vpop.permute.xlu0 %4179
        %4183 = vset.pattern.permute.xlu0 0
        %4184 = vperm.xlu0 %4183, %v4121
        %v4185 = vpop.permute.xlu0 %4184
        %4188 = vset.pattern.permute.xlu0 0
        %4189 = vperm.xlu0 %4188, %v4122
        %v4190 = vpop.permute.xlu0 %4189
        %4193 = vset.pattern.permute.xlu0 0
        %4194 = vperm.xlu0 %4193, %v4123
        %v4195 = vpop.permute.xlu0 %4194
        %4198 = vset.pattern.permute.xlu0 0
        %4199 = vperm.xlu0 %4198, %v4124
        %v4200 = vpop.permute.xlu0 %4199
        %4203 = vset.pattern.permute.xlu0 0
        %4204 = vperm.xlu0 %4203, %v4125
        %v4205 = vpop.permute.xlu0 %4204
        %4208 = vset.pattern.permute.xlu0 0
        %4209 = vperm.xlu0 %4208, %v4126
        %v4210 = vpop.permute.xlu0 %4209
        %4213 = vset.pattern.permute.xlu0 0
        %4214 = vperm.xlu0 %4213, %v4127
        %v4215 = vpop.permute.xlu0 %4214
        %4218 = vset.pattern.permute.xlu0 0
        %4219 = vperm.xlu0 %4218, %v4128
        %v4220 = vpop.permute.xlu0 %4219
        %4223 = vset.pattern.permute.xlu0 0
        %4224 = vperm.xlu0 %4223, %v4129
        %v4225 = vpop.permute.xlu0 %4224
        %4228 = vset.pattern.permute.xlu0 0
        %4229 = vperm.xlu0 %4228, %v4130
        %v4230 = vpop.permute.xlu0 %4229
        %4233 = vset.pattern.permute.xlu0 0
        %4234 = vperm.xlu0 %4233, %v4131
        %v4235 = vpop.permute.xlu0 %4234
        %4238 = vset.pattern.permute.xlu0 0
        %4239 = vperm.xlu0 %4238, %v4132
        %v4240 = vpop.permute.xlu0 %4239
        %4243 = vset.pattern.permute.xlu0 0
        %4244 = vperm.xlu0 %4243, %v4133
        %v4245 = vpop.permute.xlu0 %4244
        %4248 = vset.pattern.permute.xlu0 0
        %4249 = vperm.xlu0 %4248, %v4134
        %v4250 = vpop.permute.xlu0 %4249
        %4253 = vset.pattern.permute.xlu0 0
        %4254 = vperm.xlu0 %4253, %v4135
        %v4255 = vpop.permute.xlu0 %4254
        %4258 = vset.pattern.permute.xlu0 0
        %4259 = vperm.xlu0 %4258, %v4136
        %v4260 = vpop.permute.xlu0 %4259
        %4263 = vset.pattern.permute.xlu0 0
        %4264 = vperm.xlu0 %4263, %v4137
        %v4265 = vpop.permute.xlu0 %4264
        %4268 = vset.pattern.permute.xlu0 0
        %4269 = vperm.xlu0 %4268, %v4138
        %v4270 = vpop.permute.xlu0 %4269
        %4273 = vset.pattern.permute.xlu0 0
        %4274 = vperm.xlu0 %4273, %v4139
        %v4275 = vpop.permute.xlu0 %4274
        %4278 = vset.pattern.permute.xlu0 0
        %4279 = vperm.xlu0 %4278, %v4140
        %v4280 = vpop.permute.xlu0 %4279
        %4283 = vset.pattern.permute.xlu0 0
        %4284 = vperm.xlu0 %4283, %v4141
        %v4285 = vpop.permute.xlu0 %4284
        %4288 = vset.pattern.permute.xlu0 0
        %4289 = vperm.xlu0 %4288, %v4142
        %v4290 = vpop.permute.xlu0 %4289
        %4293 = vset.pattern.permute.xlu0 0
        %4294 = vperm.xlu0 %4293, %v4143
        %v4295 = vpop.permute.xlu0 %4294
        %4298 = vset.pattern.permute.xlu0 0
        %4299 = vperm.xlu0 %4298, %v4144
        %v4300 = vpop.permute.xlu0 %4299
        %4303 = vset.pattern.permute.xlu0 0
        %4304 = vperm.xlu0 %4303, %v4145
        %v4305 = vpop.permute.xlu0 %4304
        %v4307 = vlaneseq
        %v4308 = vshrl.u32 %v4307, 7
        %v4309 = vsub.s32 0, %v4308
        %v4310 = vrot.slane %v4146, %v4309
        %v4311 = vmul.f32 %v4150, %v4310
        %v4312 = vmul.f32 %v4155, %v4310
        %v4313 = vmul.f32 %v4160, %v4310
        %v4314 = vmul.f32 %v4165, %v4310
        %v4315 = vmul.f32 %v4170, %v4310
        %v4316 = vmul.f32 %v4175, %v4310
        %v4317 = vmul.f32 %v4180, %v4310
        %v4318 = vmul.f32 %v4185, %v4310
        %v4319 = vmul.f32 %v4190, %v4310
        %v4320 = vmul.f32 %v4195, %v4310
        %v4321 = vmul.f32 %v4200, %v4310
        %v4322 = vmul.f32 %v4205, %v4310
        %v4323 = vmul.f32 %v4210, %v4310
        %v4324 = vmul.f32 %v4215, %v4310
        %v4325 = vmul.f32 %v4220, %v4310
        %v4326 = vmul.f32 %v4225, %v4310
        %v4327 = vmul.f32 %v4230, %v4310
        %v4328 = vmul.f32 %v4235, %v4310
        %v4329 = vmul.f32 %v4240, %v4310
        %v4330 = vmul.f32 %v4245, %v4310
        %v4331 = vmul.f32 %v4250, %v4310
        %v4332 = vmul.f32 %v4255, %v4310
        %v4333 = vmul.f32 %v4260, %v4310
        %v4334 = vmul.f32 %v4265, %v4310
        %v4335 = vmul.f32 %v4270, %v4310
        %v4336 = vmul.f32 %v4275, %v4310
        %v4337 = vmul.f32 %v4280, %v4310
        %v4338 = vmul.f32 %v4285, %v4310
        %v4339 = vmul.f32 %v4290, %v4310
        %v4340 = vmul.f32 %v4295, %v4310
        %v4341 = vmul.f32 %v4300, %v4310
        %v4342 = vmul.f32 %v4305, %v4310
        %v4343 = vadd.f32 %v4082, %v4311
        %v4344 = vadd.f32 %v4083, %v4312
        %v4345 = vadd.f32 %v4084, %v4313
        %v4346 = vadd.f32 %v4085, %v4314
        %v4347 = vadd.f32 %v4086, %v4315
        %v4348 = vadd.f32 %v4087, %v4316
        %v4349 = vadd.f32 %v4088, %v4317
        %v4350 = vadd.f32 %v4089, %v4318
        %v4351 = vadd.f32 %v4090, %v4319
        %v4352 = vadd.f32 %v4091, %v4320
        %v4353 = vadd.f32 %v4092, %v4321
        %v4354 = vadd.f32 %v4093, %v4322
        %v4355 = vadd.f32 %v4094, %v4323
        %v4356 = vadd.f32 %v4095, %v4324
        %v4357 = vadd.f32 %v4096, %v4325
        %v4358 = vadd.f32 %v4097, %v4326
        %v4359 = vadd.f32 %v4098, %v4327
        %v4360 = vadd.f32 %v4099, %v4328
        %v4361 = vadd.f32 %v4100, %v4329
        %v4362 = vadd.f32 %v4101, %v4330
        %v4363 = vadd.f32 %v4102, %v4331
        %v4364 = vadd.f32 %v4103, %v4332
        %v4365 = vadd.f32 %v4104, %v4333
        %v4366 = vadd.f32 %v4105, %v4334
        %v4367 = vadd.f32 %v4106, %v4335
        %v4368 = vadd.f32 %v4107, %v4336
        %v4369 = vadd.f32 %v4108, %v4337
        %v4370 = vadd.f32 %v4109, %v4338
        %v4371 = vadd.f32 %v4110, %v4339
        %v4372 = vadd.f32 %v4111, %v4340
        %v4373 = vadd.f32 %v4112, %v4341
        %v4374 = vadd.f32 %v4113, %v4342
        %s4375 = scalar_lea.vmem [#allocation2], 72
        %v4376 = vld [vmem:[%s4375] sm:$0xff]
        %v4377 = vld [vmem:[%s4375 + $0x8] sm:$0xff]
        %v4378 = vld [vmem:[%s4375 + $0x18] sm:$0xff]
        %v4379 = vld [vmem:[%s4375 + $0x20] sm:$0xff]
        %v4380 = vld [vmem:[%s4375 + $0x30] sm:$0xff]
        %v4381 = vld [vmem:[%s4375 + $0x38] sm:$0xff]
        %v4382 = vld [vmem:[%s4375 + $0x48] sm:$0xff]
        %v4383 = vld [vmem:[%s4375 + $0x50] sm:$0xff]
        %v4384 = vld [vmem:[%s4375 + $0x60] sm:$0xff]
        %v4385 = vld [vmem:[%s4375 + $0x68] sm:$0xff]
        %v4386 = vld [vmem:[%s4375 + $0x78] sm:$0xff]
        %v4387 = vld [vmem:[%s4375 + $0x80] sm:$0xff]
        %v4388 = vld [vmem:[%s4375 + $0x90] sm:$0xff]
        %v4389 = vld [vmem:[%s4375 + $0x98] sm:$0xff]
        %v4390 = vld [vmem:[%s4375 + $0xa8] sm:$0xff]
        %v4391 = vld [vmem:[%s4375 + $0xb0] sm:$0xff]
        %v4392 = vld [vmem:[%s4375 + $0xc0] sm:$0xff]
        %v4393 = vld [vmem:[%s4375 + $0xc8] sm:$0xff]
        %v4394 = vld [vmem:[%s4375 + $0xd8] sm:$0xff]
        %v4395 = vld [vmem:[%s4375 + $0xe0] sm:$0xff]
        %v4396 = vld [vmem:[%s4375 + $0xf0] sm:$0xff]
        %v4397 = vld [vmem:[%s4375 + $0xf8] sm:$0xff]
        %v4398 = vld [vmem:[%s4375 + $0x108] sm:$0xff]
        %v4399 = vld [vmem:[%s4375 + $0x110] sm:$0xff]
        %v4400 = vld [vmem:[%s4375 + $0x120] sm:$0xff]
        %v4401 = vld [vmem:[%s4375 + $0x128] sm:$0xff]
        %v4402 = vld [vmem:[%s4375 + $0x138] sm:$0xff]
        %v4403 = vld [vmem:[%s4375 + $0x140] sm:$0xff]
        %v4404 = vld [vmem:[%s4375 + $0x150] sm:$0xff]
        %v4405 = vld [vmem:[%s4375 + $0x158] sm:$0xff]
        %v4406 = vld [vmem:[%s4375 + $0x168] sm:$0xff]
        %v4407 = vld [vmem:[%s4375 + $0x170] sm:$0xff]
        %s4408 = scalar_lea.vmem %s1, 24
        %v4409 = vld [vmem:[%s4408] sm:$0x1]
        %4411 = vset.pattern.permute.xlu0 0
        %4412 = vperm.xlu0 %4411, %v4376
        %v4413 = vpop.permute.xlu0 %4412
        %4416 = vset.pattern.permute.xlu0 0
        %4417 = vperm.xlu0 %4416, %v4377
        %v4418 = vpop.permute.xlu0 %4417
        %4421 = vset.pattern.permute.xlu0 0
        %4422 = vperm.xlu0 %4421, %v4378
        %v4423 = vpop.permute.xlu0 %4422
        %4426 = vset.pattern.permute.xlu0 0
        %4427 = vperm.xlu0 %4426, %v4379
        %v4428 = vpop.permute.xlu0 %4427
        %4431 = vset.pattern.permute.xlu0 0
        %4432 = vperm.xlu0 %4431, %v4380
        %v4433 = vpop.permute.xlu0 %4432
        %4436 = vset.pattern.permute.xlu0 0
        %4437 = vperm.xlu0 %4436, %v4381
        %v4438 = vpop.permute.xlu0 %4437
        %4441 = vset.pattern.permute.xlu0 0
        %4442 = vperm.xlu0 %4441, %v4382
        %v4443 = vpop.permute.xlu0 %4442
        %4446 = vset.pattern.permute.xlu0 0
        %4447 = vperm.xlu0 %4446, %v4383
        %v4448 = vpop.permute.xlu0 %4447
        %4451 = vset.pattern.permute.xlu0 0
        %4452 = vperm.xlu0 %4451, %v4384
        %v4453 = vpop.permute.xlu0 %4452
        %4456 = vset.pattern.permute.xlu0 0
        %4457 = vperm.xlu0 %4456, %v4385
        %v4458 = vpop.permute.xlu0 %4457
        %4461 = vset.pattern.permute.xlu0 0
        %4462 = vperm.xlu0 %4461, %v4386
        %v4463 = vpop.permute.xlu0 %4462
        %4466 = vset.pattern.permute.xlu0 0
        %4467 = vperm.xlu0 %4466, %v4387
        %v4468 = vpop.permute.xlu0 %4467
        %4471 = vset.pattern.permute.xlu0 0
        %4472 = vperm.xlu0 %4471, %v4388
        %v4473 = vpop.permute.xlu0 %4472
        %4476 = vset.pattern.permute.xlu0 0
        %4477 = vperm.xlu0 %4476, %v4389
        %v4478 = vpop.permute.xlu0 %4477
        %4481 = vset.pattern.permute.xlu0 0
        %4482 = vperm.xlu0 %4481, %v4390
        %v4483 = vpop.permute.xlu0 %4482
        %4486 = vset.pattern.permute.xlu0 0
        %4487 = vperm.xlu0 %4486, %v4391
        %v4488 = vpop.permute.xlu0 %4487
        %4491 = vset.pattern.permute.xlu0 0
        %4492 = vperm.xlu0 %4491, %v4392
        %v4493 = vpop.permute.xlu0 %4492
        %4496 = vset.pattern.permute.xlu0 0
        %4497 = vperm.xlu0 %4496, %v4393
        %v4498 = vpop.permute.xlu0 %4497
        %4501 = vset.pattern.permute.xlu0 0
        %4502 = vperm.xlu0 %4501, %v4394
        %v4503 = vpop.permute.xlu0 %4502
        %4506 = vset.pattern.permute.xlu0 0
        %4507 = vperm.xlu0 %4506, %v4395
        %v4508 = vpop.permute.xlu0 %4507
        %4511 = vset.pattern.permute.xlu0 0
        %4512 = vperm.xlu0 %4511, %v4396
        %v4513 = vpop.permute.xlu0 %4512
        %4516 = vset.pattern.permute.xlu0 0
        %4517 = vperm.xlu0 %4516, %v4397
        %v4518 = vpop.permute.xlu0 %4517
        %4521 = vset.pattern.permute.xlu0 0
        %4522 = vperm.xlu0 %4521, %v4398
        %v4523 = vpop.permute.xlu0 %4522
        %4526 = vset.pattern.permute.xlu0 0
        %4527 = vperm.xlu0 %4526, %v4399
        %v4528 = vpop.permute.xlu0 %4527
        %4531 = vset.pattern.permute.xlu0 0
        %4532 = vperm.xlu0 %4531, %v4400
        %v4533 = vpop.permute.xlu0 %4532
        %4536 = vset.pattern.permute.xlu0 0
        %4537 = vperm.xlu0 %4536, %v4401
        %v4538 = vpop.permute.xlu0 %4537
        %4541 = vset.pattern.permute.xlu0 0
        %4542 = vperm.xlu0 %4541, %v4402
        %v4543 = vpop.permute.xlu0 %4542
        %4546 = vset.pattern.permute.xlu0 0
        %4547 = vperm.xlu0 %4546, %v4403
        %v4548 = vpop.permute.xlu0 %4547
        %4551 = vset.pattern.permute.xlu0 0
        %4552 = vperm.xlu0 %4551, %v4404
        %v4553 = vpop.permute.xlu0 %4552
        %4556 = vset.pattern.permute.xlu0 0
        %4557 = vperm.xlu0 %4556, %v4405
        %v4558 = vpop.permute.xlu0 %4557
        %4561 = vset.pattern.permute.xlu0 0
        %4562 = vperm.xlu0 %4561, %v4406
        %v4563 = vpop.permute.xlu0 %4562
        %4566 = vset.pattern.permute.xlu0 0
        %4567 = vperm.xlu0 %4566, %v4407
        %v4568 = vpop.permute.xlu0 %4567
        %v4570 = vlaneseq
        %v4571 = vshrl.u32 %v4570, 7
        %v4572 = vsub.s32 0, %v4571
        %v4573 = vrot.slane %v4409, %v4572
        %v4574 = vmul.f32 %v4413, %v4573
        %v4575 = vmul.f32 %v4418, %v4573
        %v4576 = vmul.f32 %v4423, %v4573
        %v4577 = vmul.f32 %v4428, %v4573
        %v4578 = vmul.f32 %v4433, %v4573
        %v4579 = vmul.f32 %v4438, %v4573
        %v4580 = vmul.f32 %v4443, %v4573
        %v4581 = vmul.f32 %v4448, %v4573
        %v4582 = vmul.f32 %v4453, %v4573
        %v4583 = vmul.f32 %v4458, %v4573
        %v4584 = vmul.f32 %v4463, %v4573
        %v4585 = vmul.f32 %v4468, %v4573
        %v4586 = vmul.f32 %v4473, %v4573
        %v4587 = vmul.f32 %v4478, %v4573
        %v4588 = vmul.f32 %v4483, %v4573
        %v4589 = vmul.f32 %v4488, %v4573
        %v4590 = vmul.f32 %v4493, %v4573
        %v4591 = vmul.f32 %v4498, %v4573
        %v4592 = vmul.f32 %v4503, %v4573
        %v4593 = vmul.f32 %v4508, %v4573
        %v4594 = vmul.f32 %v4513, %v4573
        %v4595 = vmul.f32 %v4518, %v4573
        %v4596 = vmul.f32 %v4523, %v4573
        %v4597 = vmul.f32 %v4528, %v4573
        %v4598 = vmul.f32 %v4533, %v4573
        %v4599 = vmul.f32 %v4538, %v4573
        %v4600 = vmul.f32 %v4543, %v4573
        %v4601 = vmul.f32 %v4548, %v4573
        %v4602 = vmul.f32 %v4553, %v4573
        %v4603 = vmul.f32 %v4558, %v4573
        %v4604 = vmul.f32 %v4563, %v4573
        %v4605 = vmul.f32 %v4568, %v4573
        %v4606 = vadd.f32 %v4343, %v4574
        %v4607 = vadd.f32 %v4344, %v4575
        %v4608 = vadd.f32 %v4345, %v4576
        %v4609 = vadd.f32 %v4346, %v4577
        %v4610 = vadd.f32 %v4347, %v4578
        %v4611 = vadd.f32 %v4348, %v4579
        %v4612 = vadd.f32 %v4349, %v4580
        %v4613 = vadd.f32 %v4350, %v4581
        %v4614 = vadd.f32 %v4351, %v4582
        %v4615 = vadd.f32 %v4352, %v4583
        %v4616 = vadd.f32 %v4353, %v4584
        %v4617 = vadd.f32 %v4354, %v4585
        %v4618 = vadd.f32 %v4355, %v4586
        %v4619 = vadd.f32 %v4356, %v4587
        %v4620 = vadd.f32 %v4357, %v4588
        %v4621 = vadd.f32 %v4358, %v4589
        %v4622 = vadd.f32 %v4359, %v4590
        %v4623 = vadd.f32 %v4360, %v4591
        %v4624 = vadd.f32 %v4361, %v4592
        %v4625 = vadd.f32 %v4362, %v4593
        %v4626 = vadd.f32 %v4363, %v4594
        %v4627 = vadd.f32 %v4364, %v4595
        %v4628 = vadd.f32 %v4365, %v4596
        %v4629 = vadd.f32 %v4366, %v4597
        %v4630 = vadd.f32 %v4367, %v4598
        %v4631 = vadd.f32 %v4368, %v4599
        %v4632 = vadd.f32 %v4369, %v4600
        %v4633 = vadd.f32 %v4370, %v4601
        %v4634 = vadd.f32 %v4371, %v4602
        %v4635 = vadd.f32 %v4372, %v4603
        %v4636 = vadd.f32 %v4373, %v4604
        %v4637 = vadd.f32 %v4374, %v4605
        %v4638 = vld [vmem:[%s4375 + $0x1] sm:$0xff]
        %v4639 = vld [vmem:[%s4375 + $0x9] sm:$0xff]
        %v4640 = vld [vmem:[%s4375 + $0x19] sm:$0xff]
        %v4641 = vld [vmem:[%s4375 + $0x21] sm:$0xff]
        %v4642 = vld [vmem:[%s4375 + $0x31] sm:$0xff]
        %v4643 = vld [vmem:[%s4375 + $0x39] sm:$0xff]
        %v4644 = vld [vmem:[%s4375 + $0x49] sm:$0xff]
        %v4645 = vld [vmem:[%s4375 + $0x51] sm:$0xff]
        %v4646 = vld [vmem:[%s4375 + $0x61] sm:$0xff]
        %v4647 = vld [vmem:[%s4375 + $0x69] sm:$0xff]
        %v4648 = vld [vmem:[%s4375 + $0x79] sm:$0xff]
        %v4649 = vld [vmem:[%s4375 + $0x81] sm:$0xff]
        %v4650 = vld [vmem:[%s4375 + $0x91] sm:$0xff]
        %v4651 = vld [vmem:[%s4375 + $0x99] sm:$0xff]
        %v4652 = vld [vmem:[%s4375 + $0xa9] sm:$0xff]
        %v4653 = vld [vmem:[%s4375 + $0xb1] sm:$0xff]
        %v4654 = vld [vmem:[%s4375 + $0xc1] sm:$0xff]
        %v4655 = vld [vmem:[%s4375 + $0xc9] sm:$0xff]
        %v4656 = vld [vmem:[%s4375 + $0xd9] sm:$0xff]
        %v4657 = vld [vmem:[%s4375 + $0xe1] sm:$0xff]
        %v4658 = vld [vmem:[%s4375 + $0xf1] sm:$0xff]
        %v4659 = vld [vmem:[%s4375 + $0xf9] sm:$0xff]
        %v4660 = vld [vmem:[%s4375 + $0x109] sm:$0xff]
        %v4661 = vld [vmem:[%s4375 + $0x111] sm:$0xff]
        %v4662 = vld [vmem:[%s4375 + $0x121] sm:$0xff]
        %v4663 = vld [vmem:[%s4375 + $0x129] sm:$0xff]
        %v4664 = vld [vmem:[%s4375 + $0x139] sm:$0xff]
        %v4665 = vld [vmem:[%s4375 + $0x141] sm:$0xff]
        %v4666 = vld [vmem:[%s4375 + $0x151] sm:$0xff]
        %v4667 = vld [vmem:[%s4375 + $0x159] sm:$0xff]
        %v4668 = vld [vmem:[%s4375 + $0x169] sm:$0xff]
        %v4669 = vld [vmem:[%s4375 + $0x171] sm:$0xff]
        %v4670 = vld [vmem:[%s4408 + $0x1] sm:$0x1]
        %4672 = vset.pattern.permute.xlu0 0
        %4673 = vperm.xlu0 %4672, %v4638
        %v4674 = vpop.permute.xlu0 %4673
        %4677 = vset.pattern.permute.xlu0 0
        %4678 = vperm.xlu0 %4677, %v4639
        %v4679 = vpop.permute.xlu0 %4678
        %4682 = vset.pattern.permute.xlu0 0
        %4683 = vperm.xlu0 %4682, %v4640
        %v4684 = vpop.permute.xlu0 %4683
        %4687 = vset.pattern.permute.xlu0 0
        %4688 = vperm.xlu0 %4687, %v4641
        %v4689 = vpop.permute.xlu0 %4688
        %4692 = vset.pattern.permute.xlu0 0
        %4693 = vperm.xlu0 %4692, %v4642
        %v4694 = vpop.permute.xlu0 %4693
        %4697 = vset.pattern.permute.xlu0 0
        %4698 = vperm.xlu0 %4697, %v4643
        %v4699 = vpop.permute.xlu0 %4698
        %4702 = vset.pattern.permute.xlu0 0
        %4703 = vperm.xlu0 %4702, %v4644
        %v4704 = vpop.permute.xlu0 %4703
        %4707 = vset.pattern.permute.xlu0 0
        %4708 = vperm.xlu0 %4707, %v4645
        %v4709 = vpop.permute.xlu0 %4708
        %4712 = vset.pattern.permute.xlu0 0
        %4713 = vperm.xlu0 %4712, %v4646
        %v4714 = vpop.permute.xlu0 %4713
        %4717 = vset.pattern.permute.xlu0 0
        %4718 = vperm.xlu0 %4717, %v4647
        %v4719 = vpop.permute.xlu0 %4718
        %4722 = vset.pattern.permute.xlu0 0
        %4723 = vperm.xlu0 %4722, %v4648
        %v4724 = vpop.permute.xlu0 %4723
        %4727 = vset.pattern.permute.xlu0 0
        %4728 = vperm.xlu0 %4727, %v4649
        %v4729 = vpop.permute.xlu0 %4728
        %4732 = vset.pattern.permute.xlu0 0
        %4733 = vperm.xlu0 %4732, %v4650
        %v4734 = vpop.permute.xlu0 %4733
        %4737 = vset.pattern.permute.xlu0 0
        %4738 = vperm.xlu0 %4737, %v4651
        %v4739 = vpop.permute.xlu0 %4738
        %4742 = vset.pattern.permute.xlu0 0
        %4743 = vperm.xlu0 %4742, %v4652
        %v4744 = vpop.permute.xlu0 %4743
        %4747 = vset.pattern.permute.xlu0 0
        %4748 = vperm.xlu0 %4747, %v4653
        %v4749 = vpop.permute.xlu0 %4748
        %4752 = vset.pattern.permute.xlu0 0
        %4753 = vperm.xlu0 %4752, %v4654
        %v4754 = vpop.permute.xlu0 %4753
        %4757 = vset.pattern.permute.xlu0 0
        %4758 = vperm.xlu0 %4757, %v4655
        %v4759 = vpop.permute.xlu0 %4758
        %4762 = vset.pattern.permute.xlu0 0
        %4763 = vperm.xlu0 %4762, %v4656
        %v4764 = vpop.permute.xlu0 %4763
        %4767 = vset.pattern.permute.xlu0 0
        %4768 = vperm.xlu0 %4767, %v4657
        %v4769 = vpop.permute.xlu0 %4768
        %4772 = vset.pattern.permute.xlu0 0
        %4773 = vperm.xlu0 %4772, %v4658
        %v4774 = vpop.permute.xlu0 %4773
        %4777 = vset.pattern.permute.xlu0 0
        %4778 = vperm.xlu0 %4777, %v4659
        %v4779 = vpop.permute.xlu0 %4778
        %4782 = vset.pattern.permute.xlu0 0
        %4783 = vperm.xlu0 %4782, %v4660
        %v4784 = vpop.permute.xlu0 %4783
        %4787 = vset.pattern.permute.xlu0 0
        %4788 = vperm.xlu0 %4787, %v4661
        %v4789 = vpop.permute.xlu0 %4788
        %4792 = vset.pattern.permute.xlu0 0
        %4793 = vperm.xlu0 %4792, %v4662
        %v4794 = vpop.permute.xlu0 %4793
        %4797 = vset.pattern.permute.xlu0 0
        %4798 = vperm.xlu0 %4797, %v4663
        %v4799 = vpop.permute.xlu0 %4798
        %4802 = vset.pattern.permute.xlu0 0
        %4803 = vperm.xlu0 %4802, %v4664
        %v4804 = vpop.permute.xlu0 %4803
        %4807 = vset.pattern.permute.xlu0 0
        %4808 = vperm.xlu0 %4807, %v4665
        %v4809 = vpop.permute.xlu0 %4808
        %4812 = vset.pattern.permute.xlu0 0
        %4813 = vperm.xlu0 %4812, %v4666
        %v4814 = vpop.permute.xlu0 %4813
        %4817 = vset.pattern.permute.xlu0 0
        %4818 = vperm.xlu0 %4817, %v4667
        %v4819 = vpop.permute.xlu0 %4818
        %4822 = vset.pattern.permute.xlu0 0
        %4823 = vperm.xlu0 %4822, %v4668
        %v4824 = vpop.permute.xlu0 %4823
        %4827 = vset.pattern.permute.xlu0 0
        %4828 = vperm.xlu0 %4827, %v4669
        %v4829 = vpop.permute.xlu0 %4828
        %v4831 = vlaneseq
        %v4832 = vshrl.u32 %v4831, 7
        %v4833 = vsub.s32 0, %v4832
        %v4834 = vrot.slane %v4670, %v4833
        %v4835 = vmul.f32 %v4674, %v4834
        %v4836 = vmul.f32 %v4679, %v4834
        %v4837 = vmul.f32 %v4684, %v4834
        %v4838 = vmul.f32 %v4689, %v4834
        %v4839 = vmul.f32 %v4694, %v4834
        %v4840 = vmul.f32 %v4699, %v4834
        %v4841 = vmul.f32 %v4704, %v4834
        %v4842 = vmul.f32 %v4709, %v4834
        %v4843 = vmul.f32 %v4714, %v4834
        %v4844 = vmul.f32 %v4719, %v4834
        %v4845 = vmul.f32 %v4724, %v4834
        %v4846 = vmul.f32 %v4729, %v4834
        %v4847 = vmul.f32 %v4734, %v4834
        %v4848 = vmul.f32 %v4739, %v4834
        %v4849 = vmul.f32 %v4744, %v4834
        %v4850 = vmul.f32 %v4749, %v4834
        %v4851 = vmul.f32 %v4754, %v4834
        %v4852 = vmul.f32 %v4759, %v4834
        %v4853 = vmul.f32 %v4764, %v4834
        %v4854 = vmul.f32 %v4769, %v4834
        %v4855 = vmul.f32 %v4774, %v4834
        %v4856 = vmul.f32 %v4779, %v4834
        %v4857 = vmul.f32 %v4784, %v4834
        %v4858 = vmul.f32 %v4789, %v4834
        %v4859 = vmul.f32 %v4794, %v4834
        %v4860 = vmul.f32 %v4799, %v4834
        %v4861 = vmul.f32 %v4804, %v4834
        %v4862 = vmul.f32 %v4809, %v4834
        %v4863 = vmul.f32 %v4814, %v4834
        %v4864 = vmul.f32 %v4819, %v4834
        %v4865 = vmul.f32 %v4824, %v4834
        %v4866 = vmul.f32 %v4829, %v4834
        %v4867 = vadd.f32 %v4606, %v4835
        %v4868 = vadd.f32 %v4607, %v4836
        %v4869 = vadd.f32 %v4608, %v4837
        %v4870 = vadd.f32 %v4609, %v4838
        %v4871 = vadd.f32 %v4610, %v4839
        %v4872 = vadd.f32 %v4611, %v4840
        %v4873 = vadd.f32 %v4612, %v4841
        %v4874 = vadd.f32 %v4613, %v4842
        %v4875 = vadd.f32 %v4614, %v4843
        %v4876 = vadd.f32 %v4615, %v4844
        %v4877 = vadd.f32 %v4616, %v4845
        %v4878 = vadd.f32 %v4617, %v4846
        %v4879 = vadd.f32 %v4618, %v4847
        %v4880 = vadd.f32 %v4619, %v4848
        %v4881 = vadd.f32 %v4620, %v4849
        %v4882 = vadd.f32 %v4621, %v4850
        %v4883 = vadd.f32 %v4622, %v4851
        %v4884 = vadd.f32 %v4623, %v4852
        %v4885 = vadd.f32 %v4624, %v4853
        %v4886 = vadd.f32 %v4625, %v4854
        %v4887 = vadd.f32 %v4626, %v4855
        %v4888 = vadd.f32 %v4627, %v4856
        %v4889 = vadd.f32 %v4628, %v4857
        %v4890 = vadd.f32 %v4629, %v4858
        %v4891 = vadd.f32 %v4630, %v4859
        %v4892 = vadd.f32 %v4631, %v4860
        %v4893 = vadd.f32 %v4632, %v4861
        %v4894 = vadd.f32 %v4633, %v4862
        %v4895 = vadd.f32 %v4634, %v4863
        %v4896 = vadd.f32 %v4635, %v4864
        %v4897 = vadd.f32 %v4636, %v4865
        %v4898 = vadd.f32 %v4637, %v4866
        %v4899 = vld [vmem:[%s4375 + $0x2] sm:$0xff]
        %v4900 = vld [vmem:[%s4375 + $0xa] sm:$0xff]
        %v4901 = vld [vmem:[%s4375 + $0x1a] sm:$0xff]
        %v4902 = vld [vmem:[%s4375 + $0x22] sm:$0xff]
        %v4903 = vld [vmem:[%s4375 + $0x32] sm:$0xff]
        %v4904 = vld [vmem:[%s4375 + $0x3a] sm:$0xff]
        %v4905 = vld [vmem:[%s4375 + $0x4a] sm:$0xff]
        %v4906 = vld [vmem:[%s4375 + $0x52] sm:$0xff]
        %v4907 = vld [vmem:[%s4375 + $0x62] sm:$0xff]
        %v4908 = vld [vmem:[%s4375 + $0x6a] sm:$0xff]
        %v4909 = vld [vmem:[%s4375 + $0x7a] sm:$0xff]
        %v4910 = vld [vmem:[%s4375 + $0x82] sm:$0xff]
        %v4911 = vld [vmem:[%s4375 + $0x92] sm:$0xff]
        %v4912 = vld [vmem:[%s4375 + $0x9a] sm:$0xff]
        %v4913 = vld [vmem:[%s4375 + $0xaa] sm:$0xff]
        %v4914 = vld [vmem:[%s4375 + $0xb2] sm:$0xff]
        %v4915 = vld [vmem:[%s4375 + $0xc2] sm:$0xff]
        %v4916 = vld [vmem:[%s4375 + $0xca] sm:$0xff]
        %v4917 = vld [vmem:[%s4375 + $0xda] sm:$0xff]
        %v4918 = vld [vmem:[%s4375 + $0xe2] sm:$0xff]
        %v4919 = vld [vmem:[%s4375 + $0xf2] sm:$0xff]
        %v4920 = vld [vmem:[%s4375 + $0xfa] sm:$0xff]
        %v4921 = vld [vmem:[%s4375 + $0x10a] sm:$0xff]
        %v4922 = vld [vmem:[%s4375 + $0x112] sm:$0xff]
        %v4923 = vld [vmem:[%s4375 + $0x122] sm:$0xff]
        %v4924 = vld [vmem:[%s4375 + $0x12a] sm:$0xff]
        %v4925 = vld [vmem:[%s4375 + $0x13a] sm:$0xff]
        %v4926 = vld [vmem:[%s4375 + $0x142] sm:$0xff]
        %v4927 = vld [vmem:[%s4375 + $0x152] sm:$0xff]
        %v4928 = vld [vmem:[%s4375 + $0x15a] sm:$0xff]
        %v4929 = vld [vmem:[%s4375 + $0x16a] sm:$0xff]
        %v4930 = vld [vmem:[%s4375 + $0x172] sm:$0xff]
        %v4931 = vld [vmem:[%s4408 + $0x2] sm:$0x1]
        %4933 = vset.pattern.permute.xlu0 0
        %4934 = vperm.xlu0 %4933, %v4899
        %v4935 = vpop.permute.xlu0 %4934
        %4938 = vset.pattern.permute.xlu0 0
        %4939 = vperm.xlu0 %4938, %v4900
        %v4940 = vpop.permute.xlu0 %4939
        %4943 = vset.pattern.permute.xlu0 0
        %4944 = vperm.xlu0 %4943, %v4901
        %v4945 = vpop.permute.xlu0 %4944
        %4948 = vset.pattern.permute.xlu0 0
        %4949 = vperm.xlu0 %4948, %v4902
        %v4950 = vpop.permute.xlu0 %4949
        %4953 = vset.pattern.permute.xlu0 0
        %4954 = vperm.xlu0 %4953, %v4903
        %v4955 = vpop.permute.xlu0 %4954
        %4958 = vset.pattern.permute.xlu0 0
        %4959 = vperm.xlu0 %4958, %v4904
        %v4960 = vpop.permute.xlu0 %4959
        %4963 = vset.pattern.permute.xlu0 0
        %4964 = vperm.xlu0 %4963, %v4905
        %v4965 = vpop.permute.xlu0 %4964
        %4968 = vset.pattern.permute.xlu0 0
        %4969 = vperm.xlu0 %4968, %v4906
        %v4970 = vpop.permute.xlu0 %4969
        %4973 = vset.pattern.permute.xlu0 0
        %4974 = vperm.xlu0 %4973, %v4907
        %v4975 = vpop.permute.xlu0 %4974
        %4978 = vset.pattern.permute.xlu0 0
        %4979 = vperm.xlu0 %4978, %v4908
        %v4980 = vpop.permute.xlu0 %4979
        %4983 = vset.pattern.permute.xlu0 0
        %4984 = vperm.xlu0 %4983, %v4909
        %v4985 = vpop.permute.xlu0 %4984
        %4988 = vset.pattern.permute.xlu0 0
        %4989 = vperm.xlu0 %4988, %v4910
        %v4990 = vpop.permute.xlu0 %4989
        %4993 = vset.pattern.permute.xlu0 0
        %4994 = vperm.xlu0 %4993, %v4911
        %v4995 = vpop.permute.xlu0 %4994
        %4998 = vset.pattern.permute.xlu0 0
        %4999 = vperm.xlu0 %4998, %v4912
        %v5000 = vpop.permute.xlu0 %4999
        %5003 = vset.pattern.permute.xlu0 0
        %5004 = vperm.xlu0 %5003, %v4913
        %v5005 = vpop.permute.xlu0 %5004
        %5008 = vset.pattern.permute.xlu0 0
        %5009 = vperm.xlu0 %5008, %v4914
        %v5010 = vpop.permute.xlu0 %5009
        %5013 = vset.pattern.permute.xlu0 0
        %5014 = vperm.xlu0 %5013, %v4915
        %v5015 = vpop.permute.xlu0 %5014
        %5018 = vset.pattern.permute.xlu0 0
        %5019 = vperm.xlu0 %5018, %v4916
        %v5020 = vpop.permute.xlu0 %5019
        %5023 = vset.pattern.permute.xlu0 0
        %5024 = vperm.xlu0 %5023, %v4917
        %v5025 = vpop.permute.xlu0 %5024
        %5028 = vset.pattern.permute.xlu0 0
        %5029 = vperm.xlu0 %5028, %v4918
        %v5030 = vpop.permute.xlu0 %5029
        %5033 = vset.pattern.permute.xlu0 0
        %5034 = vperm.xlu0 %5033, %v4919
        %v5035 = vpop.permute.xlu0 %5034
        %5038 = vset.pattern.permute.xlu0 0
        %5039 = vperm.xlu0 %5038, %v4920
        %v5040 = vpop.permute.xlu0 %5039
        %5043 = vset.pattern.permute.xlu0 0
        %5044 = vperm.xlu0 %5043, %v4921
        %v5045 = vpop.permute.xlu0 %5044
        %5048 = vset.pattern.permute.xlu0 0
        %5049 = vperm.xlu0 %5048, %v4922
        %v5050 = vpop.permute.xlu0 %5049
        %5053 = vset.pattern.permute.xlu0 0
        %5054 = vperm.xlu0 %5053, %v4923
        %v5055 = vpop.permute.xlu0 %5054
        %5058 = vset.pattern.permute.xlu0 0
        %5059 = vperm.xlu0 %5058, %v4924
        %v5060 = vpop.permute.xlu0 %5059
        %5063 = vset.pattern.permute.xlu0 0
        %5064 = vperm.xlu0 %5063, %v4925
        %v5065 = vpop.permute.xlu0 %5064
        %5068 = vset.pattern.permute.xlu0 0
        %5069 = vperm.xlu0 %5068, %v4926
        %v5070 = vpop.permute.xlu0 %5069
        %5073 = vset.pattern.permute.xlu0 0
        %5074 = vperm.xlu0 %5073, %v4927
        %v5075 = vpop.permute.xlu0 %5074
        %5078 = vset.pattern.permute.xlu0 0
        %5079 = vperm.xlu0 %5078, %v4928
        %v5080 = vpop.permute.xlu0 %5079
        %5083 = vset.pattern.permute.xlu0 0
        %5084 = vperm.xlu0 %5083, %v4929
        %v5085 = vpop.permute.xlu0 %5084
        %5088 = vset.pattern.permute.xlu0 0
        %5089 = vperm.xlu0 %5088, %v4930
        %v5090 = vpop.permute.xlu0 %5089
        %v5092 = vlaneseq
        %v5093 = vshrl.u32 %v5092, 7
        %v5094 = vsub.s32 0, %v5093
        %v5095 = vrot.slane %v4931, %v5094
        %v5096 = vmul.f32 %v4935, %v5095
        %v5097 = vmul.f32 %v4940, %v5095
        %v5098 = vmul.f32 %v4945, %v5095
        %v5099 = vmul.f32 %v4950, %v5095
        %v5100 = vmul.f32 %v4955, %v5095
        %v5101 = vmul.f32 %v4960, %v5095
        %v5102 = vmul.f32 %v4965, %v5095
        %v5103 = vmul.f32 %v4970, %v5095
        %v5104 = vmul.f32 %v4975, %v5095
        %v5105 = vmul.f32 %v4980, %v5095
        %v5106 = vmul.f32 %v4985, %v5095
        %v5107 = vmul.f32 %v4990, %v5095
        %v5108 = vmul.f32 %v4995, %v5095
        %v5109 = vmul.f32 %v5000, %v5095
        %v5110 = vmul.f32 %v5005, %v5095
        %v5111 = vmul.f32 %v5010, %v5095
        %v5112 = vmul.f32 %v5015, %v5095
        %v5113 = vmul.f32 %v5020, %v5095
        %v5114 = vmul.f32 %v5025, %v5095
        %v5115 = vmul.f32 %v5030, %v5095
        %v5116 = vmul.f32 %v5035, %v5095
        %v5117 = vmul.f32 %v5040, %v5095
        %v5118 = vmul.f32 %v5045, %v5095
        %v5119 = vmul.f32 %v5050, %v5095
        %v5120 = vmul.f32 %v5055, %v5095
        %v5121 = vmul.f32 %v5060, %v5095
        %v5122 = vmul.f32 %v5065, %v5095
        %v5123 = vmul.f32 %v5070, %v5095
        %v5124 = vmul.f32 %v5075, %v5095
        %v5125 = vmul.f32 %v5080, %v5095
        %v5126 = vmul.f32 %v5085, %v5095
        %v5127 = vmul.f32 %v5090, %v5095
        %v5128 = vadd.f32 %v4867, %v5096
        %v5129 = vadd.f32 %v4868, %v5097
        %v5130 = vadd.f32 %v4869, %v5098
        %v5131 = vadd.f32 %v4870, %v5099
        %v5132 = vadd.f32 %v4871, %v5100
        %v5133 = vadd.f32 %v4872, %v5101
        %v5134 = vadd.f32 %v4873, %v5102
        %v5135 = vadd.f32 %v4874, %v5103
        %v5136 = vadd.f32 %v4875, %v5104
        %v5137 = vadd.f32 %v4876, %v5105
        %v5138 = vadd.f32 %v4877, %v5106
        %v5139 = vadd.f32 %v4878, %v5107
        %v5140 = vadd.f32 %v4879, %v5108
        %v5141 = vadd.f32 %v4880, %v5109
        %v5142 = vadd.f32 %v4881, %v5110
        %v5143 = vadd.f32 %v4882, %v5111
        %v5144 = vadd.f32 %v4883, %v5112
        %v5145 = vadd.f32 %v4884, %v5113
        %v5146 = vadd.f32 %v4885, %v5114
        %v5147 = vadd.f32 %v4886, %v5115
        %v5148 = vadd.f32 %v4887, %v5116
        %v5149 = vadd.f32 %v4888, %v5117
        %v5150 = vadd.f32 %v4889, %v5118
        %v5151 = vadd.f32 %v4890, %v5119
        %v5152 = vadd.f32 %v4891, %v5120
        %v5153 = vadd.f32 %v4892, %v5121
        %v5154 = vadd.f32 %v4893, %v5122
        %v5155 = vadd.f32 %v4894, %v5123
        %v5156 = vadd.f32 %v4895, %v5124
        %v5157 = vadd.f32 %v4896, %v5125
        %v5158 = vadd.f32 %v4897, %v5126
        %v5159 = vadd.f32 %v4898, %v5127
        %v5160 = vld [vmem:[%s4375 + $0x3] sm:$0xff]
        %v5161 = vld [vmem:[%s4375 + $0xb] sm:$0xff]
        %v5162 = vld [vmem:[%s4375 + $0x1b] sm:$0xff]
        %v5163 = vld [vmem:[%s4375 + $0x23] sm:$0xff]
        %v5164 = vld [vmem:[%s4375 + $0x33] sm:$0xff]
        %v5165 = vld [vmem:[%s4375 + $0x3b] sm:$0xff]
        %v5166 = vld [vmem:[%s4375 + $0x4b] sm:$0xff]
        %v5167 = vld [vmem:[%s4375 + $0x53] sm:$0xff]
        %v5168 = vld [vmem:[%s4375 + $0x63] sm:$0xff]
        %v5169 = vld [vmem:[%s4375 + $0x6b] sm:$0xff]
        %v5170 = vld [vmem:[%s4375 + $0x7b] sm:$0xff]
        %v5171 = vld [vmem:[%s4375 + $0x83] sm:$0xff]
        %v5172 = vld [vmem:[%s4375 + $0x93] sm:$0xff]
        %v5173 = vld [vmem:[%s4375 + $0x9b] sm:$0xff]
        %v5174 = vld [vmem:[%s4375 + $0xab] sm:$0xff]
        %v5175 = vld [vmem:[%s4375 + $0xb3] sm:$0xff]
        %v5176 = vld [vmem:[%s4375 + $0xc3] sm:$0xff]
        %v5177 = vld [vmem:[%s4375 + $0xcb] sm:$0xff]
        %v5178 = vld [vmem:[%s4375 + $0xdb] sm:$0xff]
        %v5179 = vld [vmem:[%s4375 + $0xe3] sm:$0xff]
        %v5180 = vld [vmem:[%s4375 + $0xf3] sm:$0xff]
        %v5181 = vld [vmem:[%s4375 + $0xfb] sm:$0xff]
        %v5182 = vld [vmem:[%s4375 + $0x10b] sm:$0xff]
        %v5183 = vld [vmem:[%s4375 + $0x113] sm:$0xff]
        %v5184 = vld [vmem:[%s4375 + $0x123] sm:$0xff]
        %v5185 = vld [vmem:[%s4375 + $0x12b] sm:$0xff]
        %v5186 = vld [vmem:[%s4375 + $0x13b] sm:$0xff]
        %v5187 = vld [vmem:[%s4375 + $0x143] sm:$0xff]
        %v5188 = vld [vmem:[%s4375 + $0x153] sm:$0xff]
        %v5189 = vld [vmem:[%s4375 + $0x15b] sm:$0xff]
        %v5190 = vld [vmem:[%s4375 + $0x16b] sm:$0xff]
        %v5191 = vld [vmem:[%s4375 + $0x173] sm:$0xff]
        %v5192 = vld [vmem:[%s4408 + $0x3] sm:$0x1]
        %5194 = vset.pattern.permute.xlu0 0
        %5195 = vperm.xlu0 %5194, %v5160
        %v5196 = vpop.permute.xlu0 %5195
        %5199 = vset.pattern.permute.xlu0 0
        %5200 = vperm.xlu0 %5199, %v5161
        %v5201 = vpop.permute.xlu0 %5200
        %5204 = vset.pattern.permute.xlu0 0
        %5205 = vperm.xlu0 %5204, %v5162
        %v5206 = vpop.permute.xlu0 %5205
        %5209 = vset.pattern.permute.xlu0 0
        %5210 = vperm.xlu0 %5209, %v5163
        %v5211 = vpop.permute.xlu0 %5210
        %5214 = vset.pattern.permute.xlu0 0
        %5215 = vperm.xlu0 %5214, %v5164
        %v5216 = vpop.permute.xlu0 %5215
        %5219 = vset.pattern.permute.xlu0 0
        %5220 = vperm.xlu0 %5219, %v5165
        %v5221 = vpop.permute.xlu0 %5220
        %5224 = vset.pattern.permute.xlu0 0
        %5225 = vperm.xlu0 %5224, %v5166
        %v5226 = vpop.permute.xlu0 %5225
        %5229 = vset.pattern.permute.xlu0 0
        %5230 = vperm.xlu0 %5229, %v5167
        %v5231 = vpop.permute.xlu0 %5230
        %5234 = vset.pattern.permute.xlu0 0
        %5235 = vperm.xlu0 %5234, %v5168
        %v5236 = vpop.permute.xlu0 %5235
        %5239 = vset.pattern.permute.xlu0 0
        %5240 = vperm.xlu0 %5239, %v5169
        %v5241 = vpop.permute.xlu0 %5240
        %5244 = vset.pattern.permute.xlu0 0
        %5245 = vperm.xlu0 %5244, %v5170
        %v5246 = vpop.permute.xlu0 %5245
        %5249 = vset.pattern.permute.xlu0 0
        %5250 = vperm.xlu0 %5249, %v5171
        %v5251 = vpop.permute.xlu0 %5250
        %5254 = vset.pattern.permute.xlu0 0
        %5255 = vperm.xlu0 %5254, %v5172
        %v5256 = vpop.permute.xlu0 %5255
        %5259 = vset.pattern.permute.xlu0 0
        %5260 = vperm.xlu0 %5259, %v5173
        %v5261 = vpop.permute.xlu0 %5260
        %5264 = vset.pattern.permute.xlu0 0
        %5265 = vperm.xlu0 %5264, %v5174
        %v5266 = vpop.permute.xlu0 %5265
        %5269 = vset.pattern.permute.xlu0 0
        %5270 = vperm.xlu0 %5269, %v5175
        %v5271 = vpop.permute.xlu0 %5270
        %5274 = vset.pattern.permute.xlu0 0
        %5275 = vperm.xlu0 %5274, %v5176
        %v5276 = vpop.permute.xlu0 %5275
        %5279 = vset.pattern.permute.xlu0 0
        %5280 = vperm.xlu0 %5279, %v5177
        %v5281 = vpop.permute.xlu0 %5280
        %5284 = vset.pattern.permute.xlu0 0
        %5285 = vperm.xlu0 %5284, %v5178
        %v5286 = vpop.permute.xlu0 %5285
        %5289 = vset.pattern.permute.xlu0 0
        %5290 = vperm.xlu0 %5289, %v5179
        %v5291 = vpop.permute.xlu0 %5290
        %5294 = vset.pattern.permute.xlu0 0
        %5295 = vperm.xlu0 %5294, %v5180
        %v5296 = vpop.permute.xlu0 %5295
        %5299 = vset.pattern.permute.xlu0 0
        %5300 = vperm.xlu0 %5299, %v5181
        %v5301 = vpop.permute.xlu0 %5300
        %5304 = vset.pattern.permute.xlu0 0
        %5305 = vperm.xlu0 %5304, %v5182
        %v5306 = vpop.permute.xlu0 %5305
        %5309 = vset.pattern.permute.xlu0 0
        %5310 = vperm.xlu0 %5309, %v5183
        %v5311 = vpop.permute.xlu0 %5310
        %5314 = vset.pattern.permute.xlu0 0
        %5315 = vperm.xlu0 %5314, %v5184
        %v5316 = vpop.permute.xlu0 %5315
        %5319 = vset.pattern.permute.xlu0 0
        %5320 = vperm.xlu0 %5319, %v5185
        %v5321 = vpop.permute.xlu0 %5320
        %5324 = vset.pattern.permute.xlu0 0
        %5325 = vperm.xlu0 %5324, %v5186
        %v5326 = vpop.permute.xlu0 %5325
        %5329 = vset.pattern.permute.xlu0 0
        %5330 = vperm.xlu0 %5329, %v5187
        %v5331 = vpop.permute.xlu0 %5330
        %5334 = vset.pattern.permute.xlu0 0
        %5335 = vperm.xlu0 %5334, %v5188
        %v5336 = vpop.permute.xlu0 %5335
        %5339 = vset.pattern.permute.xlu0 0
        %5340 = vperm.xlu0 %5339, %v5189
        %v5341 = vpop.permute.xlu0 %5340
        %5344 = vset.pattern.permute.xlu0 0
        %5345 = vperm.xlu0 %5344, %v5190
        %v5346 = vpop.permute.xlu0 %5345
        %5349 = vset.pattern.permute.xlu0 0
        %5350 = vperm.xlu0 %5349, %v5191
        %v5351 = vpop.permute.xlu0 %5350
        %v5353 = vlaneseq
        %v5354 = vshrl.u32 %v5353, 7
        %v5355 = vsub.s32 0, %v5354
        %v5356 = vrot.slane %v5192, %v5355
        %v5357 = vmul.f32 %v5196, %v5356
        %v5358 = vmul.f32 %v5201, %v5356
        %v5359 = vmul.f32 %v5206, %v5356
        %v5360 = vmul.f32 %v5211, %v5356
        %v5361 = vmul.f32 %v5216, %v5356
        %v5362 = vmul.f32 %v5221, %v5356
        %v5363 = vmul.f32 %v5226, %v5356
        %v5364 = vmul.f32 %v5231, %v5356
        %v5365 = vmul.f32 %v5236, %v5356
        %v5366 = vmul.f32 %v5241, %v5356
        %v5367 = vmul.f32 %v5246, %v5356
        %v5368 = vmul.f32 %v5251, %v5356
        %v5369 = vmul.f32 %v5256, %v5356
        %v5370 = vmul.f32 %v5261, %v5356
        %v5371 = vmul.f32 %v5266, %v5356
        %v5372 = vmul.f32 %v5271, %v5356
        %v5373 = vmul.f32 %v5276, %v5356
        %v5374 = vmul.f32 %v5281, %v5356
        %v5375 = vmul.f32 %v5286, %v5356
        %v5376 = vmul.f32 %v5291, %v5356
        %v5377 = vmul.f32 %v5296, %v5356
        %v5378 = vmul.f32 %v5301, %v5356
        %v5379 = vmul.f32 %v5306, %v5356
        %v5380 = vmul.f32 %v5311, %v5356
        %v5381 = vmul.f32 %v5316, %v5356
        %v5382 = vmul.f32 %v5321, %v5356
        %v5383 = vmul.f32 %v5326, %v5356
        %v5384 = vmul.f32 %v5331, %v5356
        %v5385 = vmul.f32 %v5336, %v5356
        %v5386 = vmul.f32 %v5341, %v5356
        %v5387 = vmul.f32 %v5346, %v5356
        %v5388 = vmul.f32 %v5351, %v5356
        %v5389 = vadd.f32 %v5128, %v5357
        %v5390 = vadd.f32 %v5129, %v5358
        %v5391 = vadd.f32 %v5130, %v5359
        %v5392 = vadd.f32 %v5131, %v5360
        %v5393 = vadd.f32 %v5132, %v5361
        %v5394 = vadd.f32 %v5133, %v5362
        %v5395 = vadd.f32 %v5134, %v5363
        %v5396 = vadd.f32 %v5135, %v5364
        %v5397 = vadd.f32 %v5136, %v5365
        %v5398 = vadd.f32 %v5137, %v5366
        %v5399 = vadd.f32 %v5138, %v5367
        %v5400 = vadd.f32 %v5139, %v5368
        %v5401 = vadd.f32 %v5140, %v5369
        %v5402 = vadd.f32 %v5141, %v5370
        %v5403 = vadd.f32 %v5142, %v5371
        %v5404 = vadd.f32 %v5143, %v5372
        %v5405 = vadd.f32 %v5144, %v5373
        %v5406 = vadd.f32 %v5145, %v5374
        %v5407 = vadd.f32 %v5146, %v5375
        %v5408 = vadd.f32 %v5147, %v5376
        %v5409 = vadd.f32 %v5148, %v5377
        %v5410 = vadd.f32 %v5149, %v5378
        %v5411 = vadd.f32 %v5150, %v5379
        %v5412 = vadd.f32 %v5151, %v5380
        %v5413 = vadd.f32 %v5152, %v5381
        %v5414 = vadd.f32 %v5153, %v5382
        %v5415 = vadd.f32 %v5154, %v5383
        %v5416 = vadd.f32 %v5155, %v5384
        %v5417 = vadd.f32 %v5156, %v5385
        %v5418 = vadd.f32 %v5157, %v5386
        %v5419 = vadd.f32 %v5158, %v5387
        %v5420 = vadd.f32 %v5159, %v5388
        %v5421 = vld [vmem:[%s4375 + $0x4] sm:$0xff]
        %v5422 = vld [vmem:[%s4375 + $0xc] sm:$0xff]
        %v5423 = vld [vmem:[%s4375 + $0x1c] sm:$0xff]
        %v5424 = vld [vmem:[%s4375 + $0x24] sm:$0xff]
        %v5425 = vld [vmem:[%s4375 + $0x34] sm:$0xff]
        %v5426 = vld [vmem:[%s4375 + $0x3c] sm:$0xff]
        %v5427 = vld [vmem:[%s4375 + $0x4c] sm:$0xff]
        %v5428 = vld [vmem:[%s4375 + $0x54] sm:$0xff]
        %v5429 = vld [vmem:[%s4375 + $0x64] sm:$0xff]
        %v5430 = vld [vmem:[%s4375 + $0x6c] sm:$0xff]
        %v5431 = vld [vmem:[%s4375 + $0x7c] sm:$0xff]
        %v5432 = vld [vmem:[%s4375 + $0x84] sm:$0xff]
        %v5433 = vld [vmem:[%s4375 + $0x94] sm:$0xff]
        %v5434 = vld [vmem:[%s4375 + $0x9c] sm:$0xff]
        %v5435 = vld [vmem:[%s4375 + $0xac] sm:$0xff]
        %v5436 = vld [vmem:[%s4375 + $0xb4] sm:$0xff]
        %v5437 = vld [vmem:[%s4375 + $0xc4] sm:$0xff]
        %v5438 = vld [vmem:[%s4375 + $0xcc] sm:$0xff]
        %v5439 = vld [vmem:[%s4375 + $0xdc] sm:$0xff]
        %v5440 = vld [vmem:[%s4375 + $0xe4] sm:$0xff]
        %v5441 = vld [vmem:[%s4375 + $0xf4] sm:$0xff]
        %v5442 = vld [vmem:[%s4375 + $0xfc] sm:$0xff]
        %v5443 = vld [vmem:[%s4375 + $0x10c] sm:$0xff]
        %v5444 = vld [vmem:[%s4375 + $0x114] sm:$0xff]
        %v5445 = vld [vmem:[%s4375 + $0x124] sm:$0xff]
        %v5446 = vld [vmem:[%s4375 + $0x12c] sm:$0xff]
        %v5447 = vld [vmem:[%s4375 + $0x13c] sm:$0xff]
        %v5448 = vld [vmem:[%s4375 + $0x144] sm:$0xff]
        %v5449 = vld [vmem:[%s4375 + $0x154] sm:$0xff]
        %v5450 = vld [vmem:[%s4375 + $0x15c] sm:$0xff]
        %v5451 = vld [vmem:[%s4375 + $0x16c] sm:$0xff]
        %v5452 = vld [vmem:[%s4375 + $0x174] sm:$0xff]
        %v5453 = vld [vmem:[%s4408 + $0x4] sm:$0x1]
        %5455 = vset.pattern.permute.xlu0 0
        %5456 = vperm.xlu0 %5455, %v5421
        %v5457 = vpop.permute.xlu0 %5456
        %5460 = vset.pattern.permute.xlu0 0
        %5461 = vperm.xlu0 %5460, %v5422
        %v5462 = vpop.permute.xlu0 %5461
        %5465 = vset.pattern.permute.xlu0 0
        %5466 = vperm.xlu0 %5465, %v5423
        %v5467 = vpop.permute.xlu0 %5466
        %5470 = vset.pattern.permute.xlu0 0
        %5471 = vperm.xlu0 %5470, %v5424
        %v5472 = vpop.permute.xlu0 %5471
        %5475 = vset.pattern.permute.xlu0 0
        %5476 = vperm.xlu0 %5475, %v5425
        %v5477 = vpop.permute.xlu0 %5476
        %5480 = vset.pattern.permute.xlu0 0
        %5481 = vperm.xlu0 %5480, %v5426
        %v5482 = vpop.permute.xlu0 %5481
        %5485 = vset.pattern.permute.xlu0 0
        %5486 = vperm.xlu0 %5485, %v5427
        %v5487 = vpop.permute.xlu0 %5486
        %5490 = vset.pattern.permute.xlu0 0
        %5491 = vperm.xlu0 %5490, %v5428
        %v5492 = vpop.permute.xlu0 %5491
        %5495 = vset.pattern.permute.xlu0 0
        %5496 = vperm.xlu0 %5495, %v5429
        %v5497 = vpop.permute.xlu0 %5496
        %5500 = vset.pattern.permute.xlu0 0
        %5501 = vperm.xlu0 %5500, %v5430
        %v5502 = vpop.permute.xlu0 %5501
        %5505 = vset.pattern.permute.xlu0 0
        %5506 = vperm.xlu0 %5505, %v5431
        %v5507 = vpop.permute.xlu0 %5506
        %5510 = vset.pattern.permute.xlu0 0
        %5511 = vperm.xlu0 %5510, %v5432
        %v5512 = vpop.permute.xlu0 %5511
        %5515 = vset.pattern.permute.xlu0 0
        %5516 = vperm.xlu0 %5515, %v5433
        %v5517 = vpop.permute.xlu0 %5516
        %5520 = vset.pattern.permute.xlu0 0
        %5521 = vperm.xlu0 %5520, %v5434
        %v5522 = vpop.permute.xlu0 %5521
        %5525 = vset.pattern.permute.xlu0 0
        %5526 = vperm.xlu0 %5525, %v5435
        %v5527 = vpop.permute.xlu0 %5526
        %5530 = vset.pattern.permute.xlu0 0
        %5531 = vperm.xlu0 %5530, %v5436
        %v5532 = vpop.permute.xlu0 %5531
        %5535 = vset.pattern.permute.xlu0 0
        %5536 = vperm.xlu0 %5535, %v5437
        %v5537 = vpop.permute.xlu0 %5536
        %5540 = vset.pattern.permute.xlu0 0
        %5541 = vperm.xlu0 %5540, %v5438
        %v5542 = vpop.permute.xlu0 %5541
        %5545 = vset.pattern.permute.xlu0 0
        %5546 = vperm.xlu0 %5545, %v5439
        %v5547 = vpop.permute.xlu0 %5546
        %5550 = vset.pattern.permute.xlu0 0
        %5551 = vperm.xlu0 %5550, %v5440
        %v5552 = vpop.permute.xlu0 %5551
        %5555 = vset.pattern.permute.xlu0 0
        %5556 = vperm.xlu0 %5555, %v5441
        %v5557 = vpop.permute.xlu0 %5556
        %5560 = vset.pattern.permute.xlu0 0
        %5561 = vperm.xlu0 %5560, %v5442
        %v5562 = vpop.permute.xlu0 %5561
        %5565 = vset.pattern.permute.xlu0 0
        %5566 = vperm.xlu0 %5565, %v5443
        %v5567 = vpop.permute.xlu0 %5566
        %5570 = vset.pattern.permute.xlu0 0
        %5571 = vperm.xlu0 %5570, %v5444
        %v5572 = vpop.permute.xlu0 %5571
        %5575 = vset.pattern.permute.xlu0 0
        %5576 = vperm.xlu0 %5575, %v5445
        %v5577 = vpop.permute.xlu0 %5576
        %5580 = vset.pattern.permute.xlu0 0
        %5581 = vperm.xlu0 %5580, %v5446
        %v5582 = vpop.permute.xlu0 %5581
        %5585 = vset.pattern.permute.xlu0 0
        %5586 = vperm.xlu0 %5585, %v5447
        %v5587 = vpop.permute.xlu0 %5586
        %5590 = vset.pattern.permute.xlu0 0
        %5591 = vperm.xlu0 %5590, %v5448
        %v5592 = vpop.permute.xlu0 %5591
        %5595 = vset.pattern.permute.xlu0 0
        %5596 = vperm.xlu0 %5595, %v5449
        %v5597 = vpop.permute.xlu0 %5596
        %5600 = vset.pattern.permute.xlu0 0
        %5601 = vperm.xlu0 %5600, %v5450
        %v5602 = vpop.permute.xlu0 %5601
        %5605 = vset.pattern.permute.xlu0 0
        %5606 = vperm.xlu0 %5605, %v5451
        %v5607 = vpop.permute.xlu0 %5606
        %5610 = vset.pattern.permute.xlu0 0
        %5611 = vperm.xlu0 %5610, %v5452
        %v5612 = vpop.permute.xlu0 %5611
        %v5614 = vlaneseq
        %v5615 = vshrl.u32 %v5614, 7
        %v5616 = vsub.s32 0, %v5615
        %v5617 = vrot.slane %v5453, %v5616
        %v5618 = vmul.f32 %v5457, %v5617
        %v5619 = vmul.f32 %v5462, %v5617
        %v5620 = vmul.f32 %v5467, %v5617
        %v5621 = vmul.f32 %v5472, %v5617
        %v5622 = vmul.f32 %v5477, %v5617
        %v5623 = vmul.f32 %v5482, %v5617
        %v5624 = vmul.f32 %v5487, %v5617
        %v5625 = vmul.f32 %v5492, %v5617
        %v5626 = vmul.f32 %v5497, %v5617
        %v5627 = vmul.f32 %v5502, %v5617
        %v5628 = vmul.f32 %v5507, %v5617
        %v5629 = vmul.f32 %v5512, %v5617
        %v5630 = vmul.f32 %v5517, %v5617
        %v5631 = vmul.f32 %v5522, %v5617
        %v5632 = vmul.f32 %v5527, %v5617
        %v5633 = vmul.f32 %v5532, %v5617
        %v5634 = vmul.f32 %v5537, %v5617
        %v5635 = vmul.f32 %v5542, %v5617
        %v5636 = vmul.f32 %v5547, %v5617
        %v5637 = vmul.f32 %v5552, %v5617
        %v5638 = vmul.f32 %v5557, %v5617
        %v5639 = vmul.f32 %v5562, %v5617
        %v5640 = vmul.f32 %v5567, %v5617
        %v5641 = vmul.f32 %v5572, %v5617
        %v5642 = vmul.f32 %v5577, %v5617
        %v5643 = vmul.f32 %v5582, %v5617
        %v5644 = vmul.f32 %v5587, %v5617
        %v5645 = vmul.f32 %v5592, %v5617
        %v5646 = vmul.f32 %v5597, %v5617
        %v5647 = vmul.f32 %v5602, %v5617
        %v5648 = vmul.f32 %v5607, %v5617
        %v5649 = vmul.f32 %v5612, %v5617
        %v5650 = vadd.f32 %v5389, %v5618
        %v5651 = vadd.f32 %v5390, %v5619
        %v5652 = vadd.f32 %v5391, %v5620
        %v5653 = vadd.f32 %v5392, %v5621
        %v5654 = vadd.f32 %v5393, %v5622
        %v5655 = vadd.f32 %v5394, %v5623
        %v5656 = vadd.f32 %v5395, %v5624
        %v5657 = vadd.f32 %v5396, %v5625
        %v5658 = vadd.f32 %v5397, %v5626
        %v5659 = vadd.f32 %v5398, %v5627
        %v5660 = vadd.f32 %v5399, %v5628
        %v5661 = vadd.f32 %v5400, %v5629
        %v5662 = vadd.f32 %v5401, %v5630
        %v5663 = vadd.f32 %v5402, %v5631
        %v5664 = vadd.f32 %v5403, %v5632
        %v5665 = vadd.f32 %v5404, %v5633
        %v5666 = vadd.f32 %v5405, %v5634
        %v5667 = vadd.f32 %v5406, %v5635
        %v5668 = vadd.f32 %v5407, %v5636
        %v5669 = vadd.f32 %v5408, %v5637
        %v5670 = vadd.f32 %v5409, %v5638
        %v5671 = vadd.f32 %v5410, %v5639
        %v5672 = vadd.f32 %v5411, %v5640
        %v5673 = vadd.f32 %v5412, %v5641
        %v5674 = vadd.f32 %v5413, %v5642
        %v5675 = vadd.f32 %v5414, %v5643
        %v5676 = vadd.f32 %v5415, %v5644
        %v5677 = vadd.f32 %v5416, %v5645
        %v5678 = vadd.f32 %v5417, %v5646
        %v5679 = vadd.f32 %v5418, %v5647
        %v5680 = vadd.f32 %v5419, %v5648
        %v5681 = vadd.f32 %v5420, %v5649
        %s5682 = scalar_lea.vmem [#allocation2], 96
        %v5683 = vld [vmem:[%s5682] sm:$0xff]
        %v5684 = vld [vmem:[%s5682 + $0x8] sm:$0xff]
        %v5685 = vld [vmem:[%s5682 + $0x18] sm:$0xff]
        %v5686 = vld [vmem:[%s5682 + $0x20] sm:$0xff]
        %v5687 = vld [vmem:[%s5682 + $0x30] sm:$0xff]
        %v5688 = vld [vmem:[%s5682 + $0x38] sm:$0xff]
        %v5689 = vld [vmem:[%s5682 + $0x48] sm:$0xff]
        %v5690 = vld [vmem:[%s5682 + $0x50] sm:$0xff]
        %v5691 = vld [vmem:[%s5682 + $0x60] sm:$0xff]
        %v5692 = vld [vmem:[%s5682 + $0x68] sm:$0xff]
        %v5693 = vld [vmem:[%s5682 + $0x78] sm:$0xff]
        %v5694 = vld [vmem:[%s5682 + $0x80] sm:$0xff]
        %v5695 = vld [vmem:[%s5682 + $0x90] sm:$0xff]
        %v5696 = vld [vmem:[%s5682 + $0x98] sm:$0xff]
        %v5697 = vld [vmem:[%s5682 + $0xa8] sm:$0xff]
        %v5698 = vld [vmem:[%s5682 + $0xb0] sm:$0xff]
        %v5699 = vld [vmem:[%s5682 + $0xc0] sm:$0xff]
        %v5700 = vld [vmem:[%s5682 + $0xc8] sm:$0xff]
        %v5701 = vld [vmem:[%s5682 + $0xd8] sm:$0xff]
        %v5702 = vld [vmem:[%s5682 + $0xe0] sm:$0xff]
        %v5703 = vld [vmem:[%s5682 + $0xf0] sm:$0xff]
        %v5704 = vld [vmem:[%s5682 + $0xf8] sm:$0xff]
        %v5705 = vld [vmem:[%s5682 + $0x108] sm:$0xff]
        %v5706 = vld [vmem:[%s5682 + $0x110] sm:$0xff]
        %v5707 = vld [vmem:[%s5682 + $0x120] sm:$0xff]
        %v5708 = vld [vmem:[%s5682 + $0x128] sm:$0xff]
        %v5709 = vld [vmem:[%s5682 + $0x138] sm:$0xff]
        %v5710 = vld [vmem:[%s5682 + $0x140] sm:$0xff]
        %v5711 = vld [vmem:[%s5682 + $0x150] sm:$0xff]
        %v5712 = vld [vmem:[%s5682 + $0x158] sm:$0xff]
        %v5713 = vld [vmem:[%s5682 + $0x168] sm:$0xff]
        %v5714 = vld [vmem:[%s5682 + $0x170] sm:$0xff]
        %s5715 = scalar_lea.vmem %s1, 32
        %v5716 = vld [vmem:[%s5715] sm:$0x1]
        %5718 = vset.pattern.permute.xlu0 0
        %5719 = vperm.xlu0 %5718, %v5683
        %v5720 = vpop.permute.xlu0 %5719
        %5723 = vset.pattern.permute.xlu0 0
        %5724 = vperm.xlu0 %5723, %v5684
        %v5725 = vpop.permute.xlu0 %5724
        %5728 = vset.pattern.permute.xlu0 0
        %5729 = vperm.xlu0 %5728, %v5685
        %v5730 = vpop.permute.xlu0 %5729
        %5733 = vset.pattern.permute.xlu0 0
        %5734 = vperm.xlu0 %5733, %v5686
        %v5735 = vpop.permute.xlu0 %5734
        %5738 = vset.pattern.permute.xlu0 0
        %5739 = vperm.xlu0 %5738, %v5687
        %v5740 = vpop.permute.xlu0 %5739
        %5743 = vset.pattern.permute.xlu0 0
        %5744 = vperm.xlu0 %5743, %v5688
        %v5745 = vpop.permute.xlu0 %5744
        %5748 = vset.pattern.permute.xlu0 0
        %5749 = vperm.xlu0 %5748, %v5689
        %v5750 = vpop.permute.xlu0 %5749
        %5753 = vset.pattern.permute.xlu0 0
        %5754 = vperm.xlu0 %5753, %v5690
        %v5755 = vpop.permute.xlu0 %5754
        %5758 = vset.pattern.permute.xlu0 0
        %5759 = vperm.xlu0 %5758, %v5691
        %v5760 = vpop.permute.xlu0 %5759
        %5763 = vset.pattern.permute.xlu0 0
        %5764 = vperm.xlu0 %5763, %v5692
        %v5765 = vpop.permute.xlu0 %5764
        %5768 = vset.pattern.permute.xlu0 0
        %5769 = vperm.xlu0 %5768, %v5693
        %v5770 = vpop.permute.xlu0 %5769
        %5773 = vset.pattern.permute.xlu0 0
        %5774 = vperm.xlu0 %5773, %v5694
        %v5775 = vpop.permute.xlu0 %5774
        %5778 = vset.pattern.permute.xlu0 0
        %5779 = vperm.xlu0 %5778, %v5695
        %v5780 = vpop.permute.xlu0 %5779
        %5783 = vset.pattern.permute.xlu0 0
        %5784 = vperm.xlu0 %5783, %v5696
        %v5785 = vpop.permute.xlu0 %5784
        %5788 = vset.pattern.permute.xlu0 0
        %5789 = vperm.xlu0 %5788, %v5697
        %v5790 = vpop.permute.xlu0 %5789
        %5793 = vset.pattern.permute.xlu0 0
        %5794 = vperm.xlu0 %5793, %v5698
        %v5795 = vpop.permute.xlu0 %5794
        %5798 = vset.pattern.permute.xlu0 0
        %5799 = vperm.xlu0 %5798, %v5699
        %v5800 = vpop.permute.xlu0 %5799
        %5803 = vset.pattern.permute.xlu0 0
        %5804 = vperm.xlu0 %5803, %v5700
        %v5805 = vpop.permute.xlu0 %5804
        %5808 = vset.pattern.permute.xlu0 0
        %5809 = vperm.xlu0 %5808, %v5701
        %v5810 = vpop.permute.xlu0 %5809
        %5813 = vset.pattern.permute.xlu0 0
        %5814 = vperm.xlu0 %5813, %v5702
        %v5815 = vpop.permute.xlu0 %5814
        %5818 = vset.pattern.permute.xlu0 0
        %5819 = vperm.xlu0 %5818, %v5703
        %v5820 = vpop.permute.xlu0 %5819
        %5823 = vset.pattern.permute.xlu0 0
        %5824 = vperm.xlu0 %5823, %v5704
        %v5825 = vpop.permute.xlu0 %5824
        %5828 = vset.pattern.permute.xlu0 0
        %5829 = vperm.xlu0 %5828, %v5705
        %v5830 = vpop.permute.xlu0 %5829
        %5833 = vset.pattern.permute.xlu0 0
        %5834 = vperm.xlu0 %5833, %v5706
        %v5835 = vpop.permute.xlu0 %5834
        %5838 = vset.pattern.permute.xlu0 0
        %5839 = vperm.xlu0 %5838, %v5707
        %v5840 = vpop.permute.xlu0 %5839
        %5843 = vset.pattern.permute.xlu0 0
        %5844 = vperm.xlu0 %5843, %v5708
        %v5845 = vpop.permute.xlu0 %5844
        %5848 = vset.pattern.permute.xlu0 0
        %5849 = vperm.xlu0 %5848, %v5709
        %v5850 = vpop.permute.xlu0 %5849
        %5853 = vset.pattern.permute.xlu0 0
        %5854 = vperm.xlu0 %5853, %v5710
        %v5855 = vpop.permute.xlu0 %5854
        %5858 = vset.pattern.permute.xlu0 0
        %5859 = vperm.xlu0 %5858, %v5711
        %v5860 = vpop.permute.xlu0 %5859
        %5863 = vset.pattern.permute.xlu0 0
        %5864 = vperm.xlu0 %5863, %v5712
        %v5865 = vpop.permute.xlu0 %5864
        %5868 = vset.pattern.permute.xlu0 0
        %5869 = vperm.xlu0 %5868, %v5713
        %v5870 = vpop.permute.xlu0 %5869
        %5873 = vset.pattern.permute.xlu0 0
        %5874 = vperm.xlu0 %5873, %v5714
        %v5875 = vpop.permute.xlu0 %5874
        %v5877 = vlaneseq
        %v5878 = vshrl.u32 %v5877, 7
        %v5879 = vsub.s32 0, %v5878
        %v5880 = vrot.slane %v5716, %v5879
        %v5881 = vmul.f32 %v5720, %v5880
        %v5882 = vmul.f32 %v5725, %v5880
        %v5883 = vmul.f32 %v5730, %v5880
        %v5884 = vmul.f32 %v5735, %v5880
        %v5885 = vmul.f32 %v5740, %v5880
        %v5886 = vmul.f32 %v5745, %v5880
        %v5887 = vmul.f32 %v5750, %v5880
        %v5888 = vmul.f32 %v5755, %v5880
        %v5889 = vmul.f32 %v5760, %v5880
        %v5890 = vmul.f32 %v5765, %v5880
        %v5891 = vmul.f32 %v5770, %v5880
        %v5892 = vmul.f32 %v5775, %v5880
        %v5893 = vmul.f32 %v5780, %v5880
        %v5894 = vmul.f32 %v5785, %v5880
        %v5895 = vmul.f32 %v5790, %v5880
        %v5896 = vmul.f32 %v5795, %v5880
        %v5897 = vmul.f32 %v5800, %v5880
        %v5898 = vmul.f32 %v5805, %v5880
        %v5899 = vmul.f32 %v5810, %v5880
        %v5900 = vmul.f32 %v5815, %v5880
        %v5901 = vmul.f32 %v5820, %v5880
        %v5902 = vmul.f32 %v5825, %v5880
        %v5903 = vmul.f32 %v5830, %v5880
        %v5904 = vmul.f32 %v5835, %v5880
        %v5905 = vmul.f32 %v5840, %v5880
        %v5906 = vmul.f32 %v5845, %v5880
        %v5907 = vmul.f32 %v5850, %v5880
        %v5908 = vmul.f32 %v5855, %v5880
        %v5909 = vmul.f32 %v5860, %v5880
        %v5910 = vmul.f32 %v5865, %v5880
        %v5911 = vmul.f32 %v5870, %v5880
        %v5912 = vmul.f32 %v5875, %v5880
        %v5913 = vadd.f32 %v5650, %v5881
        %v5914 = vadd.f32 %v5651, %v5882
        %v5915 = vadd.f32 %v5652, %v5883
        %v5916 = vadd.f32 %v5653, %v5884
        %v5917 = vadd.f32 %v5654, %v5885
        %v5918 = vadd.f32 %v5655, %v5886
        %v5919 = vadd.f32 %v5656, %v5887
        %v5920 = vadd.f32 %v5657, %v5888
        %v5921 = vadd.f32 %v5658, %v5889
        %v5922 = vadd.f32 %v5659, %v5890
        %v5923 = vadd.f32 %v5660, %v5891
        %v5924 = vadd.f32 %v5661, %v5892
        %v5925 = vadd.f32 %v5662, %v5893
        %v5926 = vadd.f32 %v5663, %v5894
        %v5927 = vadd.f32 %v5664, %v5895
        %v5928 = vadd.f32 %v5665, %v5896
        %v5929 = vadd.f32 %v5666, %v5897
        %v5930 = vadd.f32 %v5667, %v5898
        %v5931 = vadd.f32 %v5668, %v5899
        %v5932 = vadd.f32 %v5669, %v5900
        %v5933 = vadd.f32 %v5670, %v5901
        %v5934 = vadd.f32 %v5671, %v5902
        %v5935 = vadd.f32 %v5672, %v5903
        %v5936 = vadd.f32 %v5673, %v5904
        %v5937 = vadd.f32 %v5674, %v5905
        %v5938 = vadd.f32 %v5675, %v5906
        %v5939 = vadd.f32 %v5676, %v5907
        %v5940 = vadd.f32 %v5677, %v5908
        %v5941 = vadd.f32 %v5678, %v5909
        %v5942 = vadd.f32 %v5679, %v5910
        %v5943 = vadd.f32 %v5680, %v5911
        %v5944 = vadd.f32 %v5681, %v5912
        %v5945 = vld [vmem:[%s5682 + $0x1] sm:$0xff]
        %v5946 = vld [vmem:[%s5682 + $0x9] sm:$0xff]
        %v5947 = vld [vmem:[%s5682 + $0x19] sm:$0xff]
        %v5948 = vld [vmem:[%s5682 + $0x21] sm:$0xff]
        %v5949 = vld [vmem:[%s5682 + $0x31] sm:$0xff]
        %v5950 = vld [vmem:[%s5682 + $0x39] sm:$0xff]
        %v5951 = vld [vmem:[%s5682 + $0x49] sm:$0xff]
        %v5952 = vld [vmem:[%s5682 + $0x51] sm:$0xff]
        %v5953 = vld [vmem:[%s5682 + $0x61] sm:$0xff]
        %v5954 = vld [vmem:[%s5682 + $0x69] sm:$0xff]
        %v5955 = vld [vmem:[%s5682 + $0x79] sm:$0xff]
        %v5956 = vld [vmem:[%s5682 + $0x81] sm:$0xff]
        %v5957 = vld [vmem:[%s5682 + $0x91] sm:$0xff]
        %v5958 = vld [vmem:[%s5682 + $0x99] sm:$0xff]
        %v5959 = vld [vmem:[%s5682 + $0xa9] sm:$0xff]
        %v5960 = vld [vmem:[%s5682 + $0xb1] sm:$0xff]
        %v5961 = vld [vmem:[%s5682 + $0xc1] sm:$0xff]
        %v5962 = vld [vmem:[%s5682 + $0xc9] sm:$0xff]
        %v5963 = vld [vmem:[%s5682 + $0xd9] sm:$0xff]
        %v5964 = vld [vmem:[%s5682 + $0xe1] sm:$0xff]
        %v5965 = vld [vmem:[%s5682 + $0xf1] sm:$0xff]
        %v5966 = vld [vmem:[%s5682 + $0xf9] sm:$0xff]
        %v5967 = vld [vmem:[%s5682 + $0x109] sm:$0xff]
        %v5968 = vld [vmem:[%s5682 + $0x111] sm:$0xff]
        %v5969 = vld [vmem:[%s5682 + $0x121] sm:$0xff]
        %v5970 = vld [vmem:[%s5682 + $0x129] sm:$0xff]
        %v5971 = vld [vmem:[%s5682 + $0x139] sm:$0xff]
        %v5972 = vld [vmem:[%s5682 + $0x141] sm:$0xff]
        %v5973 = vld [vmem:[%s5682 + $0x151] sm:$0xff]
        %v5974 = vld [vmem:[%s5682 + $0x159] sm:$0xff]
        %v5975 = vld [vmem:[%s5682 + $0x169] sm:$0xff]
        %v5976 = vld [vmem:[%s5682 + $0x171] sm:$0xff]
        %v5977 = vld [vmem:[%s5715 + $0x1] sm:$0x1]
        %5979 = vset.pattern.permute.xlu0 0
        %5980 = vperm.xlu0 %5979, %v5945
        %v5981 = vpop.permute.xlu0 %5980
        %5984 = vset.pattern.permute.xlu0 0
        %5985 = vperm.xlu0 %5984, %v5946
        %v5986 = vpop.permute.xlu0 %5985
        %5989 = vset.pattern.permute.xlu0 0
        %5990 = vperm.xlu0 %5989, %v5947
        %v5991 = vpop.permute.xlu0 %5990
        %5994 = vset.pattern.permute.xlu0 0
        %5995 = vperm.xlu0 %5994, %v5948
        %v5996 = vpop.permute.xlu0 %5995
        %5999 = vset.pattern.permute.xlu0 0
        %6000 = vperm.xlu0 %5999, %v5949
        %v6001 = vpop.permute.xlu0 %6000
        %6004 = vset.pattern.permute.xlu0 0
        %6005 = vperm.xlu0 %6004, %v5950
        %v6006 = vpop.permute.xlu0 %6005
        %6009 = vset.pattern.permute.xlu0 0
        %6010 = vperm.xlu0 %6009, %v5951
        %v6011 = vpop.permute.xlu0 %6010
        %6014 = vset.pattern.permute.xlu0 0
        %6015 = vperm.xlu0 %6014, %v5952
        %v6016 = vpop.permute.xlu0 %6015
        %6019 = vset.pattern.permute.xlu0 0
        %6020 = vperm.xlu0 %6019, %v5953
        %v6021 = vpop.permute.xlu0 %6020
        %6024 = vset.pattern.permute.xlu0 0
        %6025 = vperm.xlu0 %6024, %v5954
        %v6026 = vpop.permute.xlu0 %6025
        %6029 = vset.pattern.permute.xlu0 0
        %6030 = vperm.xlu0 %6029, %v5955
        %v6031 = vpop.permute.xlu0 %6030
        %6034 = vset.pattern.permute.xlu0 0
        %6035 = vperm.xlu0 %6034, %v5956
        %v6036 = vpop.permute.xlu0 %6035
        %6039 = vset.pattern.permute.xlu0 0
        %6040 = vperm.xlu0 %6039, %v5957
        %v6041 = vpop.permute.xlu0 %6040
        %6044 = vset.pattern.permute.xlu0 0
        %6045 = vperm.xlu0 %6044, %v5958
        %v6046 = vpop.permute.xlu0 %6045
        %6049 = vset.pattern.permute.xlu0 0
        %6050 = vperm.xlu0 %6049, %v5959
        %v6051 = vpop.permute.xlu0 %6050
        %6054 = vset.pattern.permute.xlu0 0
        %6055 = vperm.xlu0 %6054, %v5960
        %v6056 = vpop.permute.xlu0 %6055
        %6059 = vset.pattern.permute.xlu0 0
        %6060 = vperm.xlu0 %6059, %v5961
        %v6061 = vpop.permute.xlu0 %6060
        %6064 = vset.pattern.permute.xlu0 0
        %6065 = vperm.xlu0 %6064, %v5962
        %v6066 = vpop.permute.xlu0 %6065
        %6069 = vset.pattern.permute.xlu0 0
        %6070 = vperm.xlu0 %6069, %v5963
        %v6071 = vpop.permute.xlu0 %6070
        %6074 = vset.pattern.permute.xlu0 0
        %6075 = vperm.xlu0 %6074, %v5964
        %v6076 = vpop.permute.xlu0 %6075
        %6079 = vset.pattern.permute.xlu0 0
        %6080 = vperm.xlu0 %6079, %v5965
        %v6081 = vpop.permute.xlu0 %6080
        %6084 = vset.pattern.permute.xlu0 0
        %6085 = vperm.xlu0 %6084, %v5966
        %v6086 = vpop.permute.xlu0 %6085
        %6089 = vset.pattern.permute.xlu0 0
        %6090 = vperm.xlu0 %6089, %v5967
        %v6091 = vpop.permute.xlu0 %6090
        %6094 = vset.pattern.permute.xlu0 0
        %6095 = vperm.xlu0 %6094, %v5968
        %v6096 = vpop.permute.xlu0 %6095
        %6099 = vset.pattern.permute.xlu0 0
        %6100 = vperm.xlu0 %6099, %v5969
        %v6101 = vpop.permute.xlu0 %6100
        %6104 = vset.pattern.permute.xlu0 0
        %6105 = vperm.xlu0 %6104, %v5970
        %v6106 = vpop.permute.xlu0 %6105
        %6109 = vset.pattern.permute.xlu0 0
        %6110 = vperm.xlu0 %6109, %v5971
        %v6111 = vpop.permute.xlu0 %6110
        %6114 = vset.pattern.permute.xlu0 0
        %6115 = vperm.xlu0 %6114, %v5972
        %v6116 = vpop.permute.xlu0 %6115
        %6119 = vset.pattern.permute.xlu0 0
        %6120 = vperm.xlu0 %6119, %v5973
        %v6121 = vpop.permute.xlu0 %6120
        %6124 = vset.pattern.permute.xlu0 0
        %6125 = vperm.xlu0 %6124, %v5974
        %v6126 = vpop.permute.xlu0 %6125
        %6129 = vset.pattern.permute.xlu0 0
        %6130 = vperm.xlu0 %6129, %v5975
        %v6131 = vpop.permute.xlu0 %6130
        %6134 = vset.pattern.permute.xlu0 0
        %6135 = vperm.xlu0 %6134, %v5976
        %v6136 = vpop.permute.xlu0 %6135
        %v6138 = vlaneseq
        %v6139 = vshrl.u32 %v6138, 7
        %v6140 = vsub.s32 0, %v6139
        %v6141 = vrot.slane %v5977, %v6140
        %v6142 = vmul.f32 %v5981, %v6141
        %v6143 = vmul.f32 %v5986, %v6141
        %v6144 = vmul.f32 %v5991, %v6141
        %v6145 = vmul.f32 %v5996, %v6141
        %v6146 = vmul.f32 %v6001, %v6141
        %v6147 = vmul.f32 %v6006, %v6141
        %v6148 = vmul.f32 %v6011, %v6141
        %v6149 = vmul.f32 %v6016, %v6141
        %v6150 = vmul.f32 %v6021, %v6141
        %v6151 = vmul.f32 %v6026, %v6141
        %v6152 = vmul.f32 %v6031, %v6141
        %v6153 = vmul.f32 %v6036, %v6141
        %v6154 = vmul.f32 %v6041, %v6141
        %v6155 = vmul.f32 %v6046, %v6141
        %v6156 = vmul.f32 %v6051, %v6141
        %v6157 = vmul.f32 %v6056, %v6141
        %v6158 = vmul.f32 %v6061, %v6141
        %v6159 = vmul.f32 %v6066, %v6141
        %v6160 = vmul.f32 %v6071, %v6141
        %v6161 = vmul.f32 %v6076, %v6141
        %v6162 = vmul.f32 %v6081, %v6141
        %v6163 = vmul.f32 %v6086, %v6141
        %v6164 = vmul.f32 %v6091, %v6141
        %v6165 = vmul.f32 %v6096, %v6141
        %v6166 = vmul.f32 %v6101, %v6141
        %v6167 = vmul.f32 %v6106, %v6141
        %v6168 = vmul.f32 %v6111, %v6141
        %v6169 = vmul.f32 %v6116, %v6141
        %v6170 = vmul.f32 %v6121, %v6141
        %v6171 = vmul.f32 %v6126, %v6141
        %v6172 = vmul.f32 %v6131, %v6141
        %v6173 = vmul.f32 %v6136, %v6141
        %v6174 = vadd.f32 %v5913, %v6142
        %v6175 = vadd.f32 %v5914, %v6143
        %v6176 = vadd.f32 %v5915, %v6144
        %v6177 = vadd.f32 %v5916, %v6145
        %v6178 = vadd.f32 %v5917, %v6146
        %v6179 = vadd.f32 %v5918, %v6147
        %v6180 = vadd.f32 %v5919, %v6148
        %v6181 = vadd.f32 %v5920, %v6149
        %v6182 = vadd.f32 %v5921, %v6150
        %v6183 = vadd.f32 %v5922, %v6151
        %v6184 = vadd.f32 %v5923, %v6152
        %v6185 = vadd.f32 %v5924, %v6153
        %v6186 = vadd.f32 %v5925, %v6154
        %v6187 = vadd.f32 %v5926, %v6155
        %v6188 = vadd.f32 %v5927, %v6156
        %v6189 = vadd.f32 %v5928, %v6157
        %v6190 = vadd.f32 %v5929, %v6158
        %v6191 = vadd.f32 %v5930, %v6159
        %v6192 = vadd.f32 %v5931, %v6160
        %v6193 = vadd.f32 %v5932, %v6161
        %v6194 = vadd.f32 %v5933, %v6162
        %v6195 = vadd.f32 %v5934, %v6163
        %v6196 = vadd.f32 %v5935, %v6164
        %v6197 = vadd.f32 %v5936, %v6165
        %v6198 = vadd.f32 %v5937, %v6166
        %v6199 = vadd.f32 %v5938, %v6167
        %v6200 = vadd.f32 %v5939, %v6168
        %v6201 = vadd.f32 %v5940, %v6169
        %v6202 = vadd.f32 %v5941, %v6170
        %v6203 = vadd.f32 %v5942, %v6171
        %v6204 = vadd.f32 %v5943, %v6172
        %v6205 = vadd.f32 %v5944, %v6173
        %v6206 = vld [vmem:[%s5682 + $0x2] sm:$0xff]
        %v6207 = vld [vmem:[%s5682 + $0xa] sm:$0xff]
        %v6208 = vld [vmem:[%s5682 + $0x1a] sm:$0xff]
        %v6209 = vld [vmem:[%s5682 + $0x22] sm:$0xff]
        %v6210 = vld [vmem:[%s5682 + $0x32] sm:$0xff]
        %v6211 = vld [vmem:[%s5682 + $0x3a] sm:$0xff]
        %v6212 = vld [vmem:[%s5682 + $0x4a] sm:$0xff]
        %v6213 = vld [vmem:[%s5682 + $0x52] sm:$0xff]
        %v6214 = vld [vmem:[%s5682 + $0x62] sm:$0xff]
        %v6215 = vld [vmem:[%s5682 + $0x6a] sm:$0xff]
        %v6216 = vld [vmem:[%s5682 + $0x7a] sm:$0xff]
        %v6217 = vld [vmem:[%s5682 + $0x82] sm:$0xff]
        %v6218 = vld [vmem:[%s5682 + $0x92] sm:$0xff]
        %v6219 = vld [vmem:[%s5682 + $0x9a] sm:$0xff]
        %v6220 = vld [vmem:[%s5682 + $0xaa] sm:$0xff]
        %v6221 = vld [vmem:[%s5682 + $0xb2] sm:$0xff]
        %v6222 = vld [vmem:[%s5682 + $0xc2] sm:$0xff]
        %v6223 = vld [vmem:[%s5682 + $0xca] sm:$0xff]
        %v6224 = vld [vmem:[%s5682 + $0xda] sm:$0xff]
        %v6225 = vld [vmem:[%s5682 + $0xe2] sm:$0xff]
        %v6226 = vld [vmem:[%s5682 + $0xf2] sm:$0xff]
        %v6227 = vld [vmem:[%s5682 + $0xfa] sm:$0xff]
        %v6228 = vld [vmem:[%s5682 + $0x10a] sm:$0xff]
        %v6229 = vld [vmem:[%s5682 + $0x112] sm:$0xff]
        %v6230 = vld [vmem:[%s5682 + $0x122] sm:$0xff]
        %v6231 = vld [vmem:[%s5682 + $0x12a] sm:$0xff]
        %v6232 = vld [vmem:[%s5682 + $0x13a] sm:$0xff]
        %v6233 = vld [vmem:[%s5682 + $0x142] sm:$0xff]
        %v6234 = vld [vmem:[%s5682 + $0x152] sm:$0xff]
        %v6235 = vld [vmem:[%s5682 + $0x15a] sm:$0xff]
        %v6236 = vld [vmem:[%s5682 + $0x16a] sm:$0xff]
        %v6237 = vld [vmem:[%s5682 + $0x172] sm:$0xff]
        %v6238 = vld [vmem:[%s5715 + $0x2] sm:$0x1]
        %6240 = vset.pattern.permute.xlu0 0
        %6241 = vperm.xlu0 %6240, %v6206
        %v6242 = vpop.permute.xlu0 %6241
        %6245 = vset.pattern.permute.xlu0 0
        %6246 = vperm.xlu0 %6245, %v6207
        %v6247 = vpop.permute.xlu0 %6246
        %6250 = vset.pattern.permute.xlu0 0
        %6251 = vperm.xlu0 %6250, %v6208
        %v6252 = vpop.permute.xlu0 %6251
        %6255 = vset.pattern.permute.xlu0 0
        %6256 = vperm.xlu0 %6255, %v6209
        %v6257 = vpop.permute.xlu0 %6256
        %6260 = vset.pattern.permute.xlu0 0
        %6261 = vperm.xlu0 %6260, %v6210
        %v6262 = vpop.permute.xlu0 %6261
        %6265 = vset.pattern.permute.xlu0 0
        %6266 = vperm.xlu0 %6265, %v6211
        %v6267 = vpop.permute.xlu0 %6266
        %6270 = vset.pattern.permute.xlu0 0
        %6271 = vperm.xlu0 %6270, %v6212
        %v6272 = vpop.permute.xlu0 %6271
        %6275 = vset.pattern.permute.xlu0 0
        %6276 = vperm.xlu0 %6275, %v6213
        %v6277 = vpop.permute.xlu0 %6276
        %6280 = vset.pattern.permute.xlu0 0
        %6281 = vperm.xlu0 %6280, %v6214
        %v6282 = vpop.permute.xlu0 %6281
        %6285 = vset.pattern.permute.xlu0 0
        %6286 = vperm.xlu0 %6285, %v6215
        %v6287 = vpop.permute.xlu0 %6286
        %6290 = vset.pattern.permute.xlu0 0
        %6291 = vperm.xlu0 %6290, %v6216
        %v6292 = vpop.permute.xlu0 %6291
        %6295 = vset.pattern.permute.xlu0 0
        %6296 = vperm.xlu0 %6295, %v6217
        %v6297 = vpop.permute.xlu0 %6296
        %6300 = vset.pattern.permute.xlu0 0
        %6301 = vperm.xlu0 %6300, %v6218
        %v6302 = vpop.permute.xlu0 %6301
        %6305 = vset.pattern.permute.xlu0 0
        %6306 = vperm.xlu0 %6305, %v6219
        %v6307 = vpop.permute.xlu0 %6306
        %6310 = vset.pattern.permute.xlu0 0
        %6311 = vperm.xlu0 %6310, %v6220
        %v6312 = vpop.permute.xlu0 %6311
        %6315 = vset.pattern.permute.xlu0 0
        %6316 = vperm.xlu0 %6315, %v6221
        %v6317 = vpop.permute.xlu0 %6316
        %6320 = vset.pattern.permute.xlu0 0
        %6321 = vperm.xlu0 %6320, %v6222
        %v6322 = vpop.permute.xlu0 %6321
        %6325 = vset.pattern.permute.xlu0 0
        %6326 = vperm.xlu0 %6325, %v6223
        %v6327 = vpop.permute.xlu0 %6326
        %6330 = vset.pattern.permute.xlu0 0
        %6331 = vperm.xlu0 %6330, %v6224
        %v6332 = vpop.permute.xlu0 %6331
        %6335 = vset.pattern.permute.xlu0 0
        %6336 = vperm.xlu0 %6335, %v6225
        %v6337 = vpop.permute.xlu0 %6336
        %6340 = vset.pattern.permute.xlu0 0
        %6341 = vperm.xlu0 %6340, %v6226
        %v6342 = vpop.permute.xlu0 %6341
        %6345 = vset.pattern.permute.xlu0 0
        %6346 = vperm.xlu0 %6345, %v6227
        %v6347 = vpop.permute.xlu0 %6346
        %6350 = vset.pattern.permute.xlu0 0
        %6351 = vperm.xlu0 %6350, %v6228
        %v6352 = vpop.permute.xlu0 %6351
        %6355 = vset.pattern.permute.xlu0 0
        %6356 = vperm.xlu0 %6355, %v6229
        %v6357 = vpop.permute.xlu0 %6356
        %6360 = vset.pattern.permute.xlu0 0
        %6361 = vperm.xlu0 %6360, %v6230
        %v6362 = vpop.permute.xlu0 %6361
        %6365 = vset.pattern.permute.xlu0 0
        %6366 = vperm.xlu0 %6365, %v6231
        %v6367 = vpop.permute.xlu0 %6366
        %6370 = vset.pattern.permute.xlu0 0
        %6371 = vperm.xlu0 %6370, %v6232
        %v6372 = vpop.permute.xlu0 %6371
        %6375 = vset.pattern.permute.xlu0 0
        %6376 = vperm.xlu0 %6375, %v6233
        %v6377 = vpop.permute.xlu0 %6376
        %6380 = vset.pattern.permute.xlu0 0
        %6381 = vperm.xlu0 %6380, %v6234
        %v6382 = vpop.permute.xlu0 %6381
        %6385 = vset.pattern.permute.xlu0 0
        %6386 = vperm.xlu0 %6385, %v6235
        %v6387 = vpop.permute.xlu0 %6386
        %6390 = vset.pattern.permute.xlu0 0
        %6391 = vperm.xlu0 %6390, %v6236
        %v6392 = vpop.permute.xlu0 %6391
        %6395 = vset.pattern.permute.xlu0 0
        %6396 = vperm.xlu0 %6395, %v6237
        %v6397 = vpop.permute.xlu0 %6396
        %v6399 = vlaneseq
        %v6400 = vshrl.u32 %v6399, 7
        %v6401 = vsub.s32 0, %v6400
        %v6402 = vrot.slane %v6238, %v6401
        %v6403 = vmul.f32 %v6242, %v6402
        %v6404 = vmul.f32 %v6247, %v6402
        %v6405 = vmul.f32 %v6252, %v6402
        %v6406 = vmul.f32 %v6257, %v6402
        %v6407 = vmul.f32 %v6262, %v6402
        %v6408 = vmul.f32 %v6267, %v6402
        %v6409 = vmul.f32 %v6272, %v6402
        %v6410 = vmul.f32 %v6277, %v6402
        %v6411 = vmul.f32 %v6282, %v6402
        %v6412 = vmul.f32 %v6287, %v6402
        %v6413 = vmul.f32 %v6292, %v6402
        %v6414 = vmul.f32 %v6297, %v6402
        %v6415 = vmul.f32 %v6302, %v6402
        %v6416 = vmul.f32 %v6307, %v6402
        %v6417 = vmul.f32 %v6312, %v6402
        %v6418 = vmul.f32 %v6317, %v6402
        %v6419 = vmul.f32 %v6322, %v6402
        %v6420 = vmul.f32 %v6327, %v6402
        %v6421 = vmul.f32 %v6332, %v6402
        %v6422 = vmul.f32 %v6337, %v6402
        %v6423 = vmul.f32 %v6342, %v6402
        %v6424 = vmul.f32 %v6347, %v6402
        %v6425 = vmul.f32 %v6352, %v6402
        %v6426 = vmul.f32 %v6357, %v6402
        %v6427 = vmul.f32 %v6362, %v6402
        %v6428 = vmul.f32 %v6367, %v6402
        %v6429 = vmul.f32 %v6372, %v6402
        %v6430 = vmul.f32 %v6377, %v6402
        %v6431 = vmul.f32 %v6382, %v6402
        %v6432 = vmul.f32 %v6387, %v6402
        %v6433 = vmul.f32 %v6392, %v6402
        %v6434 = vmul.f32 %v6397, %v6402
        %v6435 = vadd.f32 %v6174, %v6403
        %v6436 = vadd.f32 %v6175, %v6404
        %v6437 = vadd.f32 %v6176, %v6405
        %v6438 = vadd.f32 %v6177, %v6406
        %v6439 = vadd.f32 %v6178, %v6407
        %v6440 = vadd.f32 %v6179, %v6408
        %v6441 = vadd.f32 %v6180, %v6409
        %v6442 = vadd.f32 %v6181, %v6410
        %v6443 = vadd.f32 %v6182, %v6411
        %v6444 = vadd.f32 %v6183, %v6412
        %v6445 = vadd.f32 %v6184, %v6413
        %v6446 = vadd.f32 %v6185, %v6414
        %v6447 = vadd.f32 %v6186, %v6415
        %v6448 = vadd.f32 %v6187, %v6416
        %v6449 = vadd.f32 %v6188, %v6417
        %v6450 = vadd.f32 %v6189, %v6418
        %v6451 = vadd.f32 %v6190, %v6419
        %v6452 = vadd.f32 %v6191, %v6420
        %v6453 = vadd.f32 %v6192, %v6421
        %v6454 = vadd.f32 %v6193, %v6422
        %v6455 = vadd.f32 %v6194, %v6423
        %v6456 = vadd.f32 %v6195, %v6424
        %v6457 = vadd.f32 %v6196, %v6425
        %v6458 = vadd.f32 %v6197, %v6426
        %v6459 = vadd.f32 %v6198, %v6427
        %v6460 = vadd.f32 %v6199, %v6428
        %v6461 = vadd.f32 %v6200, %v6429
        %v6462 = vadd.f32 %v6201, %v6430
        %v6463 = vadd.f32 %v6202, %v6431
        %v6464 = vadd.f32 %v6203, %v6432
        %v6465 = vadd.f32 %v6204, %v6433
        %v6466 = vadd.f32 %v6205, %v6434
        %v6467 = vld [vmem:[%s5682 + $0x3] sm:$0xff]
        %v6468 = vld [vmem:[%s5682 + $0xb] sm:$0xff]
        %v6469 = vld [vmem:[%s5682 + $0x1b] sm:$0xff]
        %v6470 = vld [vmem:[%s5682 + $0x23] sm:$0xff]
        %v6471 = vld [vmem:[%s5682 + $0x33] sm:$0xff]
        %v6472 = vld [vmem:[%s5682 + $0x3b] sm:$0xff]
        %v6473 = vld [vmem:[%s5682 + $0x4b] sm:$0xff]
        %v6474 = vld [vmem:[%s5682 + $0x53] sm:$0xff]
        %v6475 = vld [vmem:[%s5682 + $0x63] sm:$0xff]
        %v6476 = vld [vmem:[%s5682 + $0x6b] sm:$0xff]
        %v6477 = vld [vmem:[%s5682 + $0x7b] sm:$0xff]
        %v6478 = vld [vmem:[%s5682 + $0x83] sm:$0xff]
        %v6479 = vld [vmem:[%s5682 + $0x93] sm:$0xff]
        %v6480 = vld [vmem:[%s5682 + $0x9b] sm:$0xff]
        %v6481 = vld [vmem:[%s5682 + $0xab] sm:$0xff]
        %v6482 = vld [vmem:[%s5682 + $0xb3] sm:$0xff]
        %v6483 = vld [vmem:[%s5682 + $0xc3] sm:$0xff]
        %v6484 = vld [vmem:[%s5682 + $0xcb] sm:$0xff]
        %v6485 = vld [vmem:[%s5682 + $0xdb] sm:$0xff]
        %v6486 = vld [vmem:[%s5682 + $0xe3] sm:$0xff]
        %v6487 = vld [vmem:[%s5682 + $0xf3] sm:$0xff]
        %v6488 = vld [vmem:[%s5682 + $0xfb] sm:$0xff]
        %v6489 = vld [vmem:[%s5682 + $0x10b] sm:$0xff]
        %v6490 = vld [vmem:[%s5682 + $0x113] sm:$0xff]
        %v6491 = vld [vmem:[%s5682 + $0x123] sm:$0xff]
        %v6492 = vld [vmem:[%s5682 + $0x12b] sm:$0xff]
        %v6493 = vld [vmem:[%s5682 + $0x13b] sm:$0xff]
        %v6494 = vld [vmem:[%s5682 + $0x143] sm:$0xff]
        %v6495 = vld [vmem:[%s5682 + $0x153] sm:$0xff]
        %v6496 = vld [vmem:[%s5682 + $0x15b] sm:$0xff]
        %v6497 = vld [vmem:[%s5682 + $0x16b] sm:$0xff]
        %v6498 = vld [vmem:[%s5682 + $0x173] sm:$0xff]
        %v6499 = vld [vmem:[%s5715 + $0x3] sm:$0x1]
        %6501 = vset.pattern.permute.xlu0 0
        %6502 = vperm.xlu0 %6501, %v6467
        %v6503 = vpop.permute.xlu0 %6502
        %6506 = vset.pattern.permute.xlu0 0
        %6507 = vperm.xlu0 %6506, %v6468
        %v6508 = vpop.permute.xlu0 %6507
        %6511 = vset.pattern.permute.xlu0 0
        %6512 = vperm.xlu0 %6511, %v6469
        %v6513 = vpop.permute.xlu0 %6512
        %6516 = vset.pattern.permute.xlu0 0
        %6517 = vperm.xlu0 %6516, %v6470
        %v6518 = vpop.permute.xlu0 %6517
        %6521 = vset.pattern.permute.xlu0 0
        %6522 = vperm.xlu0 %6521, %v6471
        %v6523 = vpop.permute.xlu0 %6522
        %6526 = vset.pattern.permute.xlu0 0
        %6527 = vperm.xlu0 %6526, %v6472
        %v6528 = vpop.permute.xlu0 %6527
        %6531 = vset.pattern.permute.xlu0 0
        %6532 = vperm.xlu0 %6531, %v6473
        %v6533 = vpop.permute.xlu0 %6532
        %6536 = vset.pattern.permute.xlu0 0
        %6537 = vperm.xlu0 %6536, %v6474
        %v6538 = vpop.permute.xlu0 %6537
        %6541 = vset.pattern.permute.xlu0 0
        %6542 = vperm.xlu0 %6541, %v6475
        %v6543 = vpop.permute.xlu0 %6542
        %6546 = vset.pattern.permute.xlu0 0
        %6547 = vperm.xlu0 %6546, %v6476
        %v6548 = vpop.permute.xlu0 %6547
        %6551 = vset.pattern.permute.xlu0 0
        %6552 = vperm.xlu0 %6551, %v6477
        %v6553 = vpop.permute.xlu0 %6552
        %6556 = vset.pattern.permute.xlu0 0
        %6557 = vperm.xlu0 %6556, %v6478
        %v6558 = vpop.permute.xlu0 %6557
        %6561 = vset.pattern.permute.xlu0 0
        %6562 = vperm.xlu0 %6561, %v6479
        %v6563 = vpop.permute.xlu0 %6562
        %6566 = vset.pattern.permute.xlu0 0
        %6567 = vperm.xlu0 %6566, %v6480
        %v6568 = vpop.permute.xlu0 %6567
        %6571 = vset.pattern.permute.xlu0 0
        %6572 = vperm.xlu0 %6571, %v6481
        %v6573 = vpop.permute.xlu0 %6572
        %6576 = vset.pattern.permute.xlu0 0
        %6577 = vperm.xlu0 %6576, %v6482
        %v6578 = vpop.permute.xlu0 %6577
        %6581 = vset.pattern.permute.xlu0 0
        %6582 = vperm.xlu0 %6581, %v6483
        %v6583 = vpop.permute.xlu0 %6582
        %6586 = vset.pattern.permute.xlu0 0
        %6587 = vperm.xlu0 %6586, %v6484
        %v6588 = vpop.permute.xlu0 %6587
        %6591 = vset.pattern.permute.xlu0 0
        %6592 = vperm.xlu0 %6591, %v6485
        %v6593 = vpop.permute.xlu0 %6592
        %6596 = vset.pattern.permute.xlu0 0
        %6597 = vperm.xlu0 %6596, %v6486
        %v6598 = vpop.permute.xlu0 %6597
        %6601 = vset.pattern.permute.xlu0 0
        %6602 = vperm.xlu0 %6601, %v6487
        %v6603 = vpop.permute.xlu0 %6602
        %6606 = vset.pattern.permute.xlu0 0
        %6607 = vperm.xlu0 %6606, %v6488
        %v6608 = vpop.permute.xlu0 %6607
        %6611 = vset.pattern.permute.xlu0 0
        %6612 = vperm.xlu0 %6611, %v6489
        %v6613 = vpop.permute.xlu0 %6612
        %6616 = vset.pattern.permute.xlu0 0
        %6617 = vperm.xlu0 %6616, %v6490
        %v6618 = vpop.permute.xlu0 %6617
        %6621 = vset.pattern.permute.xlu0 0
        %6622 = vperm.xlu0 %6621, %v6491
        %v6623 = vpop.permute.xlu0 %6622
        %6626 = vset.pattern.permute.xlu0 0
        %6627 = vperm.xlu0 %6626, %v6492
        %v6628 = vpop.permute.xlu0 %6627
        %6631 = vset.pattern.permute.xlu0 0
        %6632 = vperm.xlu0 %6631, %v6493
        %v6633 = vpop.permute.xlu0 %6632
        %6636 = vset.pattern.permute.xlu0 0
        %6637 = vperm.xlu0 %6636, %v6494
        %v6638 = vpop.permute.xlu0 %6637
        %6641 = vset.pattern.permute.xlu0 0
        %6642 = vperm.xlu0 %6641, %v6495
        %v6643 = vpop.permute.xlu0 %6642
        %6646 = vset.pattern.permute.xlu0 0
        %6647 = vperm.xlu0 %6646, %v6496
        %v6648 = vpop.permute.xlu0 %6647
        %6651 = vset.pattern.permute.xlu0 0
        %6652 = vperm.xlu0 %6651, %v6497
        %v6653 = vpop.permute.xlu0 %6652
        %6656 = vset.pattern.permute.xlu0 0
        %6657 = vperm.xlu0 %6656, %v6498
        %v6658 = vpop.permute.xlu0 %6657
        %v6660 = vlaneseq
        %v6661 = vshrl.u32 %v6660, 7
        %v6662 = vsub.s32 0, %v6661
        %v6663 = vrot.slane %v6499, %v6662
        %v6664 = vmul.f32 %v6503, %v6663
        %v6665 = vmul.f32 %v6508, %v6663
        %v6666 = vmul.f32 %v6513, %v6663
        %v6667 = vmul.f32 %v6518, %v6663
        %v6668 = vmul.f32 %v6523, %v6663
        %v6669 = vmul.f32 %v6528, %v6663
        %v6670 = vmul.f32 %v6533, %v6663
        %v6671 = vmul.f32 %v6538, %v6663
        %v6672 = vmul.f32 %v6543, %v6663
        %v6673 = vmul.f32 %v6548, %v6663
        %v6674 = vmul.f32 %v6553, %v6663
        %v6675 = vmul.f32 %v6558, %v6663
        %v6676 = vmul.f32 %v6563, %v6663
        %v6677 = vmul.f32 %v6568, %v6663
        %v6678 = vmul.f32 %v6573, %v6663
        %v6679 = vmul.f32 %v6578, %v6663
        %v6680 = vmul.f32 %v6583, %v6663
        %v6681 = vmul.f32 %v6588, %v6663
        %v6682 = vmul.f32 %v6593, %v6663
        %v6683 = vmul.f32 %v6598, %v6663
        %v6684 = vmul.f32 %v6603, %v6663
        %v6685 = vmul.f32 %v6608, %v6663
        %v6686 = vmul.f32 %v6613, %v6663
        %v6687 = vmul.f32 %v6618, %v6663
        %v6688 = vmul.f32 %v6623, %v6663
        %v6689 = vmul.f32 %v6628, %v6663
        %v6690 = vmul.f32 %v6633, %v6663
        %v6691 = vmul.f32 %v6638, %v6663
        %v6692 = vmul.f32 %v6643, %v6663
        %v6693 = vmul.f32 %v6648, %v6663
        %v6694 = vmul.f32 %v6653, %v6663
        %v6695 = vmul.f32 %v6658, %v6663
        %v6696 = vadd.f32 %v6435, %v6664
        %v6697 = vadd.f32 %v6436, %v6665
        %v6698 = vadd.f32 %v6437, %v6666
        %v6699 = vadd.f32 %v6438, %v6667
        %v6700 = vadd.f32 %v6439, %v6668
        %v6701 = vadd.f32 %v6440, %v6669
        %v6702 = vadd.f32 %v6441, %v6670
        %v6703 = vadd.f32 %v6442, %v6671
        %v6704 = vadd.f32 %v6443, %v6672
        %v6705 = vadd.f32 %v6444, %v6673
        %v6706 = vadd.f32 %v6445, %v6674
        %v6707 = vadd.f32 %v6446, %v6675
        %v6708 = vadd.f32 %v6447, %v6676
        %v6709 = vadd.f32 %v6448, %v6677
        %v6710 = vadd.f32 %v6449, %v6678
        %v6711 = vadd.f32 %v6450, %v6679
        %v6712 = vadd.f32 %v6451, %v6680
        %v6713 = vadd.f32 %v6452, %v6681
        %v6714 = vadd.f32 %v6453, %v6682
        %v6715 = vadd.f32 %v6454, %v6683
        %v6716 = vadd.f32 %v6455, %v6684
        %v6717 = vadd.f32 %v6456, %v6685
        %v6718 = vadd.f32 %v6457, %v6686
        %v6719 = vadd.f32 %v6458, %v6687
        %v6720 = vadd.f32 %v6459, %v6688
        %v6721 = vadd.f32 %v6460, %v6689
        %v6722 = vadd.f32 %v6461, %v6690
        %v6723 = vadd.f32 %v6462, %v6691
        %v6724 = vadd.f32 %v6463, %v6692
        %v6725 = vadd.f32 %v6464, %v6693
        %v6726 = vadd.f32 %v6465, %v6694
        %v6727 = vadd.f32 %v6466, %v6695
        %v6728 = vld [vmem:[%s5682 + $0x4] sm:$0xff]
        %v6729 = vld [vmem:[%s5682 + $0xc] sm:$0xff]
        %v6730 = vld [vmem:[%s5682 + $0x1c] sm:$0xff]
        %v6731 = vld [vmem:[%s5682 + $0x24] sm:$0xff]
        %v6732 = vld [vmem:[%s5682 + $0x34] sm:$0xff]
        %v6733 = vld [vmem:[%s5682 + $0x3c] sm:$0xff]
        %v6734 = vld [vmem:[%s5682 + $0x4c] sm:$0xff]
        %v6735 = vld [vmem:[%s5682 + $0x54] sm:$0xff]
        %v6736 = vld [vmem:[%s5682 + $0x64] sm:$0xff]
        %v6737 = vld [vmem:[%s5682 + $0x6c] sm:$0xff]
        %v6738 = vld [vmem:[%s5682 + $0x7c] sm:$0xff]
        %v6739 = vld [vmem:[%s5682 + $0x84] sm:$0xff]
        %v6740 = vld [vmem:[%s5682 + $0x94] sm:$0xff]
        %v6741 = vld [vmem:[%s5682 + $0x9c] sm:$0xff]
        %v6742 = vld [vmem:[%s5682 + $0xac] sm:$0xff]
        %v6743 = vld [vmem:[%s5682 + $0xb4] sm:$0xff]
        %v6744 = vld [vmem:[%s5682 + $0xc4] sm:$0xff]
        %v6745 = vld [vmem:[%s5682 + $0xcc] sm:$0xff]
        %v6746 = vld [vmem:[%s5682 + $0xdc] sm:$0xff]
        %v6747 = vld [vmem:[%s5682 + $0xe4] sm:$0xff]
        %v6748 = vld [vmem:[%s5682 + $0xf4] sm:$0xff]
        %v6749 = vld [vmem:[%s5682 + $0xfc] sm:$0xff]
        %v6750 = vld [vmem:[%s5682 + $0x10c] sm:$0xff]
        %v6751 = vld [vmem:[%s5682 + $0x114] sm:$0xff]
        %v6752 = vld [vmem:[%s5682 + $0x124] sm:$0xff]
        %v6753 = vld [vmem:[%s5682 + $0x12c] sm:$0xff]
        %v6754 = vld [vmem:[%s5682 + $0x13c] sm:$0xff]
        %v6755 = vld [vmem:[%s5682 + $0x144] sm:$0xff]
        %v6756 = vld [vmem:[%s5682 + $0x154] sm:$0xff]
        %v6757 = vld [vmem:[%s5682 + $0x15c] sm:$0xff]
        %v6758 = vld [vmem:[%s5682 + $0x16c] sm:$0xff]
        %v6759 = vld [vmem:[%s5682 + $0x174] sm:$0xff]
        %v6760 = vld [vmem:[%s5715 + $0x4] sm:$0x1]
        %6762 = vset.pattern.permute.xlu0 0
        %6763 = vperm.xlu0 %6762, %v6728
        %v6764 = vpop.permute.xlu0 %6763
        %6767 = vset.pattern.permute.xlu0 0
        %6768 = vperm.xlu0 %6767, %v6729
        %v6769 = vpop.permute.xlu0 %6768
        %6772 = vset.pattern.permute.xlu0 0
        %6773 = vperm.xlu0 %6772, %v6730
        %v6774 = vpop.permute.xlu0 %6773
        %6777 = vset.pattern.permute.xlu0 0
        %6778 = vperm.xlu0 %6777, %v6731
        %v6779 = vpop.permute.xlu0 %6778
        %6782 = vset.pattern.permute.xlu0 0
        %6783 = vperm.xlu0 %6782, %v6732
        %v6784 = vpop.permute.xlu0 %6783
        %6787 = vset.pattern.permute.xlu0 0
        %6788 = vperm.xlu0 %6787, %v6733
        %v6789 = vpop.permute.xlu0 %6788
        %6792 = vset.pattern.permute.xlu0 0
        %6793 = vperm.xlu0 %6792, %v6734
        %v6794 = vpop.permute.xlu0 %6793
        %6797 = vset.pattern.permute.xlu0 0
        %6798 = vperm.xlu0 %6797, %v6735
        %v6799 = vpop.permute.xlu0 %6798
        %6802 = vset.pattern.permute.xlu0 0
        %6803 = vperm.xlu0 %6802, %v6736
        %v6804 = vpop.permute.xlu0 %6803
        %6807 = vset.pattern.permute.xlu0 0
        %6808 = vperm.xlu0 %6807, %v6737
        %v6809 = vpop.permute.xlu0 %6808
        %6812 = vset.pattern.permute.xlu0 0
        %6813 = vperm.xlu0 %6812, %v6738
        %v6814 = vpop.permute.xlu0 %6813
        %6817 = vset.pattern.permute.xlu0 0
        %6818 = vperm.xlu0 %6817, %v6739
        %v6819 = vpop.permute.xlu0 %6818
        %6822 = vset.pattern.permute.xlu0 0
        %6823 = vperm.xlu0 %6822, %v6740
        %v6824 = vpop.permute.xlu0 %6823
        %6827 = vset.pattern.permute.xlu0 0
        %6828 = vperm.xlu0 %6827, %v6741
        %v6829 = vpop.permute.xlu0 %6828
        %6832 = vset.pattern.permute.xlu0 0
        %6833 = vperm.xlu0 %6832, %v6742
        %v6834 = vpop.permute.xlu0 %6833
        %6837 = vset.pattern.permute.xlu0 0
        %6838 = vperm.xlu0 %6837, %v6743
        %v6839 = vpop.permute.xlu0 %6838
        %6842 = vset.pattern.permute.xlu0 0
        %6843 = vperm.xlu0 %6842, %v6744
        %v6844 = vpop.permute.xlu0 %6843
        %6847 = vset.pattern.permute.xlu0 0
        %6848 = vperm.xlu0 %6847, %v6745
        %v6849 = vpop.permute.xlu0 %6848
        %6852 = vset.pattern.permute.xlu0 0
        %6853 = vperm.xlu0 %6852, %v6746
        %v6854 = vpop.permute.xlu0 %6853
        %6857 = vset.pattern.permute.xlu0 0
        %6858 = vperm.xlu0 %6857, %v6747
        %v6859 = vpop.permute.xlu0 %6858
        %6862 = vset.pattern.permute.xlu0 0
        %6863 = vperm.xlu0 %6862, %v6748
        %v6864 = vpop.permute.xlu0 %6863
        %6867 = vset.pattern.permute.xlu0 0
        %6868 = vperm.xlu0 %6867, %v6749
        %v6869 = vpop.permute.xlu0 %6868
        %6872 = vset.pattern.permute.xlu0 0
        %6873 = vperm.xlu0 %6872, %v6750
        %v6874 = vpop.permute.xlu0 %6873
        %6877 = vset.pattern.permute.xlu0 0
        %6878 = vperm.xlu0 %6877, %v6751
        %v6879 = vpop.permute.xlu0 %6878
        %6882 = vset.pattern.permute.xlu0 0
        %6883 = vperm.xlu0 %6882, %v6752
        %v6884 = vpop.permute.xlu0 %6883
        %6887 = vset.pattern.permute.xlu0 0
        %6888 = vperm.xlu0 %6887, %v6753
        %v6889 = vpop.permute.xlu0 %6888
        %6892 = vset.pattern.permute.xlu0 0
        %6893 = vperm.xlu0 %6892, %v6754
        %v6894 = vpop.permute.xlu0 %6893
        %6897 = vset.pattern.permute.xlu0 0
        %6898 = vperm.xlu0 %6897, %v6755
        %v6899 = vpop.permute.xlu0 %6898
        %6902 = vset.pattern.permute.xlu0 0
        %6903 = vperm.xlu0 %6902, %v6756
        %v6904 = vpop.permute.xlu0 %6903
        %6907 = vset.pattern.permute.xlu0 0
        %6908 = vperm.xlu0 %6907, %v6757
        %v6909 = vpop.permute.xlu0 %6908
        %6912 = vset.pattern.permute.xlu0 0
        %6913 = vperm.xlu0 %6912, %v6758
        %v6914 = vpop.permute.xlu0 %6913
        %6917 = vset.pattern.permute.xlu0 0
        %6918 = vperm.xlu0 %6917, %v6759
        %v6919 = vpop.permute.xlu0 %6918
        %v6921 = vlaneseq
        %v6922 = vshrl.u32 %v6921, 7
        %v6923 = vsub.s32 0, %v6922
        %v6924 = vrot.slane %v6760, %v6923
        %v6925 = vmul.f32 %v6764, %v6924
        %v6926 = vmul.f32 %v6769, %v6924
        %v6927 = vmul.f32 %v6774, %v6924
        %v6928 = vmul.f32 %v6779, %v6924
        %v6929 = vmul.f32 %v6784, %v6924
        %v6930 = vmul.f32 %v6789, %v6924
        %v6931 = vmul.f32 %v6794, %v6924
        %v6932 = vmul.f32 %v6799, %v6924
        %v6933 = vmul.f32 %v6804, %v6924
        %v6934 = vmul.f32 %v6809, %v6924
        %v6935 = vmul.f32 %v6814, %v6924
        %v6936 = vmul.f32 %v6819, %v6924
        %v6937 = vmul.f32 %v6824, %v6924
        %v6938 = vmul.f32 %v6829, %v6924
        %v6939 = vmul.f32 %v6834, %v6924
        %v6940 = vmul.f32 %v6839, %v6924
        %v6941 = vmul.f32 %v6844, %v6924
        %v6942 = vmul.f32 %v6849, %v6924
        %v6943 = vmul.f32 %v6854, %v6924
        %v6944 = vmul.f32 %v6859, %v6924
        %v6945 = vmul.f32 %v6864, %v6924
        %v6946 = vmul.f32 %v6869, %v6924
        %v6947 = vmul.f32 %v6874, %v6924
        %v6948 = vmul.f32 %v6879, %v6924
        %v6949 = vmul.f32 %v6884, %v6924
        %v6950 = vmul.f32 %v6889, %v6924
        %v6951 = vmul.f32 %v6894, %v6924
        %v6952 = vmul.f32 %v6899, %v6924
        %v6953 = vmul.f32 %v6904, %v6924
        %v6954 = vmul.f32 %v6909, %v6924
        %v6955 = vmul.f32 %v6914, %v6924
        %v6956 = vmul.f32 %v6919, %v6924
        %v6957 = vadd.f32 %v6696, %v6925
        %v6958 = vadd.f32 %v6697, %v6926
        %v6959 = vadd.f32 %v6698, %v6927
        %v6960 = vadd.f32 %v6699, %v6928
        %v6961 = vadd.f32 %v6700, %v6929
        %v6962 = vadd.f32 %v6701, %v6930
        %v6963 = vadd.f32 %v6702, %v6931
        %v6964 = vadd.f32 %v6703, %v6932
        %v6965 = vadd.f32 %v6704, %v6933
        %v6966 = vadd.f32 %v6705, %v6934
        %v6967 = vadd.f32 %v6706, %v6935
        %v6968 = vadd.f32 %v6707, %v6936
        %v6969 = vadd.f32 %v6708, %v6937
        %v6970 = vadd.f32 %v6709, %v6938
        %v6971 = vadd.f32 %v6710, %v6939
        %v6972 = vadd.f32 %v6711, %v6940
        %v6973 = vadd.f32 %v6712, %v6941
        %v6974 = vadd.f32 %v6713, %v6942
        %v6975 = vadd.f32 %v6714, %v6943
        %v6976 = vadd.f32 %v6715, %v6944
        %v6977 = vadd.f32 %v6716, %v6945
        %v6978 = vadd.f32 %v6717, %v6946
        %v6979 = vadd.f32 %v6718, %v6947
        %v6980 = vadd.f32 %v6719, %v6948
        %v6981 = vadd.f32 %v6720, %v6949
        %v6982 = vadd.f32 %v6721, %v6950
        %v6983 = vadd.f32 %v6722, %v6951
        %v6984 = vadd.f32 %v6723, %v6952
        %v6985 = vadd.f32 %v6724, %v6953
        %v6986 = vadd.f32 %v6725, %v6954
        %v6987 = vadd.f32 %v6726, %v6955
        %v6988 = vadd.f32 %v6727, %v6956
        %v6989 = vld [vmem:[%s2] sm:$0x1]
        %v6991 = vlaneseq
        %v6992 = vshrl.u32 %v6991, 7
        %v6993 = vsub.s32 0, %v6992
        %v6994 = vrot.slane %v6989, %v6993
        %v6996 = vadd.f32 %v6957, %v6994
        %v6997 = vadd.f32 %v6958, %v6994
        %v6998 = vadd.f32 %v6959, %v6994
        %v6999 = vadd.f32 %v6960, %v6994
        %v7000 = vadd.f32 %v6961, %v6994
        %v7001 = vadd.f32 %v6962, %v6994
        %v7002 = vadd.f32 %v6963, %v6994
        %v7003 = vadd.f32 %v6964, %v6994
        %v7004 = vadd.f32 %v6965, %v6994
        %v7005 = vadd.f32 %v6966, %v6994
        %v7006 = vadd.f32 %v6967, %v6994
        %v7007 = vadd.f32 %v6968, %v6994
        %v7008 = vadd.f32 %v6969, %v6994
        %v7009 = vadd.f32 %v6970, %v6994
        %v7010 = vadd.f32 %v6971, %v6994
        %v7011 = vadd.f32 %v6972, %v6994
        %v7012 = vadd.f32 %v6973, %v6994
        %v7013 = vadd.f32 %v6974, %v6994
        %v7014 = vadd.f32 %v6975, %v6994
        %v7015 = vadd.f32 %v6976, %v6994
        %v7016 = vadd.f32 %v6977, %v6994
        %v7017 = vadd.f32 %v6978, %v6994
        %v7018 = vadd.f32 %v6979, %v6994
        %v7019 = vadd.f32 %v6980, %v6994
        %v7020 = vadd.f32 %v6981, %v6994
        %v7021 = vadd.f32 %v6982, %v6994
        %v7022 = vadd.f32 %v6983, %v6994
        %v7023 = vadd.f32 %v6984, %v6994
        %v7024 = vadd.f32 %v6985, %v6994
        %v7025 = vadd.f32 %v6986, %v6994
        %v7026 = vadd.f32 %v6987, %v6994
        %v7027 = vadd.f32 %v6988, %v6994
        %vm7028 = vcmask 523264
        %7029 = vst.msk [vmem:[#allocation3] sm:$0xff] %vm7028, %v6996
        %7030 = vst.msk [vmem:[#allocation3 + $0x8] sm:$0xff] %vm7028, %v6997
        %7031 = vst.msk [vmem:[#allocation3 + $0x10] sm:$0xff] %vm7028, %v6998
        %7032 = vst.msk [vmem:[#allocation3 + $0x18] sm:$0xff] %vm7028, %v6999
        %7033 = vst.msk [vmem:[#allocation3 + $0x20] sm:$0xff] %vm7028, %v7000
        %7034 = vst.msk [vmem:[#allocation3 + $0x28] sm:$0xff] %vm7028, %v7001
        %7035 = vst.msk [vmem:[#allocation3 + $0x30] sm:$0xff] %vm7028, %v7002
        %7036 = vst.msk [vmem:[#allocation3 + $0x38] sm:$0xff] %vm7028, %v7003
        %7037 = vst.msk [vmem:[#allocation3 + $0x40] sm:$0xff] %vm7028, %v7004
        %7038 = vst.msk [vmem:[#allocation3 + $0x48] sm:$0xff] %vm7028, %v7005
        %7039 = vst.msk [vmem:[#allocation3 + $0x50] sm:$0xff] %vm7028, %v7006
        %7040 = vst.msk [vmem:[#allocation3 + $0x58] sm:$0xff] %vm7028, %v7007
        %7041 = vst.msk [vmem:[#allocation3 + $0x60] sm:$0xff] %vm7028, %v7008
        %7042 = vst.msk [vmem:[#allocation3 + $0x68] sm:$0xff] %vm7028, %v7009
        %7043 = vst.msk [vmem:[#allocation3 + $0x70] sm:$0xff] %vm7028, %v7010
        %7044 = vst.msk [vmem:[#allocation3 + $0x78] sm:$0xff] %vm7028, %v7011
        %7045 = vst.msk [vmem:[#allocation3 + $0x80] sm:$0xff] %vm7028, %v7012
        %7046 = vst.msk [vmem:[#allocation3 + $0x88] sm:$0xff] %vm7028, %v7013
        %7047 = vst.msk [vmem:[#allocation3 + $0x90] sm:$0xff] %vm7028, %v7014
        %7048 = vst.msk [vmem:[#allocation3 + $0x98] sm:$0xff] %vm7028, %v7015
        %7049 = vst.msk [vmem:[#allocation3 + $0xa0] sm:$0xff] %vm7028, %v7016
        %7050 = vst.msk [vmem:[#allocation3 + $0xa8] sm:$0xff] %vm7028, %v7017
        %7051 = vst.msk [vmem:[#allocation3 + $0xb0] sm:$0xff] %vm7028, %v7018
        %7052 = vst.msk [vmem:[#allocation3 + $0xb8] sm:$0xff] %vm7028, %v7019
        %7053 = vst.msk [vmem:[#allocation3 + $0xc0] sm:$0xff] %vm7028, %v7020
        %7054 = vst.msk [vmem:[#allocation3 + $0xc8] sm:$0xff] %vm7028, %v7021
        %7055 = vst.msk [vmem:[#allocation3 + $0xd0] sm:$0xff] %vm7028, %v7022
        %7056 = vst.msk [vmem:[#allocation3 + $0xd8] sm:$0xff] %vm7028, %v7023
        %7057 = vst.msk [vmem:[#allocation3 + $0xe0] sm:$0xff] %vm7028, %v7024
        %7058 = vst.msk [vmem:[#allocation3 + $0xe8] sm:$0xff] %vm7028, %v7025
        %7059 = vst.msk [vmem:[#allocation3 + $0xf0] sm:$0xff] %vm7028, %v7026
        %7060 = vst.msk [vmem:[#allocation3 + $0xf8] sm:$0xff] %vm7028, %v7027
        %v7061 = vld [vmem:[#allocation3] ss:$2 sm:$0xff]
        %s7062 = scalar_lea.vmem [#allocation3], 16
        %v7063 = vld [vmem:[%s7062] ss:$2 sm:$0xff]
        %s7064 = scalar_lea.vmem [#allocation3], 32
        %v7065 = vld [vmem:[%s7064] ss:$2 sm:$0xff]
        %s7066 = scalar_lea.vmem [#allocation3], 48
        %v7067 = vld [vmem:[%s7066] ss:$2 sm:$0xff]
        %s7068 = scalar_lea.vmem [#allocation3], 64
        %v7069 = vld [vmem:[%s7068] ss:$2 sm:$0xff]
        %s7070 = scalar_lea.vmem [#allocation3], 80
        %v7071 = vld [vmem:[%s7070] ss:$2 sm:$0xff]
        %s7072 = scalar_lea.vmem [#allocation3], 96
        %v7073 = vld [vmem:[%s7072] ss:$2 sm:$0xff]
        %s7074 = scalar_lea.vmem [#allocation3], 112
        %v7075 = vld [vmem:[%s7074] ss:$2 sm:$0xff]
        %s7076 = scalar_lea.vmem [#allocation3], 128
        %v7077 = vld [vmem:[%s7076] ss:$2 sm:$0xff]
        %s7078 = scalar_lea.vmem [#allocation3], 144
        %v7079 = vld [vmem:[%s7078] ss:$2 sm:$0xff]
        %s7080 = scalar_lea.vmem [#allocation3], 160
        %v7081 = vld [vmem:[%s7080] ss:$2 sm:$0xff]
        %s7082 = scalar_lea.vmem [#allocation3], 176
        %v7083 = vld [vmem:[%s7082] ss:$2 sm:$0xff]
        %s7084 = scalar_lea.vmem [#allocation3], 192
        %v7085 = vld [vmem:[%s7084] ss:$2 sm:$0xff]
        %s7086 = scalar_lea.vmem [#allocation3], 208
        %v7087 = vld [vmem:[%s7086] ss:$2 sm:$0xff]
        %s7088 = scalar_lea.vmem [#allocation3], 224
        %v7089 = vld [vmem:[%s7088] ss:$2 sm:$0xff]
        %s7090 = scalar_lea.vmem [#allocation3], 240
        %v7091 = vld [vmem:[%s7090] ss:$2 sm:$0xff]
        %s7092 = scalar_lea.vmem [#allocation3], 1
        %v7093 = vld [vmem:[%s7092] ss:$2 sm:$0xff]
        %s7094 = scalar_lea.vmem [#allocation3], 17
        %v7095 = vld [vmem:[%s7094] ss:$2 sm:$0xff]
        %s7096 = scalar_lea.vmem [#allocation3], 33
        %v7097 = vld [vmem:[%s7096] ss:$2 sm:$0xff]
        %s7098 = scalar_lea.vmem [#allocation3], 49
        %v7099 = vld [vmem:[%s7098] ss:$2 sm:$0xff]
        %s7100 = scalar_lea.vmem [#allocation3], 65
        %v7101 = vld [vmem:[%s7100] ss:$2 sm:$0xff]
        %s7102 = scalar_lea.vmem [#allocation3], 81
        %v7103 = vld [vmem:[%s7102] ss:$2 sm:$0xff]
        %s7104 = scalar_lea.vmem [#allocation3], 97
        %v7105 = vld [vmem:[%s7104] ss:$2 sm:$0xff]
        %s7106 = scalar_lea.vmem [#allocation3], 113
        %v7107 = vld [vmem:[%s7106] ss:$2 sm:$0xff]
        %s7108 = scalar_lea.vmem [#allocation3], 129
        %v7109 = vld [vmem:[%s7108] ss:$2 sm:$0xff]
        %s7110 = scalar_lea.vmem [#allocation3], 145
        %v7111 = vld [vmem:[%s7110] ss:$2 sm:$0xff]
        %s7112 = scalar_lea.vmem [#allocation3], 161
        %v7113 = vld [vmem:[%s7112] ss:$2 sm:$0xff]
        %s7114 = scalar_lea.vmem [#allocation3], 177
        %v7115 = vld [vmem:[%s7114] ss:$2 sm:$0xff]
        %s7116 = scalar_lea.vmem [#allocation3], 193
        %v7117 = vld [vmem:[%s7116] ss:$2 sm:$0xff]
        %s7118 = scalar_lea.vmem [#allocation3], 209
        %v7119 = vld [vmem:[%s7118] ss:$2 sm:$0xff]
        %s7120 = scalar_lea.vmem [#allocation3], 225
        %v7121 = vld [vmem:[%s7120] ss:$2 sm:$0xff]
        %s7122 = scalar_lea.vmem [#allocation3], 241
        %v7123 = vld [vmem:[%s7122] ss:$2 sm:$0xff]
        %v7124 = vmax.f32 %v7061, %v7093
        %v7125 = vmax.f32 %v7063, %v7095
        %v7126 = vmax.f32 %v7065, %v7097
        %v7127 = vmax.f32 %v7067, %v7099
        %v7128 = vmax.f32 %v7069, %v7101
        %v7129 = vmax.f32 %v7071, %v7103
        %v7130 = vmax.f32 %v7073, %v7105
        %v7131 = vmax.f32 %v7075, %v7107
        %v7132 = vmax.f32 %v7077, %v7109
        %v7133 = vmax.f32 %v7079, %v7111
        %v7134 = vmax.f32 %v7081, %v7113
        %v7135 = vmax.f32 %v7083, %v7115
        %v7136 = vmax.f32 %v7085, %v7117
        %v7137 = vmax.f32 %v7087, %v7119
        %v7138 = vmax.f32 %v7089, %v7121
        %v7139 = vmax.f32 %v7091, %v7123
        %v7140 = vmax.f32 %v7124, %v7125
        %v7141 = vmax.f32 %v7126, %v7127
        %v7142 = vmax.f32 %v7128, %v7129
        %v7143 = vmax.f32 %v7130, %v7131
        %v7144 = vmax.f32 %v7132, %v7133
        %v7145 = vmax.f32 %v7134, %v7135
        %v7146 = vmax.f32 %v7136, %v7137
        %v7147 = vmax.f32 %v7138, %v7139
        %v7148 = vmax.f32 %v7140, 0.0
        %v7149 = vmax.f32 %v7141, 0.0
        %v7150 = vmax.f32 %v7142, 0.0
        %v7151 = vmax.f32 %v7143, 0.0
        %v7152 = vmax.f32 %v7144, 0.0
        %v7153 = vmax.f32 %v7145, 0.0
        %v7154 = vmax.f32 %v7146, 0.0
        %v7155 = vmax.f32 %v7147, 0.0
        %7156 = vst.msk [vmem:[#allocation4] sm:$0xff] %vm7028, 0.0
        %vm7157 = vcmask 517120
        %7158 = vst.msk [vmem:[#allocation4 + $0x8] sm:$0x3] %vm7157, 0.0
        %7159 = vst.msk [vmem:[#allocation4 + $0x10] sm:$0xff] %vm7028, 0.0
        %7160 = vst.msk [vmem:[#allocation4 + $0x18] sm:$0x3] %vm7157, 0.0
        %7161 = vst.msk [vmem:[#allocation4 + $0x20] sm:$0xff] %vm7028, 0.0
        %7162 = vst.msk [vmem:[#allocation4 + $0x28] sm:$0x3] %vm7157, 0.0
        %7163 = vst.msk [vmem:[#allocation4 + $0x30] sm:$0xff] %vm7028, 0.0
        %7164 = vst.msk [vmem:[#allocation4 + $0x38] sm:$0x3] %vm7157, 0.0
        %7165 = vst.msk [vmem:[#allocation4 + $0x40] sm:$0xff] %vm7028, 0.0
        %7166 = vst.msk [vmem:[#allocation4 + $0x48] sm:$0x3] %vm7157, 0.0
        %7167 = vst.msk [vmem:[#allocation4 + $0x50] sm:$0xff] %vm7028, 0.0
        %7168 = vst.msk [vmem:[#allocation4 + $0x58] sm:$0x3] %vm7157, 0.0
        %7169 = vst.msk [vmem:[#allocation4 + $0x60] sm:$0xff] %vm7028, 0.0
        %7170 = vst.msk [vmem:[#allocation4 + $0x68] sm:$0x3] %vm7157, 0.0
        %7171 = vst.msk [vmem:[#allocation4 + $0x70] sm:$0xff] %vm7028, 0.0
        %7172 = vst.msk [vmem:[#allocation4 + $0x78] sm:$0x3] %vm7157, 0.0
        %7173 = vst.msk [vmem:[#allocation4 + $0x80] sm:$0xff] %vm7028, 0.0
        %7174 = vst.msk [vmem:[#allocation4 + $0x88] sm:$0x3] %vm7157, 0.0
        %7175 = vst.msk [vmem:[#allocation4 + $0x90] sm:$0xff] %vm7028, 0.0
        %7176 = vst.msk [vmem:[#allocation4 + $0x98] sm:$0x3] %vm7157, 0.0
        %s7177 = scalar_lea.vmem [#allocation4], 16
        %7178 = vst.msk [vmem:[%s7177 + $0x1] sm:$0xff] %vm7028, %v7148
        %7179 = vst.msk [vmem:[%s7177 + $0x11] sm:$0xff] %vm7028, %v7149
        %7180 = vst.msk [vmem:[%s7177 + $0x21] sm:$0xff] %vm7028, %v7150
        %7181 = vst.msk [vmem:[%s7177 + $0x31] sm:$0xff] %vm7028, %v7151
        %7182 = vst.msk [vmem:[%s7177 + $0x41] sm:$0xff] %vm7028, %v7152
        %7183 = vst.msk [vmem:[%s7177 + $0x51] sm:$0xff] %vm7028, %v7153
        %7184 = vst.msk [vmem:[%s7177 + $0x61] sm:$0xff] %vm7028, %v7154
        %7185 = vst.msk [vmem:[%s7177 + $0x71] sm:$0xff] %vm7028, %v7155
        %v7186 = vld [vmem:[#allocation4] sm:$0xff]
        %v7187 = vld [vmem:[#allocation4 + $0x10] sm:$0xff]
        %v7188 = vld [vmem:[#allocation4 + $0x20] sm:$0xff]
        %v7189 = vld [vmem:[#allocation4 + $0x30] sm:$0xff]
        %v7190 = vld [vmem:[#allocation4 + $0x40] sm:$0xff]
        %v7191 = vld [vmem:[#allocation4 + $0x50] sm:$0xff]
        %v7192 = vld [vmem:[#allocation4 + $0x60] sm:$0xff]
        %v7193 = vld [vmem:[#allocation4 + $0x70] sm:$0xff]
        %v7194 = vld [vmem:[%s3] sm:$0xff]
        %v7195 = vld [vmem:[%s3 + $0x8] sm:$0xff]
        %v7196 = vld [vmem:[%s3 + $0x10] sm:$0xff]
        %v7197 = vld [vmem:[%s3 + $0x18] sm:$0xff]
        %v7198 = vld [vmem:[%s3 + $0x20] sm:$0xff]
        %v7199 = vld [vmem:[%s3 + $0x28] sm:$0xff]
        %v7200 = vld [vmem:[%s3 + $0x30] sm:$0xff]
        %v7201 = vld [vmem:[%s3 + $0x38] sm:$0xff]
        %v7202 = vld [vmem:[#allocation4 + $0x1] sm:$0xff]
        %v7203 = vld [vmem:[#allocation4 + $0x11] sm:$0xff]
        %v7204 = vld [vmem:[#allocation4 + $0x21] sm:$0xff]
        %v7205 = vld [vmem:[#allocation4 + $0x31] sm:$0xff]
        %v7206 = vld [vmem:[#allocation4 + $0x41] sm:$0xff]
        %v7207 = vld [vmem:[#allocation4 + $0x51] sm:$0xff]
        %v7208 = vld [vmem:[#allocation4 + $0x61] sm:$0xff]
        %v7209 = vld [vmem:[#allocation4 + $0x71] sm:$0xff]
        %s7210 = scalar_lea.vmem %s3, 64
        %v7211 = vld [vmem:[%s7210] sm:$0xff]
        %v7212 = vld [vmem:[%s7210 + $0x8] sm:$0xff]
        %v7213 = vld [vmem:[%s7210 + $0x10] sm:$0xff]
        %v7214 = vld [vmem:[%s7210 + $0x18] sm:$0xff]
        %v7215 = vld [vmem:[%s7210 + $0x20] sm:$0xff]
        %v7216 = vld [vmem:[%s7210 + $0x28] sm:$0xff]
        %v7217 = vld [vmem:[%s7210 + $0x30] sm:$0xff]
        %v7218 = vld [vmem:[%s7210 + $0x38] sm:$0xff]
        %v7220 = vsel %vm7028, %v7202, 0
        %v7223 = vsel %vm7028, %v7203, 0
        %v7226 = vsel %vm7028, %v7204, 0
        %v7229 = vsel %vm7028, %v7205, 0
        %v7232 = vsel %vm7028, %v7206, 0
        %v7235 = vsel %vm7028, %v7207, 0
        %v7238 = vsel %vm7028, %v7208, 0
        %v7241 = vsel %vm7028, %v7209, 0
        %7243 = vmatprep.subr.mxu0 0.0
        %7244 = vmatpush1.msra.mxu0 %v7211
        %7245 = vmatprep.subr.mxu0 0.0
        %7246 = vmatpush1.msra.mxu0 %v7212
        %7247 = vmatprep.subr.mxu0 0.0
        %7248 = vmatpush1.msra.mxu0 %v7213
        %7249 = vmatprep.subr.mxu0 0.0
        %7250 = vmatpush1.msra.mxu0 %v7214
        %7251 = vmatprep.subr.mxu0 0.0
        %7252 = vmatpush1.msra.mxu0 %v7215
        %7253 = vmatprep.subr.mxu0 0.0
        %7254 = vmatpush1.msra.mxu0 %v7216
        %7255 = vmatprep.subr.mxu0 0.0
        %7256 = vmatpush1.msra.mxu0 %v7217
        %7257 = vmatprep.subr.mxu0 0.0
        %7258 = vmatpush1.msra.mxu0 %v7218
        %7259 = vmatprep.subr.mxu0 0.0
        %7260 = vmatpush1.msra.mxu0 0.0
        %7261 = vmatprep.subr.mxu0 0.0
        %7262 = vmatpush1.msra.mxu0 0.0
        %7263 = vmatprep.subr.mxu0 0.0
        %7264 = vmatpush1.msra.mxu0 0.0
        %7265 = vmatprep.subr.mxu0 0.0
        %7266 = vmatpush1.msra.mxu0 0.0
        %7267 = vmatprep.subr.mxu0 0.0
        %7268 = vmatpush1.msra.mxu0 0.0
        %7269 = vmatprep.subr.mxu0 0.0
        %7270 = vmatpush1.msra.mxu0 0.0
        %7271 = vmatprep.subr.mxu0 0.0
        %7272 = vmatpush1.msra.mxu0 0.0
        %7273 = vmatprep.subr.mxu0 0.0
        %7274 = vmatpush1.msra.mxu0 0.0
        %7275 = vmatprep.subr.mxu0 0.0
        %7276 = vmatpush1.msra.mxu0 0.0
        %7277 = vmatprep.subr.mxu0 0.0
        %7278 = vmatpush1.msra.mxu0 0.0
        %7279 = vmatprep.subr.mxu0 0.0
        %7280 = vmatpush1.msra.mxu0 0.0
        %7281 = vmatprep.subr.mxu0 0.0
        %7282 = vmatpush1.msra.mxu0 0.0
        %7283 = vmatprep.subr.mxu0 0.0
        %7284 = vmatpush1.msra.mxu0 0.0
        %7285 = vmatprep.subr.mxu0 0.0
        %7286 = vmatpush1.msra.mxu0 0.0
        %7287 = vmatprep.subr.mxu0 0.0
        %7288 = vmatpush1.msra.mxu0 0.0
        %7289 = vmatprep.subr.mxu0 0.0
        %7290 = vmatpush1.msra.mxu0 0.0
        %7291 = vmatprep.subr.mxu0 0.0
        %7292 = vmatpush1.msra.mxu0 0.0
        %7293 = vmatprep.subr.mxu0 0.0
        %7294 = vmatpush1.msra.mxu0 0.0
        %7295 = vmatprep.subr.mxu0 0.0
        %7296 = vmatpush1.msra.mxu0 0.0
        %7297 = vmatprep.subr.mxu0 0.0
        %7298 = vmatpush1.msra.mxu0 0.0
        %7299 = vmatprep.subr.mxu0 0.0
        %7300 = vmatpush1.msra.mxu0 0.0
        %7301 = vmatprep.subr.mxu0 0.0
        %7302 = vmatpush1.msra.mxu0 0.0
        %7303 = vmatprep.subr.mxu0 0.0
        %7304 = vmatpush1.msra.mxu0 0.0
        %7305 = vmatprep.subr.mxu0 0.0
        %7306 = vmatpush1.msra.mxu0 0.0
        %7307 = vmatprep.mubr.f32.mxu0 0.0
        %7308 = vmatmul.mubr.f32.gmra.mrb[0].mxu0 %v7220
        %v7309 = vpop.f32.mrb[0].mxu0
        %v7310 = vadd.f32 0.0, %v7309
        %v7311 = vpop.f32.mrb[0].mxu0
        %7312 = vmatprep.mubr.f32.mxu0 0.0
        %7313 = vmatmul.mubr.f32.gmra.mrb[0].mxu0 %v7223
        %v7314 = vpop.f32.mrb[0].mxu0
        %v7315 = vadd.f32 0.0, %v7314
        %v7316 = vpop.f32.mrb[0].mxu0
        %7317 = vmatprep.mubr.f32.mxu0 0.0
        %7318 = vmatmul.mubr.f32.gmra.mrb[0].mxu0 %v7226
        %v7319 = vpop.f32.mrb[0].mxu0
        %v7320 = vadd.f32 0.0, %v7319
        %v7321 = vpop.f32.mrb[0].mxu0
        %7322 = vmatprep.mubr.f32.mxu0 0.0
        %7323 = vmatmul.mubr.f32.gmra.mrb[0].mxu0 %v7229
        %v7324 = vpop.f32.mrb[0].mxu0
        %v7325 = vadd.f32 0.0, %v7324
        %v7326 = vpop.f32.mrb[0].mxu0
        %7327 = vmatprep.mubr.f32.mxu0 0.0
        %7328 = vmatmul.mubr.f32.gmra.mrb[0].mxu0 %v7232
        %v7329 = vpop.f32.mrb[0].mxu0
        %v7330 = vadd.f32 0.0, %v7329
        %v7331 = vpop.f32.mrb[0].mxu0
        %7332 = vmatprep.mubr.f32.mxu0 0.0
        %7333 = vmatmul.mubr.f32.gmra.mrb[0].mxu0 %v7235
        %v7334 = vpop.f32.mrb[0].mxu0
        %v7335 = vadd.f32 0.0, %v7334
        %v7336 = vpop.f32.mrb[0].mxu0
        %7337 = vmatprep.mubr.f32.mxu0 0.0
        %7338 = vmatmul.mubr.f32.gmra.mrb[0].mxu0 %v7238
        %v7339 = vpop.f32.mrb[0].mxu0
        %v7340 = vadd.f32 0.0, %v7339
        %v7341 = vpop.f32.mrb[0].mxu0
        %7342 = vmatprep.mubr.f32.mxu0 0.0
        %7343 = vmatmul.mubr.f32.gmra.mrb[0].mxu0 %v7241
        %v7344 = vpop.f32.mrb[0].mxu0
        %v7345 = vadd.f32 0.0, %v7344
        %v7346 = vpop.f32.mrb[0].mxu0
        %7347 = vdwg.mxu0
        %v7349 = vsel %vm7028, %v7186, 0
        %v7352 = vsel %vm7028, %v7187, 0
        %v7355 = vsel %vm7028, %v7188, 0
        %v7358 = vsel %vm7028, %v7189, 0
        %v7361 = vsel %vm7028, %v7190, 0
        %v7364 = vsel %vm7028, %v7191, 0
        %v7367 = vsel %vm7028, %v7192, 0
        %v7370 = vsel %vm7028, %v7193, 0
        %7372 = vmatprep.subr.mxu0 0.0
        %7373 = vmatpush1.msra.mxu0 %v7194
        %7374 = vmatprep.subr.mxu0 0.0
        %7375 = vmatpush1.msra.mxu0 %v7195
        %7376 = vmatprep.subr.mxu0 0.0
        %7377 = vmatpush1.msra.mxu0 %v7196
        %7378 = vmatprep.subr.mxu0 0.0
        %7379 = vmatpush1.msra.mxu0 %v7197
        %7380 = vmatprep.subr.mxu0 0.0
        %7381 = vmatpush1.msra.mxu0 %v7198
        %7382 = vmatprep.subr.mxu0 0.0
        %7383 = vmatpush1.msra.mxu0 %v7199
        %7384 = vmatprep.subr.mxu0 0.0
        %7385 = vmatpush1.msra.mxu0 %v7200
        %7386 = vmatprep.subr.mxu0 0.0
        %7387 = vmatpush1.msra.mxu0 %v7201
        %7388 = vmatprep.subr.mxu0 0.0
        %7389 = vmatpush1.msra.mxu0 0.0
        %7390 = vmatprep.subr.mxu0 0.0
        %7391 = vmatpush1.msra.mxu0 0.0
        %7392 = vmatprep.subr.mxu0 0.0
        %7393 = vmatpush1.msra.mxu0 0.0
        %7394 = vmatprep.subr.mxu0 0.0
        %7395 = vmatpush1.msra.mxu0 0.0
        %7396 = vmatprep.subr.mxu0 0.0
        %7397 = vmatpush1.msra.mxu0 0.0
        %7398 = vmatprep.subr.mxu0 0.0
        %7399 = vmatpush1.msra.mxu0 0.0
        %7400 = vmatprep.subr.mxu0 0.0
        %7401 = vmatpush1.msra.mxu0 0.0
        %7402 = vmatprep.subr.mxu0 0.0
        %7403 = vmatpush1.msra.mxu0 0.0
        %7404 = vmatprep.subr.mxu0 0.0
        %7405 = vmatpush1.msra.mxu0 0.0
        %7406 = vmatprep.subr.mxu0 0.0
        %7407 = vmatpush1.msra.mxu0 0.0
        %7408 = vmatprep.subr.mxu0 0.0
        %7409 = vmatpush1.msra.mxu0 0.0
        %7410 = vmatprep.subr.mxu0 0.0
        %7411 = vmatpush1.msra.mxu0 0.0
        %7412 = vmatprep.subr.mxu0 0.0
        %7413 = vmatpush1.msra.mxu0 0.0
        %7414 = vmatprep.subr.mxu0 0.0
        %7415 = vmatpush1.msra.mxu0 0.0
        %7416 = vmatprep.subr.mxu0 0.0
        %7417 = vmatpush1.msra.mxu0 0.0
        %7418 = vmatprep.subr.mxu0 0.0
        %7419 = vmatpush1.msra.mxu0 0.0
        %7420 = vmatprep.subr.mxu0 0.0
        %7421 = vmatpush1.msra.mxu0 0.0
        %7422 = vmatprep.subr.mxu0 0.0
        %7423 = vmatpush1.msra.mxu0 0.0
        %7424 = vmatprep.subr.mxu0 0.0
        %7425 = vmatpush1.msra.mxu0 0.0
        %7426 = vmatprep.subr.mxu0 0.0
        %7427 = vmatpush1.msra.mxu0 0.0
        %7428 = vmatprep.subr.mxu0 0.0
        %7429 = vmatpush1.msra.mxu0 0.0
        %7430 = vmatprep.subr.mxu0 0.0
        %7431 = vmatpush1.msra.mxu0 0.0
        %7432 = vmatprep.subr.mxu0 0.0
        %7433 = vmatpush1.msra.mxu0 0.0
        %7434 = vmatprep.subr.mxu0 0.0
        %7435 = vmatpush1.msra.mxu0 0.0
        %7436 = vmatprep.mubr.f32.mxu0 0.0
        %7437 = vmatmul.mubr.f32.gmra.mrb[0].mxu0 %v7349
        %v7438 = vpop.f32.mrb[0].mxu0
        %v7439 = vadd.f32 %v7310, %v7438
        %v7440 = vpop.f32.mrb[0].mxu0
        %7441 = vmatprep.mubr.f32.mxu0 0.0
        %7442 = vmatmul.mubr.f32.gmra.mrb[0].mxu0 %v7352
        %v7443 = vpop.f32.mrb[0].mxu0
        %v7444 = vadd.f32 %v7315, %v7443
        %v7445 = vpop.f32.mrb[0].mxu0
        %7446 = vmatprep.mubr.f32.mxu0 0.0
        %7447 = vmatmul.mubr.f32.gmra.mrb[0].mxu0 %v7355
        %v7448 = vpop.f32.mrb[0].mxu0
        %v7449 = vadd.f32 %v7320, %v7448
        %v7450 = vpop.f32.mrb[0].mxu0
        %7451 = vmatprep.mubr.f32.mxu0 0.0
        %7452 = vmatmul.mubr.f32.gmra.mrb[0].mxu0 %v7358
        %v7453 = vpop.f32.mrb[0].mxu0
        %v7454 = vadd.f32 %v7325, %v7453
        %v7455 = vpop.f32.mrb[0].mxu0
        %7456 = vmatprep.mubr.f32.mxu0 0.0
        %7457 = vmatmul.mubr.f32.gmra.mrb[0].mxu0 %v7361
        %v7458 = vpop.f32.mrb[0].mxu0
        %v7459 = vadd.f32 %v7330, %v7458
        %v7460 = vpop.f32.mrb[0].mxu0
        %7461 = vmatprep.mubr.f32.mxu0 0.0
        %7462 = vmatmul.mubr.f32.gmra.mrb[0].mxu0 %v7364
        %v7463 = vpop.f32.mrb[0].mxu0
        %v7464 = vadd.f32 %v7335, %v7463
        %v7465 = vpop.f32.mrb[0].mxu0
        %7466 = vmatprep.mubr.f32.mxu0 0.0
        %7467 = vmatmul.mubr.f32.gmra.mrb[0].mxu0 %v7367
        %v7468 = vpop.f32.mrb[0].mxu0
        %v7469 = vadd.f32 %v7340, %v7468
        %v7470 = vpop.f32.mrb[0].mxu0
        %7471 = vmatprep.mubr.f32.mxu0 0.0
        %7472 = vmatmul.mubr.f32.gmra.mrb[0].mxu0 %v7370
        %v7473 = vpop.f32.mrb[0].mxu0
        %v7474 = vadd.f32 %v7345, %v7473
        %v7475 = vpop.f32.mrb[0].mxu0
        %7476 = vdwg.mxu0
        %v7477 = vld [vmem:[#allocation4 + $0x2] sm:$0xff]
        %v7478 = vld [vmem:[#allocation4 + $0x12] sm:$0xff]
        %v7479 = vld [vmem:[#allocation4 + $0x22] sm:$0xff]
        %v7480 = vld [vmem:[#allocation4 + $0x32] sm:$0xff]
        %v7481 = vld [vmem:[#allocation4 + $0x42] sm:$0xff]
        %v7482 = vld [vmem:[#allocation4 + $0x52] sm:$0xff]
        %v7483 = vld [vmem:[#allocation4 + $0x62] sm:$0xff]
        %v7484 = vld [vmem:[#allocation4 + $0x72] sm:$0xff]
        %s7485 = scalar_lea.vmem %s3, 128
        %v7486 = vld [vmem:[%s7485] sm:$0xff]
        %v7487 = vld [vmem:[%s7485 + $0x8] sm:$0xff]
        %v7488 = vld [vmem:[%s7485 + $0x10] sm:$0xff]
        %v7489 = vld [vmem:[%s7485 + $0x18] sm:$0xff]
        %v7490 = vld [vmem:[%s7485 + $0x20] sm:$0xff]
        %v7491 = vld [vmem:[%s7485 + $0x28] sm:$0xff]
        %v7492 = vld [vmem:[%s7485 + $0x30] sm:$0xff]
        %v7493 = vld [vmem:[%s7485 + $0x38] sm:$0xff]
        %v7495 = vsel %vm7028, %v7477, 0
        %v7498 = vsel %vm7028, %v7478, 0
        %v7501 = vsel %vm7028, %v7479, 0
        %v7504 = vsel %vm7028, %v7480, 0
        %v7507 = vsel %vm7028, %v7481, 0
        %v7510 = vsel %vm7028, %v7482, 0
        %v7513 = vsel %vm7028, %v7483, 0
        %v7516 = vsel %vm7028, %v7484, 0
        %7518 = vmatprep.subr.mxu0 0.0
        %7519 = vmatpush1.msra.mxu0 %v7486
        %7520 = vmatprep.subr.mxu0 0.0
        %7521 = vmatpush1.msra.mxu0 %v7487
        %7522 = vmatprep.subr.mxu0 0.0
        %7523 = vmatpush1.msra.mxu0 %v7488
        %7524 = vmatprep.subr.mxu0 0.0
        %7525 = vmatpush1.msra.mxu0 %v7489
        %7526 = vmatprep.subr.mxu0 0.0
        %7527 = vmatpush1.msra.mxu0 %v7490
        %7528 = vmatprep.subr.mxu0 0.0
        %7529 = vmatpush1.msra.mxu0 %v7491
        %7530 = vmatprep.subr.mxu0 0.0
        %7531 = vmatpush1.msra.mxu0 %v7492
        %7532 = vmatprep.subr.mxu0 0.0
        %7533 = vmatpush1.msra.mxu0 %v7493
        %7534 = vmatprep.subr.mxu0 0.0
        %7535 = vmatpush1.msra.mxu0 0.0
        %7536 = vmatprep.subr.mxu0 0.0
        %7537 = vmatpush1.msra.mxu0 0.0
        %7538 = vmatprep.subr.mxu0 0.0
        %7539 = vmatpush1.msra.mxu0 0.0
        %7540 = vmatprep.subr.mxu0 0.0
        %7541 = vmatpush1.msra.mxu0 0.0
        %7542 = vmatprep.subr.mxu0 0.0
        %7543 = vmatpush1.msra.mxu0 0.0
        %7544 = vmatprep.subr.mxu0 0.0
        %7545 = vmatpush1.msra.mxu0 0.0
        %7546 = vmatprep.subr.mxu0 0.0
        %7547 = vmatpush1.msra.mxu0 0.0
        %7548 = vmatprep.subr.mxu0 0.0
        %7549 = vmatpush1.msra.mxu0 0.0
        %7550 = vmatprep.subr.mxu0 0.0
        %7551 = vmatpush1.msra.mxu0 0.0
        %7552 = vmatprep.subr.mxu0 0.0
        %7553 = vmatpush1.msra.mxu0 0.0
        %7554 = vmatprep.subr.mxu0 0.0
        %7555 = vmatpush1.msra.mxu0 0.0
        %7556 = vmatprep.subr.mxu0 0.0
        %7557 = vmatpush1.msra.mxu0 0.0
        %7558 = vmatprep.subr.mxu0 0.0
        %7559 = vmatpush1.msra.mxu0 0.0
        %7560 = vmatprep.subr.mxu0 0.0
        %7561 = vmatpush1.msra.mxu0 0.0
        %7562 = vmatprep.subr.mxu0 0.0
        %7563 = vmatpush1.msra.mxu0 0.0
        %7564 = vmatprep.subr.mxu0 0.0
        %7565 = vmatpush1.msra.mxu0 0.0
        %7566 = vmatprep.subr.mxu0 0.0
        %7567 = vmatpush1.msra.mxu0 0.0
        %7568 = vmatprep.subr.mxu0 0.0
        %7569 = vmatpush1.msra.mxu0 0.0
        %7570 = vmatprep.subr.mxu0 0.0
        %7571 = vmatpush1.msra.mxu0 0.0
        %7572 = vmatprep.subr.mxu0 0.0
        %7573 = vmatpush1.msra.mxu0 0.0
        %7574 = vmatprep.subr.mxu0 0.0
        %7575 = vmatpush1.msra.mxu0 0.0
        %7576 = vmatprep.subr.mxu0 0.0
        %7577 = vmatpush1.msra.mxu0 0.0
        %7578 = vmatprep.subr.mxu0 0.0
        %7579 = vmatpush1.msra.mxu0 0.0
        %7580 = vmatprep.subr.mxu0 0.0
        %7581 = vmatpush1.msra.mxu0 0.0
        %7582 = vmatprep.mubr.f32.mxu0 0.0
        %7583 = vmatmul.mubr.f32.gmra.mrb[0].mxu0 %v7495
        %v7584 = vpop.f32.mrb[0].mxu0
        %v7585 = vadd.f32 0.0, %v7584
        %v7586 = vpop.f32.mrb[0].mxu0
        %7587 = vmatprep.mubr.f32.mxu0 0.0
        %7588 = vmatmul.mubr.f32.gmra.mrb[0].mxu0 %v7498
        %v7589 = vpop.f32.mrb[0].mxu0
        %v7590 = vadd.f32 0.0, %v7589
        %v7591 = vpop.f32.mrb[0].mxu0
        %7592 = vmatprep.mubr.f32.mxu0 0.0
        %7593 = vmatmul.mubr.f32.gmra.mrb[0].mxu0 %v7501
        %v7594 = vpop.f32.mrb[0].mxu0
        %v7595 = vadd.f32 0.0, %v7594
        %v7596 = vpop.f32.mrb[0].mxu0
        %7597 = vmatprep.mubr.f32.mxu0 0.0
        %7598 = vmatmul.mubr.f32.gmra.mrb[0].mxu0 %v7504
        %v7599 = vpop.f32.mrb[0].mxu0
        %v7600 = vadd.f32 0.0, %v7599
        %v7601 = vpop.f32.mrb[0].mxu0
        %7602 = vmatprep.mubr.f32.mxu0 0.0
        %7603 = vmatmul.mubr.f32.gmra.mrb[0].mxu0 %v7507
        %v7604 = vpop.f32.mrb[0].mxu0
        %v7605 = vadd.f32 0.0, %v7604
        %v7606 = vpop.f32.mrb[0].mxu0
        %7607 = vmatprep.mubr.f32.mxu0 0.0
        %7608 = vmatmul.mubr.f32.gmra.mrb[0].mxu0 %v7510
        %v7609 = vpop.f32.mrb[0].mxu0
        %v7610 = vadd.f32 0.0, %v7609
        %v7611 = vpop.f32.mrb[0].mxu0
        %7612 = vmatprep.mubr.f32.mxu0 0.0
        %7613 = vmatmul.mubr.f32.gmra.mrb[0].mxu0 %v7513
        %v7614 = vpop.f32.mrb[0].mxu0
        %v7615 = vadd.f32 0.0, %v7614
        %v7616 = vpop.f32.mrb[0].mxu0
        %7617 = vmatprep.mubr.f32.mxu0 0.0
        %7618 = vmatmul.mubr.f32.gmra.mrb[0].mxu0 %v7516
        %v7619 = vpop.f32.mrb[0].mxu0
        %v7620 = vadd.f32 0.0, %v7619
        %v7621 = vpop.f32.mrb[0].mxu0
        %7622 = vdwg.mxu0
        %v7623 = vadd.f32 %v7439, %v7585
        %v7624 = vadd.f32 %v7444, %v7590
        %v7625 = vadd.f32 %v7449, %v7595
        %v7626 = vadd.f32 %v7454, %v7600
        %v7627 = vadd.f32 %v7459, %v7605
        %v7628 = vadd.f32 %v7464, %v7610
        %v7629 = vadd.f32 %v7469, %v7615
        %v7630 = vadd.f32 %v7474, %v7620
        %v7631 = vld [vmem:[%s7177] sm:$0xff]
        %v7632 = vld [vmem:[%s7177 + $0x10] sm:$0xff]
        %v7633 = vld [vmem:[%s7177 + $0x20] sm:$0xff]
        %v7634 = vld [vmem:[%s7177 + $0x30] sm:$0xff]
        %v7635 = vld [vmem:[%s7177 + $0x40] sm:$0xff]
        %v7636 = vld [vmem:[%s7177 + $0x50] sm:$0xff]
        %v7637 = vld [vmem:[%s7177 + $0x60] sm:$0xff]
        %v7638 = vld [vmem:[%s7177 + $0x70] sm:$0xff]
        %s7639 = scalar_lea.vmem %s3, 192
        %v7640 = vld [vmem:[%s7639] sm:$0xff]
        %v7641 = vld [vmem:[%s7639 + $0x8] sm:$0xff]
        %v7642 = vld [vmem:[%s7639 + $0x10] sm:$0xff]
        %v7643 = vld [vmem:[%s7639 + $0x18] sm:$0xff]
        %v7644 = vld [vmem:[%s7639 + $0x20] sm:$0xff]
        %v7645 = vld [vmem:[%s7639 + $0x28] sm:$0xff]
        %v7646 = vld [vmem:[%s7639 + $0x30] sm:$0xff]
        %v7647 = vld [vmem:[%s7639 + $0x38] sm:$0xff]
        %v7649 = vsel %vm7028, %v7631, 0
        %v7652 = vsel %vm7028, %v7632, 0
        %v7655 = vsel %vm7028, %v7633, 0
        %v7658 = vsel %vm7028, %v7634, 0
        %v7661 = vsel %vm7028, %v7635, 0
        %v7664 = vsel %vm7028, %v7636, 0
        %v7667 = vsel %vm7028, %v7637, 0
        %v7670 = vsel %vm7028, %v7638, 0
        %7672 = vmatprep.subr.mxu0 0.0
        %7673 = vmatpush1.msra.mxu0 %v7640
        %7674 = vmatprep.subr.mxu0 0.0
        %7675 = vmatpush1.msra.mxu0 %v7641
        %7676 = vmatprep.subr.mxu0 0.0
        %7677 = vmatpush1.msra.mxu0 %v7642
        %7678 = vmatprep.subr.mxu0 0.0
        %7679 = vmatpush1.msra.mxu0 %v7643
        %7680 = vmatprep.subr.mxu0 0.0
        %7681 = vmatpush1.msra.mxu0 %v7644
        %7682 = vmatprep.subr.mxu0 0.0
        %7683 = vmatpush1.msra.mxu0 %v7645
        %7684 = vmatprep.subr.mxu0 0.0
        %7685 = vmatpush1.msra.mxu0 %v7646
        %7686 = vmatprep.subr.mxu0 0.0
        %7687 = vmatpush1.msra.mxu0 %v7647
        %7688 = vmatprep.subr.mxu0 0.0
        %7689 = vmatpush1.msra.mxu0 0.0
        %7690 = vmatprep.subr.mxu0 0.0
        %7691 = vmatpush1.msra.mxu0 0.0
        %7692 = vmatprep.subr.mxu0 0.0
        %7693 = vmatpush1.msra.mxu0 0.0
        %7694 = vmatprep.subr.mxu0 0.0
        %7695 = vmatpush1.msra.mxu0 0.0
        %7696 = vmatprep.subr.mxu0 0.0
        %7697 = vmatpush1.msra.mxu0 0.0
        %7698 = vmatprep.subr.mxu0 0.0
        %7699 = vmatpush1.msra.mxu0 0.0
        %7700 = vmatprep.subr.mxu0 0.0
        %7701 = vmatpush1.msra.mxu0 0.0
        %7702 = vmatprep.subr.mxu0 0.0
        %7703 = vmatpush1.msra.mxu0 0.0
        %7704 = vmatprep.subr.mxu0 0.0
        %7705 = vmatpush1.msra.mxu0 0.0
        %7706 = vmatprep.subr.mxu0 0.0
        %7707 = vmatpush1.msra.mxu0 0.0
        %7708 = vmatprep.subr.mxu0 0.0
        %7709 = vmatpush1.msra.mxu0 0.0
        %7710 = vmatprep.subr.mxu0 0.0
        %7711 = vmatpush1.msra.mxu0 0.0
        %7712 = vmatprep.subr.mxu0 0.0
        %7713 = vmatpush1.msra.mxu0 0.0
        %7714 = vmatprep.subr.mxu0 0.0
        %7715 = vmatpush1.msra.mxu0 0.0
        %7716 = vmatprep.subr.mxu0 0.0
        %7717 = vmatpush1.msra.mxu0 0.0
        %7718 = vmatprep.subr.mxu0 0.0
        %7719 = vmatpush1.msra.mxu0 0.0
        %7720 = vmatprep.subr.mxu0 0.0
        %7721 = vmatpush1.msra.mxu0 0.0
        %7722 = vmatprep.subr.mxu0 0.0
        %7723 = vmatpush1.msra.mxu0 0.0
        %7724 = vmatprep.subr.mxu0 0.0
        %7725 = vmatpush1.msra.mxu0 0.0
        %7726 = vmatprep.subr.mxu0 0.0
        %7727 = vmatpush1.msra.mxu0 0.0
        %7728 = vmatprep.subr.mxu0 0.0
        %7729 = vmatpush1.msra.mxu0 0.0
        %7730 = vmatprep.subr.mxu0 0.0
        %7731 = vmatpush1.msra.mxu0 0.0
        %7732 = vmatprep.subr.mxu0 0.0
        %7733 = vmatpush1.msra.mxu0 0.0
        %7734 = vmatprep.subr.mxu0 0.0
        %7735 = vmatpush1.msra.mxu0 0.0
        %7736 = vmatprep.mubr.f32.mxu0 0.0
        %7737 = vmatmul.mubr.f32.gmra.mrb[0].mxu0 %v7649
        %v7738 = vpop.f32.mrb[0].mxu0
        %v7739 = vadd.f32 0.0, %v7738
        %v7740 = vpop.f32.mrb[0].mxu0
        %7741 = vmatprep.mubr.f32.mxu0 0.0
        %7742 = vmatmul.mubr.f32.gmra.mrb[0].mxu0 %v7652
        %v7743 = vpop.f32.mrb[0].mxu0
        %v7744 = vadd.f32 0.0, %v7743
        %v7745 = vpop.f32.mrb[0].mxu0
        %7746 = vmatprep.mubr.f32.mxu0 0.0
        %7747 = vmatmul.mubr.f32.gmra.mrb[0].mxu0 %v7655
        %v7748 = vpop.f32.mrb[0].mxu0
        %v7749 = vadd.f32 0.0, %v7748
        %v7750 = vpop.f32.mrb[0].mxu0
        %7751 = vmatprep.mubr.f32.mxu0 0.0
        %7752 = vmatmul.mubr.f32.gmra.mrb[0].mxu0 %v7658
        %v7753 = vpop.f32.mrb[0].mxu0
        %v7754 = vadd.f32 0.0, %v7753
        %v7755 = vpop.f32.mrb[0].mxu0
        %7756 = vmatprep.mubr.f32.mxu0 0.0
        %7757 = vmatmul.mubr.f32.gmra.mrb[0].mxu0 %v7661
        %v7758 = vpop.f32.mrb[0].mxu0
        %v7759 = vadd.f32 0.0, %v7758
        %v7760 = vpop.f32.mrb[0].mxu0
        %7761 = vmatprep.mubr.f32.mxu0 0.0
        %7762 = vmatmul.mubr.f32.gmra.mrb[0].mxu0 %v7664
        %v7763 = vpop.f32.mrb[0].mxu0
        %v7764 = vadd.f32 0.0, %v7763
        %v7765 = vpop.f32.mrb[0].mxu0
        %7766 = vmatprep.mubr.f32.mxu0 0.0
        %7767 = vmatmul.mubr.f32.gmra.mrb[0].mxu0 %v7667
        %v7768 = vpop.f32.mrb[0].mxu0
        %v7769 = vadd.f32 0.0, %v7768
        %v7770 = vpop.f32.mrb[0].mxu0
        %7771 = vmatprep.mubr.f32.mxu0 0.0
        %7772 = vmatmul.mubr.f32.gmra.mrb[0].mxu0 %v7670
        %v7773 = vpop.f32.mrb[0].mxu0
        %v7774 = vadd.f32 0.0, %v7773
        %v7775 = vpop.f32.mrb[0].mxu0
        %7776 = vdwg.mxu0
        %v7777 = vadd.f32 %v7623, %v7739
        %v7778 = vadd.f32 %v7624, %v7744
        %v7779 = vadd.f32 %v7625, %v7749
        %v7780 = vadd.f32 %v7626, %v7754
        %v7781 = vadd.f32 %v7627, %v7759
        %v7782 = vadd.f32 %v7628, %v7764
        %v7783 = vadd.f32 %v7629, %v7769
        %v7784 = vadd.f32 %v7630, %v7774
        %v7785 = vld [vmem:[%s7177 + $0x1] sm:$0xff]
        %v7786 = vld [vmem:[%s7177 + $0x11] sm:$0xff]
        %v7787 = vld [vmem:[%s7177 + $0x21] sm:$0xff]
        %v7788 = vld [vmem:[%s7177 + $0x31] sm:$0xff]
        %v7789 = vld [vmem:[%s7177 + $0x41] sm:$0xff]
        %v7790 = vld [vmem:[%s7177 + $0x51] sm:$0xff]
        %v7791 = vld [vmem:[%s7177 + $0x61] sm:$0xff]
        %v7792 = vld [vmem:[%s7177 + $0x71] sm:$0xff]
        %s7793 = scalar_lea.vmem %s3, 256
        %v7794 = vld [vmem:[%s7793] sm:$0xff]
        %v7795 = vld [vmem:[%s7793 + $0x8] sm:$0xff]
        %v7796 = vld [vmem:[%s7793 + $0x10] sm:$0xff]
        %v7797 = vld [vmem:[%s7793 + $0x18] sm:$0xff]
        %v7798 = vld [vmem:[%s7793 + $0x20] sm:$0xff]
        %v7799 = vld [vmem:[%s7793 + $0x28] sm:$0xff]
        %v7800 = vld [vmem:[%s7793 + $0x30] sm:$0xff]
        %v7801 = vld [vmem:[%s7793 + $0x38] sm:$0xff]
        %v7803 = vsel %vm7028, %v7785, 0
        %v7806 = vsel %vm7028, %v7786, 0
        %v7809 = vsel %vm7028, %v7787, 0
        %v7812 = vsel %vm7028, %v7788, 0
        %v7815 = vsel %vm7028, %v7789, 0
        %v7818 = vsel %vm7028, %v7790, 0
        %v7821 = vsel %vm7028, %v7791, 0
        %v7824 = vsel %vm7028, %v7792, 0
        %7826 = vmatprep.subr.mxu0 0.0
        %7827 = vmatpush1.msra.mxu0 %v7794
        %7828 = vmatprep.subr.mxu0 0.0
        %7829 = vmatpush1.msra.mxu0 %v7795
        %7830 = vmatprep.subr.mxu0 0.0
        %7831 = vmatpush1.msra.mxu0 %v7796
        %7832 = vmatprep.subr.mxu0 0.0
        %7833 = vmatpush1.msra.mxu0 %v7797
        %7834 = vmatprep.subr.mxu0 0.0
        %7835 = vmatpush1.msra.mxu0 %v7798
        %7836 = vmatprep.subr.mxu0 0.0
        %7837 = vmatpush1.msra.mxu0 %v7799
        %7838 = vmatprep.subr.mxu0 0.0
        %7839 = vmatpush1.msra.mxu0 %v7800
        %7840 = vmatprep.subr.mxu0 0.0
        %7841 = vmatpush1.msra.mxu0 %v7801
        %7842 = vmatprep.subr.mxu0 0.0
        %7843 = vmatpush1.msra.mxu0 0.0
        %7844 = vmatprep.subr.mxu0 0.0
        %7845 = vmatpush1.msra.mxu0 0.0
        %7846 = vmatprep.subr.mxu0 0.0
        %7847 = vmatpush1.msra.mxu0 0.0
        %7848 = vmatprep.subr.mxu0 0.0
        %7849 = vmatpush1.msra.mxu0 0.0
        %7850 = vmatprep.subr.mxu0 0.0
        %7851 = vmatpush1.msra.mxu0 0.0
        %7852 = vmatprep.subr.mxu0 0.0
        %7853 = vmatpush1.msra.mxu0 0.0
        %7854 = vmatprep.subr.mxu0 0.0
        %7855 = vmatpush1.msra.mxu0 0.0
        %7856 = vmatprep.subr.mxu0 0.0
        %7857 = vmatpush1.msra.mxu0 0.0
        %7858 = vmatprep.subr.mxu0 0.0
        %7859 = vmatpush1.msra.mxu0 0.0
        %7860 = vmatprep.subr.mxu0 0.0
        %7861 = vmatpush1.msra.mxu0 0.0
        %7862 = vmatprep.subr.mxu0 0.0
        %7863 = vmatpush1.msra.mxu0 0.0
        %7864 = vmatprep.subr.mxu0 0.0
        %7865 = vmatpush1.msra.mxu0 0.0
        %7866 = vmatprep.subr.mxu0 0.0
        %7867 = vmatpush1.msra.mxu0 0.0
        %7868 = vmatprep.subr.mxu0 0.0
        %7869 = vmatpush1.msra.mxu0 0.0
        %7870 = vmatprep.subr.mxu0 0.0
        %7871 = vmatpush1.msra.mxu0 0.0
        %7872 = vmatprep.subr.mxu0 0.0
        %7873 = vmatpush1.msra.mxu0 0.0
        %7874 = vmatprep.subr.mxu0 0.0
        %7875 = vmatpush1.msra.mxu0 0.0
        %7876 = vmatprep.subr.mxu0 0.0
        %7877 = vmatpush1.msra.mxu0 0.0
        %7878 = vmatprep.subr.mxu0 0.0
        %7879 = vmatpush1.msra.mxu0 0.0
        %7880 = vmatprep.subr.mxu0 0.0
        %7881 = vmatpush1.msra.mxu0 0.0
        %7882 = vmatprep.subr.mxu0 0.0
        %7883 = vmatpush1.msra.mxu0 0.0
        %7884 = vmatprep.subr.mxu0 0.0
        %7885 = vmatpush1.msra.mxu0 0.0
        %7886 = vmatprep.subr.mxu0 0.0
        %7887 = vmatpush1.msra.mxu0 0.0
        %7888 = vmatprep.subr.mxu0 0.0
        %7889 = vmatpush1.msra.mxu0 0.0
        %7890 = vmatprep.mubr.f32.mxu0 0.0
        %7891 = vmatmul.mubr.f32.gmra.mrb[0].mxu0 %v7803
        %v7892 = vpop.f32.mrb[0].mxu0
        %v7893 = vadd.f32 0.0, %v7892
        %v7894 = vpop.f32.mrb[0].mxu0
        %7895 = vmatprep.mubr.f32.mxu0 0.0
        %7896 = vmatmul.mubr.f32.gmra.mrb[0].mxu0 %v7806
        %v7897 = vpop.f32.mrb[0].mxu0
        %v7898 = vadd.f32 0.0, %v7897
        %v7899 = vpop.f32.mrb[0].mxu0
        %7900 = vmatprep.mubr.f32.mxu0 0.0
        %7901 = vmatmul.mubr.f32.gmra.mrb[0].mxu0 %v7809
        %v7902 = vpop.f32.mrb[0].mxu0
        %v7903 = vadd.f32 0.0, %v7902
        %v7904 = vpop.f32.mrb[0].mxu0
        %7905 = vmatprep.mubr.f32.mxu0 0.0
        %7906 = vmatmul.mubr.f32.gmra.mrb[0].mxu0 %v7812
        %v7907 = vpop.f32.mrb[0].mxu0
        %v7908 = vadd.f32 0.0, %v7907
        %v7909 = vpop.f32.mrb[0].mxu0
        %7910 = vmatprep.mubr.f32.mxu0 0.0
        %7911 = vmatmul.mubr.f32.gmra.mrb[0].mxu0 %v7815
        %v7912 = vpop.f32.mrb[0].mxu0
        %v7913 = vadd.f32 0.0, %v7912
        %v7914 = vpop.f32.mrb[0].mxu0
        %7915 = vmatprep.mubr.f32.mxu0 0.0
        %7916 = vmatmul.mubr.f32.gmra.mrb[0].mxu0 %v7818
        %v7917 = vpop.f32.mrb[0].mxu0
        %v7918 = vadd.f32 0.0, %v7917
        %v7919 = vpop.f32.mrb[0].mxu0
        %7920 = vmatprep.mubr.f32.mxu0 0.0
        %7921 = vmatmul.mubr.f32.gmra.mrb[0].mxu0 %v7821
        %v7922 = vpop.f32.mrb[0].mxu0
        %v7923 = vadd.f32 0.0, %v7922
        %v7924 = vpop.f32.mrb[0].mxu0
        %7925 = vmatprep.mubr.f32.mxu0 0.0
        %7926 = vmatmul.mubr.f32.gmra.mrb[0].mxu0 %v7824
        %v7927 = vpop.f32.mrb[0].mxu0
        %v7928 = vadd.f32 0.0, %v7927
        %v7929 = vpop.f32.mrb[0].mxu0
        %7930 = vdwg.mxu0
        %v7931 = vadd.f32 %v7777, %v7893
        %v7932 = vadd.f32 %v7778, %v7898
        %v7933 = vadd.f32 %v7779, %v7903
        %v7934 = vadd.f32 %v7780, %v7908
        %v7935 = vadd.f32 %v7781, %v7913
        %v7936 = vadd.f32 %v7782, %v7918
        %v7937 = vadd.f32 %v7783, %v7923
        %v7938 = vadd.f32 %v7784, %v7928
        %v7939 = vld [vmem:[%s7177 + $0x2] sm:$0xff]
        %v7940 = vld [vmem:[%s7177 + $0x12] sm:$0xff]
        %v7941 = vld [vmem:[%s7177 + $0x22] sm:$0xff]
        %v7942 = vld [vmem:[%s7177 + $0x32] sm:$0xff]
        %v7943 = vld [vmem:[%s7177 + $0x42] sm:$0xff]
        %v7944 = vld [vmem:[%s7177 + $0x52] sm:$0xff]
        %v7945 = vld [vmem:[%s7177 + $0x62] sm:$0xff]
        %v7946 = vld [vmem:[%s7177 + $0x72] sm:$0xff]
        %s7947 = scalar_lea.vmem %s3, 320
        %v7948 = vld [vmem:[%s7947] sm:$0xff]
        %v7949 = vld [vmem:[%s7947 + $0x8] sm:$0xff]
        %v7950 = vld [vmem:[%s7947 + $0x10] sm:$0xff]
        %v7951 = vld [vmem:[%s7947 + $0x18] sm:$0xff]
        %v7952 = vld [vmem:[%s7947 + $0x20] sm:$0xff]
        %v7953 = vld [vmem:[%s7947 + $0x28] sm:$0xff]
        %v7954 = vld [vmem:[%s7947 + $0x30] sm:$0xff]
        %v7955 = vld [vmem:[%s7947 + $0x38] sm:$0xff]
        %v7957 = vsel %vm7028, %v7939, 0
        %v7960 = vsel %vm7028, %v7940, 0
        %v7963 = vsel %vm7028, %v7941, 0
        %v7966 = vsel %vm7028, %v7942, 0
        %v7969 = vsel %vm7028, %v7943, 0
        %v7972 = vsel %vm7028, %v7944, 0
        %v7975 = vsel %vm7028, %v7945, 0
        %v7978 = vsel %vm7028, %v7946, 0
        %7980 = vmatprep.subr.mxu0 0.0
        %7981 = vmatpush1.msra.mxu0 %v7948
        %7982 = vmatprep.subr.mxu0 0.0
        %7983 = vmatpush1.msra.mxu0 %v7949
        %7984 = vmatprep.subr.mxu0 0.0
        %7985 = vmatpush1.msra.mxu0 %v7950
        %7986 = vmatprep.subr.mxu0 0.0
        %7987 = vmatpush1.msra.mxu0 %v7951
        %7988 = vmatprep.subr.mxu0 0.0
        %7989 = vmatpush1.msra.mxu0 %v7952
        %7990 = vmatprep.subr.mxu0 0.0
        %7991 = vmatpush1.msra.mxu0 %v7953
        %7992 = vmatprep.subr.mxu0 0.0
        %7993 = vmatpush1.msra.mxu0 %v7954
        %7994 = vmatprep.subr.mxu0 0.0
        %7995 = vmatpush1.msra.mxu0 %v7955
        %7996 = vmatprep.subr.mxu0 0.0
        %7997 = vmatpush1.msra.mxu0 0.0
        %7998 = vmatprep.subr.mxu0 0.0
        %7999 = vmatpush1.msra.mxu0 0.0
        %8000 = vmatprep.subr.mxu0 0.0
        %8001 = vmatpush1.msra.mxu0 0.0
        %8002 = vmatprep.subr.mxu0 0.0
        %8003 = vmatpush1.msra.mxu0 0.0
        %8004 = vmatprep.subr.mxu0 0.0
        %8005 = vmatpush1.msra.mxu0 0.0
        %8006 = vmatprep.subr.mxu0 0.0
        %8007 = vmatpush1.msra.mxu0 0.0
        %8008 = vmatprep.subr.mxu0 0.0
        %8009 = vmatpush1.msra.mxu0 0.0
        %8010 = vmatprep.subr.mxu0 0.0
        %8011 = vmatpush1.msra.mxu0 0.0
        %8012 = vmatprep.subr.mxu0 0.0
        %8013 = vmatpush1.msra.mxu0 0.0
        %8014 = vmatprep.subr.mxu0 0.0
        %8015 = vmatpush1.msra.mxu0 0.0
        %8016 = vmatprep.subr.mxu0 0.0
        %8017 = vmatpush1.msra.mxu0 0.0
        %8018 = vmatprep.subr.mxu0 0.0
        %8019 = vmatpush1.msra.mxu0 0.0
        %8020 = vmatprep.subr.mxu0 0.0
        %8021 = vmatpush1.msra.mxu0 0.0
        %8022 = vmatprep.subr.mxu0 0.0
        %8023 = vmatpush1.msra.mxu0 0.0
        %8024 = vmatprep.subr.mxu0 0.0
        %8025 = vmatpush1.msra.mxu0 0.0
        %8026 = vmatprep.subr.mxu0 0.0
        %8027 = vmatpush1.msra.mxu0 0.0
        %8028 = vmatprep.subr.mxu0 0.0
        %8029 = vmatpush1.msra.mxu0 0.0
        %8030 = vmatprep.subr.mxu0 0.0
        %8031 = vmatpush1.msra.mxu0 0.0
        %8032 = vmatprep.subr.mxu0 0.0
        %8033 = vmatpush1.msra.mxu0 0.0
        %8034 = vmatprep.subr.mxu0 0.0
        %8035 = vmatpush1.msra.mxu0 0.0
        %8036 = vmatprep.subr.mxu0 0.0
        %8037 = vmatpush1.msra.mxu0 0.0
        %8038 = vmatprep.subr.mxu0 0.0
        %8039 = vmatpush1.msra.mxu0 0.0
        %8040 = vmatprep.subr.mxu0 0.0
        %8041 = vmatpush1.msra.mxu0 0.0
        %8042 = vmatprep.subr.mxu0 0.0
        %8043 = vmatpush1.msra.mxu0 0.0
        %8044 = vmatprep.mubr.f32.mxu0 0.0
        %8045 = vmatmul.mubr.f32.gmra.mrb[0].mxu0 %v7957
        %v8046 = vpop.f32.mrb[0].mxu0
        %v8047 = vadd.f32 0.0, %v8046
        %v8048 = vpop.f32.mrb[0].mxu0
        %8049 = vmatprep.mubr.f32.mxu0 0.0
        %8050 = vmatmul.mubr.f32.gmra.mrb[0].mxu0 %v7960
        %v8051 = vpop.f32.mrb[0].mxu0
        %v8052 = vadd.f32 0.0, %v8051
        %v8053 = vpop.f32.mrb[0].mxu0
        %8054 = vmatprep.mubr.f32.mxu0 0.0
        %8055 = vmatmul.mubr.f32.gmra.mrb[0].mxu0 %v7963
        %v8056 = vpop.f32.mrb[0].mxu0
        %v8057 = vadd.f32 0.0, %v8056
        %v8058 = vpop.f32.mrb[0].mxu0
        %8059 = vmatprep.mubr.f32.mxu0 0.0
        %8060 = vmatmul.mubr.f32.gmra.mrb[0].mxu0 %v7966
        %v8061 = vpop.f32.mrb[0].mxu0
        %v8062 = vadd.f32 0.0, %v8061
        %v8063 = vpop.f32.mrb[0].mxu0
        %8064 = vmatprep.mubr.f32.mxu0 0.0
        %8065 = vmatmul.mubr.f32.gmra.mrb[0].mxu0 %v7969
        %v8066 = vpop.f32.mrb[0].mxu0
        %v8067 = vadd.f32 0.0, %v8066
        %v8068 = vpop.f32.mrb[0].mxu0
        %8069 = vmatprep.mubr.f32.mxu0 0.0
        %8070 = vmatmul.mubr.f32.gmra.mrb[0].mxu0 %v7972
        %v8071 = vpop.f32.mrb[0].mxu0
        %v8072 = vadd.f32 0.0, %v8071
        %v8073 = vpop.f32.mrb[0].mxu0
        %8074 = vmatprep.mubr.f32.mxu0 0.0
        %8075 = vmatmul.mubr.f32.gmra.mrb[0].mxu0 %v7975
        %v8076 = vpop.f32.mrb[0].mxu0
        %v8077 = vadd.f32 0.0, %v8076
        %v8078 = vpop.f32.mrb[0].mxu0
        %8079 = vmatprep.mubr.f32.mxu0 0.0
        %8080 = vmatmul.mubr.f32.gmra.mrb[0].mxu0 %v7978
        %v8081 = vpop.f32.mrb[0].mxu0
        %v8082 = vadd.f32 0.0, %v8081
        %v8083 = vpop.f32.mrb[0].mxu0
        %8084 = vdwg.mxu0
        %v8085 = vadd.f32 %v7931, %v8047
        %v8086 = vadd.f32 %v7932, %v8052
        %v8087 = vadd.f32 %v7933, %v8057
        %v8088 = vadd.f32 %v7934, %v8062
        %v8089 = vadd.f32 %v7935, %v8067
        %v8090 = vadd.f32 %v7936, %v8072
        %v8091 = vadd.f32 %v7937, %v8077
        %v8092 = vadd.f32 %v7938, %v8082
        %s8093 = scalar_lea.vmem [#allocation4], 32
        %v8094 = vld [vmem:[%s8093] sm:$0xff]
        %v8095 = vld [vmem:[%s8093 + $0x10] sm:$0xff]
        %v8096 = vld [vmem:[%s8093 + $0x20] sm:$0xff]
        %v8097 = vld [vmem:[%s8093 + $0x30] sm:$0xff]
        %v8098 = vld [vmem:[%s8093 + $0x40] sm:$0xff]
        %v8099 = vld [vmem:[%s8093 + $0x50] sm:$0xff]
        %v8100 = vld [vmem:[%s8093 + $0x60] sm:$0xff]
        %v8101 = vld [vmem:[%s8093 + $0x70] sm:$0xff]
        %s8102 = scalar_lea.vmem %s3, 384
        %v8103 = vld [vmem:[%s8102] sm:$0xff]
        %v8104 = vld [vmem:[%s8102 + $0x8] sm:$0xff]
        %v8105 = vld [vmem:[%s8102 + $0x10] sm:$0xff]
        %v8106 = vld [vmem:[%s8102 + $0x18] sm:$0xff]
        %v8107 = vld [vmem:[%s8102 + $0x20] sm:$0xff]
        %v8108 = vld [vmem:[%s8102 + $0x28] sm:$0xff]
        %v8109 = vld [vmem:[%s8102 + $0x30] sm:$0xff]
        %v8110 = vld [vmem:[%s8102 + $0x38] sm:$0xff]
        %v8112 = vsel %vm7028, %v8094, 0
        %v8115 = vsel %vm7028, %v8095, 0
        %v8118 = vsel %vm7028, %v8096, 0
        %v8121 = vsel %vm7028, %v8097, 0
        %v8124 = vsel %vm7028, %v8098, 0
        %v8127 = vsel %vm7028, %v8099, 0
        %v8130 = vsel %vm7028, %v8100, 0
        %v8133 = vsel %vm7028, %v8101, 0
        %8135 = vmatprep.subr.mxu0 0.0
        %8136 = vmatpush1.msra.mxu0 %v8103
        %8137 = vmatprep.subr.mxu0 0.0
        %8138 = vmatpush1.msra.mxu0 %v8104
        %8139 = vmatprep.subr.mxu0 0.0
        %8140 = vmatpush1.msra.mxu0 %v8105
        %8141 = vmatprep.subr.mxu0 0.0
        %8142 = vmatpush1.msra.mxu0 %v8106
        %8143 = vmatprep.subr.mxu0 0.0
        %8144 = vmatpush1.msra.mxu0 %v8107
        %8145 = vmatprep.subr.mxu0 0.0
        %8146 = vmatpush1.msra.mxu0 %v8108
        %8147 = vmatprep.subr.mxu0 0.0
        %8148 = vmatpush1.msra.mxu0 %v8109
        %8149 = vmatprep.subr.mxu0 0.0
        %8150 = vmatpush1.msra.mxu0 %v8110
        %8151 = vmatprep.subr.mxu0 0.0
        %8152 = vmatpush1.msra.mxu0 0.0
        %8153 = vmatprep.subr.mxu0 0.0
        %8154 = vmatpush1.msra.mxu0 0.0
        %8155 = vmatprep.subr.mxu0 0.0
        %8156 = vmatpush1.msra.mxu0 0.0
        %8157 = vmatprep.subr.mxu0 0.0
        %8158 = vmatpush1.msra.mxu0 0.0
        %8159 = vmatprep.subr.mxu0 0.0
        %8160 = vmatpush1.msra.mxu0 0.0
        %8161 = vmatprep.subr.mxu0 0.0
        %8162 = vmatpush1.msra.mxu0 0.0
        %8163 = vmatprep.subr.mxu0 0.0
        %8164 = vmatpush1.msra.mxu0 0.0
        %8165 = vmatprep.subr.mxu0 0.0
        %8166 = vmatpush1.msra.mxu0 0.0
        %8167 = vmatprep.subr.mxu0 0.0
        %8168 = vmatpush1.msra.mxu0 0.0
        %8169 = vmatprep.subr.mxu0 0.0
        %8170 = vmatpush1.msra.mxu0 0.0
        %8171 = vmatprep.subr.mxu0 0.0
        %8172 = vmatpush1.msra.mxu0 0.0
        %8173 = vmatprep.subr.mxu0 0.0
        %8174 = vmatpush1.msra.mxu0 0.0
        %8175 = vmatprep.subr.mxu0 0.0
        %8176 = vmatpush1.msra.mxu0 0.0
        %8177 = vmatprep.subr.mxu0 0.0
        %8178 = vmatpush1.msra.mxu0 0.0
        %8179 = vmatprep.subr.mxu0 0.0
        %8180 = vmatpush1.msra.mxu0 0.0
        %8181 = vmatprep.subr.mxu0 0.0
        %8182 = vmatpush1.msra.mxu0 0.0
        %8183 = vmatprep.subr.mxu0 0.0
        %8184 = vmatpush1.msra.mxu0 0.0
        %8185 = vmatprep.subr.mxu0 0.0
        %8186 = vmatpush1.msra.mxu0 0.0
        %8187 = vmatprep.subr.mxu0 0.0
        %8188 = vmatpush1.msra.mxu0 0.0
        %8189 = vmatprep.subr.mxu0 0.0
        %8190 = vmatpush1.msra.mxu0 0.0
        %8191 = vmatprep.subr.mxu0 0.0
        %8192 = vmatpush1.msra.mxu0 0.0
        %8193 = vmatprep.subr.mxu0 0.0
        %8194 = vmatpush1.msra.mxu0 0.0
        %8195 = vmatprep.subr.mxu0 0.0
        %8196 = vmatpush1.msra.mxu0 0.0
        %8197 = vmatprep.subr.mxu0 0.0
        %8198 = vmatpush1.msra.mxu0 0.0
        %8199 = vmatprep.mubr.f32.mxu0 0.0
        %8200 = vmatmul.mubr.f32.gmra.mrb[0].mxu0 %v8112
        %v8201 = vpop.f32.mrb[0].mxu0
        %v8202 = vadd.f32 0.0, %v8201
        %v8203 = vpop.f32.mrb[0].mxu0
        %8204 = vmatprep.mubr.f32.mxu0 0.0
        %8205 = vmatmul.mubr.f32.gmra.mrb[0].mxu0 %v8115
        %v8206 = vpop.f32.mrb[0].mxu0
        %v8207 = vadd.f32 0.0, %v8206
        %v8208 = vpop.f32.mrb[0].mxu0
        %8209 = vmatprep.mubr.f32.mxu0 0.0
        %8210 = vmatmul.mubr.f32.gmra.mrb[0].mxu0 %v8118
        %v8211 = vpop.f32.mrb[0].mxu0
        %v8212 = vadd.f32 0.0, %v8211
        %v8213 = vpop.f32.mrb[0].mxu0
        %8214 = vmatprep.mubr.f32.mxu0 0.0
        %8215 = vmatmul.mubr.f32.gmra.mrb[0].mxu0 %v8121
        %v8216 = vpop.f32.mrb[0].mxu0
        %v8217 = vadd.f32 0.0, %v8216
        %v8218 = vpop.f32.mrb[0].mxu0
        %8219 = vmatprep.mubr.f32.mxu0 0.0
        %8220 = vmatmul.mubr.f32.gmra.mrb[0].mxu0 %v8124
        %v8221 = vpop.f32.mrb[0].mxu0
        %v8222 = vadd.f32 0.0, %v8221
        %v8223 = vpop.f32.mrb[0].mxu0
        %8224 = vmatprep.mubr.f32.mxu0 0.0
        %8225 = vmatmul.mubr.f32.gmra.mrb[0].mxu0 %v8127
        %v8226 = vpop.f32.mrb[0].mxu0
        %v8227 = vadd.f32 0.0, %v8226
        %v8228 = vpop.f32.mrb[0].mxu0
        %8229 = vmatprep.mubr.f32.mxu0 0.0
        %8230 = vmatmul.mubr.f32.gmra.mrb[0].mxu0 %v8130
        %v8231 = vpop.f32.mrb[0].mxu0
        %v8232 = vadd.f32 0.0, %v8231
        %v8233 = vpop.f32.mrb[0].mxu0
        %8234 = vmatprep.mubr.f32.mxu0 0.0
        %8235 = vmatmul.mubr.f32.gmra.mrb[0].mxu0 %v8133
        %v8236 = vpop.f32.mrb[0].mxu0
        %v8237 = vadd.f32 0.0, %v8236
        %v8238 = vpop.f32.mrb[0].mxu0
        %8239 = vdwg.mxu0
        %v8240 = vadd.f32 %v8085, %v8202
        %v8241 = vadd.f32 %v8086, %v8207
        %v8242 = vadd.f32 %v8087, %v8212
        %v8243 = vadd.f32 %v8088, %v8217
        %v8244 = vadd.f32 %v8089, %v8222
        %v8245 = vadd.f32 %v8090, %v8227
        %v8246 = vadd.f32 %v8091, %v8232
        %v8247 = vadd.f32 %v8092, %v8237
        %v8248 = vld [vmem:[%s8093 + $0x1] sm:$0xff]
        %v8249 = vld [vmem:[%s8093 + $0x11] sm:$0xff]
        %v8250 = vld [vmem:[%s8093 + $0x21] sm:$0xff]
        %v8251 = vld [vmem:[%s8093 + $0x31] sm:$0xff]
        %v8252 = vld [vmem:[%s8093 + $0x41] sm:$0xff]
        %v8253 = vld [vmem:[%s8093 + $0x51] sm:$0xff]
        %v8254 = vld [vmem:[%s8093 + $0x61] sm:$0xff]
        %v8255 = vld [vmem:[%s8093 + $0x71] sm:$0xff]
        %s8256 = scalar_lea.vmem %s3, 448
        %v8257 = vld [vmem:[%s8256] sm:$0xff]
        %v8258 = vld [vmem:[%s8256 + $0x8] sm:$0xff]
        %v8259 = vld [vmem:[%s8256 + $0x10] sm:$0xff]
        %v8260 = vld [vmem:[%s8256 + $0x18] sm:$0xff]
        %v8261 = vld [vmem:[%s8256 + $0x20] sm:$0xff]
        %v8262 = vld [vmem:[%s8256 + $0x28] sm:$0xff]
        %v8263 = vld [vmem:[%s8256 + $0x30] sm:$0xff]
        %v8264 = vld [vmem:[%s8256 + $0x38] sm:$0xff]
        %v8266 = vsel %vm7028, %v8248, 0
        %v8269 = vsel %vm7028, %v8249, 0
        %v8272 = vsel %vm7028, %v8250, 0
        %v8275 = vsel %vm7028, %v8251, 0
        %v8278 = vsel %vm7028, %v8252, 0
        %v8281 = vsel %vm7028, %v8253, 0
        %v8284 = vsel %vm7028, %v8254, 0
        %v8287 = vsel %vm7028, %v8255, 0
        %8289 = vmatprep.subr.mxu0 0.0
        %8290 = vmatpush1.msra.mxu0 %v8257
        %8291 = vmatprep.subr.mxu0 0.0
        %8292 = vmatpush1.msra.mxu0 %v8258
        %8293 = vmatprep.subr.mxu0 0.0
        %8294 = vmatpush1.msra.mxu0 %v8259
        %8295 = vmatprep.subr.mxu0 0.0
        %8296 = vmatpush1.msra.mxu0 %v8260
        %8297 = vmatprep.subr.mxu0 0.0
        %8298 = vmatpush1.msra.mxu0 %v8261
        %8299 = vmatprep.subr.mxu0 0.0
        %8300 = vmatpush1.msra.mxu0 %v8262
        %8301 = vmatprep.subr.mxu0 0.0
        %8302 = vmatpush1.msra.mxu0 %v8263
        %8303 = vmatprep.subr.mxu0 0.0
        %8304 = vmatpush1.msra.mxu0 %v8264
        %8305 = vmatprep.subr.mxu0 0.0
        %8306 = vmatpush1.msra.mxu0 0.0
        %8307 = vmatprep.subr.mxu0 0.0
        %8308 = vmatpush1.msra.mxu0 0.0
        %8309 = vmatprep.subr.mxu0 0.0
        %8310 = vmatpush1.msra.mxu0 0.0
        %8311 = vmatprep.subr.mxu0 0.0
        %8312 = vmatpush1.msra.mxu0 0.0
        %8313 = vmatprep.subr.mxu0 0.0
        %8314 = vmatpush1.msra.mxu0 0.0
        %8315 = vmatprep.subr.mxu0 0.0
        %8316 = vmatpush1.msra.mxu0 0.0
        %8317 = vmatprep.subr.mxu0 0.0
        %8318 = vmatpush1.msra.mxu0 0.0
        %8319 = vmatprep.subr.mxu0 0.0
        %8320 = vmatpush1.msra.mxu0 0.0
        %8321 = vmatprep.subr.mxu0 0.0
        %8322 = vmatpush1.msra.mxu0 0.0
        %8323 = vmatprep.subr.mxu0 0.0
        %8324 = vmatpush1.msra.mxu0 0.0
        %8325 = vmatprep.subr.mxu0 0.0
        %8326 = vmatpush1.msra.mxu0 0.0
        %8327 = vmatprep.subr.mxu0 0.0
        %8328 = vmatpush1.msra.mxu0 0.0
        %8329 = vmatprep.subr.mxu0 0.0
        %8330 = vmatpush1.msra.mxu0 0.0
        %8331 = vmatprep.subr.mxu0 0.0
        %8332 = vmatpush1.msra.mxu0 0.0
        %8333 = vmatprep.subr.mxu0 0.0
        %8334 = vmatpush1.msra.mxu0 0.0
        %8335 = vmatprep.subr.mxu0 0.0
        %8336 = vmatpush1.msra.mxu0 0.0
        %8337 = vmatprep.subr.mxu0 0.0
        %8338 = vmatpush1.msra.mxu0 0.0
        %8339 = vmatprep.subr.mxu0 0.0
        %8340 = vmatpush1.msra.mxu0 0.0
        %8341 = vmatprep.subr.mxu0 0.0
        %8342 = vmatpush1.msra.mxu0 0.0
        %8343 = vmatprep.subr.mxu0 0.0
        %8344 = vmatpush1.msra.mxu0 0.0
        %8345 = vmatprep.subr.mxu0 0.0
        %8346 = vmatpush1.msra.mxu0 0.0
        %8347 = vmatprep.subr.mxu0 0.0
        %8348 = vmatpush1.msra.mxu0 0.0
        %8349 = vmatprep.subr.mxu0 0.0
        %8350 = vmatpush1.msra.mxu0 0.0
        %8351 = vmatprep.subr.mxu0 0.0
        %8352 = vmatpush1.msra.mxu0 0.0
        %8353 = vmatprep.mubr.f32.mxu0 0.0
        %8354 = vmatmul.mubr.f32.gmra.mrb[0].mxu0 %v8266
        %v8355 = vpop.f32.mrb[0].mxu0
        %v8356 = vadd.f32 0.0, %v8355
        %v8357 = vpop.f32.mrb[0].mxu0
        %8358 = vmatprep.mubr.f32.mxu0 0.0
        %8359 = vmatmul.mubr.f32.gmra.mrb[0].mxu0 %v8269
        %v8360 = vpop.f32.mrb[0].mxu0
        %v8361 = vadd.f32 0.0, %v8360
        %v8362 = vpop.f32.mrb[0].mxu0
        %8363 = vmatprep.mubr.f32.mxu0 0.0
        %8364 = vmatmul.mubr.f32.gmra.mrb[0].mxu0 %v8272
        %v8365 = vpop.f32.mrb[0].mxu0
        %v8366 = vadd.f32 0.0, %v8365
        %v8367 = vpop.f32.mrb[0].mxu0
        %8368 = vmatprep.mubr.f32.mxu0 0.0
        %8369 = vmatmul.mubr.f32.gmra.mrb[0].mxu0 %v8275
        %v8370 = vpop.f32.mrb[0].mxu0
        %v8371 = vadd.f32 0.0, %v8370
        %v8372 = vpop.f32.mrb[0].mxu0
        %8373 = vmatprep.mubr.f32.mxu0 0.0
        %8374 = vmatmul.mubr.f32.gmra.mrb[0].mxu0 %v8278
        %v8375 = vpop.f32.mrb[0].mxu0
        %v8376 = vadd.f32 0.0, %v8375
        %v8377 = vpop.f32.mrb[0].mxu0
        %8378 = vmatprep.mubr.f32.mxu0 0.0
        %8379 = vmatmul.mubr.f32.gmra.mrb[0].mxu0 %v8281
        %v8380 = vpop.f32.mrb[0].mxu0
        %v8381 = vadd.f32 0.0, %v8380
        %v8382 = vpop.f32.mrb[0].mxu0
        %8383 = vmatprep.mubr.f32.mxu0 0.0
        %8384 = vmatmul.mubr.f32.gmra.mrb[0].mxu0 %v8284
        %v8385 = vpop.f32.mrb[0].mxu0
        %v8386 = vadd.f32 0.0, %v8385
        %v8387 = vpop.f32.mrb[0].mxu0
        %8388 = vmatprep.mubr.f32.mxu0 0.0
        %8389 = vmatmul.mubr.f32.gmra.mrb[0].mxu0 %v8287
        %v8390 = vpop.f32.mrb[0].mxu0
        %v8391 = vadd.f32 0.0, %v8390
        %v8392 = vpop.f32.mrb[0].mxu0
        %8393 = vdwg.mxu0
        %v8394 = vadd.f32 %v8240, %v8356
        %v8395 = vadd.f32 %v8241, %v8361
        %v8396 = vadd.f32 %v8242, %v8366
        %v8397 = vadd.f32 %v8243, %v8371
        %v8398 = vadd.f32 %v8244, %v8376
        %v8399 = vadd.f32 %v8245, %v8381
        %v8400 = vadd.f32 %v8246, %v8386
        %v8401 = vadd.f32 %v8247, %v8391
        %v8402 = vld [vmem:[%s8093 + $0x2] sm:$0xff]
        %v8403 = vld [vmem:[%s8093 + $0x12] sm:$0xff]
        %v8404 = vld [vmem:[%s8093 + $0x22] sm:$0xff]
        %v8405 = vld [vmem:[%s8093 + $0x32] sm:$0xff]
        %v8406 = vld [vmem:[%s8093 + $0x42] sm:$0xff]
        %v8407 = vld [vmem:[%s8093 + $0x52] sm:$0xff]
        %v8408 = vld [vmem:[%s8093 + $0x62] sm:$0xff]
        %v8409 = vld [vmem:[%s8093 + $0x72] sm:$0xff]
        %s8410 = scalar_lea.vmem %s3, 512
        %v8411 = vld [vmem:[%s8410] sm:$0xff]
        %v8412 = vld [vmem:[%s8410 + $0x8] sm:$0xff]
        %v8413 = vld [vmem:[%s8410 + $0x10] sm:$0xff]
        %v8414 = vld [vmem:[%s8410 + $0x18] sm:$0xff]
        %v8415 = vld [vmem:[%s8410 + $0x20] sm:$0xff]
        %v8416 = vld [vmem:[%s8410 + $0x28] sm:$0xff]
        %v8417 = vld [vmem:[%s8410 + $0x30] sm:$0xff]
        %v8418 = vld [vmem:[%s8410 + $0x38] sm:$0xff]
        %v8420 = vsel %vm7028, %v8402, 0
        %v8423 = vsel %vm7028, %v8403, 0
        %v8426 = vsel %vm7028, %v8404, 0
        %v8429 = vsel %vm7028, %v8405, 0
        %v8432 = vsel %vm7028, %v8406, 0
        %v8435 = vsel %vm7028, %v8407, 0
        %v8438 = vsel %vm7028, %v8408, 0
        %v8441 = vsel %vm7028, %v8409, 0
        %8443 = vmatprep.subr.mxu0 0.0
        %8444 = vmatpush1.msra.mxu0 %v8411
        %8445 = vmatprep.subr.mxu0 0.0
        %8446 = vmatpush1.msra.mxu0 %v8412
        %8447 = vmatprep.subr.mxu0 0.0
        %8448 = vmatpush1.msra.mxu0 %v8413
        %8449 = vmatprep.subr.mxu0 0.0
        %8450 = vmatpush1.msra.mxu0 %v8414
        %8451 = vmatprep.subr.mxu0 0.0
        %8452 = vmatpush1.msra.mxu0 %v8415
        %8453 = vmatprep.subr.mxu0 0.0
        %8454 = vmatpush1.msra.mxu0 %v8416
        %8455 = vmatprep.subr.mxu0 0.0
        %8456 = vmatpush1.msra.mxu0 %v8417
        %8457 = vmatprep.subr.mxu0 0.0
        %8458 = vmatpush1.msra.mxu0 %v8418
        %8459 = vmatprep.subr.mxu0 0.0
        %8460 = vmatpush1.msra.mxu0 0.0
        %8461 = vmatprep.subr.mxu0 0.0
        %8462 = vmatpush1.msra.mxu0 0.0
        %8463 = vmatprep.subr.mxu0 0.0
        %8464 = vmatpush1.msra.mxu0 0.0
        %8465 = vmatprep.subr.mxu0 0.0
        %8466 = vmatpush1.msra.mxu0 0.0
        %8467 = vmatprep.subr.mxu0 0.0
        %8468 = vmatpush1.msra.mxu0 0.0
        %8469 = vmatprep.subr.mxu0 0.0
        %8470 = vmatpush1.msra.mxu0 0.0
        %8471 = vmatprep.subr.mxu0 0.0
        %8472 = vmatpush1.msra.mxu0 0.0
        %8473 = vmatprep.subr.mxu0 0.0
        %8474 = vmatpush1.msra.mxu0 0.0
        %8475 = vmatprep.subr.mxu0 0.0
        %8476 = vmatpush1.msra.mxu0 0.0
        %8477 = vmatprep.subr.mxu0 0.0
        %8478 = vmatpush1.msra.mxu0 0.0
        %8479 = vmatprep.subr.mxu0 0.0
        %8480 = vmatpush1.msra.mxu0 0.0
        %8481 = vmatprep.subr.mxu0 0.0
        %8482 = vmatpush1.msra.mxu0 0.0
        %8483 = vmatprep.subr.mxu0 0.0
        %8484 = vmatpush1.msra.mxu0 0.0
        %8485 = vmatprep.subr.mxu0 0.0
        %8486 = vmatpush1.msra.mxu0 0.0
        %8487 = vmatprep.subr.mxu0 0.0
        %8488 = vmatpush1.msra.mxu0 0.0
        %8489 = vmatprep.subr.mxu0 0.0
        %8490 = vmatpush1.msra.mxu0 0.0
        %8491 = vmatprep.subr.mxu0 0.0
        %8492 = vmatpush1.msra.mxu0 0.0
        %8493 = vmatprep.subr.mxu0 0.0
        %8494 = vmatpush1.msra.mxu0 0.0
        %8495 = vmatprep.subr.mxu0 0.0
        %8496 = vmatpush1.msra.mxu0 0.0
        %8497 = vmatprep.subr.mxu0 0.0
        %8498 = vmatpush1.msra.mxu0 0.0
        %8499 = vmatprep.subr.mxu0 0.0
        %8500 = vmatpush1.msra.mxu0 0.0
        %8501 = vmatprep.subr.mxu0 0.0
        %8502 = vmatpush1.msra.mxu0 0.0
        %8503 = vmatprep.subr.mxu0 0.0
        %8504 = vmatpush1.msra.mxu0 0.0
        %8505 = vmatprep.subr.mxu0 0.0
        %8506 = vmatpush1.msra.mxu0 0.0
        %8507 = vmatprep.mubr.f32.mxu0 0.0
        %8508 = vmatmul.mubr.f32.gmra.mrb[0].mxu0 %v8420
        %v8509 = vpop.f32.mrb[0].mxu0
        %v8510 = vadd.f32 0.0, %v8509
        %v8511 = vpop.f32.mrb[0].mxu0
        %8512 = vmatprep.mubr.f32.mxu0 0.0
        %8513 = vmatmul.mubr.f32.gmra.mrb[0].mxu0 %v8423
        %v8514 = vpop.f32.mrb[0].mxu0
        %v8515 = vadd.f32 0.0, %v8514
        %v8516 = vpop.f32.mrb[0].mxu0
        %8517 = vmatprep.mubr.f32.mxu0 0.0
        %8518 = vmatmul.mubr.f32.gmra.mrb[0].mxu0 %v8426
        %v8519 = vpop.f32.mrb[0].mxu0
        %v8520 = vadd.f32 0.0, %v8519
        %v8521 = vpop.f32.mrb[0].mxu0
        %8522 = vmatprep.mubr.f32.mxu0 0.0
        %8523 = vmatmul.mubr.f32.gmra.mrb[0].mxu0 %v8429
        %v8524 = vpop.f32.mrb[0].mxu0
        %v8525 = vadd.f32 0.0, %v8524
        %v8526 = vpop.f32.mrb[0].mxu0
        %8527 = vmatprep.mubr.f32.mxu0 0.0
        %8528 = vmatmul.mubr.f32.gmra.mrb[0].mxu0 %v8432
        %v8529 = vpop.f32.mrb[0].mxu0
        %v8530 = vadd.f32 0.0, %v8529
        %v8531 = vpop.f32.mrb[0].mxu0
        %8532 = vmatprep.mubr.f32.mxu0 0.0
        %8533 = vmatmul.mubr.f32.gmra.mrb[0].mxu0 %v8435
        %v8534 = vpop.f32.mrb[0].mxu0
        %v8535 = vadd.f32 0.0, %v8534
        %v8536 = vpop.f32.mrb[0].mxu0
        %8537 = vmatprep.mubr.f32.mxu0 0.0
        %8538 = vmatmul.mubr.f32.gmra.mrb[0].mxu0 %v8438
        %v8539 = vpop.f32.mrb[0].mxu0
        %v8540 = vadd.f32 0.0, %v8539
        %v8541 = vpop.f32.mrb[0].mxu0
        %8542 = vmatprep.mubr.f32.mxu0 0.0
        %8543 = vmatmul.mubr.f32.gmra.mrb[0].mxu0 %v8441
        %v8544 = vpop.f32.mrb[0].mxu0
        %v8545 = vadd.f32 0.0, %v8544
        %v8546 = vpop.f32.mrb[0].mxu0
        %8547 = vdwg.mxu0
        %v8548 = vadd.f32 %v8394, %v8510
        %v8549 = vadd.f32 %v8395, %v8515
        %v8550 = vadd.f32 %v8396, %v8520
        %v8551 = vadd.f32 %v8397, %v8525
        %v8552 = vadd.f32 %v8398, %v8530
        %v8553 = vadd.f32 %v8399, %v8535
        %v8554 = vadd.f32 %v8400, %v8540
        %v8555 = vadd.f32 %v8401, %v8545
        %v8556 = vld [vmem:[%s4] sm:$0x1]
        %v8558 = vlaneseq
        %v8559 = vshrl.u32 %v8558, 7
        %v8560 = vsub.s32 0, %v8559
        %v8561 = vrot.slane %v8556, %v8560
        %v8563 = vadd.f32 %v8548, %v8561
        %v8564 = vadd.f32 %v8549, %v8561
        %v8565 = vadd.f32 %v8550, %v8561
        %v8566 = vadd.f32 %v8551, %v8561
        %v8567 = vadd.f32 %v8552, %v8561
        %v8568 = vadd.f32 %v8553, %v8561
        %v8569 = vadd.f32 %v8554, %v8561
        %v8570 = vadd.f32 %v8555, %v8561
        %vm8571 = vcmask 261120
        %8572 = vst.msk [vmem:[#allocation5] sm:$0xff] %vm8571, %v8563
        %8573 = vst.msk [vmem:[#allocation5 + $0x8] sm:$0xff] %vm8571, %v8564
        %8574 = vst.msk [vmem:[#allocation5 + $0x10] sm:$0xff] %vm8571, %v8565
        %8575 = vst.msk [vmem:[#allocation5 + $0x18] sm:$0xff] %vm8571, %v8566
        %8576 = vst.msk [vmem:[#allocation5 + $0x20] sm:$0xff] %vm8571, %v8567
        %8577 = vst.msk [vmem:[#allocation5 + $0x28] sm:$0xff] %vm8571, %v8568
        %8578 = vst.msk [vmem:[#allocation5 + $0x30] sm:$0xff] %vm8571, %v8569
        %8579 = vst.msk [vmem:[#allocation5 + $0x38] sm:$0xff] %vm8571, %v8570
        %v8580 = vld [vmem:[#allocation5] ss:$2 sm:$0xf]
        %s8581 = scalar_lea.vmem [#allocation5], 8
        %v8582 = vld [vmem:[%s8581] ss:$2 sm:$0xf]
        %s8583 = scalar_lea.vmem [#allocation5], 16
        %v8584 = vld [vmem:[%s8583] ss:$2 sm:$0xf]
        %s8585 = scalar_lea.vmem [#allocation5], 24
        %v8586 = vld [vmem:[%s8585] ss:$2 sm:$0xf]
        %s8587 = scalar_lea.vmem [#allocation5], 32
        %v8588 = vld [vmem:[%s8587] ss:$2 sm:$0xf]
        %s8589 = scalar_lea.vmem [#allocation5], 40
        %v8590 = vld [vmem:[%s8589] ss:$2 sm:$0xf]
        %s8591 = scalar_lea.vmem [#allocation5], 48
        %v8592 = vld [vmem:[%s8591] ss:$2 sm:$0xf]
        %s8593 = scalar_lea.vmem [#allocation5], 56
        %v8594 = vld [vmem:[%s8593] ss:$2 sm:$0xf]
        %s8595 = scalar_lea.vmem [#allocation5], 1
        %v8596 = vld [vmem:[%s8595] ss:$2 sm:$0xf]
        %s8597 = scalar_lea.vmem [#allocation5], 9
        %v8598 = vld [vmem:[%s8597] ss:$2 sm:$0xf]
        %s8599 = scalar_lea.vmem [#allocation5], 17
        %v8600 = vld [vmem:[%s8599] ss:$2 sm:$0xf]
        %s8601 = scalar_lea.vmem [#allocation5], 25
        %v8602 = vld [vmem:[%s8601] ss:$2 sm:$0xf]
        %s8603 = scalar_lea.vmem [#allocation5], 33
        %v8604 = vld [vmem:[%s8603] ss:$2 sm:$0xf]
        %s8605 = scalar_lea.vmem [#allocation5], 41
        %v8606 = vld [vmem:[%s8605] ss:$2 sm:$0xf]
        %s8607 = scalar_lea.vmem [#allocation5], 49
        %v8608 = vld [vmem:[%s8607] ss:$2 sm:$0xf]
        %s8609 = scalar_lea.vmem [#allocation5], 57
        %v8610 = vld [vmem:[%s8609] ss:$2 sm:$0xf]
        %v8611 = vmax.f32 %v8580, %v8596
        %v8612 = vmax.f32 %v8582, %v8598
        %v8613 = vmax.f32 %v8584, %v8600
        %v8614 = vmax.f32 %v8586, %v8602
        %v8615 = vmax.f32 %v8588, %v8604
        %v8616 = vmax.f32 %v8590, %v8606
        %v8617 = vmax.f32 %v8592, %v8608
        %v8618 = vmax.f32 %v8594, %v8610
        %v8619 = vmax.f32 %v8611, %v8612
        %v8620 = vmax.f32 %v8613, %v8614
        %v8621 = vmax.f32 %v8615, %v8616
        %v8622 = vmax.f32 %v8617, %v8618
        %v8623 = vmax.f32 %v8619, 0.0
        %v8624 = vmax.f32 %v8620, 0.0
        %v8625 = vmax.f32 %v8621, 0.0
        %v8626 = vmax.f32 %v8622, 0.0
        %vm8627 = vcmask 259072
        %8628 = vst.msk [vmem:[#allocation6] sm:$0x3f] %vm8627, 0.0
        %8629 = vst.msk [vmem:[#allocation6 + $0x8] sm:$0x3f] %vm8627, 0.0
        %8630 = vst.msk [vmem:[#allocation6 + $0x10] sm:$0x3f] %vm8627, 0.0
        %8631 = vst.msk [vmem:[#allocation6 + $0x18] sm:$0x3f] %vm8627, 0.0
        %8632 = vst.msk [vmem:[#allocation6 + $0x20] sm:$0x3f] %vm8627, 0.0
        %8633 = vst.msk [vmem:[#allocation6 + $0x28] sm:$0x3f] %vm8627, 0.0
        %s8634 = scalar_lea.vmem [#allocation6], 8
        %vm8635 = vcmask 257024
        %8636 = vst.msk [vmem:[%s8634 + $0x1] sm:$0xf] %vm8635, %v8623
        %8637 = vst.msk [vmem:[%s8634 + $0x9] sm:$0xf] %vm8635, %v8624
        %8638 = vst.msk [vmem:[%s8634 + $0x11] sm:$0xf] %vm8635, %v8625
        %8639 = vst.msk [vmem:[%s8634 + $0x19] sm:$0xf] %vm8635, %v8626
        %v8640 = vld [vmem:[#allocation6] sm:$0xf]
        %v8641 = vld [vmem:[#allocation6 + $0x8] sm:$0xf]
        %v8642 = vld [vmem:[#allocation6 + $0x10] sm:$0xf]
        %v8643 = vld [vmem:[#allocation6 + $0x18] sm:$0xf]
        %v8644 = vld [vmem:[%s5] sm:$0xff]
        %v8645 = vld [vmem:[%s5 + $0x8] sm:$0xff]
        %v8646 = vld [vmem:[%s5 + $0x10] sm:$0xff]
        %v8647 = vld [vmem:[%s5 + $0x18] sm:$0xff]
        %v8648 = vld [vmem:[#allocation6 + $0x1] sm:$0xf]
        %v8649 = vld [vmem:[#allocation6 + $0x9] sm:$0xf]
        %v8650 = vld [vmem:[#allocation6 + $0x11] sm:$0xf]
        %v8651 = vld [vmem:[#allocation6 + $0x19] sm:$0xf]
        %s8652 = scalar_lea.vmem %s5, 32
        %v8653 = vld [vmem:[%s8652] sm:$0xff]
        %v8654 = vld [vmem:[%s8652 + $0x8] sm:$0xff]
        %v8655 = vld [vmem:[%s8652 + $0x10] sm:$0xff]
        %v8656 = vld [vmem:[%s8652 + $0x18] sm:$0xff]
        %v8661 = vcombine.low %v8648, %v8649
        %v8662 = vcombine.low %v8650, %v8651
        %v8663 = vsel %vm8571, %v8661, 0
        %v8665 = vsel %vm8571, %v8662, 0
        %8667 = vmatprep.subr.mxu0 0.0
        %8668 = vmatpush1.msra.mxu0 %v8653
        %8669 = vmatprep.subr.mxu0 0.0
        %8670 = vmatpush1.msra.mxu0 %v8654
        %8671 = vmatprep.subr.mxu0 0.0
        %8672 = vmatpush1.msra.mxu0 %v8655
        %8673 = vmatprep.subr.mxu0 0.0
        %8674 = vmatpush1.msra.mxu0 %v8656
        %8675 = vmatprep.subr.mxu0 0.0
        %8676 = vmatpush1.msra.mxu0 0.0
        %8677 = vmatprep.subr.mxu0 0.0
        %8678 = vmatpush1.msra.mxu0 0.0
        %8679 = vmatprep.subr.mxu0 0.0
        %8680 = vmatpush1.msra.mxu0 0.0
        %8681 = vmatprep.subr.mxu0 0.0
        %8682 = vmatpush1.msra.mxu0 0.0
        %8683 = vmatprep.subr.mxu0 0.0
        %8684 = vmatpush1.msra.mxu0 0.0
        %8685 = vmatprep.subr.mxu0 0.0
        %8686 = vmatpush1.msra.mxu0 0.0
        %8687 = vmatprep.subr.mxu0 0.0
        %8688 = vmatpush1.msra.mxu0 0.0
        %8689 = vmatprep.subr.mxu0 0.0
        %8690 = vmatpush1.msra.mxu0 0.0
        %8691 = vmatprep.subr.mxu0 0.0
        %8692 = vmatpush1.msra.mxu0 0.0
        %8693 = vmatprep.subr.mxu0 0.0
        %8694 = vmatpush1.msra.mxu0 0.0
        %8695 = vmatprep.subr.mxu0 0.0
        %8696 = vmatpush1.msra.mxu0 0.0
        %8697 = vmatprep.subr.mxu0 0.0
        %8698 = vmatpush1.msra.mxu0 0.0
        %8699 = vmatprep.subr.mxu0 0.0
        %8700 = vmatpush1.msra.mxu0 0.0
        %8701 = vmatprep.subr.mxu0 0.0
        %8702 = vmatpush1.msra.mxu0 0.0
        %8703 = vmatprep.subr.mxu0 0.0
        %8704 = vmatpush1.msra.mxu0 0.0
        %8705 = vmatprep.subr.mxu0 0.0
        %8706 = vmatpush1.msra.mxu0 0.0
        %8707 = vmatprep.subr.mxu0 0.0
        %8708 = vmatpush1.msra.mxu0 0.0
        %8709 = vmatprep.subr.mxu0 0.0
        %8710 = vmatpush1.msra.mxu0 0.0
        %8711 = vmatprep.subr.mxu0 0.0
        %8712 = vmatpush1.msra.mxu0 0.0
        %8713 = vmatprep.subr.mxu0 0.0
        %8714 = vmatpush1.msra.mxu0 0.0
        %8715 = vmatprep.subr.mxu0 0.0
        %8716 = vmatpush1.msra.mxu0 0.0
        %8717 = vmatprep.subr.mxu0 0.0
        %8718 = vmatpush1.msra.mxu0 0.0
        %8719 = vmatprep.subr.mxu0 0.0
        %8720 = vmatpush1.msra.mxu0 0.0
        %8721 = vmatprep.subr.mxu0 0.0
        %8722 = vmatpush1.msra.mxu0 0.0
        %8723 = vmatprep.subr.mxu0 0.0
        %8724 = vmatpush1.msra.mxu0 0.0
        %8725 = vmatprep.subr.mxu0 0.0
        %8726 = vmatpush1.msra.mxu0 0.0
        %8727 = vmatprep.subr.mxu0 0.0
        %8728 = vmatpush1.msra.mxu0 0.0
        %8729 = vmatprep.subr.mxu0 0.0
        %8730 = vmatpush1.msra.mxu0 0.0
        %8731 = vmatprep.mubr.f32.mxu0 0.0
        %8732 = vmatmul.mubr.f32.gmra.mrb[0].mxu0 %v8663
        %v8733 = vpop.f32.mrb[0].mxu0
        %v8734 = vadd.f32 0.0, %v8733
        %v8735 = vpop.f32.mrb[0].mxu0
        %8736 = vmatprep.mubr.f32.mxu0 0.0
        %8737 = vmatmul.mubr.f32.gmra.mrb[0].mxu0 %v8665
        %v8738 = vpop.f32.mrb[0].mxu0
        %v8739 = vadd.f32 0.0, %v8738
        %v8740 = vpop.f32.mrb[0].mxu0
        %8741 = vdwg.mxu0
        %v8746 = vcombine.low %v8640, %v8641
        %v8747 = vcombine.low %v8642, %v8643
        %v8748 = vsel %vm8571, %v8746, 0
        %v8750 = vsel %vm8571, %v8747, 0
        %8752 = vmatprep.subr.mxu0 0.0
        %8753 = vmatpush1.msra.mxu0 %v8644
        %8754 = vmatprep.subr.mxu0 0.0
        %8755 = vmatpush1.msra.mxu0 %v8645
        %8756 = vmatprep.subr.mxu0 0.0
        %8757 = vmatpush1.msra.mxu0 %v8646
        %8758 = vmatprep.subr.mxu0 0.0
        %8759 = vmatpush1.msra.mxu0 %v8647
        %8760 = vmatprep.subr.mxu0 0.0
        %8761 = vmatpush1.msra.mxu0 0.0
        %8762 = vmatprep.subr.mxu0 0.0
        %8763 = vmatpush1.msra.mxu0 0.0
        %8764 = vmatprep.subr.mxu0 0.0
        %8765 = vmatpush1.msra.mxu0 0.0
        %8766 = vmatprep.subr.mxu0 0.0
        %8767 = vmatpush1.msra.mxu0 0.0
        %8768 = vmatprep.subr.mxu0 0.0
        %8769 = vmatpush1.msra.mxu0 0.0
        %8770 = vmatprep.subr.mxu0 0.0
        %8771 = vmatpush1.msra.mxu0 0.0
        %8772 = vmatprep.subr.mxu0 0.0
        %8773 = vmatpush1.msra.mxu0 0.0
        %8774 = vmatprep.subr.mxu0 0.0
        %8775 = vmatpush1.msra.mxu0 0.0
        %8776 = vmatprep.subr.mxu0 0.0
        %8777 = vmatpush1.msra.mxu0 0.0
        %8778 = vmatprep.subr.mxu0 0.0
        %8779 = vmatpush1.msra.mxu0 0.0
        %8780 = vmatprep.subr.mxu0 0.0
        %8781 = vmatpush1.msra.mxu0 0.0
        %8782 = vmatprep.subr.mxu0 0.0
        %8783 = vmatpush1.msra.mxu0 0.0
        %8784 = vmatprep.subr.mxu0 0.0
        %8785 = vmatpush1.msra.mxu0 0.0
        %8786 = vmatprep.subr.mxu0 0.0
        %8787 = vmatpush1.msra.mxu0 0.0
        %8788 = vmatprep.subr.mxu0 0.0
        %8789 = vmatpush1.msra.mxu0 0.0
        %8790 = vmatprep.subr.mxu0 0.0
        %8791 = vmatpush1.msra.mxu0 0.0
        %8792 = vmatprep.subr.mxu0 0.0
        %8793 = vmatpush1.msra.mxu0 0.0
        %8794 = vmatprep.subr.mxu0 0.0
        %8795 = vmatpush1.msra.mxu0 0.0
        %8796 = vmatprep.subr.mxu0 0.0
        %8797 = vmatpush1.msra.mxu0 0.0
        %8798 = vmatprep.subr.mxu0 0.0
        %8799 = vmatpush1.msra.mxu0 0.0
        %8800 = vmatprep.subr.mxu0 0.0
        %8801 = vmatpush1.msra.mxu0 0.0
        %8802 = vmatprep.subr.mxu0 0.0
        %8803 = vmatpush1.msra.mxu0 0.0
        %8804 = vmatprep.subr.mxu0 0.0
        %8805 = vmatpush1.msra.mxu0 0.0
        %8806 = vmatprep.subr.mxu0 0.0
        %8807 = vmatpush1.msra.mxu0 0.0
        %8808 = vmatprep.subr.mxu0 0.0
        %8809 = vmatpush1.msra.mxu0 0.0
        %8810 = vmatprep.subr.mxu0 0.0
        %8811 = vmatpush1.msra.mxu0 0.0
        %8812 = vmatprep.subr.mxu0 0.0
        %8813 = vmatpush1.msra.mxu0 0.0
        %8814 = vmatprep.subr.mxu0 0.0
        %8815 = vmatpush1.msra.mxu0 0.0
        %8816 = vmatprep.mubr.f32.mxu0 0.0
        %8817 = vmatmul.mubr.f32.gmra.mrb[0].mxu0 %v8748
        %v8818 = vpop.f32.mrb[0].mxu0
        %v8819 = vadd.f32 %v8734, %v8818
        %v8820 = vpop.f32.mrb[0].mxu0
        %8821 = vmatprep.mubr.f32.mxu0 0.0
        %8822 = vmatmul.mubr.f32.gmra.mrb[0].mxu0 %v8750
        %v8823 = vpop.f32.mrb[0].mxu0
        %v8824 = vadd.f32 %v8739, %v8823
        %v8825 = vpop.f32.mrb[0].mxu0
        %8826 = vdwg.mxu0
        %v8827 = vld [vmem:[#allocation6 + $0x2] sm:$0xf]
        %v8828 = vld [vmem:[#allocation6 + $0xa] sm:$0xf]
        %v8829 = vld [vmem:[#allocation6 + $0x12] sm:$0xf]
        %v8830 = vld [vmem:[#allocation6 + $0x1a] sm:$0xf]
        %s8831 = scalar_lea.vmem %s5, 64
        %v8832 = vld [vmem:[%s8831] sm:$0xff]
        %v8833 = vld [vmem:[%s8831 + $0x8] sm:$0xff]
        %v8834 = vld [vmem:[%s8831 + $0x10] sm:$0xff]
        %v8835 = vld [vmem:[%s8831 + $0x18] sm:$0xff]
        %v8840 = vcombine.low %v8827, %v8828
        %v8841 = vcombine.low %v8829, %v8830
        %v8842 = vsel %vm8571, %v8840, 0
        %v8844 = vsel %vm8571, %v8841, 0
        %8846 = vmatprep.subr.mxu0 0.0
        %8847 = vmatpush1.msra.mxu0 %v8832
        %8848 = vmatprep.subr.mxu0 0.0
        %8849 = vmatpush1.msra.mxu0 %v8833
        %8850 = vmatprep.subr.mxu0 0.0
        %8851 = vmatpush1.msra.mxu0 %v8834
        %8852 = vmatprep.subr.mxu0 0.0
        %8853 = vmatpush1.msra.mxu0 %v8835
        %8854 = vmatprep.subr.mxu0 0.0
        %8855 = vmatpush1.msra.mxu0 0.0
        %8856 = vmatprep.subr.mxu0 0.0
        %8857 = vmatpush1.msra.mxu0 0.0
        %8858 = vmatprep.subr.mxu0 0.0
        %8859 = vmatpush1.msra.mxu0 0.0
        %8860 = vmatprep.subr.mxu0 0.0
        %8861 = vmatpush1.msra.mxu0 0.0
        %8862 = vmatprep.subr.mxu0 0.0
        %8863 = vmatpush1.msra.mxu0 0.0
        %8864 = vmatprep.subr.mxu0 0.0
        %8865 = vmatpush1.msra.mxu0 0.0
        %8866 = vmatprep.subr.mxu0 0.0
        %8867 = vmatpush1.msra.mxu0 0.0
        %8868 = vmatprep.subr.mxu0 0.0
        %8869 = vmatpush1.msra.mxu0 0.0
        %8870 = vmatprep.subr.mxu0 0.0
        %8871 = vmatpush1.msra.mxu0 0.0
        %8872 = vmatprep.subr.mxu0 0.0
        %8873 = vmatpush1.msra.mxu0 0.0
        %8874 = vmatprep.subr.mxu0 0.0
        %8875 = vmatpush1.msra.mxu0 0.0
        %8876 = vmatprep.subr.mxu0 0.0
        %8877 = vmatpush1.msra.mxu0 0.0
        %8878 = vmatprep.subr.mxu0 0.0
        %8879 = vmatpush1.msra.mxu0 0.0
        %8880 = vmatprep.subr.mxu0 0.0
        %8881 = vmatpush1.msra.mxu0 0.0
        %8882 = vmatprep.subr.mxu0 0.0
        %8883 = vmatpush1.msra.mxu0 0.0
        %8884 = vmatprep.subr.mxu0 0.0
        %8885 = vmatpush1.msra.mxu0 0.0
        %8886 = vmatprep.subr.mxu0 0.0
        %8887 = vmatpush1.msra.mxu0 0.0
        %8888 = vmatprep.subr.mxu0 0.0
        %8889 = vmatpush1.msra.mxu0 0.0
        %8890 = vmatprep.subr.mxu0 0.0
        %8891 = vmatpush1.msra.mxu0 0.0
        %8892 = vmatprep.subr.mxu0 0.0
        %8893 = vmatpush1.msra.mxu0 0.0
        %8894 = vmatprep.subr.mxu0 0.0
        %8895 = vmatpush1.msra.mxu0 0.0
        %8896 = vmatprep.subr.mxu0 0.0
        %8897 = vmatpush1.msra.mxu0 0.0
        %8898 = vmatprep.subr.mxu0 0.0
        %8899 = vmatpush1.msra.mxu0 0.0
        %8900 = vmatprep.subr.mxu0 0.0
        %8901 = vmatpush1.msra.mxu0 0.0
        %8902 = vmatprep.subr.mxu0 0.0
        %8903 = vmatpush1.msra.mxu0 0.0
        %8904 = vmatprep.subr.mxu0 0.0
        %8905 = vmatpush1.msra.mxu0 0.0
        %8906 = vmatprep.subr.mxu0 0.0
        %8907 = vmatpush1.msra.mxu0 0.0
        %8908 = vmatprep.subr.mxu0 0.0
        %8909 = vmatpush1.msra.mxu0 0.0
        %8910 = vmatprep.mubr.f32.mxu0 0.0
        %8911 = vmatmul.mubr.f32.gmra.mrb[0].mxu0 %v8842
        %v8912 = vpop.f32.mrb[0].mxu0
        %v8913 = vadd.f32 0.0, %v8912
        %v8914 = vpop.f32.mrb[0].mxu0
        %8915 = vmatprep.mubr.f32.mxu0 0.0
        %8916 = vmatmul.mubr.f32.gmra.mrb[0].mxu0 %v8844
        %v8917 = vpop.f32.mrb[0].mxu0
        %v8918 = vadd.f32 0.0, %v8917
        %v8919 = vpop.f32.mrb[0].mxu0
        %8920 = vdwg.mxu0
        %v8921 = vadd.f32 %v8819, %v8913
        %v8922 = vadd.f32 %v8824, %v8918
        %v8923 = vld [vmem:[%s8634] sm:$0xf]
        %v8924 = vld [vmem:[%s8634 + $0x8] sm:$0xf]
        %v8925 = vld [vmem:[%s8634 + $0x10] sm:$0xf]
        %v8926 = vld [vmem:[%s8634 + $0x18] sm:$0xf]
        %s8927 = scalar_lea.vmem %s5, 96
        %v8928 = vld [vmem:[%s8927] sm:$0xff]
        %v8929 = vld [vmem:[%s8927 + $0x8] sm:$0xff]
        %v8930 = vld [vmem:[%s8927 + $0x10] sm:$0xff]
        %v8931 = vld [vmem:[%s8927 + $0x18] sm:$0xff]
        %v8936 = vcombine.low %v8923, %v8924
        %v8937 = vcombine.low %v8925, %v8926
        %v8938 = vsel %vm8571, %v8936, 0
        %v8940 = vsel %vm8571, %v8937, 0
        %8942 = vmatprep.subr.mxu0 0.0
        %8943 = vmatpush1.msra.mxu0 %v8928
        %8944 = vmatprep.subr.mxu0 0.0
        %8945 = vmatpush1.msra.mxu0 %v8929
        %8946 = vmatprep.subr.mxu0 0.0
        %8947 = vmatpush1.msra.mxu0 %v8930
        %8948 = vmatprep.subr.mxu0 0.0
        %8949 = vmatpush1.msra.mxu0 %v8931
        %8950 = vmatprep.subr.mxu0 0.0
        %8951 = vmatpush1.msra.mxu0 0.0
        %8952 = vmatprep.subr.mxu0 0.0
        %8953 = vmatpush1.msra.mxu0 0.0
        %8954 = vmatprep.subr.mxu0 0.0
        %8955 = vmatpush1.msra.mxu0 0.0
        %8956 = vmatprep.subr.mxu0 0.0
        %8957 = vmatpush1.msra.mxu0 0.0
        %8958 = vmatprep.subr.mxu0 0.0
        %8959 = vmatpush1.msra.mxu0 0.0
        %8960 = vmatprep.subr.mxu0 0.0
        %8961 = vmatpush1.msra.mxu0 0.0
        %8962 = vmatprep.subr.mxu0 0.0
        %8963 = vmatpush1.msra.mxu0 0.0
        %8964 = vmatprep.subr.mxu0 0.0
        %8965 = vmatpush1.msra.mxu0 0.0
        %8966 = vmatprep.subr.mxu0 0.0
        %8967 = vmatpush1.msra.mxu0 0.0
        %8968 = vmatprep.subr.mxu0 0.0
        %8969 = vmatpush1.msra.mxu0 0.0
        %8970 = vmatprep.subr.mxu0 0.0
        %8971 = vmatpush1.msra.mxu0 0.0
        %8972 = vmatprep.subr.mxu0 0.0
        %8973 = vmatpush1.msra.mxu0 0.0
        %8974 = vmatprep.subr.mxu0 0.0
        %8975 = vmatpush1.msra.mxu0 0.0
        %8976 = vmatprep.subr.mxu0 0.0
        %8977 = vmatpush1.msra.mxu0 0.0
        %8978 = vmatprep.subr.mxu0 0.0
        %8979 = vmatpush1.msra.mxu0 0.0
        %8980 = vmatprep.subr.mxu0 0.0
        %8981 = vmatpush1.msra.mxu0 0.0
        %8982 = vmatprep.subr.mxu0 0.0
        %8983 = vmatpush1.msra.mxu0 0.0
        %8984 = vmatprep.subr.mxu0 0.0
        %8985 = vmatpush1.msra.mxu0 0.0
        %8986 = vmatprep.subr.mxu0 0.0
        %8987 = vmatpush1.msra.mxu0 0.0
        %8988 = vmatprep.subr.mxu0 0.0
        %8989 = vmatpush1.msra.mxu0 0.0
        %8990 = vmatprep.subr.mxu0 0.0
        %8991 = vmatpush1.msra.mxu0 0.0
        %8992 = vmatprep.subr.mxu0 0.0
        %8993 = vmatpush1.msra.mxu0 0.0
        %8994 = vmatprep.subr.mxu0 0.0
        %8995 = vmatpush1.msra.mxu0 0.0
        %8996 = vmatprep.subr.mxu0 0.0
        %8997 = vmatpush1.msra.mxu0 0.0
        %8998 = vmatprep.subr.mxu0 0.0
        %8999 = vmatpush1.msra.mxu0 0.0
        %9000 = vmatprep.subr.mxu0 0.0
        %9001 = vmatpush1.msra.mxu0 0.0
        %9002 = vmatprep.subr.mxu0 0.0
        %9003 = vmatpush1.msra.mxu0 0.0
        %9004 = vmatprep.subr.mxu0 0.0
        %9005 = vmatpush1.msra.mxu0 0.0
        %9006 = vmatprep.mubr.f32.mxu0 0.0
        %9007 = vmatmul.mubr.f32.gmra.mrb[0].mxu0 %v8938
        %v9008 = vpop.f32.mrb[0].mxu0
        %v9009 = vadd.f32 0.0, %v9008
        %v9010 = vpop.f32.mrb[0].mxu0
        %9011 = vmatprep.mubr.f32.mxu0 0.0
        %9012 = vmatmul.mubr.f32.gmra.mrb[0].mxu0 %v8940
        %v9013 = vpop.f32.mrb[0].mxu0
        %v9014 = vadd.f32 0.0, %v9013
        %v9015 = vpop.f32.mrb[0].mxu0
        %9016 = vdwg.mxu0
        %v9017 = vadd.f32 %v8921, %v9009
        %v9018 = vadd.f32 %v8922, %v9014
        %v9019 = vld [vmem:[%s8634 + $0x1] sm:$0xf]
        %v9020 = vld [vmem:[%s8634 + $0x9] sm:$0xf]
        %v9021 = vld [vmem:[%s8634 + $0x11] sm:$0xf]
        %v9022 = vld [vmem:[%s8634 + $0x19] sm:$0xf]
        %s9023 = scalar_lea.vmem %s5, 128
        %v9024 = vld [vmem:[%s9023] sm:$0xff]
        %v9025 = vld [vmem:[%s9023 + $0x8] sm:$0xff]
        %v9026 = vld [vmem:[%s9023 + $0x10] sm:$0xff]
        %v9027 = vld [vmem:[%s9023 + $0x18] sm:$0xff]
        %v9032 = vcombine.low %v9019, %v9020
        %v9033 = vcombine.low %v9021, %v9022
        %v9034 = vsel %vm8571, %v9032, 0
        %v9036 = vsel %vm8571, %v9033, 0
        %9038 = vmatprep.subr.mxu0 0.0
        %9039 = vmatpush1.msra.mxu0 %v9024
        %9040 = vmatprep.subr.mxu0 0.0
        %9041 = vmatpush1.msra.mxu0 %v9025
        %9042 = vmatprep.subr.mxu0 0.0
        %9043 = vmatpush1.msra.mxu0 %v9026
        %9044 = vmatprep.subr.mxu0 0.0
        %9045 = vmatpush1.msra.mxu0 %v9027
        %9046 = vmatprep.subr.mxu0 0.0
        %9047 = vmatpush1.msra.mxu0 0.0
        %9048 = vmatprep.subr.mxu0 0.0
        %9049 = vmatpush1.msra.mxu0 0.0
        %9050 = vmatprep.subr.mxu0 0.0
        %9051 = vmatpush1.msra.mxu0 0.0
        %9052 = vmatprep.subr.mxu0 0.0
        %9053 = vmatpush1.msra.mxu0 0.0
        %9054 = vmatprep.subr.mxu0 0.0
        %9055 = vmatpush1.msra.mxu0 0.0
        %9056 = vmatprep.subr.mxu0 0.0
        %9057 = vmatpush1.msra.mxu0 0.0
        %9058 = vmatprep.subr.mxu0 0.0
        %9059 = vmatpush1.msra.mxu0 0.0
        %9060 = vmatprep.subr.mxu0 0.0
        %9061 = vmatpush1.msra.mxu0 0.0
        %9062 = vmatprep.subr.mxu0 0.0
        %9063 = vmatpush1.msra.mxu0 0.0
        %9064 = vmatprep.subr.mxu0 0.0
        %9065 = vmatpush1.msra.mxu0 0.0
        %9066 = vmatprep.subr.mxu0 0.0
        %9067 = vmatpush1.msra.mxu0 0.0
        %9068 = vmatprep.subr.mxu0 0.0
        %9069 = vmatpush1.msra.mxu0 0.0
        %9070 = vmatprep.subr.mxu0 0.0
        %9071 = vmatpush1.msra.mxu0 0.0
        %9072 = vmatprep.subr.mxu0 0.0
        %9073 = vmatpush1.msra.mxu0 0.0
        %9074 = vmatprep.subr.mxu0 0.0
        %9075 = vmatpush1.msra.mxu0 0.0
        %9076 = vmatprep.subr.mxu0 0.0
        %9077 = vmatpush1.msra.mxu0 0.0
        %9078 = vmatprep.subr.mxu0 0.0
        %9079 = vmatpush1.msra.mxu0 0.0
        %9080 = vmatprep.subr.mxu0 0.0
        %9081 = vmatpush1.msra.mxu0 0.0
        %9082 = vmatprep.subr.mxu0 0.0
        %9083 = vmatpush1.msra.mxu0 0.0
        %9084 = vmatprep.subr.mxu0 0.0
        %9085 = vmatpush1.msra.mxu0 0.0
        %9086 = vmatprep.subr.mxu0 0.0
        %9087 = vmatpush1.msra.mxu0 0.0
        %9088 = vmatprep.subr.mxu0 0.0
        %9089 = vmatpush1.msra.mxu0 0.0
        %9090 = vmatprep.subr.mxu0 0.0
        %9091 = vmatpush1.msra.mxu0 0.0
        %9092 = vmatprep.subr.mxu0 0.0
        %9093 = vmatpush1.msra.mxu0 0.0
        %9094 = vmatprep.subr.mxu0 0.0
        %9095 = vmatpush1.msra.mxu0 0.0
        %9096 = vmatprep.subr.mxu0 0.0
        %9097 = vmatpush1.msra.mxu0 0.0
        %9098 = vmatprep.subr.mxu0 0.0
        %9099 = vmatpush1.msra.mxu0 0.0
        %9100 = vmatprep.subr.mxu0 0.0
        %9101 = vmatpush1.msra.mxu0 0.0
        %9102 = vmatprep.mubr.f32.mxu0 0.0
        %9103 = vmatmul.mubr.f32.gmra.mrb[0].mxu0 %v9034
        %v9104 = vpop.f32.mrb[0].mxu0
        %v9105 = vadd.f32 0.0, %v9104
        %v9106 = vpop.f32.mrb[0].mxu0
        %9107 = vmatprep.mubr.f32.mxu0 0.0
        %9108 = vmatmul.mubr.f32.gmra.mrb[0].mxu0 %v9036
        %v9109 = vpop.f32.mrb[0].mxu0
        %v9110 = vadd.f32 0.0, %v9109
        %v9111 = vpop.f32.mrb[0].mxu0
        %9112 = vdwg.mxu0
        %v9113 = vadd.f32 %v9017, %v9105
        %v9114 = vadd.f32 %v9018, %v9110
        %v9115 = vld [vmem:[%s8634 + $0x2] sm:$0xf]
        %v9116 = vld [vmem:[%s8634 + $0xa] sm:$0xf]
        %v9117 = vld [vmem:[%s8634 + $0x12] sm:$0xf]
        %v9118 = vld [vmem:[%s8634 + $0x1a] sm:$0xf]
        %s9119 = scalar_lea.vmem %s5, 160
        %v9120 = vld [vmem:[%s9119] sm:$0xff]
        %v9121 = vld [vmem:[%s9119 + $0x8] sm:$0xff]
        %v9122 = vld [vmem:[%s9119 + $0x10] sm:$0xff]
        %v9123 = vld [vmem:[%s9119 + $0x18] sm:$0xff]
        %v9128 = vcombine.low %v9115, %v9116
        %v9129 = vcombine.low %v9117, %v9118
        %v9130 = vsel %vm8571, %v9128, 0
        %v9132 = vsel %vm8571, %v9129, 0
        %9134 = vmatprep.subr.mxu0 0.0
        %9135 = vmatpush1.msra.mxu0 %v9120
        %9136 = vmatprep.subr.mxu0 0.0
        %9137 = vmatpush1.msra.mxu0 %v9121
        %9138 = vmatprep.subr.mxu0 0.0
        %9139 = vmatpush1.msra.mxu0 %v9122
        %9140 = vmatprep.subr.mxu0 0.0
        %9141 = vmatpush1.msra.mxu0 %v9123
        %9142 = vmatprep.subr.mxu0 0.0
        %9143 = vmatpush1.msra.mxu0 0.0
        %9144 = vmatprep.subr.mxu0 0.0
        %9145 = vmatpush1.msra.mxu0 0.0
        %9146 = vmatprep.subr.mxu0 0.0
        %9147 = vmatpush1.msra.mxu0 0.0
        %9148 = vmatprep.subr.mxu0 0.0
        %9149 = vmatpush1.msra.mxu0 0.0
        %9150 = vmatprep.subr.mxu0 0.0
        %9151 = vmatpush1.msra.mxu0 0.0
        %9152 = vmatprep.subr.mxu0 0.0
        %9153 = vmatpush1.msra.mxu0 0.0
        %9154 = vmatprep.subr.mxu0 0.0
        %9155 = vmatpush1.msra.mxu0 0.0
        %9156 = vmatprep.subr.mxu0 0.0
        %9157 = vmatpush1.msra.mxu0 0.0
        %9158 = vmatprep.subr.mxu0 0.0
        %9159 = vmatpush1.msra.mxu0 0.0
        %9160 = vmatprep.subr.mxu0 0.0
        %9161 = vmatpush1.msra.mxu0 0.0
        %9162 = vmatprep.subr.mxu0 0.0
        %9163 = vmatpush1.msra.mxu0 0.0
        %9164 = vmatprep.subr.mxu0 0.0
        %9165 = vmatpush1.msra.mxu0 0.0
        %9166 = vmatprep.subr.mxu0 0.0
        %9167 = vmatpush1.msra.mxu0 0.0
        %9168 = vmatprep.subr.mxu0 0.0
        %9169 = vmatpush1.msra.mxu0 0.0
        %9170 = vmatprep.subr.mxu0 0.0
        %9171 = vmatpush1.msra.mxu0 0.0
        %9172 = vmatprep.subr.mxu0 0.0
        %9173 = vmatpush1.msra.mxu0 0.0
        %9174 = vmatprep.subr.mxu0 0.0
        %9175 = vmatpush1.msra.mxu0 0.0
        %9176 = vmatprep.subr.mxu0 0.0
        %9177 = vmatpush1.msra.mxu0 0.0
        %9178 = vmatprep.subr.mxu0 0.0
        %9179 = vmatpush1.msra.mxu0 0.0
        %9180 = vmatprep.subr.mxu0 0.0
        %9181 = vmatpush1.msra.mxu0 0.0
        %9182 = vmatprep.subr.mxu0 0.0
        %9183 = vmatpush1.msra.mxu0 0.0
        %9184 = vmatprep.subr.mxu0 0.0
        %9185 = vmatpush1.msra.mxu0 0.0
        %9186 = vmatprep.subr.mxu0 0.0
        %9187 = vmatpush1.msra.mxu0 0.0
        %9188 = vmatprep.subr.mxu0 0.0
        %9189 = vmatpush1.msra.mxu0 0.0
        %9190 = vmatprep.subr.mxu0 0.0
        %9191 = vmatpush1.msra.mxu0 0.0
        %9192 = vmatprep.subr.mxu0 0.0
        %9193 = vmatpush1.msra.mxu0 0.0
        %9194 = vmatprep.subr.mxu0 0.0
        %9195 = vmatpush1.msra.mxu0 0.0
        %9196 = vmatprep.subr.mxu0 0.0
        %9197 = vmatpush1.msra.mxu0 0.0
        %9198 = vmatprep.mubr.f32.mxu0 0.0
        %9199 = vmatmul.mubr.f32.gmra.mrb[0].mxu0 %v9130
        %v9200 = vpop.f32.mrb[0].mxu0
        %v9201 = vadd.f32 0.0, %v9200
        %v9202 = vpop.f32.mrb[0].mxu0
        %9203 = vmatprep.mubr.f32.mxu0 0.0
        %9204 = vmatmul.mubr.f32.gmra.mrb[0].mxu0 %v9132
        %v9205 = vpop.f32.mrb[0].mxu0
        %v9206 = vadd.f32 0.0, %v9205
        %v9207 = vpop.f32.mrb[0].mxu0
        %9208 = vdwg.mxu0
        %v9209 = vadd.f32 %v9113, %v9201
        %v9210 = vadd.f32 %v9114, %v9206
        %s9211 = scalar_lea.vmem [#allocation6], 16
        %v9212 = vld [vmem:[%s9211] sm:$0xf]
        %v9213 = vld [vmem:[%s9211 + $0x8] sm:$0xf]
        %v9214 = vld [vmem:[%s9211 + $0x10] sm:$0xf]
        %v9215 = vld [vmem:[%s9211 + $0x18] sm:$0xf]
        %s9216 = scalar_lea.vmem %s5, 192
        %v9217 = vld [vmem:[%s9216] sm:$0xff]
        %v9218 = vld [vmem:[%s9216 + $0x8] sm:$0xff]
        %v9219 = vld [vmem:[%s9216 + $0x10] sm:$0xff]
        %v9220 = vld [vmem:[%s9216 + $0x18] sm:$0xff]
        %v9225 = vcombine.low %v9212, %v9213
        %v9226 = vcombine.low %v9214, %v9215
        %v9227 = vsel %vm8571, %v9225, 0
        %v9229 = vsel %vm8571, %v9226, 0
        %9231 = vmatprep.subr.mxu0 0.0
        %9232 = vmatpush1.msra.mxu0 %v9217
        %9233 = vmatprep.subr.mxu0 0.0
        %9234 = vmatpush1.msra.mxu0 %v9218
        %9235 = vmatprep.subr.mxu0 0.0
        %9236 = vmatpush1.msra.mxu0 %v9219
        %9237 = vmatprep.subr.mxu0 0.0
        %9238 = vmatpush1.msra.mxu0 %v9220
        %9239 = vmatprep.subr.mxu0 0.0
        %9240 = vmatpush1.msra.mxu0 0.0
        %9241 = vmatprep.subr.mxu0 0.0
        %9242 = vmatpush1.msra.mxu0 0.0
        %9243 = vmatprep.subr.mxu0 0.0
        %9244 = vmatpush1.msra.mxu0 0.0
        %9245 = vmatprep.subr.mxu0 0.0
        %9246 = vmatpush1.msra.mxu0 0.0
        %9247 = vmatprep.subr.mxu0 0.0
        %9248 = vmatpush1.msra.mxu0 0.0
        %9249 = vmatprep.subr.mxu0 0.0
        %9250 = vmatpush1.msra.mxu0 0.0
        %9251 = vmatprep.subr.mxu0 0.0
        %9252 = vmatpush1.msra.mxu0 0.0
        %9253 = vmatprep.subr.mxu0 0.0
        %9254 = vmatpush1.msra.mxu0 0.0
        %9255 = vmatprep.subr.mxu0 0.0
        %9256 = vmatpush1.msra.mxu0 0.0
        %9257 = vmatprep.subr.mxu0 0.0
        %9258 = vmatpush1.msra.mxu0 0.0
        %9259 = vmatprep.subr.mxu0 0.0
        %9260 = vmatpush1.msra.mxu0 0.0
        %9261 = vmatprep.subr.mxu0 0.0
        %9262 = vmatpush1.msra.mxu0 0.0
        %9263 = vmatprep.subr.mxu0 0.0
        %9264 = vmatpush1.msra.mxu0 0.0
        %9265 = vmatprep.subr.mxu0 0.0
        %9266 = vmatpush1.msra.mxu0 0.0
        %9267 = vmatprep.subr.mxu0 0.0
        %9268 = vmatpush1.msra.mxu0 0.0
        %9269 = vmatprep.subr.mxu0 0.0
        %9270 = vmatpush1.msra.mxu0 0.0
        %9271 = vmatprep.subr.mxu0 0.0
        %9272 = vmatpush1.msra.mxu0 0.0
        %9273 = vmatprep.subr.mxu0 0.0
        %9274 = vmatpush1.msra.mxu0 0.0
        %9275 = vmatprep.subr.mxu0 0.0
        %9276 = vmatpush1.msra.mxu0 0.0
        %9277 = vmatprep.subr.mxu0 0.0
        %9278 = vmatpush1.msra.mxu0 0.0
        %9279 = vmatprep.subr.mxu0 0.0
        %9280 = vmatpush1.msra.mxu0 0.0
        %9281 = vmatprep.subr.mxu0 0.0
        %9282 = vmatpush1.msra.mxu0 0.0
        %9283 = vmatprep.subr.mxu0 0.0
        %9284 = vmatpush1.msra.mxu0 0.0
        %9285 = vmatprep.subr.mxu0 0.0
        %9286 = vmatpush1.msra.mxu0 0.0
        %9287 = vmatprep.subr.mxu0 0.0
        %9288 = vmatpush1.msra.mxu0 0.0
        %9289 = vmatprep.subr.mxu0 0.0
        %9290 = vmatpush1.msra.mxu0 0.0
        %9291 = vmatprep.subr.mxu0 0.0
        %9292 = vmatpush1.msra.mxu0 0.0
        %9293 = vmatprep.subr.mxu0 0.0
        %9294 = vmatpush1.msra.mxu0 0.0
        %9295 = vmatprep.mubr.f32.mxu0 0.0
        %9296 = vmatmul.mubr.f32.gmra.mrb[0].mxu0 %v9227
        %v9297 = vpop.f32.mrb[0].mxu0
        %v9298 = vadd.f32 0.0, %v9297
        %v9299 = vpop.f32.mrb[0].mxu0
        %9300 = vmatprep.mubr.f32.mxu0 0.0
        %9301 = vmatmul.mubr.f32.gmra.mrb[0].mxu0 %v9229
        %v9302 = vpop.f32.mrb[0].mxu0
        %v9303 = vadd.f32 0.0, %v9302
        %v9304 = vpop.f32.mrb[0].mxu0
        %9305 = vdwg.mxu0
        %v9306 = vadd.f32 %v9209, %v9298
        %v9307 = vadd.f32 %v9210, %v9303
        %v9308 = vld [vmem:[%s9211 + $0x1] sm:$0xf]
        %v9309 = vld [vmem:[%s9211 + $0x9] sm:$0xf]
        %v9310 = vld [vmem:[%s9211 + $0x11] sm:$0xf]
        %v9311 = vld [vmem:[%s9211 + $0x19] sm:$0xf]
        %s9312 = scalar_lea.vmem %s5, 224
        %v9313 = vld [vmem:[%s9312] sm:$0xff]
        %v9314 = vld [vmem:[%s9312 + $0x8] sm:$0xff]
        %v9315 = vld [vmem:[%s9312 + $0x10] sm:$0xff]
        %v9316 = vld [vmem:[%s9312 + $0x18] sm:$0xff]
        %v9321 = vcombine.low %v9308, %v9309
        %v9322 = vcombine.low %v9310, %v9311
        %v9323 = vsel %vm8571, %v9321, 0
        %v9325 = vsel %vm8571, %v9322, 0
        %9327 = vmatprep.subr.mxu0 0.0
        %9328 = vmatpush1.msra.mxu0 %v9313
        %9329 = vmatprep.subr.mxu0 0.0
        %9330 = vmatpush1.msra.mxu0 %v9314
        %9331 = vmatprep.subr.mxu0 0.0
        %9332 = vmatpush1.msra.mxu0 %v9315
        %9333 = vmatprep.subr.mxu0 0.0
        %9334 = vmatpush1.msra.mxu0 %v9316
        %9335 = vmatprep.subr.mxu0 0.0
        %9336 = vmatpush1.msra.mxu0 0.0
        %9337 = vmatprep.subr.mxu0 0.0
        %9338 = vmatpush1.msra.mxu0 0.0
        %9339 = vmatprep.subr.mxu0 0.0
        %9340 = vmatpush1.msra.mxu0 0.0
        %9341 = vmatprep.subr.mxu0 0.0
        %9342 = vmatpush1.msra.mxu0 0.0
        %9343 = vmatprep.subr.mxu0 0.0
        %9344 = vmatpush1.msra.mxu0 0.0
        %9345 = vmatprep.subr.mxu0 0.0
        %9346 = vmatpush1.msra.mxu0 0.0
        %9347 = vmatprep.subr.mxu0 0.0
        %9348 = vmatpush1.msra.mxu0 0.0
        %9349 = vmatprep.subr.mxu0 0.0
        %9350 = vmatpush1.msra.mxu0 0.0
        %9351 = vmatprep.subr.mxu0 0.0
        %9352 = vmatpush1.msra.mxu0 0.0
        %9353 = vmatprep.subr.mxu0 0.0
        %9354 = vmatpush1.msra.mxu0 0.0
        %9355 = vmatprep.subr.mxu0 0.0
        %9356 = vmatpush1.msra.mxu0 0.0
        %9357 = vmatprep.subr.mxu0 0.0
        %9358 = vmatpush1.msra.mxu0 0.0
        %9359 = vmatprep.subr.mxu0 0.0
        %9360 = vmatpush1.msra.mxu0 0.0
        %9361 = vmatprep.subr.mxu0 0.0
        %9362 = vmatpush1.msra.mxu0 0.0
        %9363 = vmatprep.subr.mxu0 0.0
        %9364 = vmatpush1.msra.mxu0 0.0
        %9365 = vmatprep.subr.mxu0 0.0
        %9366 = vmatpush1.msra.mxu0 0.0
        %9367 = vmatprep.subr.mxu0 0.0
        %9368 = vmatpush1.msra.mxu0 0.0
        %9369 = vmatprep.subr.mxu0 0.0
        %9370 = vmatpush1.msra.mxu0 0.0
        %9371 = vmatprep.subr.mxu0 0.0
        %9372 = vmatpush1.msra.mxu0 0.0
        %9373 = vmatprep.subr.mxu0 0.0
        %9374 = vmatpush1.msra.mxu0 0.0
        %9375 = vmatprep.subr.mxu0 0.0
        %9376 = vmatpush1.msra.mxu0 0.0
        %9377 = vmatprep.subr.mxu0 0.0
        %9378 = vmatpush1.msra.mxu0 0.0
        %9379 = vmatprep.subr.mxu0 0.0
        %9380 = vmatpush1.msra.mxu0 0.0
        %9381 = vmatprep.subr.mxu0 0.0
        %9382 = vmatpush1.msra.mxu0 0.0
        %9383 = vmatprep.subr.mxu0 0.0
        %9384 = vmatpush1.msra.mxu0 0.0
        %9385 = vmatprep.subr.mxu0 0.0
        %9386 = vmatpush1.msra.mxu0 0.0
        %9387 = vmatprep.subr.mxu0 0.0
        %9388 = vmatpush1.msra.mxu0 0.0
        %9389 = vmatprep.subr.mxu0 0.0
        %9390 = vmatpush1.msra.mxu0 0.0
        %9391 = vmatprep.mubr.f32.mxu0 0.0
        %9392 = vmatmul.mubr.f32.gmra.mrb[0].mxu0 %v9323
        %v9393 = vpop.f32.mrb[0].mxu0
        %v9394 = vadd.f32 0.0, %v9393
        %v9395 = vpop.f32.mrb[0].mxu0
        %9396 = vmatprep.mubr.f32.mxu0 0.0
        %9397 = vmatmul.mubr.f32.gmra.mrb[0].mxu0 %v9325
        %v9398 = vpop.f32.mrb[0].mxu0
        %v9399 = vadd.f32 0.0, %v9398
        %v9400 = vpop.f32.mrb[0].mxu0
        %9401 = vdwg.mxu0
        %v9402 = vadd.f32 %v9306, %v9394
        %v9403 = vadd.f32 %v9307, %v9399
        %v9404 = vld [vmem:[%s9211 + $0x2] sm:$0xf]
        %v9405 = vld [vmem:[%s9211 + $0xa] sm:$0xf]
        %v9406 = vld [vmem:[%s9211 + $0x12] sm:$0xf]
        %v9407 = vld [vmem:[%s9211 + $0x1a] sm:$0xf]
        %s9408 = scalar_lea.vmem %s5, 256
        %v9409 = vld [vmem:[%s9408] sm:$0xff]
        %v9410 = vld [vmem:[%s9408 + $0x8] sm:$0xff]
        %v9411 = vld [vmem:[%s9408 + $0x10] sm:$0xff]
        %v9412 = vld [vmem:[%s9408 + $0x18] sm:$0xff]
        %v9417 = vcombine.low %v9404, %v9405
        %v9418 = vcombine.low %v9406, %v9407
        %v9419 = vsel %vm8571, %v9417, 0
        %v9421 = vsel %vm8571, %v9418, 0
        %9423 = vmatprep.subr.mxu0 0.0
        %9424 = vmatpush1.msra.mxu0 %v9409
        %9425 = vmatprep.subr.mxu0 0.0
        %9426 = vmatpush1.msra.mxu0 %v9410
        %9427 = vmatprep.subr.mxu0 0.0
        %9428 = vmatpush1.msra.mxu0 %v9411
        %9429 = vmatprep.subr.mxu0 0.0
        %9430 = vmatpush1.msra.mxu0 %v9412
        %9431 = vmatprep.subr.mxu0 0.0
        %9432 = vmatpush1.msra.mxu0 0.0
        %9433 = vmatprep.subr.mxu0 0.0
        %9434 = vmatpush1.msra.mxu0 0.0
        %9435 = vmatprep.subr.mxu0 0.0
        %9436 = vmatpush1.msra.mxu0 0.0
        %9437 = vmatprep.subr.mxu0 0.0
        %9438 = vmatpush1.msra.mxu0 0.0
        %9439 = vmatprep.subr.mxu0 0.0
        %9440 = vmatpush1.msra.mxu0 0.0
        %9441 = vmatprep.subr.mxu0 0.0
        %9442 = vmatpush1.msra.mxu0 0.0
        %9443 = vmatprep.subr.mxu0 0.0
        %9444 = vmatpush1.msra.mxu0 0.0
        %9445 = vmatprep.subr.mxu0 0.0
        %9446 = vmatpush1.msra.mxu0 0.0
        %9447 = vmatprep.subr.mxu0 0.0
        %9448 = vmatpush1.msra.mxu0 0.0
        %9449 = vmatprep.subr.mxu0 0.0
        %9450 = vmatpush1.msra.mxu0 0.0
        %9451 = vmatprep.subr.mxu0 0.0
        %9452 = vmatpush1.msra.mxu0 0.0
        %9453 = vmatprep.subr.mxu0 0.0
        %9454 = vmatpush1.msra.mxu0 0.0
        %9455 = vmatprep.subr.mxu0 0.0
        %9456 = vmatpush1.msra.mxu0 0.0
        %9457 = vmatprep.subr.mxu0 0.0
        %9458 = vmatpush1.msra.mxu0 0.0
        %9459 = vmatprep.subr.mxu0 0.0
        %9460 = vmatpush1.msra.mxu0 0.0
        %9461 = vmatprep.subr.mxu0 0.0
        %9462 = vmatpush1.msra.mxu0 0.0
        %9463 = vmatprep.subr.mxu0 0.0
        %9464 = vmatpush1.msra.mxu0 0.0
        %9465 = vmatprep.subr.mxu0 0.0
        %9466 = vmatpush1.msra.mxu0 0.0
        %9467 = vmatprep.subr.mxu0 0.0
        %9468 = vmatpush1.msra.mxu0 0.0
        %9469 = vmatprep.subr.mxu0 0.0
        %9470 = vmatpush1.msra.mxu0 0.0
        %9471 = vmatprep.subr.mxu0 0.0
        %9472 = vmatpush1.msra.mxu0 0.0
        %9473 = vmatprep.subr.mxu0 0.0
        %9474 = vmatpush1.msra.mxu0 0.0
        %9475 = vmatprep.subr.mxu0 0.0
        %9476 = vmatpush1.msra.mxu0 0.0
        %9477 = vmatprep.subr.mxu0 0.0
        %9478 = vmatpush1.msra.mxu0 0.0
        %9479 = vmatprep.subr.mxu0 0.0
        %9480 = vmatpush1.msra.mxu0 0.0
        %9481 = vmatprep.subr.mxu0 0.0
        %9482 = vmatpush1.msra.mxu0 0.0
        %9483 = vmatprep.subr.mxu0 0.0
        %9484 = vmatpush1.msra.mxu0 0.0
        %9485 = vmatprep.subr.mxu0 0.0
        %9486 = vmatpush1.msra.mxu0 0.0
        %9487 = vmatprep.mubr.f32.mxu0 0.0
        %9488 = vmatmul.mubr.f32.gmra.mrb[0].mxu0 %v9419
        %v9489 = vpop.f32.mrb[0].mxu0
        %v9490 = vadd.f32 0.0, %v9489
        %v9491 = vpop.f32.mrb[0].mxu0
        %9492 = vmatprep.mubr.f32.mxu0 0.0
        %9493 = vmatmul.mubr.f32.gmra.mrb[0].mxu0 %v9421
        %v9494 = vpop.f32.mrb[0].mxu0
        %v9495 = vadd.f32 0.0, %v9494
        %v9496 = vpop.f32.mrb[0].mxu0
        %9497 = vdwg.mxu0
        %v9498 = vadd.f32 %v9402, %v9490
        %v9499 = vadd.f32 %v9403, %v9495
        %v9500 = vld [vmem:[%s6] sm:$0x1]
        %v9502 = vlaneseq
        %v9503 = vshrl.u32 %v9502, 7
        %v9504 = vsub.s32 0, %v9503
        %v9505 = vrot.slane %v9500, %v9504
        %v9507 = vadd.f32 %v9498, %v9505
        %v9508 = vadd.f32 %v9499, %v9505
        %v9511 = vcombine.high %v9507, %v9507
        %v9512 = vcombine.high %v9508, %v9508
        %9515 = vst.msk [vmem:[#allocation7] sm:$0xf] %vm8635, %v9507
        %9516 = vst.msk [vmem:[#allocation7 + $0x4] sm:$0xf] %vm8635, %v9511
        %9517 = vst.msk [vmem:[#allocation7 + $0x8] sm:$0xf] %vm8635, %v9508
        %9518 = vst.msk [vmem:[#allocation7 + $0xc] sm:$0xf] %vm8635, %v9512
        %v9519 = vld [vmem:[#allocation7] ss:$2 sm:$0x3]
        %s9520 = scalar_lea.vmem [#allocation7], 4
        %v9521 = vld [vmem:[%s9520] ss:$2 sm:$0x3]
        %s9522 = scalar_lea.vmem [#allocation7], 8
        %v9523 = vld [vmem:[%s9522] ss:$2 sm:$0x3]
        %s9524 = scalar_lea.vmem [#allocation7], 12
        %v9525 = vld [vmem:[%s9524] ss:$2 sm:$0x3]
        %s9526 = scalar_lea.vmem [#allocation7], 1
        %v9527 = vld [vmem:[%s9526] ss:$2 sm:$0x3]
        %s9528 = scalar_lea.vmem [#allocation7], 5
        %v9529 = vld [vmem:[%s9528] ss:$2 sm:$0x3]
        %s9530 = scalar_lea.vmem [#allocation7], 9
        %v9531 = vld [vmem:[%s9530] ss:$2 sm:$0x3]
        %s9532 = scalar_lea.vmem [#allocation7], 13
        %v9533 = vld [vmem:[%s9532] ss:$2 sm:$0x3]
        %v9534 = vmax.f32 %v9519, %v9527
        %v9535 = vmax.f32 %v9521, %v9529
        %v9536 = vmax.f32 %v9523, %v9531
        %v9537 = vmax.f32 %v9525, %v9533
        %v9538 = vmax.f32 %v9534, %v9535
        %v9539 = vmax.f32 %v9536, %v9537
        %v9540 = vmax.f32 %v9538, 0.0
        %v9541 = vmax.f32 %v9539, 0.0
        %v9542 = vld [vmem:[%s8] sm:$0x1]
        %v9543 = vld [vmem:[%s7] sm:$0xff]
        %v9544 = vld [vmem:[%s7 + $0x8] sm:$0xff]
        %v9545 = vld [vmem:[%s7 + $0x10] sm:$0xff]
        %v9546 = vld [vmem:[%s7 + $0x18] sm:$0xff]
        %v9548 = vsel %vm8571, %v9540, 0
        %9550 = vmatprep.subr.mxu0 0.0
        %9551 = vmatpush1.msra.mxu0 %v9543
        %9552 = vmatprep.subr.mxu0 0.0
        %9553 = vmatpush1.msra.mxu0 %v9544
        %9554 = vmatprep.subr.mxu0 0.0
        %9555 = vmatpush1.msra.mxu0 %v9545
        %9556 = vmatprep.subr.mxu0 0.0
        %9557 = vmatpush1.msra.mxu0 %v9546
        %9558 = vmatprep.subr.mxu0 0.0
        %9559 = vmatpush1.msra.mxu0 0.0
        %9560 = vmatprep.subr.mxu0 0.0
        %9561 = vmatpush1.msra.mxu0 0.0
        %9562 = vmatprep.subr.mxu0 0.0
        %9563 = vmatpush1.msra.mxu0 0.0
        %9564 = vmatprep.subr.mxu0 0.0
        %9565 = vmatpush1.msra.mxu0 0.0
        %9566 = vmatprep.subr.mxu0 0.0
        %9567 = vmatpush1.msra.mxu0 0.0
        %9568 = vmatprep.subr.mxu0 0.0
        %9569 = vmatpush1.msra.mxu0 0.0
        %9570 = vmatprep.subr.mxu0 0.0
        %9571 = vmatpush1.msra.mxu0 0.0
        %9572 = vmatprep.subr.mxu0 0.0
        %9573 = vmatpush1.msra.mxu0 0.0
        %9574 = vmatprep.subr.mxu0 0.0
        %9575 = vmatpush1.msra.mxu0 0.0
        %9576 = vmatprep.subr.mxu0 0.0
        %9577 = vmatpush1.msra.mxu0 0.0
        %9578 = vmatprep.subr.mxu0 0.0
        %9579 = vmatpush1.msra.mxu0 0.0
        %9580 = vmatprep.subr.mxu0 0.0
        %9581 = vmatpush1.msra.mxu0 0.0
        %9582 = vmatprep.subr.mxu0 0.0
        %9583 = vmatpush1.msra.mxu0 0.0
        %9584 = vmatprep.subr.mxu0 0.0
        %9585 = vmatpush1.msra.mxu0 0.0
        %9586 = vmatprep.subr.mxu0 0.0
        %9587 = vmatpush1.msra.mxu0 0.0
        %9588 = vmatprep.subr.mxu0 0.0
        %9589 = vmatpush1.msra.mxu0 0.0
        %9590 = vmatprep.subr.mxu0 0.0
        %9591 = vmatpush1.msra.mxu0 0.0
        %9592 = vmatprep.subr.mxu0 0.0
        %9593 = vmatpush1.msra.mxu0 0.0
        %9594 = vmatprep.subr.mxu0 0.0
        %9595 = vmatpush1.msra.mxu0 0.0
        %9596 = vmatprep.subr.mxu0 0.0
        %9597 = vmatpush1.msra.mxu0 0.0
        %9598 = vmatprep.subr.mxu0 0.0
        %9599 = vmatpush1.msra.mxu0 0.0
        %9600 = vmatprep.subr.mxu0 0.0
        %9601 = vmatpush1.msra.mxu0 0.0
        %9602 = vmatprep.subr.mxu0 0.0
        %9603 = vmatpush1.msra.mxu0 0.0
        %9604 = vmatprep.subr.mxu0 0.0
        %9605 = vmatpush1.msra.mxu0 0.0
        %9606 = vmatprep.subr.mxu0 0.0
        %9607 = vmatpush1.msra.mxu0 0.0
        %9608 = vmatprep.subr.mxu0 0.0
        %9609 = vmatpush1.msra.mxu0 0.0
        %9610 = vmatprep.subr.mxu0 0.0
        %9611 = vmatpush1.msra.mxu0 0.0
        %9612 = vmatprep.subr.mxu0 0.0
        %9613 = vmatpush1.msra.mxu0 0.0
        %9614 = vmatprep.mubr.f32.mxu0 0.0
        %9615 = vmatmul.mubr.f32.gmra.mrb[0].mxu0 %v9548
        %v9616 = vpop.f32.mrb[0].mxu0
        %v9617 = vadd.f32 0.0, %v9616
        %v9618 = vpop.f32.mrb[0].mxu0
        %9619 = vdwg.mxu0
        %v9620 = vadd.f32 %v9542, %v9617
        %s9621 = scalar_lea.vmem %s7, 32
        %v9622 = vld [vmem:[%s9621] sm:$0xff]
        %v9623 = vld [vmem:[%s9621 + $0x8] sm:$0xff]
        %v9624 = vld [vmem:[%s9621 + $0x10] sm:$0xff]
        %v9625 = vld [vmem:[%s9621 + $0x18] sm:$0xff]
        %v9626 = vrot.slane %v9540, 1
        %v9627 = vsel %vm8571, %v9626, 0
        %9629 = vmatprep.subr.mxu0 0.0
        %9630 = vmatpush1.msra.mxu0 %v9622
        %9631 = vmatprep.subr.mxu0 0.0
        %9632 = vmatpush1.msra.mxu0 %v9623
        %9633 = vmatprep.subr.mxu0 0.0
        %9634 = vmatpush1.msra.mxu0 %v9624
        %9635 = vmatprep.subr.mxu0 0.0
        %9636 = vmatpush1.msra.mxu0 %v9625
        %9637 = vmatprep.subr.mxu0 0.0
        %9638 = vmatpush1.msra.mxu0 0.0
        %9639 = vmatprep.subr.mxu0 0.0
        %9640 = vmatpush1.msra.mxu0 0.0
        %9641 = vmatprep.subr.mxu0 0.0
        %9642 = vmatpush1.msra.mxu0 0.0
        %9643 = vmatprep.subr.mxu0 0.0
        %9644 = vmatpush1.msra.mxu0 0.0
        %9645 = vmatprep.subr.mxu0 0.0
        %9646 = vmatpush1.msra.mxu0 0.0
        %9647 = vmatprep.subr.mxu0 0.0
        %9648 = vmatpush1.msra.mxu0 0.0
        %9649 = vmatprep.subr.mxu0 0.0
        %9650 = vmatpush1.msra.mxu0 0.0
        %9651 = vmatprep.subr.mxu0 0.0
        %9652 = vmatpush1.msra.mxu0 0.0
        %9653 = vmatprep.subr.mxu0 0.0
        %9654 = vmatpush1.msra.mxu0 0.0
        %9655 = vmatprep.subr.mxu0 0.0
        %9656 = vmatpush1.msra.mxu0 0.0
        %9657 = vmatprep.subr.mxu0 0.0
        %9658 = vmatpush1.msra.mxu0 0.0
        %9659 = vmatprep.subr.mxu0 0.0
        %9660 = vmatpush1.msra.mxu0 0.0
        %9661 = vmatprep.subr.mxu0 0.0
        %9662 = vmatpush1.msra.mxu0 0.0
        %9663 = vmatprep.subr.mxu0 0.0
        %9664 = vmatpush1.msra.mxu0 0.0
        %9665 = vmatprep.subr.mxu0 0.0
        %9666 = vmatpush1.msra.mxu0 0.0
        %9667 = vmatprep.subr.mxu0 0.0
        %9668 = vmatpush1.msra.mxu0 0.0
        %9669 = vmatprep.subr.mxu0 0.0
        %9670 = vmatpush1.msra.mxu0 0.0
        %9671 = vmatprep.subr.mxu0 0.0
        %9672 = vmatpush1.msra.mxu0 0.0
        %9673 = vmatprep.subr.mxu0 0.0
        %9674 = vmatpush1.msra.mxu0 0.0
        %9675 = vmatprep.subr.mxu0 0.0
        %9676 = vmatpush1.msra.mxu0 0.0
        %9677 = vmatprep.subr.mxu0 0.0
        %9678 = vmatpush1.msra.mxu0 0.0
        %9679 = vmatprep.subr.mxu0 0.0
        %9680 = vmatpush1.msra.mxu0 0.0
        %9681 = vmatprep.subr.mxu0 0.0
        %9682 = vmatpush1.msra.mxu0 0.0
        %9683 = vmatprep.subr.mxu0 0.0
        %9684 = vmatpush1.msra.mxu0 0.0
        %9685 = vmatprep.subr.mxu0 0.0
        %9686 = vmatpush1.msra.mxu0 0.0
        %9687 = vmatprep.subr.mxu0 0.0
        %9688 = vmatpush1.msra.mxu0 0.0
        %9689 = vmatprep.subr.mxu0 0.0
        %9690 = vmatpush1.msra.mxu0 0.0
        %9691 = vmatprep.subr.mxu0 0.0
        %9692 = vmatpush1.msra.mxu0 0.0
        %9693 = vmatprep.mubr.f32.mxu0 0.0
        %9694 = vmatmul.mubr.f32.gmra.mrb[0].mxu0 %v9627
        %v9695 = vpop.f32.mrb[0].mxu0
        %v9696 = vadd.f32 0.0, %v9695
        %v9697 = vpop.f32.mrb[0].mxu0
        %9698 = vdwg.mxu0
        %v9699 = vadd.f32 %v9620, %v9696
        %s9700 = scalar_lea.vmem %s7, 64
        %v9701 = vld [vmem:[%s9700] sm:$0xff]
        %v9702 = vld [vmem:[%s9700 + $0x8] sm:$0xff]
        %v9703 = vld [vmem:[%s9700 + $0x10] sm:$0xff]
        %v9704 = vld [vmem:[%s9700 + $0x18] sm:$0xff]
        %v9706 = vsel %vm8571, %v9541, 0
        %9708 = vmatprep.subr.mxu0 0.0
        %9709 = vmatpush1.msra.mxu0 %v9701
        %9710 = vmatprep.subr.mxu0 0.0
        %9711 = vmatpush1.msra.mxu0 %v9702
        %9712 = vmatprep.subr.mxu0 0.0
        %9713 = vmatpush1.msra.mxu0 %v9703
        %9714 = vmatprep.subr.mxu0 0.0
        %9715 = vmatpush1.msra.mxu0 %v9704
        %9716 = vmatprep.subr.mxu0 0.0
        %9717 = vmatpush1.msra.mxu0 0.0
        %9718 = vmatprep.subr.mxu0 0.0
        %9719 = vmatpush1.msra.mxu0 0.0
        %9720 = vmatprep.subr.mxu0 0.0
        %9721 = vmatpush1.msra.mxu0 0.0
        %9722 = vmatprep.subr.mxu0 0.0
        %9723 = vmatpush1.msra.mxu0 0.0
        %9724 = vmatprep.subr.mxu0 0.0
        %9725 = vmatpush1.msra.mxu0 0.0
        %9726 = vmatprep.subr.mxu0 0.0
        %9727 = vmatpush1.msra.mxu0 0.0
        %9728 = vmatprep.subr.mxu0 0.0
        %9729 = vmatpush1.msra.mxu0 0.0
        %9730 = vmatprep.subr.mxu0 0.0
        %9731 = vmatpush1.msra.mxu0 0.0
        %9732 = vmatprep.subr.mxu0 0.0
        %9733 = vmatpush1.msra.mxu0 0.0
        %9734 = vmatprep.subr.mxu0 0.0
        %9735 = vmatpush1.msra.mxu0 0.0
        %9736 = vmatprep.subr.mxu0 0.0
        %9737 = vmatpush1.msra.mxu0 0.0
        %9738 = vmatprep.subr.mxu0 0.0
        %9739 = vmatpush1.msra.mxu0 0.0
        %9740 = vmatprep.subr.mxu0 0.0
        %9741 = vmatpush1.msra.mxu0 0.0
        %9742 = vmatprep.subr.mxu0 0.0
        %9743 = vmatpush1.msra.mxu0 0.0
        %9744 = vmatprep.subr.mxu0 0.0
        %9745 = vmatpush1.msra.mxu0 0.0
        %9746 = vmatprep.subr.mxu0 0.0
        %9747 = vmatpush1.msra.mxu0 0.0
        %9748 = vmatprep.subr.mxu0 0.0
        %9749 = vmatpush1.msra.mxu0 0.0
        %9750 = vmatprep.subr.mxu0 0.0
        %9751 = vmatpush1.msra.mxu0 0.0
        %9752 = vmatprep.subr.mxu0 0.0
        %9753 = vmatpush1.msra.mxu0 0.0
        %9754 = vmatprep.subr.mxu0 0.0
        %9755 = vmatpush1.msra.mxu0 0.0
        %9756 = vmatprep.subr.mxu0 0.0
        %9757 = vmatpush1.msra.mxu0 0.0
        %9758 = vmatprep.subr.mxu0 0.0
        %9759 = vmatpush1.msra.mxu0 0.0
        %9760 = vmatprep.subr.mxu0 0.0
        %9761 = vmatpush1.msra.mxu0 0.0
        %9762 = vmatprep.subr.mxu0 0.0
        %9763 = vmatpush1.msra.mxu0 0.0
        %9764 = vmatprep.subr.mxu0 0.0
        %9765 = vmatpush1.msra.mxu0 0.0
        %9766 = vmatprep.subr.mxu0 0.0
        %9767 = vmatpush1.msra.mxu0 0.0
        %9768 = vmatprep.subr.mxu0 0.0
        %9769 = vmatpush1.msra.mxu0 0.0
        %9770 = vmatprep.subr.mxu0 0.0
        %9771 = vmatpush1.msra.mxu0 0.0
        %9772 = vmatprep.mubr.f32.mxu0 0.0
        %9773 = vmatmul.mubr.f32.gmra.mrb[0].mxu0 %v9706
        %v9774 = vpop.f32.mrb[0].mxu0
        %v9775 = vadd.f32 0.0, %v9774
        %v9776 = vpop.f32.mrb[0].mxu0
        %9777 = vdwg.mxu0
        %v9778 = vadd.f32 %v9699, %v9775
        %s9779 = scalar_lea.vmem %s7, 96
        %v9780 = vld [vmem:[%s9779] sm:$0xff]
        %v9781 = vld [vmem:[%s9779 + $0x8] sm:$0xff]
        %v9782 = vld [vmem:[%s9779 + $0x10] sm:$0xff]
        %v9783 = vld [vmem:[%s9779 + $0x18] sm:$0xff]
        %v9784 = vrot.slane %v9541, 1
        %v9785 = vsel %vm8571, %v9784, 0
        %9787 = vmatprep.subr.mxu0 0.0
        %9788 = vmatpush1.msra.mxu0 %v9780
        %9789 = vmatprep.subr.mxu0 0.0
        %9790 = vmatpush1.msra.mxu0 %v9781
        %9791 = vmatprep.subr.mxu0 0.0
        %9792 = vmatpush1.msra.mxu0 %v9782
        %9793 = vmatprep.subr.mxu0 0.0
        %9794 = vmatpush1.msra.mxu0 %v9783
        %9795 = vmatprep.subr.mxu0 0.0
        %9796 = vmatpush1.msra.mxu0 0.0
        %9797 = vmatprep.subr.mxu0 0.0
        %9798 = vmatpush1.msra.mxu0 0.0
        %9799 = vmatprep.subr.mxu0 0.0
        %9800 = vmatpush1.msra.mxu0 0.0
        %9801 = vmatprep.subr.mxu0 0.0
        %9802 = vmatpush1.msra.mxu0 0.0
        %9803 = vmatprep.subr.mxu0 0.0
        %9804 = vmatpush1.msra.mxu0 0.0
        %9805 = vmatprep.subr.mxu0 0.0
        %9806 = vmatpush1.msra.mxu0 0.0
        %9807 = vmatprep.subr.mxu0 0.0
        %9808 = vmatpush1.msra.mxu0 0.0
        %9809 = vmatprep.subr.mxu0 0.0
        %9810 = vmatpush1.msra.mxu0 0.0
        %9811 = vmatprep.subr.mxu0 0.0
        %9812 = vmatpush1.msra.mxu0 0.0
        %9813 = vmatprep.subr.mxu0 0.0
        %9814 = vmatpush1.msra.mxu0 0.0
        %9815 = vmatprep.subr.mxu0 0.0
        %9816 = vmatpush1.msra.mxu0 0.0
        %9817 = vmatprep.subr.mxu0 0.0
        %9818 = vmatpush1.msra.mxu0 0.0
        %9819 = vmatprep.subr.mxu0 0.0
        %9820 = vmatpush1.msra.mxu0 0.0
        %9821 = vmatprep.subr.mxu0 0.0
        %9822 = vmatpush1.msra.mxu0 0.0
        %9823 = vmatprep.subr.mxu0 0.0
        %9824 = vmatpush1.msra.mxu0 0.0
        %9825 = vmatprep.subr.mxu0 0.0
        %9826 = vmatpush1.msra.mxu0 0.0
        %9827 = vmatprep.subr.mxu0 0.0
        %9828 = vmatpush1.msra.mxu0 0.0
        %9829 = vmatprep.subr.mxu0 0.0
        %9830 = vmatpush1.msra.mxu0 0.0
        %9831 = vmatprep.subr.mxu0 0.0
        %9832 = vmatpush1.msra.mxu0 0.0
        %9833 = vmatprep.subr.mxu0 0.0
        %9834 = vmatpush1.msra.mxu0 0.0
        %9835 = vmatprep.subr.mxu0 0.0
        %9836 = vmatpush1.msra.mxu0 0.0
        %9837 = vmatprep.subr.mxu0 0.0
        %9838 = vmatpush1.msra.mxu0 0.0
        %9839 = vmatprep.subr.mxu0 0.0
        %9840 = vmatpush1.msra.mxu0 0.0
        %9841 = vmatprep.subr.mxu0 0.0
        %9842 = vmatpush1.msra.mxu0 0.0
        %9843 = vmatprep.subr.mxu0 0.0
        %9844 = vmatpush1.msra.mxu0 0.0
        %9845 = vmatprep.subr.mxu0 0.0
        %9846 = vmatpush1.msra.mxu0 0.0
        %9847 = vmatprep.subr.mxu0 0.0
        %9848 = vmatpush1.msra.mxu0 0.0
        %9849 = vmatprep.subr.mxu0 0.0
        %9850 = vmatpush1.msra.mxu0 0.0
        %9851 = vmatprep.mubr.f32.mxu0 0.0
        %9852 = vmatmul.mubr.f32.gmra.mrb[0].mxu0 %v9785
        %v9853 = vpop.f32.mrb[0].mxu0
        %v9854 = vadd.f32 0.0, %v9853
        %v9855 = vpop.f32.mrb[0].mxu0
        %9856 = vdwg.mxu0
        %v9857 = vadd.f32 %v9778, %v9854
        %vm9858 = vcmask 253952
        %9859 = vst.msk [vmem:[%s324] sm:$0x1] %vm9858, %v9857
        %s9860 = sand.u32 %s225, 1
        %s9861 = scalar_lea.sflag [#allocation9], %s9860
        %s9862 = sand.u32 %s225, 1
        %s9863 = scalar_lea.vmem [#allocation8], %s9862
        // Predicated region
        $region57: #{wm811k_encoder_ae_forward.1} parent=55 // pred_check
          %p9864 = pneg %p235
        $region58: #{wm811k_encoder_ae_forward.1} parent=55 // pred_check_branch
          %9866 = sbr.rel (%p9864) target = $region60
        $region59: #{wm811k_encoder_ae_forward.1} parent=55 // pred_region
          %s9868 = ssub.s32 16, 16
          %9869 = vsyncadd %s9861, %s9868
          %s9870 = smul.addr %s23, 16
          %s9871 = scalar_lea.hbm %s9, %s9870
          %s9873 = sshll.u32 %s9863, 4
          %s9874 = int_to_ptr.vmem [resolvable:$true] %s9873
          %9876 = dma.vmem_to_hbm [thread:$0]  %s9874, 16, %s9871, %s9861
        $region60: #{wm811k_encoder_ae_forward.1} parent=55 // pred_fallthru
          _
      $region56: #{wm811k_encoder_ae_forward.1} parent=5 // pred_fallthru
        _
      %p9877 = scmp.le.s32.totalorder 2, %s18
      // Predicated region
      $region61: #{wm811k_encoder_ae_forward.1} parent=5 // pred_check
        %p9878 = pneg %p9877
      $region62: #{wm811k_encoder_ae_forward.1} parent=5 // pred_check_branch
        %9880 = sbr.rel (%p9878) target = $region64
      $region63: #{wm811k_encoder_ae_forward.1} parent=5 // pred_region
        %s9881 = ssub.s32 %s18, 2
        // Predicated region
        $region65: #{wm811k_encoder_ae_forward.1} parent=63 // pred_check
          %p9882 = pneg %p241
        $region66: #{wm811k_encoder_ae_forward.1} parent=63 // pred_check_branch
          %9884 = sbr.rel (%p9882) target = $region68
        $region67: #{wm811k_encoder_ae_forward.1} parent=63 // pred_region
          %s9885 = sand.u32 %s226, 1
          %s9886 = scalar_lea.sflag [#allocation9], %s9885
          %s9887 = sand.u32 %s226, 1
          %s9888 = scalar_lea.vmem [#allocation8], %s9887
          %9889 = dma.done %s9886, 16
        $region68: #{wm811k_encoder_ae_forward.1} parent=63 // pred_fallthru
          _
      $region64: #{wm811k_encoder_ae_forward.1} parent=5 // pred_fallthru
        _
    $region6: #{wm811k_encoder_ae_forward.1} parent=1 // loop_footer
      %s22 = sadd.s32 1, %s18
    $region7: #{wm811k_encoder_ae_forward.1} parent=1 // loop_footer_branch
      %17 = sbr.rel target = $region3
    $region8: #{wm811k_encoder_ae_forward.1} parent=1 // loop_exit
      _
    %9890 = vsyncpa [#allocation9], 1
    %s9891 = scalar_lea.sflag [#allocation9], 1
    %9892 = vsyncpa %s9891, 1

</llo_original>
